<compile_context>
chip_gen: v6e
topology: v6e:2x2x1
jax: 0.10.0
libtpu: 0.0.40
codegen_flags: <defaults>
</compile_context>

<pallas_src>
import jax
import jax.numpy as jnp
from jax.experimental import pallas as pl
from jax.experimental.pallas import tpu as pltpu

_K_IN = 12 * 30 * 30  # 10800, fixed by the .view(bs, 12, 30, 30)


# -----------------------------------------------------------------------------
# Pallas kernel: per-(batch, saccade-tile) backbone body.
#   x_ref : (K, TS)  f32   -- one batch's saccade slab, original layout
#   w1_ref: (H, K)   bf16  -- pre-transposed (out, in)
#   b1_ref: (H, 1)   f32
#   w2_ref: (F, H)   bf16
#   b2_ref: (F, 1)   f32
#   o_ref : (F, TS)  f32   -- already in the torch (bs, F, s) layout
# -----------------------------------------------------------------------------
def _body_kernel(x_ref, w1_ref, b1_ref, w2_ref, b2_ref, o_ref):
    # Cast the activation slab to bf16 in VMEM (free-ish VPU work) so both MXU
    # operands are bf16; accumulate in f32.
    x = x_ref[...].astype(jnp.bfloat16)                                  # (K, TS)
    h = jnp.dot(w1_ref[...], x, preferred_element_type=jnp.float32)     # (H, TS)
    h = jnp.maximum(h + b1_ref[...], 0.0)                               # ReLU
    y = jnp.dot(w2_ref[...], h.astype(jnp.bfloat16),
                preferred_element_type=jnp.float32)                     # (F, TS)
    o_ref[...] = (y + b2_ref[...]).astype(o_ref.dtype)


def _run_body(x, w1, b1, w2, b2, *, ts):
    """x: (bs, K, s) f32 -> (bs, F, s) f32 via pallas_call (no HBM transposes)."""
    bs, K, s = x.shape
    H = w1.shape[0]
    F_out = w2.shape[0]
    grid = (bs, pl.cdiv(s, ts))

    bytes_accessed = int(
        x.size * x.dtype.itemsize
        + w1.size * w1.dtype.itemsize
        + w2.size * w2.dtype.itemsize
        + b1.size * b1.dtype.itemsize
        + b2.size * b2.dtype.itemsize
        + bs * F_out * s * 4
    )
    cost = pl.CostEstimate(
        flops=int(2 * bs * s * K * H + 2 * bs * s * H * F_out),
        transcendentals=0,
        bytes_accessed=bytes_accessed,
    )

    return pl.pallas_call(
        _body_kernel,
        out_shape=jax.ShapeDtypeStruct((bs, F_out, s), jnp.float32),
        grid=grid,
        in_specs=[
            # One contiguous (K, TS) slab per (batch, saccade-tile) grid step.
            pl.BlockSpec((None, K, ts), lambda b, j: (b, 0, j)),
            # Weights/biases: constant index_map -> fetched once, stay resident.
            pl.BlockSpec((H, K), lambda b, j: (0, 0)),
            pl.BlockSpec((H, 1), lambda b, j: (0, 0)),
            pl.BlockSpec((F_out, H), lambda b, j: (0, 0)),
            pl.BlockSpec((F_out, 1), lambda b, j: (0, 0)),
        ],
        out_specs=pl.BlockSpec((None, F_out, ts), lambda b, j: (b, 0, j)),
        compiler_params=pltpu.CompilerParams(
            # No reduction grid axis -> both parallel (v7x dual-TC sharding).
            dimension_semantics=("parallel", "parallel"),
            # Default scoped VMEM (32 MiB) is plenty for these tiles, even with
            # double buffering; do not request v7x's full 64 MiB physical VMEM.
        ),
        cost_estimate=cost,
    )(x, w1, b1, w2, b2)


# -----------------------------------------------------------------------------
# BackboneBase.forward (return_interm_layers=False path)
# -----------------------------------------------------------------------------
def backbone_base_forward(tensors, mask, params, num_channels):
    """
    tensors: (bs, c, s) with c == 12*30*30
    mask:    (bs, L) boolean
    returns: {'0': (x, mask_out)} with
             x:        (bs, num_channels*4*4, s)  float32
             mask_out: (bs, s)                    bool
    """
    bs, c, s = tensors.shape
    assert c == _K_IN, "per-saccade slice must view as (bs, 12, 30, 30)"

    # Saccade tile: the lane-minor block dim must be a multiple of 128 or the
    # full s.  Saccade counts are small in this model, so full-s blocks are the
    # common case; large 128-multiples get tiled to bound VMEM.
    # TODO(synk): a very large s that is not a multiple of 128 would need s
    # padding to tile further; not needed for the module's saccade counts.
    ts = min(s, 128) if s % 128 == 0 else s

    # `.float()` in the torch module.
    x_out = _run_body(
        tensors.astype(jnp.float32),
        params["w1"], params["b1"], params["w2"], params["b2"],
        ts=ts,
    )  # (bs, F, s) -- already torch.stack(layer1, 2) layout, no post-transpose.

    # F.interpolate(m[None].float(), size=s), default 'nearest', .to(bool)[0].
    # Nearest maps output i -> input floor(i * L / s).  (Glue, not hot path.)
    L = mask.shape[-1]
    idx = (jnp.arange(s) * L) // s
    mask_out = mask.astype(jnp.float32)[:, idx] != 0.0

    return {"0": (x_out, mask_out)}


# -----------------------------------------------------------------------------
# Deterministic parameter init for the synthetic backbone body.
# Weights are stored pre-transposed as (out, in) and in bf16 (halves the
# dominant HBM traffic); biases stay f32 and are added post-accumulation.
# -----------------------------------------------------------------------------
def init_params(key, num_channels, hidden=128):
    k_in = _K_IN
    f_out = num_channels * 4 * 4
    k1, k2 = jax.random.split(key)
    w1 = (jax.random.normal(k1, (hidden, k_in), jnp.float32)
          * (1.0 / jnp.sqrt(k_in))).astype(jnp.bfloat16)
    b1 = jnp.zeros((hidden, 1), jnp.float32)
    w2 = (jax.random.normal(k2, (f_out, hidden), jnp.float32)
          * (1.0 / jnp.sqrt(hidden))).astype(jnp.bfloat16)
    b2 = jnp.zeros((f_out, 1), jnp.float32)
    return {"w1": w1, "b1": b1, "w2": w2, "b2": b2}


if __name__ == "__main__":
    key = jax.random.PRNGKey(0)
    k_x, k_m, k_p = jax.random.split(key, 3)

    bs, s = 2, 8
    num_channels = 8                       # -> feature dim num_channels*16 = 128
    c = _K_IN                              # 10800, fixed by the .view(bs, 12, 30, 30)

    tensors = jax.random.normal(k_x, (bs, c, s), jnp.float32)
    mask = jax.random.bernoulli(k_m, 0.3, (bs, s))          # (bs, s) bool mask
    params = init_params(k_p, num_channels)

    out = backbone_base_forward(tensors, mask, params, num_channels)
    x_out, mask_out = out["0"]
    jax.block_until_ready(x_out)
    jax.block_until_ready(mask_out)

    # sanity: shape/dtype contract of the torch module
    assert x_out.shape == (bs, num_channels * 16, s)
    assert mask_out.shape == (bs, s) and mask_out.dtype == jnp.bool_

    # cross-check the Pallas path against pure JAX (same bf16 rounding of the
    # MXU inputs, exact f32 reference math).
    xb = tensors.astype(jnp.bfloat16).astype(jnp.float32)            # (bs, K, s)
    w1f = params["w1"].astype(jnp.float32)
    w2f = params["w2"].astype(jnp.float32)
    h_ref = jnp.einsum("hk,bks->bhs", w1f, xb, precision="highest") + params["b1"][None]
    h_ref = jnp.maximum(h_ref, 0.0).astype(jnp.bfloat16).astype(jnp.float32)
    ref = jnp.einsum("fh,bhs->bfs", w2f, h_ref, precision="highest") + params["b2"][None]
    assert jnp.allclose(x_out, ref, atol=1e-2, rtol=1e-2)

    print("KERNEL_OK")
</pallas_src>

<mosaic_0001>
module attributes {stable_mosaic.version = 11 : i64} {
  func.func @_body_kernel(%arg0: i32, %arg1: i32, %arg2: memref<1x10800x8xf32, #tpu.memory_space<vmem>>, %arg3: memref<128x10800xbf16, #tpu.memory_space<vmem>>, %arg4: memref<128x1xf32, #tpu.memory_space<vmem>>, %arg5: memref<128x128xbf16, #tpu.memory_space<vmem>>, %arg6: memref<128x1xf32, #tpu.memory_space<vmem>>, %arg7: memref<1x128x8xf32, #tpu.memory_space<vmem>>) attributes {dimension_semantics = [#tpu.dimension_semantics<parallel>, #tpu.dimension_semantics<parallel>], iteration_bounds = array<i64: 2, 1>, scalar_prefetch = 0 : i64, scratch_operands = 0 : i64, tpu.core_type = #tpu.core_type<tc>, window_params = [{transform_indices = @transform_0, window_bounds = array<i64: 1, 10800, 8>}, {pipeline_mode = #tpu.pipeline_mode<synchronous>, transform_indices = @transform_1, window_bounds = array<i64: 128, 10800>}, {pipeline_mode = #tpu.pipeline_mode<synchronous>, transform_indices = @transform_2, window_bounds = array<i64: 128, 1>}, {pipeline_mode = #tpu.pipeline_mode<synchronous>, transform_indices = @transform_3, window_bounds = array<i64: 128, 128>}, {pipeline_mode = #tpu.pipeline_mode<synchronous>, transform_indices = @transform_4, window_bounds = array<i64: 128, 1>}, {transform_indices = @transform_5, window_bounds = array<i64: 1, 128, 8>}]} {
    %c0 = arith.constant 0 : index
    %c0_0 = arith.constant 0 : index
    %c0_1 = arith.constant 0 : index
    %0 = vector.load %arg2[%c0, %c0_0, %c0_1] : memref<1x10800x8xf32, #tpu.memory_space<vmem>>, vector<1x10800x8xf32>
    %1 = vector.shape_cast %0 : vector<1x10800x8xf32> to vector<10800x8xf32>
    %2 = arith.truncf %1 : vector<10800x8xf32> to vector<10800x8xbf16>
    %c0_2 = arith.constant 0 : index
    %c0_3 = arith.constant 0 : index
    %3 = vector.load %arg3[%c0_2, %c0_3] : memref<128x10800xbf16, #tpu.memory_space<vmem>>, vector<128x10800xbf16>
    %cst = arith.constant dense<0.000000e+00> : vector<128x8xf32>
    %4 = tpu.matmul %3, %2, %cst {dimension_numbers = #tpu.dot_dimension_numbers<[1], [0], [0], [1], [0, 0, 1, 1], [], []>} : vector<128x10800xbf16>, vector<10800x8xbf16>, vector<128x8xf32> -> vector<128x8xf32>
    %c0_4 = arith.constant 0 : index
    %c0_5 = arith.constant 0 : index
    %5 = vector.load %arg4[%c0_4, %c0_5] : memref<128x1xf32, #tpu.memory_space<vmem>>, vector<128x1xf32>
    %6 = vector.broadcast %5 : vector<128x1xf32> to vector<128x8xf32>
    %7 = arith.addf %4, %6 : vector<128x8xf32>
    %cst_6 = arith.constant 0.000000e+00 : f32
    %8 = vector.broadcast %cst_6 : f32 to vector<128x8xf32>
    %9 = arith.maximumf %7, %8 : vector<128x8xf32>
    %c0_7 = arith.constant 0 : index
    %c0_8 = arith.constant 0 : index
    %10 = vector.load %arg5[%c0_7, %c0_8] : memref<128x128xbf16, #tpu.memory_space<vmem>>, vector<128x128xbf16>
    %11 = arith.truncf %9 : vector<128x8xf32> to vector<128x8xbf16>
    %cst_9 = arith.constant dense<0.000000e+00> : vector<128x8xf32>
    %12 = tpu.matmul %10, %11, %cst_9 {dimension_numbers = #tpu.dot_dimension_numbers<[1], [0], [0], [1], [0, 0, 1, 1], [], []>} : vector<128x128xbf16>, vector<128x8xbf16>, vector<128x8xf32> -> vector<128x8xf32>
    %c0_10 = arith.constant 0 : index
    %c0_11 = arith.constant 0 : index
    %13 = vector.load %arg6[%c0_10, %c0_11] : memref<128x1xf32, #tpu.memory_space<vmem>>, vector<128x1xf32>
    %14 = vector.broadcast %13 : vector<128x1xf32> to vector<128x8xf32>
    %15 = arith.addf %12, %14 : vector<128x8xf32>
    %c0_12 = arith.constant 0 : index
    %c0_13 = arith.constant 0 : index
    %c0_14 = arith.constant 0 : index
    %16 = vector.load %arg7[%c0_12, %c0_13, %c0_14] : memref<1x128x8xf32, #tpu.memory_space<vmem>>, vector<1x128x8xf32>
    %17 = vector.shape_cast %16 : vector<1x128x8xf32> to vector<128x8xf32>
    %18 = vector.shape_cast %15 : vector<128x8xf32> to vector<1x128x8xf32>
    tpu.vector_store %arg7[%c0_12, %c0_13, %c0_14], %18 {strides = array<i32>} : memref<1x128x8xf32, #tpu.memory_space<vmem>>, vector<1x128x8xf32>,
    return
  }
  func.func @transform_0(%arg0: i32, %arg1: i32) -> (i32, i32, i32) {
    %c0_i32 = arith.constant 0 : i32
    %c0_i32_0 = arith.constant 0 : i32
    return %arg0, %c0_i32, %arg1 : i32, i32, i32
  }
  func.func @transform_1(%arg0: i32, %arg1: i32) -> (i32, i32) {
    %c0_i32 = arith.constant 0 : i32
    %c0_i32_0 = arith.constant 0 : i32
    %c0_i32_1 = arith.constant 0 : i32
    return %c0_i32, %c0_i32_0 : i32, i32
  }
  func.func @transform_2(%arg0: i32, %arg1: i32) -> (i32, i32) {
    %c0_i32 = arith.constant 0 : i32
    %c0_i32_0 = arith.constant 0 : i32
    %c0_i32_1 = arith.constant 0 : i32
    return %c0_i32, %c0_i32_0 : i32, i32
  }
  func.func @transform_3(%arg0: i32, %arg1: i32) -> (i32, i32) {
    %c0_i32 = arith.constant 0 : i32
    %c0_i32_0 = arith.constant 0 : i32
    %c0_i32_1 = arith.constant 0 : i32
    return %c0_i32, %c0_i32_0 : i32, i32
  }
  func.func @transform_4(%arg0: i32, %arg1: i32) -> (i32, i32) {
    %c0_i32 = arith.constant 0 : i32
    %c0_i32_0 = arith.constant 0 : i32
    %c0_i32_1 = arith.constant 0 : i32
    return %c0_i32, %c0_i32_0 : i32, i32
  }
  func.func @transform_5(%arg0: i32, %arg1: i32) -> (i32, i32, i32) {
    %c0_i32 = arith.constant 0 : i32
    %c0_i32_0 = arith.constant 0 : i32
    return %arg0, %c0_i32, %arg1 : i32, i32, i32
  }
}

</mosaic_0001>

<llo_original>
// kernel: tpu_custom_call.1
$region0: #{tpu_custom_call.1}
  #allocation0 [shape = 'u32[]', space=smem, size = 0x4, offset = 0x4, fixed_abs, tag = 'smem constant byte address 0x4 - core index']
  #allocation1 [shape = 'u32[144,128]{1,0:T(1,128)}', space=vmem, size = 0x12000, scoped, tag = 'internal scratch']
  %s0 = inlined_call_operand.vmem [shape: f32[2,10800,8], index: 0, kind: input, shape index: {}]
  %s1 = inlined_call_operand.vmem [shape: bf16[128,10800], index: 1, kind: input, shape index: {}]
  %s2 = inlined_call_operand.vmem [shape: f32[128,1], index: 2, kind: input, shape index: {}]
  %s3 = inlined_call_operand.vmem [shape: bf16[128,128], index: 3, kind: input, shape index: {}]
  %s4 = inlined_call_operand.vmem [shape: f32[128,1], index: 4, kind: input, shape index: {}]
  %s5 = inlined_call_operand.vmem [shape: f32[2,128,8], index: 5, kind: output, shape index: {}]
  %s6 = sld [smem:[#allocation0]]
  $region53: #{tpu_custom_call.1} parent=0
    _
  %s8 = ssub.s32 1, %s6
  %s9 = scalar_select 0, %s8, %s6
  loop: start=0, step=1, limit=4
  $region2: #{tpu_custom_call.1} parent=0 // loop_pre_header
    _
  $region3: #{tpu_custom_call.1} parent=0 // loop_header
    %s11 = sphi 0, %s15
    %p12 = scmp.ge.s32.totalorder %s11, 4
    %s18 = sphi 0, %s30
    %s19 = sphi 0, %s26
    %s20 = sphi 0, %s18
    %s21 = sphi 0, %s19
    %s22 = sphi 0, %s20
    %s23 = sphi 0, %s21
    %s35 = sphi 0, %s37
    %s38 = sphi 0, %s35
    %s39 = sphi 0, %s38
    %s55 = sphi 0, %s39
    %s59 = sphi 0, %s59
    %s61 = sphi 0, %s59
    %s62 = sphi 0, %s61
    %s76 = sphi 0, %s62
    %s80 = sphi 0, %s80
    %s82 = sphi 0, %s80
    %s83 = sphi 0, %s82
    %s97 = sphi 0, %s83
    %s101 = sphi 0, %s101
    %s103 = sphi 0, %s101
    %s104 = sphi 0, %s103
    %s118 = sphi 0, %s104
    %s122 = sphi 0, %s122
    %s124 = sphi 0, %s122
    %s125 = sphi 0, %s124
    %s139 = sphi 0, %s125
    %s147 = sphi 0, %s149
    %s150 = sphi 0, %s147
    %s151 = sphi 0, %s150
    %s167 = sphi 0, %s151
  $region4: #{tpu_custom_call.1} parent=0 // loop_header_branch
    %14 = sbr.rel (%p12) target = $region8
  $region5: #{tpu_custom_call.1} parent=0 // loop_body
    %s16 = ssub.s32 %s11, 1
    %s17 = ssub.s32 %s11, 2
    %s24 = sadd.s32 1, %s19
    %p25 = scmp.ge.s32.totalorder %s24, 1
    %s26 = scalar_select %p25, 0, %s24
    %s27 = sadd.s32 1, %s18
    %s28 = scalar_select %p25, %s27, %s18
    %p29 = scmp.ge.s32.totalorder %s28, 2
    %s30 = scalar_select %p29, 0, %s28
    %s31 = ssub.s32 %s18, %s30
    %s32 = ssub.s32 %s19, %s26
    %s33 = sor.u32 %s31, %s32
    %p34 = scmp.eq.s32.totalorder %s33, 0
    %s36 = sadd.s32 %s35, 1
    %s37 = scalar_select %p34, %s35, %s36
    %p40 = pneg %p34
    %p41 = scmp.eq.s32.totalorder %s11, 1
    %p42 = por %p40, %p41
    %p43 = scmp.ne.s32.totalorder %s35, %s38
    %p44 = scmp.eq.s32.totalorder %s11, 0
    %p45 = por %p43, %p44
    %p46 = scmp.ne.s32.totalorder %s35, %s38
    %p47 = scmp.eq.s32.totalorder %s16, 1
    %p48 = por %p46, %p47
    %p49 = scmp.ne.s32.totalorder %s38, %s39
    %p50 = scmp.eq.s32.totalorder %s16, 0
    %p51 = por %p49, %p50
    %p52 = scmp.ne.s32.totalorder %s38, %s39
    %p53 = scmp.eq.s32.totalorder %s17, 1
    %p54 = por %p52, %p53
    %p56 = scmp.ne.s32.totalorder %s39, %s55
    %p57 = scmp.eq.s32.totalorder %s17, 0
    %p58 = por %p56, %p57
    %s60 = sadd.s32 %s59, 1
    %p63 = scmp.eq.s32.totalorder %s11, 1
    %p64 = scmp.ne.s32.totalorder %s59, %s61
    %p65 = scmp.eq.s32.totalorder %s11, 0
    %p66 = por %p64, %p65
    %p67 = scmp.ne.s32.totalorder %s59, %s61
    %p68 = scmp.eq.s32.totalorder %s16, 1
    %p69 = por %p67, %p68
    %p70 = scmp.ne.s32.totalorder %s61, %s62
    %p71 = scmp.eq.s32.totalorder %s16, 0
    %p72 = por %p70, %p71
    %p73 = scmp.ne.s32.totalorder %s61, %s62
    %p74 = scmp.eq.s32.totalorder %s17, 1
    %p75 = por %p73, %p74
    %p77 = scmp.ne.s32.totalorder %s62, %s76
    %p78 = scmp.eq.s32.totalorder %s17, 0
    %p79 = por %p77, %p78
    %s81 = sadd.s32 %s80, 1
    %p84 = scmp.eq.s32.totalorder %s11, 1
    %p85 = scmp.ne.s32.totalorder %s80, %s82
    %p86 = scmp.eq.s32.totalorder %s11, 0
    %p87 = por %p85, %p86
    %p88 = scmp.ne.s32.totalorder %s80, %s82
    %p89 = scmp.eq.s32.totalorder %s16, 1
    %p90 = por %p88, %p89
    %p91 = scmp.ne.s32.totalorder %s82, %s83
    %p92 = scmp.eq.s32.totalorder %s16, 0
    %p93 = por %p91, %p92
    %p94 = scmp.ne.s32.totalorder %s82, %s83
    %p95 = scmp.eq.s32.totalorder %s17, 1
    %p96 = por %p94, %p95
    %p98 = scmp.ne.s32.totalorder %s83, %s97
    %p99 = scmp.eq.s32.totalorder %s17, 0
    %p100 = por %p98, %p99
    %s102 = sadd.s32 %s101, 1
    %p105 = scmp.eq.s32.totalorder %s11, 1
    %p106 = scmp.ne.s32.totalorder %s101, %s103
    %p107 = scmp.eq.s32.totalorder %s11, 0
    %p108 = por %p106, %p107
    %p109 = scmp.ne.s32.totalorder %s101, %s103
    %p110 = scmp.eq.s32.totalorder %s16, 1
    %p111 = por %p109, %p110
    %p112 = scmp.ne.s32.totalorder %s103, %s104
    %p113 = scmp.eq.s32.totalorder %s16, 0
    %p114 = por %p112, %p113
    %p115 = scmp.ne.s32.totalorder %s103, %s104
    %p116 = scmp.eq.s32.totalorder %s17, 1
    %p117 = por %p115, %p116
    %p119 = scmp.ne.s32.totalorder %s104, %s118
    %p120 = scmp.eq.s32.totalorder %s17, 0
    %p121 = por %p119, %p120
    %s123 = sadd.s32 %s122, 1
    %p126 = scmp.eq.s32.totalorder %s11, 1
    %p127 = scmp.ne.s32.totalorder %s122, %s124
    %p128 = scmp.eq.s32.totalorder %s11, 0
    %p129 = por %p127, %p128
    %p130 = scmp.ne.s32.totalorder %s122, %s124
    %p131 = scmp.eq.s32.totalorder %s16, 1
    %p132 = por %p130, %p131
    %p133 = scmp.ne.s32.totalorder %s124, %s125
    %p134 = scmp.eq.s32.totalorder %s16, 0
    %p135 = por %p133, %p134
    %p136 = scmp.ne.s32.totalorder %s124, %s125
    %p137 = scmp.eq.s32.totalorder %s17, 1
    %p138 = por %p136, %p137
    %p140 = scmp.ne.s32.totalorder %s125, %s139
    %p141 = scmp.eq.s32.totalorder %s17, 0
    %p142 = por %p140, %p141
    %s143 = ssub.s32 %s18, %s30
    %s144 = ssub.s32 %s19, %s26
    %s145 = sor.u32 %s143, %s144
    %p146 = scmp.eq.s32.totalorder %s145, 0
    %s148 = sadd.s32 %s147, 1
    %s149 = scalar_select %p146, %s147, %s148
    %p152 = pneg %p146
    %p153 = scmp.eq.s32.totalorder %s11, 1
    %p154 = por %p152, %p153
    %p155 = scmp.ne.s32.totalorder %s147, %s150
    %p156 = scmp.eq.s32.totalorder %s11, 0
    %p157 = por %p155, %p156
    %p158 = scmp.ne.s32.totalorder %s147, %s150
    %p159 = scmp.eq.s32.totalorder %s16, 1
    %p160 = por %p158, %p159
    %p161 = scmp.ne.s32.totalorder %s150, %s151
    %p162 = scmp.eq.s32.totalorder %s16, 0
    %p163 = por %p161, %p162
    %p164 = scmp.ne.s32.totalorder %s150, %s151
    %p165 = scmp.eq.s32.totalorder %s17, 1
    %p166 = por %p164, %p165
    %p168 = scmp.ne.s32.totalorder %s151, %s167
    %p169 = scmp.eq.s32.totalorder %s17, 0
    %p170 = por %p168, %p169
    %p171 = scmp.le.s32.totalorder 1, %s11
    %p172 = scmp.lt.s32.totalorder %s11, 3
    %p173 = pnand %p171, %p172
    %p174 = pneg %p173
    // Predicated region
    $region9: #{tpu_custom_call.1} parent=5 // pred_check
      _
    $region10: #{tpu_custom_call.1} parent=5 // pred_check_branch
      %176 = sbr.rel (%p173) target = $region12
    $region11: #{tpu_custom_call.1} parent=5 // pred_region
      %s177 = ssub.s32 %s11, 1
      // Predicated region
      $region13: #{tpu_custom_call.1} parent=11 // pred_check
        %p178 = pneg %p72
      $region14: #{tpu_custom_call.1} parent=11 // pred_check_branch
        %180 = sbr.rel (%p178) target = $region16
      $region15: #{tpu_custom_call.1} parent=11 // pred_region
        _
      $region16: #{tpu_custom_call.1} parent=11 // pred_fallthru
        _
      // Predicated region
      $region17: #{tpu_custom_call.1} parent=11 // pred_check
        %p181 = pneg %p93
      $region18: #{tpu_custom_call.1} parent=11 // pred_check_branch
        %183 = sbr.rel (%p181) target = $region20
      $region19: #{tpu_custom_call.1} parent=11 // pred_region
        _
      $region20: #{tpu_custom_call.1} parent=11 // pred_fallthru
        _
      // Predicated region
      $region21: #{tpu_custom_call.1} parent=11 // pred_check
        %p184 = pneg %p114
      $region22: #{tpu_custom_call.1} parent=11 // pred_check_branch
        %186 = sbr.rel (%p184) target = $region24
      $region23: #{tpu_custom_call.1} parent=11 // pred_region
        _
      $region24: #{tpu_custom_call.1} parent=11 // pred_fallthru
        _
      // Predicated region
      $region25: #{tpu_custom_call.1} parent=11 // pred_check
        %p187 = pneg %p135
      $region26: #{tpu_custom_call.1} parent=11 // pred_check_branch
        %189 = sbr.rel (%p187) target = $region28
      $region27: #{tpu_custom_call.1} parent=11 // pred_region
        _
      $region28: #{tpu_custom_call.1} parent=11 // pred_fallthru
        _
    $region12: #{tpu_custom_call.1} parent=5 // pred_fallthru
      _
    %p190 = scmp.lt.s32.totalorder %s11, 2
    // Predicated region
    $region29: #{tpu_custom_call.1} parent=5 // pred_check
      %p191 = pneg %p190
    $region30: #{tpu_custom_call.1} parent=5 // pred_check_branch
      %193 = sbr.rel (%p191) target = $region32
    $region31: #{tpu_custom_call.1} parent=5 // pred_region
      // Predicated region
      $region33: #{tpu_custom_call.1} parent=31 // pred_check
        %p194 = pneg %p45
      $region34: #{tpu_custom_call.1} parent=31 // pred_check_branch
        %196 = sbr.rel (%p194) target = $region36
      $region35: #{tpu_custom_call.1} parent=31 // pred_region
        %p197 = scmp.lt.s32.totalorder %s18, 1
        %s198 = scalar_select %p197, %s18, 1
        %p199 = scmp.lt.s32.totalorder %s19, 0
        %s200 = scalar_select %p199, %s19, 0
        %s201 = smul.addr %s198, 1350
        %s202 = sadd.s32 %s200, %s201
        %s203 = smul.addr %s202, 8
        %s204 = scalar_lea.vmem %s0, %s203
      $region36: #{tpu_custom_call.1} parent=31 // pred_fallthru
        _
    $region32: #{tpu_custom_call.1} parent=5 // pred_fallthru
      _
    %p205 = scmp.le.s32.totalorder 1, %s11
    %p206 = scmp.lt.s32.totalorder %s11, 3
    %p207 = pnand %p205, %p206
    %p208 = pneg %p207
    // Predicated region
    $region37: #{tpu_custom_call.1} parent=5 // pred_check
      _
    $region38: #{tpu_custom_call.1} parent=5 // pred_check_branch
      %210 = sbr.rel (%p207) target = $region40
    $region39: #{tpu_custom_call.1} parent=5 // pred_region
      %s211 = ssub.s32 %s11, 1
      %p212 = scmp.lt.s32.totalorder %s20, 1
      %s213 = scalar_select %p212, %s20, 1
      %p214 = scmp.lt.s32.totalorder %s21, 0
      %s215 = scalar_select %p214, %s21, 0
      %s216 = smul.addr %s213, 1350
      %s217 = sadd.s32 %s215, %s216
      %s218 = smul.addr %s217, 8
      %s219 = scalar_lea.vmem %s0, %s218
      %p220 = pneg %p51
      %p221 = pneg %p48
      %p222 = pneg %p72
      %p223 = pneg %p69
      %p224 = pneg %p93
      %p225 = pneg %p90
      %p226 = pneg %p114
      %p227 = pneg %p111
      %p228 = pneg %p135
      %p229 = pneg %p132
      %p230 = pneg %p163
      %p231 = pneg %p160
      %p232 = scmp.lt.s32.totalorder %s20, 1
      %s233 = scalar_select %p232, %s20, 1
      %p234 = scmp.lt.s32.totalorder %s21, 0
      %s235 = scalar_select %p234, %s21, 0
      %s236 = smul.addr %s233, 16
      %s237 = sadd.s32 %s235, %s236
      %s238 = smul.addr %s237, 8
      %s239 = scalar_lea.vmem %s5, %s238
      %p240 = scmp.lt.s32.totalorder %s20, 1
      %s241 = scalar_select %p240, %s20, 1
      %p242 = scmp.lt.s32.totalorder %s21, 0
      %s243 = scalar_select %p242, %s21, 0
      %s244 = smul.addr %s241, 1350
      %s245 = sadd.s32 %s243, %s244
      %s246 = smul.addr %s245, 8
      %s247 = scalar_lea.vmem %s0, %s246
      %p248 = scmp.lt.s32.totalorder %s20, 1
      %s249 = scalar_select %p248, %s20, 1
      %p250 = scmp.lt.s32.totalorder %s21, 0
      %s251 = scalar_select %p250, %s21, 0
      %s252 = smul.addr %s249, 16
      %s253 = sadd.s32 %s251, %s252
      %s254 = smul.addr %s253, 8
      %s255 = scalar_lea.vmem %s5, %s254
      %v257 = vld [vmem:[%s247] sm:$0xff]
      %v258 = vld [vmem:[%s247 + $0x8] sm:$0xff]
      %v259 = vld [vmem:[%s247 + $0x10] sm:$0xff]
      %v260 = vld [vmem:[%s247 + $0x18] sm:$0xff]
      %v261 = vld [vmem:[%s247 + $0x20] sm:$0xff]
      %v262 = vld [vmem:[%s247 + $0x28] sm:$0xff]
      %v263 = vld [vmem:[%s247 + $0x30] sm:$0xff]
      %v264 = vld [vmem:[%s247 + $0x38] sm:$0xff]
      %v265 = vld [vmem:[%s247 + $0x40] sm:$0xff]
      %v266 = vld [vmem:[%s247 + $0x48] sm:$0xff]
      %v267 = vld [vmem:[%s247 + $0x50] sm:$0xff]
      %v268 = vld [vmem:[%s247 + $0x58] sm:$0xff]
      %v269 = vld [vmem:[%s247 + $0x60] sm:$0xff]
      %v270 = vld [vmem:[%s247 + $0x68] sm:$0xff]
      %v271 = vld [vmem:[%s247 + $0x70] sm:$0xff]
      %v272 = vld [vmem:[%s247 + $0x78] sm:$0xff]
      %v273 = vld [vmem:[%s247 + $0x80] sm:$0xff]
      %v274 = vld [vmem:[%s247 + $0x88] sm:$0xff]
      %v275 = vld [vmem:[%s247 + $0x90] sm:$0xff]
      %v276 = vld [vmem:[%s247 + $0x98] sm:$0xff]
      %v277 = vld [vmem:[%s247 + $0xa0] sm:$0xff]
      %v278 = vld [vmem:[%s247 + $0xa8] sm:$0xff]
      %v279 = vld [vmem:[%s247 + $0xb0] sm:$0xff]
      %v280 = vld [vmem:[%s247 + $0xb8] sm:$0xff]
      %v281 = vld [vmem:[%s247 + $0xc0] sm:$0xff]
      %v282 = vld [vmem:[%s247 + $0xc8] sm:$0xff]
      %v283 = vld [vmem:[%s247 + $0xd0] sm:$0xff]
      %v284 = vld [vmem:[%s247 + $0xd8] sm:$0xff]
      %v285 = vld [vmem:[%s247 + $0xe0] sm:$0xff]
      %v286 = vld [vmem:[%s247 + $0xe8] sm:$0xff]
      %v287 = vld [vmem:[%s247 + $0xf0] sm:$0xff]
      %v288 = vld [vmem:[%s247 + $0xf8] sm:$0xff]
      %v289 = vld [vmem:[%s247 + $0x100] sm:$0xff]
      %v290 = vld [vmem:[%s247 + $0x108] sm:$0xff]
      %v291 = vld [vmem:[%s247 + $0x110] sm:$0xff]
      %v292 = vld [vmem:[%s247 + $0x118] sm:$0xff]
      %v293 = vld [vmem:[%s247 + $0x120] sm:$0xff]
      %v294 = vld [vmem:[%s247 + $0x128] sm:$0xff]
      %v295 = vld [vmem:[%s247 + $0x130] sm:$0xff]
      %v296 = vld [vmem:[%s247 + $0x138] sm:$0xff]
      %v297 = vld [vmem:[%s247 + $0x140] sm:$0xff]
      %v298 = vld [vmem:[%s247 + $0x148] sm:$0xff]
      %v299 = vld [vmem:[%s247 + $0x150] sm:$0xff]
      %v300 = vld [vmem:[%s247 + $0x158] sm:$0xff]
      %v301 = vld [vmem:[%s247 + $0x160] sm:$0xff]
      %v302 = vld [vmem:[%s247 + $0x168] sm:$0xff]
      %v303 = vld [vmem:[%s247 + $0x170] sm:$0xff]
      %v304 = vld [vmem:[%s247 + $0x178] sm:$0xff]
      %v305 = vld [vmem:[%s247 + $0x180] sm:$0xff]
      %v306 = vld [vmem:[%s247 + $0x188] sm:$0xff]
      %v307 = vld [vmem:[%s247 + $0x190] sm:$0xff]
      %v308 = vld [vmem:[%s247 + $0x198] sm:$0xff]
      %v309 = vld [vmem:[%s247 + $0x1a0] sm:$0xff]
      %v310 = vld [vmem:[%s247 + $0x1a8] sm:$0xff]
      %v311 = vld [vmem:[%s247 + $0x1b0] sm:$0xff]
      %v312 = vld [vmem:[%s247 + $0x1b8] sm:$0xff]
      %v313 = vld [vmem:[%s247 + $0x1c0] sm:$0xff]
      %v314 = vld [vmem:[%s247 + $0x1c8] sm:$0xff]
      %v315 = vld [vmem:[%s247 + $0x1d0] sm:$0xff]
      %v316 = vld [vmem:[%s247 + $0x1d8] sm:$0xff]
      %v317 = vld [vmem:[%s247 + $0x1e0] sm:$0xff]
      %v318 = vld [vmem:[%s247 + $0x1e8] sm:$0xff]
      %v319 = vld [vmem:[%s247 + $0x1f0] sm:$0xff]
      %v320 = vld [vmem:[%s247 + $0x1f8] sm:$0xff]
      %v321 = vld [vmem:[%s247 + $0x200] sm:$0xff]
      %v322 = vld [vmem:[%s247 + $0x208] sm:$0xff]
      %v323 = vld [vmem:[%s247 + $0x210] sm:$0xff]
      %v324 = vld [vmem:[%s247 + $0x218] sm:$0xff]
      %v325 = vld [vmem:[%s247 + $0x220] sm:$0xff]
      %v326 = vld [vmem:[%s247 + $0x228] sm:$0xff]
      %v327 = vld [vmem:[%s247 + $0x230] sm:$0xff]
      %v328 = vld [vmem:[%s247 + $0x238] sm:$0xff]
      %v329 = vld [vmem:[%s247 + $0x240] sm:$0xff]
      %v330 = vld [vmem:[%s247 + $0x248] sm:$0xff]
      %v331 = vld [vmem:[%s247 + $0x250] sm:$0xff]
      %v332 = vld [vmem:[%s247 + $0x258] sm:$0xff]
      %v333 = vld [vmem:[%s247 + $0x260] sm:$0xff]
      %v334 = vld [vmem:[%s247 + $0x268] sm:$0xff]
      %v335 = vld [vmem:[%s247 + $0x270] sm:$0xff]
      %v336 = vld [vmem:[%s247 + $0x278] sm:$0xff]
      %v337 = vld [vmem:[%s247 + $0x280] sm:$0xff]
      %v338 = vld [vmem:[%s247 + $0x288] sm:$0xff]
      %v339 = vld [vmem:[%s247 + $0x290] sm:$0xff]
      %v340 = vld [vmem:[%s247 + $0x298] sm:$0xff]
      %v341 = vld [vmem:[%s247 + $0x2a0] sm:$0xff]
      %v342 = vld [vmem:[%s247 + $0x2a8] sm:$0xff]
      %v343 = vld [vmem:[%s247 + $0x2b0] sm:$0xff]
      %v344 = vld [vmem:[%s247 + $0x2b8] sm:$0xff]
      %v345 = vld [vmem:[%s247 + $0x2c0] sm:$0xff]
      %v346 = vld [vmem:[%s247 + $0x2c8] sm:$0xff]
      %v347 = vld [vmem:[%s247 + $0x2d0] sm:$0xff]
      %v348 = vld [vmem:[%s247 + $0x2d8] sm:$0xff]
      %v349 = vld [vmem:[%s247 + $0x2e0] sm:$0xff]
      %v350 = vld [vmem:[%s247 + $0x2e8] sm:$0xff]
      %v351 = vld [vmem:[%s247 + $0x2f0] sm:$0xff]
      %v352 = vld [vmem:[%s247 + $0x2f8] sm:$0xff]
      %v353 = vld [vmem:[%s247 + $0x300] sm:$0xff]
      %v354 = vld [vmem:[%s247 + $0x308] sm:$0xff]
      %v355 = vld [vmem:[%s247 + $0x310] sm:$0xff]
      %v356 = vld [vmem:[%s247 + $0x318] sm:$0xff]
      %v357 = vld [vmem:[%s247 + $0x320] sm:$0xff]
      %v358 = vld [vmem:[%s247 + $0x328] sm:$0xff]
      %v359 = vld [vmem:[%s247 + $0x330] sm:$0xff]
      %v360 = vld [vmem:[%s247 + $0x338] sm:$0xff]
      %v361 = vld [vmem:[%s247 + $0x340] sm:$0xff]
      %v362 = vld [vmem:[%s247 + $0x348] sm:$0xff]
      %v363 = vld [vmem:[%s247 + $0x350] sm:$0xff]
      %v364 = vld [vmem:[%s247 + $0x358] sm:$0xff]
      %v365 = vld [vmem:[%s247 + $0x360] sm:$0xff]
      %v366 = vld [vmem:[%s247 + $0x368] sm:$0xff]
      %v367 = vld [vmem:[%s247 + $0x370] sm:$0xff]
      %v368 = vld [vmem:[%s247 + $0x378] sm:$0xff]
      %v369 = vld [vmem:[%s247 + $0x380] sm:$0xff]
      %v370 = vld [vmem:[%s247 + $0x388] sm:$0xff]
      %v371 = vld [vmem:[%s247 + $0x390] sm:$0xff]
      %v372 = vld [vmem:[%s247 + $0x398] sm:$0xff]
      %v373 = vld [vmem:[%s247 + $0x3a0] sm:$0xff]
      %v374 = vld [vmem:[%s247 + $0x3a8] sm:$0xff]
      %v375 = vld [vmem:[%s247 + $0x3b0] sm:$0xff]
      %v376 = vld [vmem:[%s247 + $0x3b8] sm:$0xff]
      %v377 = vld [vmem:[%s247 + $0x3c0] sm:$0xff]
      %v378 = vld [vmem:[%s247 + $0x3c8] sm:$0xff]
      %v379 = vld [vmem:[%s247 + $0x3d0] sm:$0xff]
      %v380 = vld [vmem:[%s247 + $0x3d8] sm:$0xff]
      %v381 = vld [vmem:[%s247 + $0x3e0] sm:$0xff]
      %v382 = vld [vmem:[%s247 + $0x3e8] sm:$0xff]
      %v383 = vld [vmem:[%s247 + $0x3f0] sm:$0xff]
      %v384 = vld [vmem:[%s247 + $0x3f8] sm:$0xff]
      %v385 = vld [vmem:[%s247 + $0x400] sm:$0xff]
      %v386 = vld [vmem:[%s247 + $0x408] sm:$0xff]
      %v387 = vld [vmem:[%s247 + $0x410] sm:$0xff]
      %v388 = vld [vmem:[%s247 + $0x418] sm:$0xff]
      %v389 = vld [vmem:[%s247 + $0x420] sm:$0xff]
      %v390 = vld [vmem:[%s247 + $0x428] sm:$0xff]
      %v391 = vld [vmem:[%s247 + $0x430] sm:$0xff]
      %v392 = vld [vmem:[%s247 + $0x438] sm:$0xff]
      %v393 = vld [vmem:[%s247 + $0x440] sm:$0xff]
      %v394 = vld [vmem:[%s247 + $0x448] sm:$0xff]
      %v395 = vld [vmem:[%s247 + $0x450] sm:$0xff]
      %v396 = vld [vmem:[%s247 + $0x458] sm:$0xff]
      %v397 = vld [vmem:[%s247 + $0x460] sm:$0xff]
      %v398 = vld [vmem:[%s247 + $0x468] sm:$0xff]
      %v399 = vld [vmem:[%s247 + $0x470] sm:$0xff]
      %v400 = vld [vmem:[%s247 + $0x478] sm:$0xff]
      %v401 = vld [vmem:[%s247 + $0x480] sm:$0xff]
      %v402 = vld [vmem:[%s247 + $0x488] sm:$0xff]
      %v403 = vld [vmem:[%s247 + $0x490] sm:$0xff]
      %v404 = vld [vmem:[%s247 + $0x498] sm:$0xff]
      %v405 = vld [vmem:[%s247 + $0x4a0] sm:$0xff]
      %v406 = vld [vmem:[%s247 + $0x4a8] sm:$0xff]
      %v407 = vld [vmem:[%s247 + $0x4b0] sm:$0xff]
      %v408 = vld [vmem:[%s247 + $0x4b8] sm:$0xff]
      %v409 = vld [vmem:[%s247 + $0x4c0] sm:$0xff]
      %v410 = vld [vmem:[%s247 + $0x4c8] sm:$0xff]
      %v411 = vld [vmem:[%s247 + $0x4d0] sm:$0xff]
      %v412 = vld [vmem:[%s247 + $0x4d8] sm:$0xff]
      %v413 = vld [vmem:[%s247 + $0x4e0] sm:$0xff]
      %v414 = vld [vmem:[%s247 + $0x4e8] sm:$0xff]
      %v415 = vld [vmem:[%s247 + $0x4f0] sm:$0xff]
      %v416 = vld [vmem:[%s247 + $0x4f8] sm:$0xff]
      %v417 = vld [vmem:[%s247 + $0x500] sm:$0xff]
      %v418 = vld [vmem:[%s247 + $0x508] sm:$0xff]
      %v419 = vld [vmem:[%s247 + $0x510] sm:$0xff]
      %v420 = vld [vmem:[%s247 + $0x518] sm:$0xff]
      %v421 = vld [vmem:[%s247 + $0x520] sm:$0xff]
      %v422 = vld [vmem:[%s247 + $0x528] sm:$0xff]
      %v423 = vld [vmem:[%s247 + $0x530] sm:$0xff]
      %v424 = vld [vmem:[%s247 + $0x538] sm:$0xff]
      %v425 = vld [vmem:[%s247 + $0x540] sm:$0xff]
      %v426 = vld [vmem:[%s247 + $0x548] sm:$0xff]
      %v427 = vld [vmem:[%s247 + $0x550] sm:$0xff]
      %v428 = vld [vmem:[%s247 + $0x558] sm:$0xff]
      %v429 = vld [vmem:[%s247 + $0x560] sm:$0xff]
      %v430 = vld [vmem:[%s247 + $0x568] sm:$0xff]
      %v431 = vld [vmem:[%s247 + $0x570] sm:$0xff]
      %v432 = vld [vmem:[%s247 + $0x578] sm:$0xff]
      %v433 = vld [vmem:[%s247 + $0x580] sm:$0xff]
      %v434 = vld [vmem:[%s247 + $0x588] sm:$0xff]
      %v435 = vld [vmem:[%s247 + $0x590] sm:$0xff]
      %v436 = vld [vmem:[%s247 + $0x598] sm:$0xff]
      %v437 = vld [vmem:[%s247 + $0x5a0] sm:$0xff]
      %v438 = vld [vmem:[%s247 + $0x5a8] sm:$0xff]
      %v439 = vld [vmem:[%s247 + $0x5b0] sm:$0xff]
      %v440 = vld [vmem:[%s247 + $0x5b8] sm:$0xff]
      %v441 = vld [vmem:[%s247 + $0x5c0] sm:$0xff]
      %v442 = vld [vmem:[%s247 + $0x5c8] sm:$0xff]
      %v443 = vld [vmem:[%s247 + $0x5d0] sm:$0xff]
      %v444 = vld [vmem:[%s247 + $0x5d8] sm:$0xff]
      %v445 = vld [vmem:[%s247 + $0x5e0] sm:$0xff]
      %v446 = vld [vmem:[%s247 + $0x5e8] sm:$0xff]
      %v447 = vld [vmem:[%s247 + $0x5f0] sm:$0xff]
      %v448 = vld [vmem:[%s247 + $0x5f8] sm:$0xff]
      %v449 = vld [vmem:[%s247 + $0x600] sm:$0xff]
      %v450 = vld [vmem:[%s247 + $0x608] sm:$0xff]
      %v451 = vld [vmem:[%s247 + $0x610] sm:$0xff]
      %v452 = vld [vmem:[%s247 + $0x618] sm:$0xff]
      %v453 = vld [vmem:[%s247 + $0x620] sm:$0xff]
      %v454 = vld [vmem:[%s247 + $0x628] sm:$0xff]
      %v455 = vld [vmem:[%s247 + $0x630] sm:$0xff]
      %v456 = vld [vmem:[%s247 + $0x638] sm:$0xff]
      %v457 = vld [vmem:[%s247 + $0x640] sm:$0xff]
      %v458 = vld [vmem:[%s247 + $0x648] sm:$0xff]
      %v459 = vld [vmem:[%s247 + $0x650] sm:$0xff]
      %v460 = vld [vmem:[%s247 + $0x658] sm:$0xff]
      %v461 = vld [vmem:[%s247 + $0x660] sm:$0xff]
      %v462 = vld [vmem:[%s247 + $0x668] sm:$0xff]
      %v463 = vld [vmem:[%s247 + $0x670] sm:$0xff]
      %v464 = vld [vmem:[%s247 + $0x678] sm:$0xff]
      %v465 = vld [vmem:[%s247 + $0x680] sm:$0xff]
      %v466 = vld [vmem:[%s247 + $0x688] sm:$0xff]
      %v467 = vld [vmem:[%s247 + $0x690] sm:$0xff]
      %v468 = vld [vmem:[%s247 + $0x698] sm:$0xff]
      %v469 = vld [vmem:[%s247 + $0x6a0] sm:$0xff]
      %v470 = vld [vmem:[%s247 + $0x6a8] sm:$0xff]
      %v471 = vld [vmem:[%s247 + $0x6b0] sm:$0xff]
      %v472 = vld [vmem:[%s247 + $0x6b8] sm:$0xff]
      %v473 = vld [vmem:[%s247 + $0x6c0] sm:$0xff]
      %v474 = vld [vmem:[%s247 + $0x6c8] sm:$0xff]
      %v475 = vld [vmem:[%s247 + $0x6d0] sm:$0xff]
      %v476 = vld [vmem:[%s247 + $0x6d8] sm:$0xff]
      %v477 = vld [vmem:[%s247 + $0x6e0] sm:$0xff]
      %v478 = vld [vmem:[%s247 + $0x6e8] sm:$0xff]
      %v479 = vld [vmem:[%s247 + $0x6f0] sm:$0xff]
      %v480 = vld [vmem:[%s247 + $0x6f8] sm:$0xff]
      %v481 = vld [vmem:[%s247 + $0x700] sm:$0xff]
      %v482 = vld [vmem:[%s247 + $0x708] sm:$0xff]
      %v483 = vld [vmem:[%s247 + $0x710] sm:$0xff]
      %v484 = vld [vmem:[%s247 + $0x718] sm:$0xff]
      %v485 = vld [vmem:[%s247 + $0x720] sm:$0xff]
      %v486 = vld [vmem:[%s247 + $0x728] sm:$0xff]
      %v487 = vld [vmem:[%s247 + $0x730] sm:$0xff]
      %v488 = vld [vmem:[%s247 + $0x738] sm:$0xff]
      %v489 = vld [vmem:[%s247 + $0x740] sm:$0xff]
      %v490 = vld [vmem:[%s247 + $0x748] sm:$0xff]
      %v491 = vld [vmem:[%s247 + $0x750] sm:$0xff]
      %v492 = vld [vmem:[%s247 + $0x758] sm:$0xff]
      %v493 = vld [vmem:[%s247 + $0x760] sm:$0xff]
      %v494 = vld [vmem:[%s247 + $0x768] sm:$0xff]
      %v495 = vld [vmem:[%s247 + $0x770] sm:$0xff]
      %v496 = vld [vmem:[%s247 + $0x778] sm:$0xff]
      %v497 = vld [vmem:[%s247 + $0x780] sm:$0xff]
      %v498 = vld [vmem:[%s247 + $0x788] sm:$0xff]
      %v499 = vld [vmem:[%s247 + $0x790] sm:$0xff]
      %v500 = vld [vmem:[%s247 + $0x798] sm:$0xff]
      %v501 = vld [vmem:[%s247 + $0x7a0] sm:$0xff]
      %v502 = vld [vmem:[%s247 + $0x7a8] sm:$0xff]
      %v503 = vld [vmem:[%s247 + $0x7b0] sm:$0xff]
      %v504 = vld [vmem:[%s247 + $0x7b8] sm:$0xff]
      %v505 = vld [vmem:[%s247 + $0x7c0] sm:$0xff]
      %v506 = vld [vmem:[%s247 + $0x7c8] sm:$0xff]
      %v507 = vld [vmem:[%s247 + $0x7d0] sm:$0xff]
      %v508 = vld [vmem:[%s247 + $0x7d8] sm:$0xff]
      %v509 = vld [vmem:[%s247 + $0x7e0] sm:$0xff]
      %v510 = vld [vmem:[%s247 + $0x7e8] sm:$0xff]
      %v511 = vld [vmem:[%s247 + $0x7f0] sm:$0xff]
      %v512 = vld [vmem:[%s247 + $0x7f8] sm:$0xff]
      %v513 = vld [vmem:[%s247 + $0x800] sm:$0xff]
      %v514 = vld [vmem:[%s247 + $0x808] sm:$0xff]
      %v515 = vld [vmem:[%s247 + $0x810] sm:$0xff]
      %v516 = vld [vmem:[%s247 + $0x818] sm:$0xff]
      %v517 = vld [vmem:[%s247 + $0x820] sm:$0xff]
      %v518 = vld [vmem:[%s247 + $0x828] sm:$0xff]
      %v519 = vld [vmem:[%s247 + $0x830] sm:$0xff]
      %v520 = vld [vmem:[%s247 + $0x838] sm:$0xff]
      %v521 = vld [vmem:[%s247 + $0x840] sm:$0xff]
      %v522 = vld [vmem:[%s247 + $0x848] sm:$0xff]
      %v523 = vld [vmem:[%s247 + $0x850] sm:$0xff]
      %v524 = vld [vmem:[%s247 + $0x858] sm:$0xff]
      %v525 = vld [vmem:[%s247 + $0x860] sm:$0xff]
      %v526 = vld [vmem:[%s247 + $0x868] sm:$0xff]
      %v527 = vld [vmem:[%s247 + $0x870] sm:$0xff]
      %v528 = vld [vmem:[%s247 + $0x878] sm:$0xff]
      %v529 = vld [vmem:[%s247 + $0x880] sm:$0xff]
      %v530 = vld [vmem:[%s247 + $0x888] sm:$0xff]
      %v531 = vld [vmem:[%s247 + $0x890] sm:$0xff]
      %v532 = vld [vmem:[%s247 + $0x898] sm:$0xff]
      %v533 = vld [vmem:[%s247 + $0x8a0] sm:$0xff]
      %v534 = vld [vmem:[%s247 + $0x8a8] sm:$0xff]
      %v535 = vld [vmem:[%s247 + $0x8b0] sm:$0xff]
      %v536 = vld [vmem:[%s247 + $0x8b8] sm:$0xff]
      %v537 = vld [vmem:[%s247 + $0x8c0] sm:$0xff]
      %v538 = vld [vmem:[%s247 + $0x8c8] sm:$0xff]
      %v539 = vld [vmem:[%s247 + $0x8d0] sm:$0xff]
      %v540 = vld [vmem:[%s247 + $0x8d8] sm:$0xff]
      %v541 = vld [vmem:[%s247 + $0x8e0] sm:$0xff]
      %v542 = vld [vmem:[%s247 + $0x8e8] sm:$0xff]
      %v543 = vld [vmem:[%s247 + $0x8f0] sm:$0xff]
      %v544 = vld [vmem:[%s247 + $0x8f8] sm:$0xff]
      %v545 = vld [vmem:[%s247 + $0x900] sm:$0xff]
      %v546 = vld [vmem:[%s247 + $0x908] sm:$0xff]
      %v547 = vld [vmem:[%s247 + $0x910] sm:$0xff]
      %v548 = vld [vmem:[%s247 + $0x918] sm:$0xff]
      %v549 = vld [vmem:[%s247 + $0x920] sm:$0xff]
      %v550 = vld [vmem:[%s247 + $0x928] sm:$0xff]
      %v551 = vld [vmem:[%s247 + $0x930] sm:$0xff]
      %v552 = vld [vmem:[%s247 + $0x938] sm:$0xff]
      %v553 = vld [vmem:[%s247 + $0x940] sm:$0xff]
      %v554 = vld [vmem:[%s247 + $0x948] sm:$0xff]
      %v555 = vld [vmem:[%s247 + $0x950] sm:$0xff]
      %v556 = vld [vmem:[%s247 + $0x958] sm:$0xff]
      %v557 = vld [vmem:[%s247 + $0x960] sm:$0xff]
      %v558 = vld [vmem:[%s247 + $0x968] sm:$0xff]
      %v559 = vld [vmem:[%s247 + $0x970] sm:$0xff]
      %v560 = vld [vmem:[%s247 + $0x978] sm:$0xff]
      %v561 = vld [vmem:[%s247 + $0x980] sm:$0xff]
      %v562 = vld [vmem:[%s247 + $0x988] sm:$0xff]
      %v563 = vld [vmem:[%s247 + $0x990] sm:$0xff]
      %v564 = vld [vmem:[%s247 + $0x998] sm:$0xff]
      %v565 = vld [vmem:[%s247 + $0x9a0] sm:$0xff]
      %v566 = vld [vmem:[%s247 + $0x9a8] sm:$0xff]
      %v567 = vld [vmem:[%s247 + $0x9b0] sm:$0xff]
      %v568 = vld [vmem:[%s247 + $0x9b8] sm:$0xff]
      %v569 = vld [vmem:[%s247 + $0x9c0] sm:$0xff]
      %v570 = vld [vmem:[%s247 + $0x9c8] sm:$0xff]
      %v571 = vld [vmem:[%s247 + $0x9d0] sm:$0xff]
      %v572 = vld [vmem:[%s247 + $0x9d8] sm:$0xff]
      %v573 = vld [vmem:[%s247 + $0x9e0] sm:$0xff]
      %v574 = vld [vmem:[%s247 + $0x9e8] sm:$0xff]
      %v575 = vld [vmem:[%s247 + $0x9f0] sm:$0xff]
      %v576 = vld [vmem:[%s247 + $0x9f8] sm:$0xff]
      %v577 = vld [vmem:[%s247 + $0xa00] sm:$0xff]
      %v578 = vld [vmem:[%s247 + $0xa08] sm:$0xff]
      %v579 = vld [vmem:[%s247 + $0xa10] sm:$0xff]
      %v580 = vld [vmem:[%s247 + $0xa18] sm:$0xff]
      %v581 = vld [vmem:[%s247 + $0xa20] sm:$0xff]
      %v582 = vld [vmem:[%s247 + $0xa28] sm:$0xff]
      %v583 = vld [vmem:[%s247 + $0xa30] sm:$0xff]
      %v584 = vld [vmem:[%s247 + $0xa38] sm:$0xff]
      %v585 = vld [vmem:[%s247 + $0xa40] sm:$0xff]
      %v586 = vld [vmem:[%s247 + $0xa48] sm:$0xff]
      %v587 = vld [vmem:[%s247 + $0xa50] sm:$0xff]
      %v588 = vld [vmem:[%s247 + $0xa58] sm:$0xff]
      %v589 = vld [vmem:[%s247 + $0xa60] sm:$0xff]
      %v590 = vld [vmem:[%s247 + $0xa68] sm:$0xff]
      %v591 = vld [vmem:[%s247 + $0xa70] sm:$0xff]
      %v592 = vld [vmem:[%s247 + $0xa78] sm:$0xff]
      %v593 = vld [vmem:[%s247 + $0xa80] sm:$0xff]
      %v594 = vld [vmem:[%s247 + $0xa88] sm:$0xff]
      %v595 = vld [vmem:[%s247 + $0xa90] sm:$0xff]
      %v596 = vld [vmem:[%s247 + $0xa98] sm:$0xff]
      %v597 = vld [vmem:[%s247 + $0xaa0] sm:$0xff]
      %v598 = vld [vmem:[%s247 + $0xaa8] sm:$0xff]
      %v599 = vld [vmem:[%s247 + $0xab0] sm:$0xff]
      %v600 = vld [vmem:[%s247 + $0xab8] sm:$0xff]
      %v601 = vld [vmem:[%s247 + $0xac0] sm:$0xff]
      %v602 = vld [vmem:[%s247 + $0xac8] sm:$0xff]
      %v603 = vld [vmem:[%s247 + $0xad0] sm:$0xff]
      %v604 = vld [vmem:[%s247 + $0xad8] sm:$0xff]
      %v605 = vld [vmem:[%s247 + $0xae0] sm:$0xff]
      %v606 = vld [vmem:[%s247 + $0xae8] sm:$0xff]
      %v607 = vld [vmem:[%s247 + $0xaf0] sm:$0xff]
      %v608 = vld [vmem:[%s247 + $0xaf8] sm:$0xff]
      %v609 = vld [vmem:[%s247 + $0xb00] sm:$0xff]
      %v610 = vld [vmem:[%s247 + $0xb08] sm:$0xff]
      %v611 = vld [vmem:[%s247 + $0xb10] sm:$0xff]
      %v612 = vld [vmem:[%s247 + $0xb18] sm:$0xff]
      %v613 = vld [vmem:[%s247 + $0xb20] sm:$0xff]
      %v614 = vld [vmem:[%s247 + $0xb28] sm:$0xff]
      %v615 = vld [vmem:[%s247 + $0xb30] sm:$0xff]
      %v616 = vld [vmem:[%s247 + $0xb38] sm:$0xff]
      %v617 = vld [vmem:[%s247 + $0xb40] sm:$0xff]
      %v618 = vld [vmem:[%s247 + $0xb48] sm:$0xff]
      %v619 = vld [vmem:[%s247 + $0xb50] sm:$0xff]
      %v620 = vld [vmem:[%s247 + $0xb58] sm:$0xff]
      %v621 = vld [vmem:[%s247 + $0xb60] sm:$0xff]
      %v622 = vld [vmem:[%s247 + $0xb68] sm:$0xff]
      %v623 = vld [vmem:[%s247 + $0xb70] sm:$0xff]
      %v624 = vld [vmem:[%s247 + $0xb78] sm:$0xff]
      %v625 = vld [vmem:[%s247 + $0xb80] sm:$0xff]
      %v626 = vld [vmem:[%s247 + $0xb88] sm:$0xff]
      %v627 = vld [vmem:[%s247 + $0xb90] sm:$0xff]
      %v628 = vld [vmem:[%s247 + $0xb98] sm:$0xff]
      %v629 = vld [vmem:[%s247 + $0xba0] sm:$0xff]
      %v630 = vld [vmem:[%s247 + $0xba8] sm:$0xff]
      %v631 = vld [vmem:[%s247 + $0xbb0] sm:$0xff]
      %v632 = vld [vmem:[%s247 + $0xbb8] sm:$0xff]
      %v633 = vld [vmem:[%s247 + $0xbc0] sm:$0xff]
      %v634 = vld [vmem:[%s247 + $0xbc8] sm:$0xff]
      %v635 = vld [vmem:[%s247 + $0xbd0] sm:$0xff]
      %v636 = vld [vmem:[%s247 + $0xbd8] sm:$0xff]
      %v637 = vld [vmem:[%s247 + $0xbe0] sm:$0xff]
      %v638 = vld [vmem:[%s247 + $0xbe8] sm:$0xff]
      %v639 = vld [vmem:[%s247 + $0xbf0] sm:$0xff]
      %v640 = vld [vmem:[%s247 + $0xbf8] sm:$0xff]
      %v641 = vld [vmem:[%s247 + $0xc00] sm:$0xff]
      %v642 = vld [vmem:[%s247 + $0xc08] sm:$0xff]
      %v643 = vld [vmem:[%s247 + $0xc10] sm:$0xff]
      %v644 = vld [vmem:[%s247 + $0xc18] sm:$0xff]
      %v645 = vld [vmem:[%s247 + $0xc20] sm:$0xff]
      %v646 = vld [vmem:[%s247 + $0xc28] sm:$0xff]
      %v647 = vld [vmem:[%s247 + $0xc30] sm:$0xff]
      %v648 = vld [vmem:[%s247 + $0xc38] sm:$0xff]
      %v649 = vld [vmem:[%s247 + $0xc40] sm:$0xff]
      %v650 = vld [vmem:[%s247 + $0xc48] sm:$0xff]
      %v651 = vld [vmem:[%s247 + $0xc50] sm:$0xff]
      %v652 = vld [vmem:[%s247 + $0xc58] sm:$0xff]
      %v653 = vld [vmem:[%s247 + $0xc60] sm:$0xff]
      %v654 = vld [vmem:[%s247 + $0xc68] sm:$0xff]
      %v655 = vld [vmem:[%s247 + $0xc70] sm:$0xff]
      %v656 = vld [vmem:[%s247 + $0xc78] sm:$0xff]
      %v657 = vld [vmem:[%s247 + $0xc80] sm:$0xff]
      %v658 = vld [vmem:[%s247 + $0xc88] sm:$0xff]
      %v659 = vld [vmem:[%s247 + $0xc90] sm:$0xff]
      %v660 = vld [vmem:[%s247 + $0xc98] sm:$0xff]
      %v661 = vld [vmem:[%s247 + $0xca0] sm:$0xff]
      %v662 = vld [vmem:[%s247 + $0xca8] sm:$0xff]
      %v663 = vld [vmem:[%s247 + $0xcb0] sm:$0xff]
      %v664 = vld [vmem:[%s247 + $0xcb8] sm:$0xff]
      %v665 = vld [vmem:[%s247 + $0xcc0] sm:$0xff]
      %v666 = vld [vmem:[%s247 + $0xcc8] sm:$0xff]
      %v667 = vld [vmem:[%s247 + $0xcd0] sm:$0xff]
      %v668 = vld [vmem:[%s247 + $0xcd8] sm:$0xff]
      %v669 = vld [vmem:[%s247 + $0xce0] sm:$0xff]
      %v670 = vld [vmem:[%s247 + $0xce8] sm:$0xff]
      %v671 = vld [vmem:[%s247 + $0xcf0] sm:$0xff]
      %v672 = vld [vmem:[%s247 + $0xcf8] sm:$0xff]
      %v673 = vld [vmem:[%s247 + $0xd00] sm:$0xff]
      %v674 = vld [vmem:[%s247 + $0xd08] sm:$0xff]
      %v675 = vld [vmem:[%s247 + $0xd10] sm:$0xff]
      %v676 = vld [vmem:[%s247 + $0xd18] sm:$0xff]
      %v677 = vld [vmem:[%s247 + $0xd20] sm:$0xff]
      %v678 = vld [vmem:[%s247 + $0xd28] sm:$0xff]
      %v679 = vld [vmem:[%s247 + $0xd30] sm:$0xff]
      %v680 = vld [vmem:[%s247 + $0xd38] sm:$0xff]
      %v681 = vld [vmem:[%s247 + $0xd40] sm:$0xff]
      %v682 = vld [vmem:[%s247 + $0xd48] sm:$0xff]
      %v683 = vld [vmem:[%s247 + $0xd50] sm:$0xff]
      %v684 = vld [vmem:[%s247 + $0xd58] sm:$0xff]
      %v685 = vld [vmem:[%s247 + $0xd60] sm:$0xff]
      %v686 = vld [vmem:[%s247 + $0xd68] sm:$0xff]
      %v687 = vld [vmem:[%s247 + $0xd70] sm:$0xff]
      %v688 = vld [vmem:[%s247 + $0xd78] sm:$0xff]
      %v689 = vld [vmem:[%s247 + $0xd80] sm:$0xff]
      %v690 = vld [vmem:[%s247 + $0xd88] sm:$0xff]
      %v691 = vld [vmem:[%s247 + $0xd90] sm:$0xff]
      %v692 = vld [vmem:[%s247 + $0xd98] sm:$0xff]
      %v693 = vld [vmem:[%s247 + $0xda0] sm:$0xff]
      %v694 = vld [vmem:[%s247 + $0xda8] sm:$0xff]
      %v695 = vld [vmem:[%s247 + $0xdb0] sm:$0xff]
      %v696 = vld [vmem:[%s247 + $0xdb8] sm:$0xff]
      %v697 = vld [vmem:[%s247 + $0xdc0] sm:$0xff]
      %v698 = vld [vmem:[%s247 + $0xdc8] sm:$0xff]
      %v699 = vld [vmem:[%s247 + $0xdd0] sm:$0xff]
      %v700 = vld [vmem:[%s247 + $0xdd8] sm:$0xff]
      %v701 = vld [vmem:[%s247 + $0xde0] sm:$0xff]
      %v702 = vld [vmem:[%s247 + $0xde8] sm:$0xff]
      %v703 = vld [vmem:[%s247 + $0xdf0] sm:$0xff]
      %v704 = vld [vmem:[%s247 + $0xdf8] sm:$0xff]
      %v705 = vld [vmem:[%s247 + $0xe00] sm:$0xff]
      %v706 = vld [vmem:[%s247 + $0xe08] sm:$0xff]
      %v707 = vld [vmem:[%s247 + $0xe10] sm:$0xff]
      %v708 = vld [vmem:[%s247 + $0xe18] sm:$0xff]
      %v709 = vld [vmem:[%s247 + $0xe20] sm:$0xff]
      %v710 = vld [vmem:[%s247 + $0xe28] sm:$0xff]
      %v711 = vld [vmem:[%s247 + $0xe30] sm:$0xff]
      %v712 = vld [vmem:[%s247 + $0xe38] sm:$0xff]
      %v713 = vld [vmem:[%s247 + $0xe40] sm:$0xff]
      %v714 = vld [vmem:[%s247 + $0xe48] sm:$0xff]
      %v715 = vld [vmem:[%s247 + $0xe50] sm:$0xff]
      %v716 = vld [vmem:[%s247 + $0xe58] sm:$0xff]
      %v717 = vld [vmem:[%s247 + $0xe60] sm:$0xff]
      %v718 = vld [vmem:[%s247 + $0xe68] sm:$0xff]
      %v719 = vld [vmem:[%s247 + $0xe70] sm:$0xff]
      %v720 = vld [vmem:[%s247 + $0xe78] sm:$0xff]
      %v721 = vld [vmem:[%s247 + $0xe80] sm:$0xff]
      %v722 = vld [vmem:[%s247 + $0xe88] sm:$0xff]
      %v723 = vld [vmem:[%s247 + $0xe90] sm:$0xff]
      %v724 = vld [vmem:[%s247 + $0xe98] sm:$0xff]
      %v725 = vld [vmem:[%s247 + $0xea0] sm:$0xff]
      %v726 = vld [vmem:[%s247 + $0xea8] sm:$0xff]
      %v727 = vld [vmem:[%s247 + $0xeb0] sm:$0xff]
      %v728 = vld [vmem:[%s247 + $0xeb8] sm:$0xff]
      %v729 = vld [vmem:[%s247 + $0xec0] sm:$0xff]
      %v730 = vld [vmem:[%s247 + $0xec8] sm:$0xff]
      %v731 = vld [vmem:[%s247 + $0xed0] sm:$0xff]
      %v732 = vld [vmem:[%s247 + $0xed8] sm:$0xff]
      %v733 = vld [vmem:[%s247 + $0xee0] sm:$0xff]
      %v734 = vld [vmem:[%s247 + $0xee8] sm:$0xff]
      %v735 = vld [vmem:[%s247 + $0xef0] sm:$0xff]
      %v736 = vld [vmem:[%s247 + $0xef8] sm:$0xff]
      %v737 = vld [vmem:[%s247 + $0xf00] sm:$0xff]
      %v738 = vld [vmem:[%s247 + $0xf08] sm:$0xff]
      %v739 = vld [vmem:[%s247 + $0xf10] sm:$0xff]
      %v740 = vld [vmem:[%s247 + $0xf18] sm:$0xff]
      %v741 = vld [vmem:[%s247 + $0xf20] sm:$0xff]
      %v742 = vld [vmem:[%s247 + $0xf28] sm:$0xff]
      %v743 = vld [vmem:[%s247 + $0xf30] sm:$0xff]
      %v744 = vld [vmem:[%s247 + $0xf38] sm:$0xff]
      %v745 = vld [vmem:[%s247 + $0xf40] sm:$0xff]
      %v746 = vld [vmem:[%s247 + $0xf48] sm:$0xff]
      %v747 = vld [vmem:[%s247 + $0xf50] sm:$0xff]
      %v748 = vld [vmem:[%s247 + $0xf58] sm:$0xff]
      %v749 = vld [vmem:[%s247 + $0xf60] sm:$0xff]
      %v750 = vld [vmem:[%s247 + $0xf68] sm:$0xff]
      %v751 = vld [vmem:[%s247 + $0xf70] sm:$0xff]
      %v752 = vld [vmem:[%s247 + $0xf78] sm:$0xff]
      %v753 = vld [vmem:[%s247 + $0xf80] sm:$0xff]
      %v754 = vld [vmem:[%s247 + $0xf88] sm:$0xff]
      %v755 = vld [vmem:[%s247 + $0xf90] sm:$0xff]
      %v756 = vld [vmem:[%s247 + $0xf98] sm:$0xff]
      %v757 = vld [vmem:[%s247 + $0xfa0] sm:$0xff]
      %v758 = vld [vmem:[%s247 + $0xfa8] sm:$0xff]
      %v759 = vld [vmem:[%s247 + $0xfb0] sm:$0xff]
      %v760 = vld [vmem:[%s247 + $0xfb8] sm:$0xff]
      %v761 = vld [vmem:[%s247 + $0xfc0] sm:$0xff]
      %v762 = vld [vmem:[%s247 + $0xfc8] sm:$0xff]
      %v763 = vld [vmem:[%s247 + $0xfd0] sm:$0xff]
      %v764 = vld [vmem:[%s247 + $0xfd8] sm:$0xff]
      %v765 = vld [vmem:[%s247 + $0xfe0] sm:$0xff]
      %v766 = vld [vmem:[%s247 + $0xfe8] sm:$0xff]
      %v767 = vld [vmem:[%s247 + $0xff0] sm:$0xff]
      %v768 = vld [vmem:[%s247 + $0xff8] sm:$0xff]
      %v769 = vld [vmem:[%s247 + $0x1000] sm:$0xff]
      %v770 = vld [vmem:[%s247 + $0x1008] sm:$0xff]
      %v771 = vld [vmem:[%s247 + $0x1010] sm:$0xff]
      %v772 = vld [vmem:[%s247 + $0x1018] sm:$0xff]
      %v773 = vld [vmem:[%s247 + $0x1020] sm:$0xff]
      %v774 = vld [vmem:[%s247 + $0x1028] sm:$0xff]
      %v775 = vld [vmem:[%s247 + $0x1030] sm:$0xff]
      %v776 = vld [vmem:[%s247 + $0x1038] sm:$0xff]
      %v777 = vld [vmem:[%s247 + $0x1040] sm:$0xff]
      %v778 = vld [vmem:[%s247 + $0x1048] sm:$0xff]
      %v779 = vld [vmem:[%s247 + $0x1050] sm:$0xff]
      %v780 = vld [vmem:[%s247 + $0x1058] sm:$0xff]
      %v781 = vld [vmem:[%s247 + $0x1060] sm:$0xff]
      %v782 = vld [vmem:[%s247 + $0x1068] sm:$0xff]
      %v783 = vld [vmem:[%s247 + $0x1070] sm:$0xff]
      %v784 = vld [vmem:[%s247 + $0x1078] sm:$0xff]
      %v785 = vld [vmem:[%s247 + $0x1080] sm:$0xff]
      %v786 = vld [vmem:[%s247 + $0x1088] sm:$0xff]
      %v787 = vld [vmem:[%s247 + $0x1090] sm:$0xff]
      %v788 = vld [vmem:[%s247 + $0x1098] sm:$0xff]
      %v789 = vld [vmem:[%s247 + $0x10a0] sm:$0xff]
      %v790 = vld [vmem:[%s247 + $0x10a8] sm:$0xff]
      %v791 = vld [vmem:[%s247 + $0x10b0] sm:$0xff]
      %v792 = vld [vmem:[%s247 + $0x10b8] sm:$0xff]
      %v793 = vld [vmem:[%s247 + $0x10c0] sm:$0xff]
      %v794 = vld [vmem:[%s247 + $0x10c8] sm:$0xff]
      %v795 = vld [vmem:[%s247 + $0x10d0] sm:$0xff]
      %v796 = vld [vmem:[%s247 + $0x10d8] sm:$0xff]
      %v797 = vld [vmem:[%s247 + $0x10e0] sm:$0xff]
      %v798 = vld [vmem:[%s247 + $0x10e8] sm:$0xff]
      %v799 = vld [vmem:[%s247 + $0x10f0] sm:$0xff]
      %v800 = vld [vmem:[%s247 + $0x10f8] sm:$0xff]
      %v801 = vld [vmem:[%s247 + $0x1100] sm:$0xff]
      %v802 = vld [vmem:[%s247 + $0x1108] sm:$0xff]
      %v803 = vld [vmem:[%s247 + $0x1110] sm:$0xff]
      %v804 = vld [vmem:[%s247 + $0x1118] sm:$0xff]
      %v805 = vld [vmem:[%s247 + $0x1120] sm:$0xff]
      %v806 = vld [vmem:[%s247 + $0x1128] sm:$0xff]
      %v807 = vld [vmem:[%s247 + $0x1130] sm:$0xff]
      %v808 = vld [vmem:[%s247 + $0x1138] sm:$0xff]
      %v809 = vld [vmem:[%s247 + $0x1140] sm:$0xff]
      %v810 = vld [vmem:[%s247 + $0x1148] sm:$0xff]
      %v811 = vld [vmem:[%s247 + $0x1150] sm:$0xff]
      %v812 = vld [vmem:[%s247 + $0x1158] sm:$0xff]
      %v813 = vld [vmem:[%s247 + $0x1160] sm:$0xff]
      %v814 = vld [vmem:[%s247 + $0x1168] sm:$0xff]
      %v815 = vld [vmem:[%s247 + $0x1170] sm:$0xff]
      %v816 = vld [vmem:[%s247 + $0x1178] sm:$0xff]
      %v817 = vld [vmem:[%s247 + $0x1180] sm:$0xff]
      %v818 = vld [vmem:[%s247 + $0x1188] sm:$0xff]
      %v819 = vld [vmem:[%s247 + $0x1190] sm:$0xff]
      %v820 = vld [vmem:[%s247 + $0x1198] sm:$0xff]
      %v821 = vld [vmem:[%s247 + $0x11a0] sm:$0xff]
      %v822 = vld [vmem:[%s247 + $0x11a8] sm:$0xff]
      %v823 = vld [vmem:[%s247 + $0x11b0] sm:$0xff]
      %v824 = vld [vmem:[%s247 + $0x11b8] sm:$0xff]
      %v825 = vld [vmem:[%s247 + $0x11c0] sm:$0xff]
      %v826 = vld [vmem:[%s247 + $0x11c8] sm:$0xff]
      %v827 = vld [vmem:[%s247 + $0x11d0] sm:$0xff]
      %v828 = vld [vmem:[%s247 + $0x11d8] sm:$0xff]
      %v829 = vld [vmem:[%s247 + $0x11e0] sm:$0xff]
      %v830 = vld [vmem:[%s247 + $0x11e8] sm:$0xff]
      %v831 = vld [vmem:[%s247 + $0x11f0] sm:$0xff]
      %v832 = vld [vmem:[%s247 + $0x11f8] sm:$0xff]
      %v833 = vld [vmem:[%s247 + $0x1200] sm:$0xff]
      %v834 = vld [vmem:[%s247 + $0x1208] sm:$0xff]
      %v835 = vld [vmem:[%s247 + $0x1210] sm:$0xff]
      %v836 = vld [vmem:[%s247 + $0x1218] sm:$0xff]
      %v837 = vld [vmem:[%s247 + $0x1220] sm:$0xff]
      %v838 = vld [vmem:[%s247 + $0x1228] sm:$0xff]
      %v839 = vld [vmem:[%s247 + $0x1230] sm:$0xff]
      %v840 = vld [vmem:[%s247 + $0x1238] sm:$0xff]
      %v841 = vld [vmem:[%s247 + $0x1240] sm:$0xff]
      %v842 = vld [vmem:[%s247 + $0x1248] sm:$0xff]
      %v843 = vld [vmem:[%s247 + $0x1250] sm:$0xff]
      %v844 = vld [vmem:[%s247 + $0x1258] sm:$0xff]
      %v845 = vld [vmem:[%s247 + $0x1260] sm:$0xff]
      %v846 = vld [vmem:[%s247 + $0x1268] sm:$0xff]
      %v847 = vld [vmem:[%s247 + $0x1270] sm:$0xff]
      %v848 = vld [vmem:[%s247 + $0x1278] sm:$0xff]
      %v849 = vld [vmem:[%s247 + $0x1280] sm:$0xff]
      %v850 = vld [vmem:[%s247 + $0x1288] sm:$0xff]
      %v851 = vld [vmem:[%s247 + $0x1290] sm:$0xff]
      %v852 = vld [vmem:[%s247 + $0x1298] sm:$0xff]
      %v853 = vld [vmem:[%s247 + $0x12a0] sm:$0xff]
      %v854 = vld [vmem:[%s247 + $0x12a8] sm:$0xff]
      %v855 = vld [vmem:[%s247 + $0x12b0] sm:$0xff]
      %v856 = vld [vmem:[%s247 + $0x12b8] sm:$0xff]
      %v857 = vld [vmem:[%s247 + $0x12c0] sm:$0xff]
      %v858 = vld [vmem:[%s247 + $0x12c8] sm:$0xff]
      %v859 = vld [vmem:[%s247 + $0x12d0] sm:$0xff]
      %v860 = vld [vmem:[%s247 + $0x12d8] sm:$0xff]
      %v861 = vld [vmem:[%s247 + $0x12e0] sm:$0xff]
      %v862 = vld [vmem:[%s247 + $0x12e8] sm:$0xff]
      %v863 = vld [vmem:[%s247 + $0x12f0] sm:$0xff]
      %v864 = vld [vmem:[%s247 + $0x12f8] sm:$0xff]
      %v865 = vld [vmem:[%s247 + $0x1300] sm:$0xff]
      %v866 = vld [vmem:[%s247 + $0x1308] sm:$0xff]
      %v867 = vld [vmem:[%s247 + $0x1310] sm:$0xff]
      %v868 = vld [vmem:[%s247 + $0x1318] sm:$0xff]
      %v869 = vld [vmem:[%s247 + $0x1320] sm:$0xff]
      %v870 = vld [vmem:[%s247 + $0x1328] sm:$0xff]
      %v871 = vld [vmem:[%s247 + $0x1330] sm:$0xff]
      %v872 = vld [vmem:[%s247 + $0x1338] sm:$0xff]
      %v873 = vld [vmem:[%s247 + $0x1340] sm:$0xff]
      %v874 = vld [vmem:[%s247 + $0x1348] sm:$0xff]
      %v875 = vld [vmem:[%s247 + $0x1350] sm:$0xff]
      %v876 = vld [vmem:[%s247 + $0x1358] sm:$0xff]
      %v877 = vld [vmem:[%s247 + $0x1360] sm:$0xff]
      %v878 = vld [vmem:[%s247 + $0x1368] sm:$0xff]
      %v879 = vld [vmem:[%s247 + $0x1370] sm:$0xff]
      %v880 = vld [vmem:[%s247 + $0x1378] sm:$0xff]
      %v881 = vld [vmem:[%s247 + $0x1380] sm:$0xff]
      %v882 = vld [vmem:[%s247 + $0x1388] sm:$0xff]
      %v883 = vld [vmem:[%s247 + $0x1390] sm:$0xff]
      %v884 = vld [vmem:[%s247 + $0x1398] sm:$0xff]
      %v885 = vld [vmem:[%s247 + $0x13a0] sm:$0xff]
      %v886 = vld [vmem:[%s247 + $0x13a8] sm:$0xff]
      %v887 = vld [vmem:[%s247 + $0x13b0] sm:$0xff]
      %v888 = vld [vmem:[%s247 + $0x13b8] sm:$0xff]
      %v889 = vld [vmem:[%s247 + $0x13c0] sm:$0xff]
      %v890 = vld [vmem:[%s247 + $0x13c8] sm:$0xff]
      %v891 = vld [vmem:[%s247 + $0x13d0] sm:$0xff]
      %v892 = vld [vmem:[%s247 + $0x13d8] sm:$0xff]
      %v893 = vld [vmem:[%s247 + $0x13e0] sm:$0xff]
      %v894 = vld [vmem:[%s247 + $0x13e8] sm:$0xff]
      %v895 = vld [vmem:[%s247 + $0x13f0] sm:$0xff]
      %v896 = vld [vmem:[%s247 + $0x13f8] sm:$0xff]
      %v897 = vld [vmem:[%s247 + $0x1400] sm:$0xff]
      %v898 = vld [vmem:[%s247 + $0x1408] sm:$0xff]
      %v899 = vld [vmem:[%s247 + $0x1410] sm:$0xff]
      %v900 = vld [vmem:[%s247 + $0x1418] sm:$0xff]
      %v901 = vld [vmem:[%s247 + $0x1420] sm:$0xff]
      %v902 = vld [vmem:[%s247 + $0x1428] sm:$0xff]
      %v903 = vld [vmem:[%s247 + $0x1430] sm:$0xff]
      %v904 = vld [vmem:[%s247 + $0x1438] sm:$0xff]
      %v905 = vld [vmem:[%s247 + $0x1440] sm:$0xff]
      %v906 = vld [vmem:[%s247 + $0x1448] sm:$0xff]
      %v907 = vld [vmem:[%s247 + $0x1450] sm:$0xff]
      %v908 = vld [vmem:[%s247 + $0x1458] sm:$0xff]
      %v909 = vld [vmem:[%s247 + $0x1460] sm:$0xff]
      %v910 = vld [vmem:[%s247 + $0x1468] sm:$0xff]
      %v911 = vld [vmem:[%s247 + $0x1470] sm:$0xff]
      %v912 = vld [vmem:[%s247 + $0x1478] sm:$0xff]
      %v913 = vld [vmem:[%s247 + $0x1480] sm:$0xff]
      %v914 = vld [vmem:[%s247 + $0x1488] sm:$0xff]
      %v915 = vld [vmem:[%s247 + $0x1490] sm:$0xff]
      %v916 = vld [vmem:[%s247 + $0x1498] sm:$0xff]
      %v917 = vld [vmem:[%s247 + $0x14a0] sm:$0xff]
      %v918 = vld [vmem:[%s247 + $0x14a8] sm:$0xff]
      %v919 = vld [vmem:[%s247 + $0x14b0] sm:$0xff]
      %v920 = vld [vmem:[%s247 + $0x14b8] sm:$0xff]
      %v921 = vld [vmem:[%s247 + $0x14c0] sm:$0xff]
      %v922 = vld [vmem:[%s247 + $0x14c8] sm:$0xff]
      %v923 = vld [vmem:[%s247 + $0x14d0] sm:$0xff]
      %v924 = vld [vmem:[%s247 + $0x14d8] sm:$0xff]
      %v925 = vld [vmem:[%s247 + $0x14e0] sm:$0xff]
      %v926 = vld [vmem:[%s247 + $0x14e8] sm:$0xff]
      %v927 = vld [vmem:[%s247 + $0x14f0] sm:$0xff]
      %v928 = vld [vmem:[%s247 + $0x14f8] sm:$0xff]
      %v929 = vld [vmem:[%s247 + $0x1500] sm:$0xff]
      %v930 = vld [vmem:[%s247 + $0x1508] sm:$0xff]
      %v931 = vld [vmem:[%s247 + $0x1510] sm:$0xff]
      %v932 = vld [vmem:[%s247 + $0x1518] sm:$0xff]
      %v933 = vld [vmem:[%s247 + $0x1520] sm:$0xff]
      %v934 = vld [vmem:[%s247 + $0x1528] sm:$0xff]
      %v935 = vld [vmem:[%s247 + $0x1530] sm:$0xff]
      %v936 = vld [vmem:[%s247 + $0x1538] sm:$0xff]
      %v937 = vld [vmem:[%s247 + $0x1540] sm:$0xff]
      %v938 = vld [vmem:[%s247 + $0x1548] sm:$0xff]
      %v939 = vld [vmem:[%s247 + $0x1550] sm:$0xff]
      %v940 = vld [vmem:[%s247 + $0x1558] sm:$0xff]
      %v941 = vld [vmem:[%s247 + $0x1560] sm:$0xff]
      %v942 = vld [vmem:[%s247 + $0x1568] sm:$0xff]
      %v943 = vld [vmem:[%s247 + $0x1570] sm:$0xff]
      %v944 = vld [vmem:[%s247 + $0x1578] sm:$0xff]
      %v945 = vld [vmem:[%s247 + $0x1580] sm:$0xff]
      %v946 = vld [vmem:[%s247 + $0x1588] sm:$0xff]
      %v947 = vld [vmem:[%s247 + $0x1590] sm:$0xff]
      %v948 = vld [vmem:[%s247 + $0x1598] sm:$0xff]
      %v949 = vld [vmem:[%s247 + $0x15a0] sm:$0xff]
      %v950 = vld [vmem:[%s247 + $0x15a8] sm:$0xff]
      %v951 = vld [vmem:[%s247 + $0x15b0] sm:$0xff]
      %v952 = vld [vmem:[%s247 + $0x15b8] sm:$0xff]
      %v953 = vld [vmem:[%s247 + $0x15c0] sm:$0xff]
      %v954 = vld [vmem:[%s247 + $0x15c8] sm:$0xff]
      %v955 = vld [vmem:[%s247 + $0x15d0] sm:$0xff]
      %v956 = vld [vmem:[%s247 + $0x15d8] sm:$0xff]
      %v957 = vld [vmem:[%s247 + $0x15e0] sm:$0xff]
      %v958 = vld [vmem:[%s247 + $0x15e8] sm:$0xff]
      %v959 = vld [vmem:[%s247 + $0x15f0] sm:$0xff]
      %v960 = vld [vmem:[%s247 + $0x15f8] sm:$0xff]
      %v961 = vld [vmem:[%s247 + $0x1600] sm:$0xff]
      %v962 = vld [vmem:[%s247 + $0x1608] sm:$0xff]
      %v963 = vld [vmem:[%s247 + $0x1610] sm:$0xff]
      %v964 = vld [vmem:[%s247 + $0x1618] sm:$0xff]
      %v965 = vld [vmem:[%s247 + $0x1620] sm:$0xff]
      %v966 = vld [vmem:[%s247 + $0x1628] sm:$0xff]
      %v967 = vld [vmem:[%s247 + $0x1630] sm:$0xff]
      %v968 = vld [vmem:[%s247 + $0x1638] sm:$0xff]
      %v969 = vld [vmem:[%s247 + $0x1640] sm:$0xff]
      %v970 = vld [vmem:[%s247 + $0x1648] sm:$0xff]
      %v971 = vld [vmem:[%s247 + $0x1650] sm:$0xff]
      %v972 = vld [vmem:[%s247 + $0x1658] sm:$0xff]
      %v973 = vld [vmem:[%s247 + $0x1660] sm:$0xff]
      %v974 = vld [vmem:[%s247 + $0x1668] sm:$0xff]
      %v975 = vld [vmem:[%s247 + $0x1670] sm:$0xff]
      %v976 = vld [vmem:[%s247 + $0x1678] sm:$0xff]
      %v977 = vld [vmem:[%s247 + $0x1680] sm:$0xff]
      %v978 = vld [vmem:[%s247 + $0x1688] sm:$0xff]
      %v979 = vld [vmem:[%s247 + $0x1690] sm:$0xff]
      %v980 = vld [vmem:[%s247 + $0x1698] sm:$0xff]
      %v981 = vld [vmem:[%s247 + $0x16a0] sm:$0xff]
      %v982 = vld [vmem:[%s247 + $0x16a8] sm:$0xff]
      %v983 = vld [vmem:[%s247 + $0x16b0] sm:$0xff]
      %v984 = vld [vmem:[%s247 + $0x16b8] sm:$0xff]
      %v985 = vld [vmem:[%s247 + $0x16c0] sm:$0xff]
      %v986 = vld [vmem:[%s247 + $0x16c8] sm:$0xff]
      %v987 = vld [vmem:[%s247 + $0x16d0] sm:$0xff]
      %v988 = vld [vmem:[%s247 + $0x16d8] sm:$0xff]
      %v989 = vld [vmem:[%s247 + $0x16e0] sm:$0xff]
      %v990 = vld [vmem:[%s247 + $0x16e8] sm:$0xff]
      %v991 = vld [vmem:[%s247 + $0x16f0] sm:$0xff]
      %v992 = vld [vmem:[%s247 + $0x16f8] sm:$0xff]
      %v993 = vld [vmem:[%s247 + $0x1700] sm:$0xff]
      %v994 = vld [vmem:[%s247 + $0x1708] sm:$0xff]
      %v995 = vld [vmem:[%s247 + $0x1710] sm:$0xff]
      %v996 = vld [vmem:[%s247 + $0x1718] sm:$0xff]
      %v997 = vld [vmem:[%s247 + $0x1720] sm:$0xff]
      %v998 = vld [vmem:[%s247 + $0x1728] sm:$0xff]
      %v999 = vld [vmem:[%s247 + $0x1730] sm:$0xff]
      %v1000 = vld [vmem:[%s247 + $0x1738] sm:$0xff]
      %v1001 = vld [vmem:[%s247 + $0x1740] sm:$0xff]
      %v1002 = vld [vmem:[%s247 + $0x1748] sm:$0xff]
      %v1003 = vld [vmem:[%s247 + $0x1750] sm:$0xff]
      %v1004 = vld [vmem:[%s247 + $0x1758] sm:$0xff]
      %v1005 = vld [vmem:[%s247 + $0x1760] sm:$0xff]
      %v1006 = vld [vmem:[%s247 + $0x1768] sm:$0xff]
      %v1007 = vld [vmem:[%s247 + $0x1770] sm:$0xff]
      %v1008 = vld [vmem:[%s247 + $0x1778] sm:$0xff]
      %v1009 = vld [vmem:[%s247 + $0x1780] sm:$0xff]
      %v1010 = vld [vmem:[%s247 + $0x1788] sm:$0xff]
      %v1011 = vld [vmem:[%s247 + $0x1790] sm:$0xff]
      %v1012 = vld [vmem:[%s247 + $0x1798] sm:$0xff]
      %v1013 = vld [vmem:[%s247 + $0x17a0] sm:$0xff]
      %v1014 = vld [vmem:[%s247 + $0x17a8] sm:$0xff]
      %v1015 = vld [vmem:[%s247 + $0x17b0] sm:$0xff]
      %v1016 = vld [vmem:[%s247 + $0x17b8] sm:$0xff]
      %v1017 = vld [vmem:[%s247 + $0x17c0] sm:$0xff]
      %v1018 = vld [vmem:[%s247 + $0x17c8] sm:$0xff]
      %v1019 = vld [vmem:[%s247 + $0x17d0] sm:$0xff]
      %v1020 = vld [vmem:[%s247 + $0x17d8] sm:$0xff]
      %v1021 = vld [vmem:[%s247 + $0x17e0] sm:$0xff]
      %v1022 = vld [vmem:[%s247 + $0x17e8] sm:$0xff]
      %v1023 = vld [vmem:[%s247 + $0x17f0] sm:$0xff]
      %v1024 = vld [vmem:[%s247 + $0x17f8] sm:$0xff]
      %v1025 = vld [vmem:[%s247 + $0x1800] sm:$0xff]
      %v1026 = vld [vmem:[%s247 + $0x1808] sm:$0xff]
      %v1027 = vld [vmem:[%s247 + $0x1810] sm:$0xff]
      %v1028 = vld [vmem:[%s247 + $0x1818] sm:$0xff]
      %v1029 = vld [vmem:[%s247 + $0x1820] sm:$0xff]
      %v1030 = vld [vmem:[%s247 + $0x1828] sm:$0xff]
      %v1031 = vld [vmem:[%s247 + $0x1830] sm:$0xff]
      %v1032 = vld [vmem:[%s247 + $0x1838] sm:$0xff]
      %v1033 = vld [vmem:[%s247 + $0x1840] sm:$0xff]
      %v1034 = vld [vmem:[%s247 + $0x1848] sm:$0xff]
      %v1035 = vld [vmem:[%s247 + $0x1850] sm:$0xff]
      %v1036 = vld [vmem:[%s247 + $0x1858] sm:$0xff]
      %v1037 = vld [vmem:[%s247 + $0x1860] sm:$0xff]
      %v1038 = vld [vmem:[%s247 + $0x1868] sm:$0xff]
      %v1039 = vld [vmem:[%s247 + $0x1870] sm:$0xff]
      %v1040 = vld [vmem:[%s247 + $0x1878] sm:$0xff]
      %v1041 = vld [vmem:[%s247 + $0x1880] sm:$0xff]
      %v1042 = vld [vmem:[%s247 + $0x1888] sm:$0xff]
      %v1043 = vld [vmem:[%s247 + $0x1890] sm:$0xff]
      %v1044 = vld [vmem:[%s247 + $0x1898] sm:$0xff]
      %v1045 = vld [vmem:[%s247 + $0x18a0] sm:$0xff]
      %v1046 = vld [vmem:[%s247 + $0x18a8] sm:$0xff]
      %v1047 = vld [vmem:[%s247 + $0x18b0] sm:$0xff]
      %v1048 = vld [vmem:[%s247 + $0x18b8] sm:$0xff]
      %v1049 = vld [vmem:[%s247 + $0x18c0] sm:$0xff]
      %v1050 = vld [vmem:[%s247 + $0x18c8] sm:$0xff]
      %v1051 = vld [vmem:[%s247 + $0x18d0] sm:$0xff]
      %v1052 = vld [vmem:[%s247 + $0x18d8] sm:$0xff]
      %v1053 = vld [vmem:[%s247 + $0x18e0] sm:$0xff]
      %v1054 = vld [vmem:[%s247 + $0x18e8] sm:$0xff]
      %v1055 = vld [vmem:[%s247 + $0x18f0] sm:$0xff]
      %v1056 = vld [vmem:[%s247 + $0x18f8] sm:$0xff]
      %v1057 = vld [vmem:[%s247 + $0x1900] sm:$0xff]
      %v1058 = vld [vmem:[%s247 + $0x1908] sm:$0xff]
      %v1059 = vld [vmem:[%s247 + $0x1910] sm:$0xff]
      %v1060 = vld [vmem:[%s247 + $0x1918] sm:$0xff]
      %v1061 = vld [vmem:[%s247 + $0x1920] sm:$0xff]
      %v1062 = vld [vmem:[%s247 + $0x1928] sm:$0xff]
      %v1063 = vld [vmem:[%s247 + $0x1930] sm:$0xff]
      %v1064 = vld [vmem:[%s247 + $0x1938] sm:$0xff]
      %v1065 = vld [vmem:[%s247 + $0x1940] sm:$0xff]
      %v1066 = vld [vmem:[%s247 + $0x1948] sm:$0xff]
      %v1067 = vld [vmem:[%s247 + $0x1950] sm:$0xff]
      %v1068 = vld [vmem:[%s247 + $0x1958] sm:$0xff]
      %v1069 = vld [vmem:[%s247 + $0x1960] sm:$0xff]
      %v1070 = vld [vmem:[%s247 + $0x1968] sm:$0xff]
      %v1071 = vld [vmem:[%s247 + $0x1970] sm:$0xff]
      %v1072 = vld [vmem:[%s247 + $0x1978] sm:$0xff]
      %v1073 = vld [vmem:[%s247 + $0x1980] sm:$0xff]
      %v1074 = vld [vmem:[%s247 + $0x1988] sm:$0xff]
      %v1075 = vld [vmem:[%s247 + $0x1990] sm:$0xff]
      %v1076 = vld [vmem:[%s247 + $0x1998] sm:$0xff]
      %v1077 = vld [vmem:[%s247 + $0x19a0] sm:$0xff]
      %v1078 = vld [vmem:[%s247 + $0x19a8] sm:$0xff]
      %v1079 = vld [vmem:[%s247 + $0x19b0] sm:$0xff]
      %v1080 = vld [vmem:[%s247 + $0x19b8] sm:$0xff]
      %v1081 = vld [vmem:[%s247 + $0x19c0] sm:$0xff]
      %v1082 = vld [vmem:[%s247 + $0x19c8] sm:$0xff]
      %v1083 = vld [vmem:[%s247 + $0x19d0] sm:$0xff]
      %v1084 = vld [vmem:[%s247 + $0x19d8] sm:$0xff]
      %v1085 = vld [vmem:[%s247 + $0x19e0] sm:$0xff]
      %v1086 = vld [vmem:[%s247 + $0x19e8] sm:$0xff]
      %v1087 = vld [vmem:[%s247 + $0x19f0] sm:$0xff]
      %v1088 = vld [vmem:[%s247 + $0x19f8] sm:$0xff]
      %v1089 = vld [vmem:[%s247 + $0x1a00] sm:$0xff]
      %v1090 = vld [vmem:[%s247 + $0x1a08] sm:$0xff]
      %v1091 = vld [vmem:[%s247 + $0x1a10] sm:$0xff]
      %v1092 = vld [vmem:[%s247 + $0x1a18] sm:$0xff]
      %v1093 = vld [vmem:[%s247 + $0x1a20] sm:$0xff]
      %v1094 = vld [vmem:[%s247 + $0x1a28] sm:$0xff]
      %v1095 = vld [vmem:[%s247 + $0x1a30] sm:$0xff]
      %v1096 = vld [vmem:[%s247 + $0x1a38] sm:$0xff]
      %v1097 = vld [vmem:[%s247 + $0x1a40] sm:$0xff]
      %v1098 = vld [vmem:[%s247 + $0x1a48] sm:$0xff]
      %v1099 = vld [vmem:[%s247 + $0x1a50] sm:$0xff]
      %v1100 = vld [vmem:[%s247 + $0x1a58] sm:$0xff]
      %v1101 = vld [vmem:[%s247 + $0x1a60] sm:$0xff]
      %v1102 = vld [vmem:[%s247 + $0x1a68] sm:$0xff]
      %v1103 = vld [vmem:[%s247 + $0x1a70] sm:$0xff]
      %v1104 = vld [vmem:[%s247 + $0x1a78] sm:$0xff]
      %v1105 = vld [vmem:[%s247 + $0x1a80] sm:$0xff]
      %v1106 = vld [vmem:[%s247 + $0x1a88] sm:$0xff]
      %v1107 = vld [vmem:[%s247 + $0x1a90] sm:$0xff]
      %v1108 = vld [vmem:[%s247 + $0x1a98] sm:$0xff]
      %v1109 = vld [vmem:[%s247 + $0x1aa0] sm:$0xff]
      %v1110 = vld [vmem:[%s247 + $0x1aa8] sm:$0xff]
      %v1111 = vld [vmem:[%s247 + $0x1ab0] sm:$0xff]
      %v1112 = vld [vmem:[%s247 + $0x1ab8] sm:$0xff]
      %v1113 = vld [vmem:[%s247 + $0x1ac0] sm:$0xff]
      %v1114 = vld [vmem:[%s247 + $0x1ac8] sm:$0xff]
      %v1115 = vld [vmem:[%s247 + $0x1ad0] sm:$0xff]
      %v1116 = vld [vmem:[%s247 + $0x1ad8] sm:$0xff]
      %v1117 = vld [vmem:[%s247 + $0x1ae0] sm:$0xff]
      %v1118 = vld [vmem:[%s247 + $0x1ae8] sm:$0xff]
      %v1119 = vld [vmem:[%s247 + $0x1af0] sm:$0xff]
      %v1120 = vld [vmem:[%s247 + $0x1af8] sm:$0xff]
      %v1121 = vld [vmem:[%s247 + $0x1b00] sm:$0xff]
      %v1122 = vld [vmem:[%s247 + $0x1b08] sm:$0xff]
      %v1123 = vld [vmem:[%s247 + $0x1b10] sm:$0xff]
      %v1124 = vld [vmem:[%s247 + $0x1b18] sm:$0xff]
      %v1125 = vld [vmem:[%s247 + $0x1b20] sm:$0xff]
      %v1126 = vld [vmem:[%s247 + $0x1b28] sm:$0xff]
      %v1127 = vld [vmem:[%s247 + $0x1b30] sm:$0xff]
      %v1128 = vld [vmem:[%s247 + $0x1b38] sm:$0xff]
      %v1129 = vld [vmem:[%s247 + $0x1b40] sm:$0xff]
      %v1130 = vld [vmem:[%s247 + $0x1b48] sm:$0xff]
      %v1131 = vld [vmem:[%s247 + $0x1b50] sm:$0xff]
      %v1132 = vld [vmem:[%s247 + $0x1b58] sm:$0xff]
      %v1133 = vld [vmem:[%s247 + $0x1b60] sm:$0xff]
      %v1134 = vld [vmem:[%s247 + $0x1b68] sm:$0xff]
      %v1135 = vld [vmem:[%s247 + $0x1b70] sm:$0xff]
      %v1136 = vld [vmem:[%s247 + $0x1b78] sm:$0xff]
      %v1137 = vld [vmem:[%s247 + $0x1b80] sm:$0xff]
      %v1138 = vld [vmem:[%s247 + $0x1b88] sm:$0xff]
      %v1139 = vld [vmem:[%s247 + $0x1b90] sm:$0xff]
      %v1140 = vld [vmem:[%s247 + $0x1b98] sm:$0xff]
      %v1141 = vld [vmem:[%s247 + $0x1ba0] sm:$0xff]
      %v1142 = vld [vmem:[%s247 + $0x1ba8] sm:$0xff]
      %v1143 = vld [vmem:[%s247 + $0x1bb0] sm:$0xff]
      %v1144 = vld [vmem:[%s247 + $0x1bb8] sm:$0xff]
      %v1145 = vld [vmem:[%s247 + $0x1bc0] sm:$0xff]
      %v1146 = vld [vmem:[%s247 + $0x1bc8] sm:$0xff]
      %v1147 = vld [vmem:[%s247 + $0x1bd0] sm:$0xff]
      %v1148 = vld [vmem:[%s247 + $0x1bd8] sm:$0xff]
      %v1149 = vld [vmem:[%s247 + $0x1be0] sm:$0xff]
      %v1150 = vld [vmem:[%s247 + $0x1be8] sm:$0xff]
      %v1151 = vld [vmem:[%s247 + $0x1bf0] sm:$0xff]
      %v1152 = vld [vmem:[%s247 + $0x1bf8] sm:$0xff]
      %v1153 = vld [vmem:[%s247 + $0x1c00] sm:$0xff]
      %v1154 = vld [vmem:[%s247 + $0x1c08] sm:$0xff]
      %v1155 = vld [vmem:[%s247 + $0x1c10] sm:$0xff]
      %v1156 = vld [vmem:[%s247 + $0x1c18] sm:$0xff]
      %v1157 = vld [vmem:[%s247 + $0x1c20] sm:$0xff]
      %v1158 = vld [vmem:[%s247 + $0x1c28] sm:$0xff]
      %v1159 = vld [vmem:[%s247 + $0x1c30] sm:$0xff]
      %v1160 = vld [vmem:[%s247 + $0x1c38] sm:$0xff]
      %v1161 = vld [vmem:[%s247 + $0x1c40] sm:$0xff]
      %v1162 = vld [vmem:[%s247 + $0x1c48] sm:$0xff]
      %v1163 = vld [vmem:[%s247 + $0x1c50] sm:$0xff]
      %v1164 = vld [vmem:[%s247 + $0x1c58] sm:$0xff]
      %v1165 = vld [vmem:[%s247 + $0x1c60] sm:$0xff]
      %v1166 = vld [vmem:[%s247 + $0x1c68] sm:$0xff]
      %v1167 = vld [vmem:[%s247 + $0x1c70] sm:$0xff]
      %v1168 = vld [vmem:[%s247 + $0x1c78] sm:$0xff]
      %v1169 = vld [vmem:[%s247 + $0x1c80] sm:$0xff]
      %v1170 = vld [vmem:[%s247 + $0x1c88] sm:$0xff]
      %v1171 = vld [vmem:[%s247 + $0x1c90] sm:$0xff]
      %v1172 = vld [vmem:[%s247 + $0x1c98] sm:$0xff]
      %v1173 = vld [vmem:[%s247 + $0x1ca0] sm:$0xff]
      %v1174 = vld [vmem:[%s247 + $0x1ca8] sm:$0xff]
      %v1175 = vld [vmem:[%s247 + $0x1cb0] sm:$0xff]
      %v1176 = vld [vmem:[%s247 + $0x1cb8] sm:$0xff]
      %v1177 = vld [vmem:[%s247 + $0x1cc0] sm:$0xff]
      %v1178 = vld [vmem:[%s247 + $0x1cc8] sm:$0xff]
      %v1179 = vld [vmem:[%s247 + $0x1cd0] sm:$0xff]
      %v1180 = vld [vmem:[%s247 + $0x1cd8] sm:$0xff]
      %v1181 = vld [vmem:[%s247 + $0x1ce0] sm:$0xff]
      %v1182 = vld [vmem:[%s247 + $0x1ce8] sm:$0xff]
      %v1183 = vld [vmem:[%s247 + $0x1cf0] sm:$0xff]
      %v1184 = vld [vmem:[%s247 + $0x1cf8] sm:$0xff]
      %v1185 = vld [vmem:[%s247 + $0x1d00] sm:$0xff]
      %v1186 = vld [vmem:[%s247 + $0x1d08] sm:$0xff]
      %v1187 = vld [vmem:[%s247 + $0x1d10] sm:$0xff]
      %v1188 = vld [vmem:[%s247 + $0x1d18] sm:$0xff]
      %v1189 = vld [vmem:[%s247 + $0x1d20] sm:$0xff]
      %v1190 = vld [vmem:[%s247 + $0x1d28] sm:$0xff]
      %v1191 = vld [vmem:[%s247 + $0x1d30] sm:$0xff]
      %v1192 = vld [vmem:[%s247 + $0x1d38] sm:$0xff]
      %v1193 = vld [vmem:[%s247 + $0x1d40] sm:$0xff]
      %v1194 = vld [vmem:[%s247 + $0x1d48] sm:$0xff]
      %v1195 = vld [vmem:[%s247 + $0x1d50] sm:$0xff]
      %v1196 = vld [vmem:[%s247 + $0x1d58] sm:$0xff]
      %v1197 = vld [vmem:[%s247 + $0x1d60] sm:$0xff]
      %v1198 = vld [vmem:[%s247 + $0x1d68] sm:$0xff]
      %v1199 = vld [vmem:[%s247 + $0x1d70] sm:$0xff]
      %v1200 = vld [vmem:[%s247 + $0x1d78] sm:$0xff]
      %v1201 = vld [vmem:[%s247 + $0x1d80] sm:$0xff]
      %v1202 = vld [vmem:[%s247 + $0x1d88] sm:$0xff]
      %v1203 = vld [vmem:[%s247 + $0x1d90] sm:$0xff]
      %v1204 = vld [vmem:[%s247 + $0x1d98] sm:$0xff]
      %v1205 = vld [vmem:[%s247 + $0x1da0] sm:$0xff]
      %v1206 = vld [vmem:[%s247 + $0x1da8] sm:$0xff]
      %v1207 = vld [vmem:[%s247 + $0x1db0] sm:$0xff]
      %v1208 = vld [vmem:[%s247 + $0x1db8] sm:$0xff]
      %v1209 = vld [vmem:[%s247 + $0x1dc0] sm:$0xff]
      %v1210 = vld [vmem:[%s247 + $0x1dc8] sm:$0xff]
      %v1211 = vld [vmem:[%s247 + $0x1dd0] sm:$0xff]
      %v1212 = vld [vmem:[%s247 + $0x1dd8] sm:$0xff]
      %v1213 = vld [vmem:[%s247 + $0x1de0] sm:$0xff]
      %v1214 = vld [vmem:[%s247 + $0x1de8] sm:$0xff]
      %v1215 = vld [vmem:[%s247 + $0x1df0] sm:$0xff]
      %v1216 = vld [vmem:[%s247 + $0x1df8] sm:$0xff]
      %v1217 = vld [vmem:[%s247 + $0x1e00] sm:$0xff]
      %v1218 = vld [vmem:[%s247 + $0x1e08] sm:$0xff]
      %v1219 = vld [vmem:[%s247 + $0x1e10] sm:$0xff]
      %v1220 = vld [vmem:[%s247 + $0x1e18] sm:$0xff]
      %v1221 = vld [vmem:[%s247 + $0x1e20] sm:$0xff]
      %v1222 = vld [vmem:[%s247 + $0x1e28] sm:$0xff]
      %v1223 = vld [vmem:[%s247 + $0x1e30] sm:$0xff]
      %v1224 = vld [vmem:[%s247 + $0x1e38] sm:$0xff]
      %v1225 = vld [vmem:[%s247 + $0x1e40] sm:$0xff]
      %v1226 = vld [vmem:[%s247 + $0x1e48] sm:$0xff]
      %v1227 = vld [vmem:[%s247 + $0x1e50] sm:$0xff]
      %v1228 = vld [vmem:[%s247 + $0x1e58] sm:$0xff]
      %v1229 = vld [vmem:[%s247 + $0x1e60] sm:$0xff]
      %v1230 = vld [vmem:[%s247 + $0x1e68] sm:$0xff]
      %v1231 = vld [vmem:[%s247 + $0x1e70] sm:$0xff]
      %v1232 = vld [vmem:[%s247 + $0x1e78] sm:$0xff]
      %v1233 = vld [vmem:[%s247 + $0x1e80] sm:$0xff]
      %v1234 = vld [vmem:[%s247 + $0x1e88] sm:$0xff]
      %v1235 = vld [vmem:[%s247 + $0x1e90] sm:$0xff]
      %v1236 = vld [vmem:[%s247 + $0x1e98] sm:$0xff]
      %v1237 = vld [vmem:[%s247 + $0x1ea0] sm:$0xff]
      %v1238 = vld [vmem:[%s247 + $0x1ea8] sm:$0xff]
      %v1239 = vld [vmem:[%s247 + $0x1eb0] sm:$0xff]
      %v1240 = vld [vmem:[%s247 + $0x1eb8] sm:$0xff]
      %v1241 = vld [vmem:[%s247 + $0x1ec0] sm:$0xff]
      %v1242 = vld [vmem:[%s247 + $0x1ec8] sm:$0xff]
      %v1243 = vld [vmem:[%s247 + $0x1ed0] sm:$0xff]
      %v1244 = vld [vmem:[%s247 + $0x1ed8] sm:$0xff]
      %v1245 = vld [vmem:[%s247 + $0x1ee0] sm:$0xff]
      %v1246 = vld [vmem:[%s247 + $0x1ee8] sm:$0xff]
      %v1247 = vld [vmem:[%s247 + $0x1ef0] sm:$0xff]
      %v1248 = vld [vmem:[%s247 + $0x1ef8] sm:$0xff]
      %v1249 = vld [vmem:[%s247 + $0x1f00] sm:$0xff]
      %v1250 = vld [vmem:[%s247 + $0x1f08] sm:$0xff]
      %v1251 = vld [vmem:[%s247 + $0x1f10] sm:$0xff]
      %v1252 = vld [vmem:[%s247 + $0x1f18] sm:$0xff]
      %v1253 = vld [vmem:[%s247 + $0x1f20] sm:$0xff]
      %v1254 = vld [vmem:[%s247 + $0x1f28] sm:$0xff]
      %v1255 = vld [vmem:[%s247 + $0x1f30] sm:$0xff]
      %v1256 = vld [vmem:[%s247 + $0x1f38] sm:$0xff]
      %v1257 = vld [vmem:[%s247 + $0x1f40] sm:$0xff]
      %v1258 = vld [vmem:[%s247 + $0x1f48] sm:$0xff]
      %v1259 = vld [vmem:[%s247 + $0x1f50] sm:$0xff]
      %v1260 = vld [vmem:[%s247 + $0x1f58] sm:$0xff]
      %v1261 = vld [vmem:[%s247 + $0x1f60] sm:$0xff]
      %v1262 = vld [vmem:[%s247 + $0x1f68] sm:$0xff]
      %v1263 = vld [vmem:[%s247 + $0x1f70] sm:$0xff]
      %v1264 = vld [vmem:[%s247 + $0x1f78] sm:$0xff]
      %v1265 = vld [vmem:[%s247 + $0x1f80] sm:$0xff]
      %v1266 = vld [vmem:[%s247 + $0x1f88] sm:$0xff]
      %v1267 = vld [vmem:[%s247 + $0x1f90] sm:$0xff]
      %v1268 = vld [vmem:[%s247 + $0x1f98] sm:$0xff]
      %v1269 = vld [vmem:[%s247 + $0x1fa0] sm:$0xff]
      %v1270 = vld [vmem:[%s247 + $0x1fa8] sm:$0xff]
      %v1271 = vld [vmem:[%s247 + $0x1fb0] sm:$0xff]
      %v1272 = vld [vmem:[%s247 + $0x1fb8] sm:$0xff]
      %v1273 = vld [vmem:[%s247 + $0x1fc0] sm:$0xff]
      %v1274 = vld [vmem:[%s247 + $0x1fc8] sm:$0xff]
      %v1275 = vld [vmem:[%s247 + $0x1fd0] sm:$0xff]
      %v1276 = vld [vmem:[%s247 + $0x1fd8] sm:$0xff]
      %v1277 = vld [vmem:[%s247 + $0x1fe0] sm:$0xff]
      %v1278 = vld [vmem:[%s247 + $0x1fe8] sm:$0xff]
      %v1279 = vld [vmem:[%s247 + $0x1ff0] sm:$0xff]
      %v1280 = vld [vmem:[%s247 + $0x1ff8] sm:$0xff]
      %v1281 = vld [vmem:[%s247 + $0x2000] sm:$0xff]
      %v1282 = vld [vmem:[%s247 + $0x2008] sm:$0xff]
      %v1283 = vld [vmem:[%s247 + $0x2010] sm:$0xff]
      %v1284 = vld [vmem:[%s247 + $0x2018] sm:$0xff]
      %v1285 = vld [vmem:[%s247 + $0x2020] sm:$0xff]
      %v1286 = vld [vmem:[%s247 + $0x2028] sm:$0xff]
      %v1287 = vld [vmem:[%s247 + $0x2030] sm:$0xff]
      %v1288 = vld [vmem:[%s247 + $0x2038] sm:$0xff]
      %v1289 = vld [vmem:[%s247 + $0x2040] sm:$0xff]
      %v1290 = vld [vmem:[%s247 + $0x2048] sm:$0xff]
      %v1291 = vld [vmem:[%s247 + $0x2050] sm:$0xff]
      %v1292 = vld [vmem:[%s247 + $0x2058] sm:$0xff]
      %v1293 = vld [vmem:[%s247 + $0x2060] sm:$0xff]
      %v1294 = vld [vmem:[%s247 + $0x2068] sm:$0xff]
      %v1295 = vld [vmem:[%s247 + $0x2070] sm:$0xff]
      %v1296 = vld [vmem:[%s247 + $0x2078] sm:$0xff]
      %v1297 = vld [vmem:[%s247 + $0x2080] sm:$0xff]
      %v1298 = vld [vmem:[%s247 + $0x2088] sm:$0xff]
      %v1299 = vld [vmem:[%s247 + $0x2090] sm:$0xff]
      %v1300 = vld [vmem:[%s247 + $0x2098] sm:$0xff]
      %v1301 = vld [vmem:[%s247 + $0x20a0] sm:$0xff]
      %v1302 = vld [vmem:[%s247 + $0x20a8] sm:$0xff]
      %v1303 = vld [vmem:[%s247 + $0x20b0] sm:$0xff]
      %v1304 = vld [vmem:[%s247 + $0x20b8] sm:$0xff]
      %v1305 = vld [vmem:[%s247 + $0x20c0] sm:$0xff]
      %v1306 = vld [vmem:[%s247 + $0x20c8] sm:$0xff]
      %v1307 = vld [vmem:[%s247 + $0x20d0] sm:$0xff]
      %v1308 = vld [vmem:[%s247 + $0x20d8] sm:$0xff]
      %v1309 = vld [vmem:[%s247 + $0x20e0] sm:$0xff]
      %v1310 = vld [vmem:[%s247 + $0x20e8] sm:$0xff]
      %v1311 = vld [vmem:[%s247 + $0x20f0] sm:$0xff]
      %v1312 = vld [vmem:[%s247 + $0x20f8] sm:$0xff]
      %v1313 = vld [vmem:[%s247 + $0x2100] sm:$0xff]
      %v1314 = vld [vmem:[%s247 + $0x2108] sm:$0xff]
      %v1315 = vld [vmem:[%s247 + $0x2110] sm:$0xff]
      %v1316 = vld [vmem:[%s247 + $0x2118] sm:$0xff]
      %v1317 = vld [vmem:[%s247 + $0x2120] sm:$0xff]
      %v1318 = vld [vmem:[%s247 + $0x2128] sm:$0xff]
      %v1319 = vld [vmem:[%s247 + $0x2130] sm:$0xff]
      %v1320 = vld [vmem:[%s247 + $0x2138] sm:$0xff]
      %v1321 = vld [vmem:[%s247 + $0x2140] sm:$0xff]
      %v1322 = vld [vmem:[%s247 + $0x2148] sm:$0xff]
      %v1323 = vld [vmem:[%s247 + $0x2150] sm:$0xff]
      %v1324 = vld [vmem:[%s247 + $0x2158] sm:$0xff]
      %v1325 = vld [vmem:[%s247 + $0x2160] sm:$0xff]
      %v1326 = vld [vmem:[%s247 + $0x2168] sm:$0xff]
      %v1327 = vld [vmem:[%s247 + $0x2170] sm:$0xff]
      %v1328 = vld [vmem:[%s247 + $0x2178] sm:$0xff]
      %v1329 = vld [vmem:[%s247 + $0x2180] sm:$0xff]
      %v1330 = vld [vmem:[%s247 + $0x2188] sm:$0xff]
      %v1331 = vld [vmem:[%s247 + $0x2190] sm:$0xff]
      %v1332 = vld [vmem:[%s247 + $0x2198] sm:$0xff]
      %v1333 = vld [vmem:[%s247 + $0x21a0] sm:$0xff]
      %v1334 = vld [vmem:[%s247 + $0x21a8] sm:$0xff]
      %v1335 = vld [vmem:[%s247 + $0x21b0] sm:$0xff]
      %v1336 = vld [vmem:[%s247 + $0x21b8] sm:$0xff]
      %v1337 = vld [vmem:[%s247 + $0x21c0] sm:$0xff]
      %v1338 = vld [vmem:[%s247 + $0x21c8] sm:$0xff]
      %v1339 = vld [vmem:[%s247 + $0x21d0] sm:$0xff]
      %v1340 = vld [vmem:[%s247 + $0x21d8] sm:$0xff]
      %v1341 = vld [vmem:[%s247 + $0x21e0] sm:$0xff]
      %v1342 = vld [vmem:[%s247 + $0x21e8] sm:$0xff]
      %v1343 = vld [vmem:[%s247 + $0x21f0] sm:$0xff]
      %v1344 = vld [vmem:[%s247 + $0x21f8] sm:$0xff]
      %v1345 = vld [vmem:[%s247 + $0x2200] sm:$0xff]
      %v1346 = vld [vmem:[%s247 + $0x2208] sm:$0xff]
      %v1347 = vld [vmem:[%s247 + $0x2210] sm:$0xff]
      %v1348 = vld [vmem:[%s247 + $0x2218] sm:$0xff]
      %v1349 = vld [vmem:[%s247 + $0x2220] sm:$0xff]
      %v1350 = vld [vmem:[%s247 + $0x2228] sm:$0xff]
      %v1351 = vld [vmem:[%s247 + $0x2230] sm:$0xff]
      %v1352 = vld [vmem:[%s247 + $0x2238] sm:$0xff]
      %v1353 = vld [vmem:[%s247 + $0x2240] sm:$0xff]
      %v1354 = vld [vmem:[%s247 + $0x2248] sm:$0xff]
      %v1355 = vld [vmem:[%s247 + $0x2250] sm:$0xff]
      %v1356 = vld [vmem:[%s247 + $0x2258] sm:$0xff]
      %v1357 = vld [vmem:[%s247 + $0x2260] sm:$0xff]
      %v1358 = vld [vmem:[%s247 + $0x2268] sm:$0xff]
      %v1359 = vld [vmem:[%s247 + $0x2270] sm:$0xff]
      %v1360 = vld [vmem:[%s247 + $0x2278] sm:$0xff]
      %v1361 = vld [vmem:[%s247 + $0x2280] sm:$0xff]
      %v1362 = vld [vmem:[%s247 + $0x2288] sm:$0xff]
      %v1363 = vld [vmem:[%s247 + $0x2290] sm:$0xff]
      %v1364 = vld [vmem:[%s247 + $0x2298] sm:$0xff]
      %v1365 = vld [vmem:[%s247 + $0x22a0] sm:$0xff]
      %v1366 = vld [vmem:[%s247 + $0x22a8] sm:$0xff]
      %v1367 = vld [vmem:[%s247 + $0x22b0] sm:$0xff]
      %v1368 = vld [vmem:[%s247 + $0x22b8] sm:$0xff]
      %v1369 = vld [vmem:[%s247 + $0x22c0] sm:$0xff]
      %v1370 = vld [vmem:[%s247 + $0x22c8] sm:$0xff]
      %v1371 = vld [vmem:[%s247 + $0x22d0] sm:$0xff]
      %v1372 = vld [vmem:[%s247 + $0x22d8] sm:$0xff]
      %v1373 = vld [vmem:[%s247 + $0x22e0] sm:$0xff]
      %v1374 = vld [vmem:[%s247 + $0x22e8] sm:$0xff]
      %v1375 = vld [vmem:[%s247 + $0x22f0] sm:$0xff]
      %v1376 = vld [vmem:[%s247 + $0x22f8] sm:$0xff]
      %v1377 = vld [vmem:[%s247 + $0x2300] sm:$0xff]
      %v1378 = vld [vmem:[%s247 + $0x2308] sm:$0xff]
      %v1379 = vld [vmem:[%s247 + $0x2310] sm:$0xff]
      %v1380 = vld [vmem:[%s247 + $0x2318] sm:$0xff]
      %v1381 = vld [vmem:[%s247 + $0x2320] sm:$0xff]
      %v1382 = vld [vmem:[%s247 + $0x2328] sm:$0xff]
      %v1383 = vld [vmem:[%s247 + $0x2330] sm:$0xff]
      %v1384 = vld [vmem:[%s247 + $0x2338] sm:$0xff]
      %v1385 = vld [vmem:[%s247 + $0x2340] sm:$0xff]
      %v1386 = vld [vmem:[%s247 + $0x2348] sm:$0xff]
      %v1387 = vld [vmem:[%s247 + $0x2350] sm:$0xff]
      %v1388 = vld [vmem:[%s247 + $0x2358] sm:$0xff]
      %v1389 = vld [vmem:[%s247 + $0x2360] sm:$0xff]
      %v1390 = vld [vmem:[%s247 + $0x2368] sm:$0xff]
      %v1391 = vld [vmem:[%s247 + $0x2370] sm:$0xff]
      %v1392 = vld [vmem:[%s247 + $0x2378] sm:$0xff]
      %v1393 = vld [vmem:[%s247 + $0x2380] sm:$0xff]
      %v1394 = vld [vmem:[%s247 + $0x2388] sm:$0xff]
      %v1395 = vld [vmem:[%s247 + $0x2390] sm:$0xff]
      %v1396 = vld [vmem:[%s247 + $0x2398] sm:$0xff]
      %v1397 = vld [vmem:[%s247 + $0x23a0] sm:$0xff]
      %v1398 = vld [vmem:[%s247 + $0x23a8] sm:$0xff]
      %v1399 = vld [vmem:[%s247 + $0x23b0] sm:$0xff]
      %v1400 = vld [vmem:[%s247 + $0x23b8] sm:$0xff]
      %v1401 = vld [vmem:[%s247 + $0x23c0] sm:$0xff]
      %v1402 = vld [vmem:[%s247 + $0x23c8] sm:$0xff]
      %v1403 = vld [vmem:[%s247 + $0x23d0] sm:$0xff]
      %v1404 = vld [vmem:[%s247 + $0x23d8] sm:$0xff]
      %v1405 = vld [vmem:[%s247 + $0x23e0] sm:$0xff]
      %v1406 = vld [vmem:[%s247 + $0x23e8] sm:$0xff]
      %v1407 = vld [vmem:[%s247 + $0x23f0] sm:$0xff]
      %v1408 = vld [vmem:[%s247 + $0x23f8] sm:$0xff]
      %v1409 = vld [vmem:[%s247 + $0x2400] sm:$0xff]
      %v1410 = vld [vmem:[%s247 + $0x2408] sm:$0xff]
      %v1411 = vld [vmem:[%s247 + $0x2410] sm:$0xff]
      %v1412 = vld [vmem:[%s247 + $0x2418] sm:$0xff]
      %v1413 = vld [vmem:[%s247 + $0x2420] sm:$0xff]
      %v1414 = vld [vmem:[%s247 + $0x2428] sm:$0xff]
      %v1415 = vld [vmem:[%s247 + $0x2430] sm:$0xff]
      %v1416 = vld [vmem:[%s247 + $0x2438] sm:$0xff]
      %v1417 = vld [vmem:[%s247 + $0x2440] sm:$0xff]
      %v1418 = vld [vmem:[%s247 + $0x2448] sm:$0xff]
      %v1419 = vld [vmem:[%s247 + $0x2450] sm:$0xff]
      %v1420 = vld [vmem:[%s247 + $0x2458] sm:$0xff]
      %v1421 = vld [vmem:[%s247 + $0x2460] sm:$0xff]
      %v1422 = vld [vmem:[%s247 + $0x2468] sm:$0xff]
      %v1423 = vld [vmem:[%s247 + $0x2470] sm:$0xff]
      %v1424 = vld [vmem:[%s247 + $0x2478] sm:$0xff]
      %v1425 = vld [vmem:[%s247 + $0x2480] sm:$0xff]
      %v1426 = vld [vmem:[%s247 + $0x2488] sm:$0xff]
      %v1427 = vld [vmem:[%s247 + $0x2490] sm:$0xff]
      %v1428 = vld [vmem:[%s247 + $0x2498] sm:$0xff]
      %v1429 = vld [vmem:[%s247 + $0x24a0] sm:$0xff]
      %v1430 = vld [vmem:[%s247 + $0x24a8] sm:$0xff]
      %v1431 = vld [vmem:[%s247 + $0x24b0] sm:$0xff]
      %v1432 = vld [vmem:[%s247 + $0x24b8] sm:$0xff]
      %v1433 = vld [vmem:[%s247 + $0x24c0] sm:$0xff]
      %v1434 = vld [vmem:[%s247 + $0x24c8] sm:$0xff]
      %v1435 = vld [vmem:[%s247 + $0x24d0] sm:$0xff]
      %v1436 = vld [vmem:[%s247 + $0x24d8] sm:$0xff]
      %v1437 = vld [vmem:[%s247 + $0x24e0] sm:$0xff]
      %v1438 = vld [vmem:[%s247 + $0x24e8] sm:$0xff]
      %v1439 = vld [vmem:[%s247 + $0x24f0] sm:$0xff]
      %v1440 = vld [vmem:[%s247 + $0x24f8] sm:$0xff]
      %v1441 = vld [vmem:[%s247 + $0x2500] sm:$0xff]
      %v1442 = vld [vmem:[%s247 + $0x2508] sm:$0xff]
      %v1443 = vld [vmem:[%s247 + $0x2510] sm:$0xff]
      %v1444 = vld [vmem:[%s247 + $0x2518] sm:$0xff]
      %v1445 = vld [vmem:[%s247 + $0x2520] sm:$0xff]
      %v1446 = vld [vmem:[%s247 + $0x2528] sm:$0xff]
      %v1447 = vld [vmem:[%s247 + $0x2530] sm:$0xff]
      %v1448 = vld [vmem:[%s247 + $0x2538] sm:$0xff]
      %v1449 = vld [vmem:[%s247 + $0x2540] sm:$0xff]
      %v1450 = vld [vmem:[%s247 + $0x2548] sm:$0xff]
      %v1451 = vld [vmem:[%s247 + $0x2550] sm:$0xff]
      %v1452 = vld [vmem:[%s247 + $0x2558] sm:$0xff]
      %v1453 = vld [vmem:[%s247 + $0x2560] sm:$0xff]
      %v1454 = vld [vmem:[%s247 + $0x2568] sm:$0xff]
      %v1455 = vld [vmem:[%s247 + $0x2570] sm:$0xff]
      %v1456 = vld [vmem:[%s247 + $0x2578] sm:$0xff]
      %v1457 = vld [vmem:[%s247 + $0x2580] sm:$0xff]
      %v1458 = vld [vmem:[%s247 + $0x2588] sm:$0xff]
      %v1459 = vld [vmem:[%s247 + $0x2590] sm:$0xff]
      %v1460 = vld [vmem:[%s247 + $0x2598] sm:$0xff]
      %v1461 = vld [vmem:[%s247 + $0x25a0] sm:$0xff]
      %v1462 = vld [vmem:[%s247 + $0x25a8] sm:$0xff]
      %v1463 = vld [vmem:[%s247 + $0x25b0] sm:$0xff]
      %v1464 = vld [vmem:[%s247 + $0x25b8] sm:$0xff]
      %v1465 = vld [vmem:[%s247 + $0x25c0] sm:$0xff]
      %v1466 = vld [vmem:[%s247 + $0x25c8] sm:$0xff]
      %v1467 = vld [vmem:[%s247 + $0x25d0] sm:$0xff]
      %v1468 = vld [vmem:[%s247 + $0x25d8] sm:$0xff]
      %v1469 = vld [vmem:[%s247 + $0x25e0] sm:$0xff]
      %v1470 = vld [vmem:[%s247 + $0x25e8] sm:$0xff]
      %v1471 = vld [vmem:[%s247 + $0x25f0] sm:$0xff]
      %v1472 = vld [vmem:[%s247 + $0x25f8] sm:$0xff]
      %v1473 = vld [vmem:[%s247 + $0x2600] sm:$0xff]
      %v1474 = vld [vmem:[%s247 + $0x2608] sm:$0xff]
      %v1475 = vld [vmem:[%s247 + $0x2610] sm:$0xff]
      %v1476 = vld [vmem:[%s247 + $0x2618] sm:$0xff]
      %v1477 = vld [vmem:[%s247 + $0x2620] sm:$0xff]
      %v1478 = vld [vmem:[%s247 + $0x2628] sm:$0xff]
      %v1479 = vld [vmem:[%s247 + $0x2630] sm:$0xff]
      %v1480 = vld [vmem:[%s247 + $0x2638] sm:$0xff]
      %v1481 = vld [vmem:[%s247 + $0x2640] sm:$0xff]
      %v1482 = vld [vmem:[%s247 + $0x2648] sm:$0xff]
      %v1483 = vld [vmem:[%s247 + $0x2650] sm:$0xff]
      %v1484 = vld [vmem:[%s247 + $0x2658] sm:$0xff]
      %v1485 = vld [vmem:[%s247 + $0x2660] sm:$0xff]
      %v1486 = vld [vmem:[%s247 + $0x2668] sm:$0xff]
      %v1487 = vld [vmem:[%s247 + $0x2670] sm:$0xff]
      %v1488 = vld [vmem:[%s247 + $0x2678] sm:$0xff]
      %v1489 = vld [vmem:[%s247 + $0x2680] sm:$0xff]
      %v1490 = vld [vmem:[%s247 + $0x2688] sm:$0xff]
      %v1491 = vld [vmem:[%s247 + $0x2690] sm:$0xff]
      %v1492 = vld [vmem:[%s247 + $0x2698] sm:$0xff]
      %v1493 = vld [vmem:[%s247 + $0x26a0] sm:$0xff]
      %v1494 = vld [vmem:[%s247 + $0x26a8] sm:$0xff]
      %v1495 = vld [vmem:[%s247 + $0x26b0] sm:$0xff]
      %v1496 = vld [vmem:[%s247 + $0x26b8] sm:$0xff]
      %v1497 = vld [vmem:[%s247 + $0x26c0] sm:$0xff]
      %v1498 = vld [vmem:[%s247 + $0x26c8] sm:$0xff]
      %v1499 = vld [vmem:[%s247 + $0x26d0] sm:$0xff]
      %v1500 = vld [vmem:[%s247 + $0x26d8] sm:$0xff]
      %v1501 = vld [vmem:[%s247 + $0x26e0] sm:$0xff]
      %v1502 = vld [vmem:[%s247 + $0x26e8] sm:$0xff]
      %v1503 = vld [vmem:[%s247 + $0x26f0] sm:$0xff]
      %v1504 = vld [vmem:[%s247 + $0x26f8] sm:$0xff]
      %v1505 = vld [vmem:[%s247 + $0x2700] sm:$0xff]
      %v1506 = vld [vmem:[%s247 + $0x2708] sm:$0xff]
      %v1507 = vld [vmem:[%s247 + $0x2710] sm:$0xff]
      %v1508 = vld [vmem:[%s247 + $0x2718] sm:$0xff]
      %v1509 = vld [vmem:[%s247 + $0x2720] sm:$0xff]
      %v1510 = vld [vmem:[%s247 + $0x2728] sm:$0xff]
      %v1511 = vld [vmem:[%s247 + $0x2730] sm:$0xff]
      %v1512 = vld [vmem:[%s247 + $0x2738] sm:$0xff]
      %v1513 = vld [vmem:[%s247 + $0x2740] sm:$0xff]
      %v1514 = vld [vmem:[%s247 + $0x2748] sm:$0xff]
      %v1515 = vld [vmem:[%s247 + $0x2750] sm:$0xff]
      %v1516 = vld [vmem:[%s247 + $0x2758] sm:$0xff]
      %v1517 = vld [vmem:[%s247 + $0x2760] sm:$0xff]
      %v1518 = vld [vmem:[%s247 + $0x2768] sm:$0xff]
      %v1519 = vld [vmem:[%s247 + $0x2770] sm:$0xff]
      %v1520 = vld [vmem:[%s247 + $0x2778] sm:$0xff]
      %v1521 = vld [vmem:[%s247 + $0x2780] sm:$0xff]
      %v1522 = vld [vmem:[%s247 + $0x2788] sm:$0xff]
      %v1523 = vld [vmem:[%s247 + $0x2790] sm:$0xff]
      %v1524 = vld [vmem:[%s247 + $0x2798] sm:$0xff]
      %v1525 = vld [vmem:[%s247 + $0x27a0] sm:$0xff]
      %v1526 = vld [vmem:[%s247 + $0x27a8] sm:$0xff]
      %v1527 = vld [vmem:[%s247 + $0x27b0] sm:$0xff]
      %v1528 = vld [vmem:[%s247 + $0x27b8] sm:$0xff]
      %v1529 = vld [vmem:[%s247 + $0x27c0] sm:$0xff]
      %v1530 = vld [vmem:[%s247 + $0x27c8] sm:$0xff]
      %v1531 = vld [vmem:[%s247 + $0x27d0] sm:$0xff]
      %v1532 = vld [vmem:[%s247 + $0x27d8] sm:$0xff]
      %v1533 = vld [vmem:[%s247 + $0x27e0] sm:$0xff]
      %v1534 = vld [vmem:[%s247 + $0x27e8] sm:$0xff]
      %v1535 = vld [vmem:[%s247 + $0x27f0] sm:$0xff]
      %v1536 = vld [vmem:[%s247 + $0x27f8] sm:$0xff]
      %v1537 = vld [vmem:[%s247 + $0x2800] sm:$0xff]
      %v1538 = vld [vmem:[%s247 + $0x2808] sm:$0xff]
      %v1539 = vld [vmem:[%s247 + $0x2810] sm:$0xff]
      %v1540 = vld [vmem:[%s247 + $0x2818] sm:$0xff]
      %v1541 = vld [vmem:[%s247 + $0x2820] sm:$0xff]
      %v1542 = vld [vmem:[%s247 + $0x2828] sm:$0xff]
      %v1543 = vld [vmem:[%s247 + $0x2830] sm:$0xff]
      %v1544 = vld [vmem:[%s247 + $0x2838] sm:$0xff]
      %v1545 = vld [vmem:[%s247 + $0x2840] sm:$0xff]
      %v1546 = vld [vmem:[%s247 + $0x2848] sm:$0xff]
      %v1547 = vld [vmem:[%s247 + $0x2850] sm:$0xff]
      %v1548 = vld [vmem:[%s247 + $0x2858] sm:$0xff]
      %v1549 = vld [vmem:[%s247 + $0x2860] sm:$0xff]
      %v1550 = vld [vmem:[%s247 + $0x2868] sm:$0xff]
      %v1551 = vld [vmem:[%s247 + $0x2870] sm:$0xff]
      %v1552 = vld [vmem:[%s247 + $0x2878] sm:$0xff]
      %v1553 = vld [vmem:[%s247 + $0x2880] sm:$0xff]
      %v1554 = vld [vmem:[%s247 + $0x2888] sm:$0xff]
      %v1555 = vld [vmem:[%s247 + $0x2890] sm:$0xff]
      %v1556 = vld [vmem:[%s247 + $0x2898] sm:$0xff]
      %v1557 = vld [vmem:[%s247 + $0x28a0] sm:$0xff]
      %v1558 = vld [vmem:[%s247 + $0x28a8] sm:$0xff]
      %v1559 = vld [vmem:[%s247 + $0x28b0] sm:$0xff]
      %v1560 = vld [vmem:[%s247 + $0x28b8] sm:$0xff]
      %v1561 = vld [vmem:[%s247 + $0x28c0] sm:$0xff]
      %v1562 = vld [vmem:[%s247 + $0x28c8] sm:$0xff]
      %v1563 = vld [vmem:[%s247 + $0x28d0] sm:$0xff]
      %v1564 = vld [vmem:[%s247 + $0x28d8] sm:$0xff]
      %v1565 = vld [vmem:[%s247 + $0x28e0] sm:$0xff]
      %v1566 = vld [vmem:[%s247 + $0x28e8] sm:$0xff]
      %v1567 = vld [vmem:[%s247 + $0x28f0] sm:$0xff]
      %v1568 = vld [vmem:[%s247 + $0x28f8] sm:$0xff]
      %v1569 = vld [vmem:[%s247 + $0x2900] sm:$0xff]
      %v1570 = vld [vmem:[%s247 + $0x2908] sm:$0xff]
      %v1571 = vld [vmem:[%s247 + $0x2910] sm:$0xff]
      %v1572 = vld [vmem:[%s247 + $0x2918] sm:$0xff]
      %v1573 = vld [vmem:[%s247 + $0x2920] sm:$0xff]
      %v1574 = vld [vmem:[%s247 + $0x2928] sm:$0xff]
      %v1575 = vld [vmem:[%s247 + $0x2930] sm:$0xff]
      %v1576 = vld [vmem:[%s247 + $0x2938] sm:$0xff]
      %v1577 = vld [vmem:[%s247 + $0x2940] sm:$0xff]
      %v1578 = vld [vmem:[%s247 + $0x2948] sm:$0xff]
      %v1579 = vld [vmem:[%s247 + $0x2950] sm:$0xff]
      %v1580 = vld [vmem:[%s247 + $0x2958] sm:$0xff]
      %v1581 = vld [vmem:[%s247 + $0x2960] sm:$0xff]
      %v1582 = vld [vmem:[%s247 + $0x2968] sm:$0xff]
      %v1583 = vld [vmem:[%s247 + $0x2970] sm:$0xff]
      %v1584 = vld [vmem:[%s247 + $0x2978] sm:$0xff]
      %v1585 = vld [vmem:[%s247 + $0x2980] sm:$0xff]
      %v1586 = vld [vmem:[%s247 + $0x2988] sm:$0xff]
      %v1587 = vld [vmem:[%s247 + $0x2990] sm:$0xff]
      %v1588 = vld [vmem:[%s247 + $0x2998] sm:$0xff]
      %v1589 = vld [vmem:[%s247 + $0x29a0] sm:$0xff]
      %v1590 = vld [vmem:[%s247 + $0x29a8] sm:$0xff]
      %v1591 = vld [vmem:[%s247 + $0x29b0] sm:$0xff]
      %v1592 = vld [vmem:[%s247 + $0x29b8] sm:$0xff]
      %v1593 = vld [vmem:[%s247 + $0x29c0] sm:$0xff]
      %v1594 = vld [vmem:[%s247 + $0x29c8] sm:$0xff]
      %v1595 = vld [vmem:[%s247 + $0x29d0] sm:$0xff]
      %v1596 = vld [vmem:[%s247 + $0x29d8] sm:$0xff]
      %v1597 = vld [vmem:[%s247 + $0x29e0] sm:$0xff]
      %v1598 = vld [vmem:[%s247 + $0x29e8] sm:$0xff]
      %v1599 = vld [vmem:[%s247 + $0x29f0] sm:$0xff]
      %v1600 = vld [vmem:[%s247 + $0x29f8] sm:$0xff]
      %v1601 = vld [vmem:[%s247 + $0x2a00] sm:$0xff]
      %v1602 = vld [vmem:[%s247 + $0x2a08] sm:$0xff]
      %v1603 = vld [vmem:[%s247 + $0x2a10] sm:$0xff]
      %v1604 = vld [vmem:[%s247 + $0x2a18] sm:$0xff]
      %v1605 = vld [vmem:[%s247 + $0x2a20] sm:$0xff]
      %v1606 = vld [vmem:[%s247 + $0x2a28] sm:$0xff]
      %v1607 = vpack.c.bf16 %v258, %v257
      %v1608 = vpack.c.bf16 %v260, %v259
      %v1609 = vpack.c.bf16 %v262, %v261
      %v1610 = vpack.c.bf16 %v264, %v263
      %v1611 = vpack.c.bf16 %v266, %v265
      %v1612 = vpack.c.bf16 %v268, %v267
      %v1613 = vpack.c.bf16 %v270, %v269
      %v1614 = vpack.c.bf16 %v272, %v271
      %v1615 = vpack.c.bf16 %v274, %v273
      %v1616 = vpack.c.bf16 %v276, %v275
      %v1617 = vpack.c.bf16 %v278, %v277
      %v1618 = vpack.c.bf16 %v280, %v279
      %v1619 = vpack.c.bf16 %v282, %v281
      %v1620 = vpack.c.bf16 %v284, %v283
      %v1621 = vpack.c.bf16 %v286, %v285
      %v1622 = vpack.c.bf16 %v288, %v287
      %v1623 = vpack.c.bf16 %v290, %v289
      %v1624 = vpack.c.bf16 %v292, %v291
      %v1625 = vpack.c.bf16 %v294, %v293
      %v1626 = vpack.c.bf16 %v296, %v295
      %v1627 = vpack.c.bf16 %v298, %v297
      %v1628 = vpack.c.bf16 %v300, %v299
      %v1629 = vpack.c.bf16 %v302, %v301
      %v1630 = vpack.c.bf16 %v304, %v303
      %v1631 = vpack.c.bf16 %v306, %v305
      %v1632 = vpack.c.bf16 %v308, %v307
      %v1633 = vpack.c.bf16 %v310, %v309
      %v1634 = vpack.c.bf16 %v312, %v311
      %v1635 = vpack.c.bf16 %v314, %v313
      %v1636 = vpack.c.bf16 %v316, %v315
      %v1637 = vpack.c.bf16 %v318, %v317
      %v1638 = vpack.c.bf16 %v320, %v319
      %v1639 = vpack.c.bf16 %v322, %v321
      %v1640 = vpack.c.bf16 %v324, %v323
      %v1641 = vpack.c.bf16 %v326, %v325
      %v1642 = vpack.c.bf16 %v328, %v327
      %v1643 = vpack.c.bf16 %v330, %v329
      %v1644 = vpack.c.bf16 %v332, %v331
      %v1645 = vpack.c.bf16 %v334, %v333
      %v1646 = vpack.c.bf16 %v336, %v335
      %v1647 = vpack.c.bf16 %v338, %v337
      %v1648 = vpack.c.bf16 %v340, %v339
      %v1649 = vpack.c.bf16 %v342, %v341
      %v1650 = vpack.c.bf16 %v344, %v343
      %v1651 = vpack.c.bf16 %v346, %v345
      %v1652 = vpack.c.bf16 %v348, %v347
      %v1653 = vpack.c.bf16 %v350, %v349
      %v1654 = vpack.c.bf16 %v352, %v351
      %v1655 = vpack.c.bf16 %v354, %v353
      %v1656 = vpack.c.bf16 %v356, %v355
      %v1657 = vpack.c.bf16 %v358, %v357
      %v1658 = vpack.c.bf16 %v360, %v359
      %v1659 = vpack.c.bf16 %v362, %v361
      %v1660 = vpack.c.bf16 %v364, %v363
      %v1661 = vpack.c.bf16 %v366, %v365
      %v1662 = vpack.c.bf16 %v368, %v367
      %v1663 = vpack.c.bf16 %v370, %v369
      %v1664 = vpack.c.bf16 %v372, %v371
      %v1665 = vpack.c.bf16 %v374, %v373
      %v1666 = vpack.c.bf16 %v376, %v375
      %v1667 = vpack.c.bf16 %v378, %v377
      %v1668 = vpack.c.bf16 %v380, %v379
      %v1669 = vpack.c.bf16 %v382, %v381
      %v1670 = vpack.c.bf16 %v384, %v383
      %v1671 = vpack.c.bf16 %v386, %v385
      %v1672 = vpack.c.bf16 %v388, %v387
      %v1673 = vpack.c.bf16 %v390, %v389
      %v1674 = vpack.c.bf16 %v392, %v391
      %v1675 = vpack.c.bf16 %v394, %v393
      %v1676 = vpack.c.bf16 %v396, %v395
      %v1677 = vpack.c.bf16 %v398, %v397
      %v1678 = vpack.c.bf16 %v400, %v399
      %v1679 = vpack.c.bf16 %v402, %v401
      %v1680 = vpack.c.bf16 %v404, %v403
      %v1681 = vpack.c.bf16 %v406, %v405
      %v1682 = vpack.c.bf16 %v408, %v407
      %v1683 = vpack.c.bf16 %v410, %v409
      %v1684 = vpack.c.bf16 %v412, %v411
      %v1685 = vpack.c.bf16 %v414, %v413
      %v1686 = vpack.c.bf16 %v416, %v415
      %v1687 = vpack.c.bf16 %v418, %v417
      %v1688 = vpack.c.bf16 %v420, %v419
      %v1689 = vpack.c.bf16 %v422, %v421
      %v1690 = vpack.c.bf16 %v424, %v423
      %v1691 = vpack.c.bf16 %v426, %v425
      %v1692 = vpack.c.bf16 %v428, %v427
      %v1693 = vpack.c.bf16 %v430, %v429
      %v1694 = vpack.c.bf16 %v432, %v431
      %v1695 = vpack.c.bf16 %v434, %v433
      %v1696 = vpack.c.bf16 %v436, %v435
      %v1697 = vpack.c.bf16 %v438, %v437
      %v1698 = vpack.c.bf16 %v440, %v439
      %v1699 = vpack.c.bf16 %v442, %v441
      %v1700 = vpack.c.bf16 %v444, %v443
      %v1701 = vpack.c.bf16 %v446, %v445
      %v1702 = vpack.c.bf16 %v448, %v447
      %v1703 = vpack.c.bf16 %v450, %v449
      %v1704 = vpack.c.bf16 %v452, %v451
      %v1705 = vpack.c.bf16 %v454, %v453
      %v1706 = vpack.c.bf16 %v456, %v455
      %v1707 = vpack.c.bf16 %v458, %v457
      %v1708 = vpack.c.bf16 %v460, %v459
      %v1709 = vpack.c.bf16 %v462, %v461
      %v1710 = vpack.c.bf16 %v464, %v463
      %v1711 = vpack.c.bf16 %v466, %v465
      %v1712 = vpack.c.bf16 %v468, %v467
      %v1713 = vpack.c.bf16 %v470, %v469
      %v1714 = vpack.c.bf16 %v472, %v471
      %v1715 = vpack.c.bf16 %v474, %v473
      %v1716 = vpack.c.bf16 %v476, %v475
      %v1717 = vpack.c.bf16 %v478, %v477
      %v1718 = vpack.c.bf16 %v480, %v479
      %v1719 = vpack.c.bf16 %v482, %v481
      %v1720 = vpack.c.bf16 %v484, %v483
      %v1721 = vpack.c.bf16 %v486, %v485
      %v1722 = vpack.c.bf16 %v488, %v487
      %v1723 = vpack.c.bf16 %v490, %v489
      %v1724 = vpack.c.bf16 %v492, %v491
      %v1725 = vpack.c.bf16 %v494, %v493
      %v1726 = vpack.c.bf16 %v496, %v495
      %v1727 = vpack.c.bf16 %v498, %v497
      %v1728 = vpack.c.bf16 %v500, %v499
      %v1729 = vpack.c.bf16 %v502, %v501
      %v1730 = vpack.c.bf16 %v504, %v503
      %v1731 = vpack.c.bf16 %v506, %v505
      %v1732 = vpack.c.bf16 %v508, %v507
      %v1733 = vpack.c.bf16 %v510, %v509
      %v1734 = vpack.c.bf16 %v512, %v511
      %v1735 = vpack.c.bf16 %v514, %v513
      %v1736 = vpack.c.bf16 %v516, %v515
      %v1737 = vpack.c.bf16 %v518, %v517
      %v1738 = vpack.c.bf16 %v520, %v519
      %v1739 = vpack.c.bf16 %v522, %v521
      %v1740 = vpack.c.bf16 %v524, %v523
      %v1741 = vpack.c.bf16 %v526, %v525
      %v1742 = vpack.c.bf16 %v528, %v527
      %v1743 = vpack.c.bf16 %v530, %v529
      %v1744 = vpack.c.bf16 %v532, %v531
      %v1745 = vpack.c.bf16 %v534, %v533
      %v1746 = vpack.c.bf16 %v536, %v535
      %v1747 = vpack.c.bf16 %v538, %v537
      %v1748 = vpack.c.bf16 %v540, %v539
      %v1749 = vpack.c.bf16 %v542, %v541
      %v1750 = vpack.c.bf16 %v544, %v543
      %v1751 = vpack.c.bf16 %v546, %v545
      %v1752 = vpack.c.bf16 %v548, %v547
      %v1753 = vpack.c.bf16 %v550, %v549
      %v1754 = vpack.c.bf16 %v552, %v551
      %v1755 = vpack.c.bf16 %v554, %v553
      %v1756 = vpack.c.bf16 %v556, %v555
      %v1757 = vpack.c.bf16 %v558, %v557
      %v1758 = vpack.c.bf16 %v560, %v559
      %v1759 = vpack.c.bf16 %v562, %v561
      %v1760 = vpack.c.bf16 %v564, %v563
      %v1761 = vpack.c.bf16 %v566, %v565
      %v1762 = vpack.c.bf16 %v568, %v567
      %v1763 = vpack.c.bf16 %v570, %v569
      %v1764 = vpack.c.bf16 %v572, %v571
      %v1765 = vpack.c.bf16 %v574, %v573
      %v1766 = vpack.c.bf16 %v576, %v575
      %v1767 = vpack.c.bf16 %v578, %v577
      %v1768 = vpack.c.bf16 %v580, %v579
      %v1769 = vpack.c.bf16 %v582, %v581
      %v1770 = vpack.c.bf16 %v584, %v583
      %v1771 = vpack.c.bf16 %v586, %v585
      %v1772 = vpack.c.bf16 %v588, %v587
      %v1773 = vpack.c.bf16 %v590, %v589
      %v1774 = vpack.c.bf16 %v592, %v591
      %v1775 = vpack.c.bf16 %v594, %v593
      %v1776 = vpack.c.bf16 %v596, %v595
      %v1777 = vpack.c.bf16 %v598, %v597
      %v1778 = vpack.c.bf16 %v600, %v599
      %v1779 = vpack.c.bf16 %v602, %v601
      %v1780 = vpack.c.bf16 %v604, %v603
      %v1781 = vpack.c.bf16 %v606, %v605
      %v1782 = vpack.c.bf16 %v608, %v607
      %v1783 = vpack.c.bf16 %v610, %v609
      %v1784 = vpack.c.bf16 %v612, %v611
      %v1785 = vpack.c.bf16 %v614, %v613
      %v1786 = vpack.c.bf16 %v616, %v615
      %v1787 = vpack.c.bf16 %v618, %v617
      %v1788 = vpack.c.bf16 %v620, %v619
      %v1789 = vpack.c.bf16 %v622, %v621
      %v1790 = vpack.c.bf16 %v624, %v623
      %v1791 = vpack.c.bf16 %v626, %v625
      %v1792 = vpack.c.bf16 %v628, %v627
      %v1793 = vpack.c.bf16 %v630, %v629
      %v1794 = vpack.c.bf16 %v632, %v631
      %v1795 = vpack.c.bf16 %v634, %v633
      %v1796 = vpack.c.bf16 %v636, %v635
      %v1797 = vpack.c.bf16 %v638, %v637
      %v1798 = vpack.c.bf16 %v640, %v639
      %v1799 = vpack.c.bf16 %v642, %v641
      %v1800 = vpack.c.bf16 %v644, %v643
      %v1801 = vpack.c.bf16 %v646, %v645
      %v1802 = vpack.c.bf16 %v648, %v647
      %v1803 = vpack.c.bf16 %v650, %v649
      %v1804 = vpack.c.bf16 %v652, %v651
      %v1805 = vpack.c.bf16 %v654, %v653
      %v1806 = vpack.c.bf16 %v656, %v655
      %v1807 = vpack.c.bf16 %v658, %v657
      %v1808 = vpack.c.bf16 %v660, %v659
      %v1809 = vpack.c.bf16 %v662, %v661
      %v1810 = vpack.c.bf16 %v664, %v663
      %v1811 = vpack.c.bf16 %v666, %v665
      %v1812 = vpack.c.bf16 %v668, %v667
      %v1813 = vpack.c.bf16 %v670, %v669
      %v1814 = vpack.c.bf16 %v672, %v671
      %v1815 = vpack.c.bf16 %v674, %v673
      %v1816 = vpack.c.bf16 %v676, %v675
      %v1817 = vpack.c.bf16 %v678, %v677
      %v1818 = vpack.c.bf16 %v680, %v679
      %v1819 = vpack.c.bf16 %v682, %v681
      %v1820 = vpack.c.bf16 %v684, %v683
      %v1821 = vpack.c.bf16 %v686, %v685
      %v1822 = vpack.c.bf16 %v688, %v687
      %v1823 = vpack.c.bf16 %v690, %v689
      %v1824 = vpack.c.bf16 %v692, %v691
      %v1825 = vpack.c.bf16 %v694, %v693
      %v1826 = vpack.c.bf16 %v696, %v695
      %v1827 = vpack.c.bf16 %v698, %v697
      %v1828 = vpack.c.bf16 %v700, %v699
      %v1829 = vpack.c.bf16 %v702, %v701
      %v1830 = vpack.c.bf16 %v704, %v703
      %v1831 = vpack.c.bf16 %v706, %v705
      %v1832 = vpack.c.bf16 %v708, %v707
      %v1833 = vpack.c.bf16 %v710, %v709
      %v1834 = vpack.c.bf16 %v712, %v711
      %v1835 = vpack.c.bf16 %v714, %v713
      %v1836 = vpack.c.bf16 %v716, %v715
      %v1837 = vpack.c.bf16 %v718, %v717
      %v1838 = vpack.c.bf16 %v720, %v719
      %v1839 = vpack.c.bf16 %v722, %v721
      %v1840 = vpack.c.bf16 %v724, %v723
      %v1841 = vpack.c.bf16 %v726, %v725
      %v1842 = vpack.c.bf16 %v728, %v727
      %v1843 = vpack.c.bf16 %v730, %v729
      %v1844 = vpack.c.bf16 %v732, %v731
      %v1845 = vpack.c.bf16 %v734, %v733
      %v1846 = vpack.c.bf16 %v736, %v735
      %v1847 = vpack.c.bf16 %v738, %v737
      %v1848 = vpack.c.bf16 %v740, %v739
      %v1849 = vpack.c.bf16 %v742, %v741
      %v1850 = vpack.c.bf16 %v744, %v743
      %v1851 = vpack.c.bf16 %v746, %v745
      %v1852 = vpack.c.bf16 %v748, %v747
      %v1853 = vpack.c.bf16 %v750, %v749
      %v1854 = vpack.c.bf16 %v752, %v751
      %v1855 = vpack.c.bf16 %v754, %v753
      %v1856 = vpack.c.bf16 %v756, %v755
      %v1857 = vpack.c.bf16 %v758, %v757
      %v1858 = vpack.c.bf16 %v760, %v759
      %v1859 = vpack.c.bf16 %v762, %v761
      %v1860 = vpack.c.bf16 %v764, %v763
      %v1861 = vpack.c.bf16 %v766, %v765
      %v1862 = vpack.c.bf16 %v768, %v767
      %v1863 = vpack.c.bf16 %v770, %v769
      %v1864 = vpack.c.bf16 %v772, %v771
      %v1865 = vpack.c.bf16 %v774, %v773
      %v1866 = vpack.c.bf16 %v776, %v775
      %v1867 = vpack.c.bf16 %v778, %v777
      %v1868 = vpack.c.bf16 %v780, %v779
      %v1869 = vpack.c.bf16 %v782, %v781
      %v1870 = vpack.c.bf16 %v784, %v783
      %v1871 = vpack.c.bf16 %v786, %v785
      %v1872 = vpack.c.bf16 %v788, %v787
      %v1873 = vpack.c.bf16 %v790, %v789
      %v1874 = vpack.c.bf16 %v792, %v791
      %v1875 = vpack.c.bf16 %v794, %v793
      %v1876 = vpack.c.bf16 %v796, %v795
      %v1877 = vpack.c.bf16 %v798, %v797
      %v1878 = vpack.c.bf16 %v800, %v799
      %v1879 = vpack.c.bf16 %v802, %v801
      %v1880 = vpack.c.bf16 %v804, %v803
      %v1881 = vpack.c.bf16 %v806, %v805
      %v1882 = vpack.c.bf16 %v808, %v807
      %v1883 = vpack.c.bf16 %v810, %v809
      %v1884 = vpack.c.bf16 %v812, %v811
      %v1885 = vpack.c.bf16 %v814, %v813
      %v1886 = vpack.c.bf16 %v816, %v815
      %v1887 = vpack.c.bf16 %v818, %v817
      %v1888 = vpack.c.bf16 %v820, %v819
      %v1889 = vpack.c.bf16 %v822, %v821
      %v1890 = vpack.c.bf16 %v824, %v823
      %v1891 = vpack.c.bf16 %v826, %v825
      %v1892 = vpack.c.bf16 %v828, %v827
      %v1893 = vpack.c.bf16 %v830, %v829
      %v1894 = vpack.c.bf16 %v832, %v831
      %v1895 = vpack.c.bf16 %v834, %v833
      %v1896 = vpack.c.bf16 %v836, %v835
      %v1897 = vpack.c.bf16 %v838, %v837
      %v1898 = vpack.c.bf16 %v840, %v839
      %v1899 = vpack.c.bf16 %v842, %v841
      %v1900 = vpack.c.bf16 %v844, %v843
      %v1901 = vpack.c.bf16 %v846, %v845
      %v1902 = vpack.c.bf16 %v848, %v847
      %v1903 = vpack.c.bf16 %v850, %v849
      %v1904 = vpack.c.bf16 %v852, %v851
      %v1905 = vpack.c.bf16 %v854, %v853
      %v1906 = vpack.c.bf16 %v856, %v855
      %v1907 = vpack.c.bf16 %v858, %v857
      %v1908 = vpack.c.bf16 %v860, %v859
      %v1909 = vpack.c.bf16 %v862, %v861
      %v1910 = vpack.c.bf16 %v864, %v863
      %v1911 = vpack.c.bf16 %v866, %v865
      %v1912 = vpack.c.bf16 %v868, %v867
      %v1913 = vpack.c.bf16 %v870, %v869
      %v1914 = vpack.c.bf16 %v872, %v871
      %v1915 = vpack.c.bf16 %v874, %v873
      %v1916 = vpack.c.bf16 %v876, %v875
      %v1917 = vpack.c.bf16 %v878, %v877
      %v1918 = vpack.c.bf16 %v880, %v879
      %v1919 = vpack.c.bf16 %v882, %v881
      %v1920 = vpack.c.bf16 %v884, %v883
      %v1921 = vpack.c.bf16 %v886, %v885
      %v1922 = vpack.c.bf16 %v888, %v887
      %v1923 = vpack.c.bf16 %v890, %v889
      %v1924 = vpack.c.bf16 %v892, %v891
      %v1925 = vpack.c.bf16 %v894, %v893
      %v1926 = vpack.c.bf16 %v896, %v895
      %v1927 = vpack.c.bf16 %v898, %v897
      %v1928 = vpack.c.bf16 %v900, %v899
      %v1929 = vpack.c.bf16 %v902, %v901
      %v1930 = vpack.c.bf16 %v904, %v903
      %v1931 = vpack.c.bf16 %v906, %v905
      %v1932 = vpack.c.bf16 %v908, %v907
      %v1933 = vpack.c.bf16 %v910, %v909
      %v1934 = vpack.c.bf16 %v912, %v911
      %v1935 = vpack.c.bf16 %v914, %v913
      %v1936 = vpack.c.bf16 %v916, %v915
      %v1937 = vpack.c.bf16 %v918, %v917
      %v1938 = vpack.c.bf16 %v920, %v919
      %v1939 = vpack.c.bf16 %v922, %v921
      %v1940 = vpack.c.bf16 %v924, %v923
      %v1941 = vpack.c.bf16 %v926, %v925
      %v1942 = vpack.c.bf16 %v928, %v927
      %v1943 = vpack.c.bf16 %v930, %v929
      %v1944 = vpack.c.bf16 %v932, %v931
      %v1945 = vpack.c.bf16 %v934, %v933
      %v1946 = vpack.c.bf16 %v936, %v935
      %v1947 = vpack.c.bf16 %v938, %v937
      %v1948 = vpack.c.bf16 %v940, %v939
      %v1949 = vpack.c.bf16 %v942, %v941
      %v1950 = vpack.c.bf16 %v944, %v943
      %v1951 = vpack.c.bf16 %v946, %v945
      %v1952 = vpack.c.bf16 %v948, %v947
      %v1953 = vpack.c.bf16 %v950, %v949
      %v1954 = vpack.c.bf16 %v952, %v951
      %v1955 = vpack.c.bf16 %v954, %v953
      %v1956 = vpack.c.bf16 %v956, %v955
      %v1957 = vpack.c.bf16 %v958, %v957
      %v1958 = vpack.c.bf16 %v960, %v959
      %v1959 = vpack.c.bf16 %v962, %v961
      %v1960 = vpack.c.bf16 %v964, %v963
      %v1961 = vpack.c.bf16 %v966, %v965
      %v1962 = vpack.c.bf16 %v968, %v967
      %v1963 = vpack.c.bf16 %v970, %v969
      %v1964 = vpack.c.bf16 %v972, %v971
      %v1965 = vpack.c.bf16 %v974, %v973
      %v1966 = vpack.c.bf16 %v976, %v975
      %v1967 = vpack.c.bf16 %v978, %v977
      %v1968 = vpack.c.bf16 %v980, %v979
      %v1969 = vpack.c.bf16 %v982, %v981
      %v1970 = vpack.c.bf16 %v984, %v983
      %v1971 = vpack.c.bf16 %v986, %v985
      %v1972 = vpack.c.bf16 %v988, %v987
      %v1973 = vpack.c.bf16 %v990, %v989
      %v1974 = vpack.c.bf16 %v992, %v991
      %v1975 = vpack.c.bf16 %v994, %v993
      %v1976 = vpack.c.bf16 %v996, %v995
      %v1977 = vpack.c.bf16 %v998, %v997
      %v1978 = vpack.c.bf16 %v1000, %v999
      %v1979 = vpack.c.bf16 %v1002, %v1001
      %v1980 = vpack.c.bf16 %v1004, %v1003
      %v1981 = vpack.c.bf16 %v1006, %v1005
      %v1982 = vpack.c.bf16 %v1008, %v1007
      %v1983 = vpack.c.bf16 %v1010, %v1009
      %v1984 = vpack.c.bf16 %v1012, %v1011
      %v1985 = vpack.c.bf16 %v1014, %v1013
      %v1986 = vpack.c.bf16 %v1016, %v1015
      %v1987 = vpack.c.bf16 %v1018, %v1017
      %v1988 = vpack.c.bf16 %v1020, %v1019
      %v1989 = vpack.c.bf16 %v1022, %v1021
      %v1990 = vpack.c.bf16 %v1024, %v1023
      %v1991 = vpack.c.bf16 %v1026, %v1025
      %v1992 = vpack.c.bf16 %v1028, %v1027
      %v1993 = vpack.c.bf16 %v1030, %v1029
      %v1994 = vpack.c.bf16 %v1032, %v1031
      %v1995 = vpack.c.bf16 %v1034, %v1033
      %v1996 = vpack.c.bf16 %v1036, %v1035
      %v1997 = vpack.c.bf16 %v1038, %v1037
      %v1998 = vpack.c.bf16 %v1040, %v1039
      %v1999 = vpack.c.bf16 %v1042, %v1041
      %v2000 = vpack.c.bf16 %v1044, %v1043
      %v2001 = vpack.c.bf16 %v1046, %v1045
      %v2002 = vpack.c.bf16 %v1048, %v1047
      %v2003 = vpack.c.bf16 %v1050, %v1049
      %v2004 = vpack.c.bf16 %v1052, %v1051
      %v2005 = vpack.c.bf16 %v1054, %v1053
      %v2006 = vpack.c.bf16 %v1056, %v1055
      %v2007 = vpack.c.bf16 %v1058, %v1057
      %v2008 = vpack.c.bf16 %v1060, %v1059
      %v2009 = vpack.c.bf16 %v1062, %v1061
      %v2010 = vpack.c.bf16 %v1064, %v1063
      %v2011 = vpack.c.bf16 %v1066, %v1065
      %v2012 = vpack.c.bf16 %v1068, %v1067
      %v2013 = vpack.c.bf16 %v1070, %v1069
      %v2014 = vpack.c.bf16 %v1072, %v1071
      %v2015 = vpack.c.bf16 %v1074, %v1073
      %v2016 = vpack.c.bf16 %v1076, %v1075
      %v2017 = vpack.c.bf16 %v1078, %v1077
      %v2018 = vpack.c.bf16 %v1080, %v1079
      %v2019 = vpack.c.bf16 %v1082, %v1081
      %v2020 = vpack.c.bf16 %v1084, %v1083
      %v2021 = vpack.c.bf16 %v1086, %v1085
      %v2022 = vpack.c.bf16 %v1088, %v1087
      %v2023 = vpack.c.bf16 %v1090, %v1089
      %v2024 = vpack.c.bf16 %v1092, %v1091
      %v2025 = vpack.c.bf16 %v1094, %v1093
      %v2026 = vpack.c.bf16 %v1096, %v1095
      %v2027 = vpack.c.bf16 %v1098, %v1097
      %v2028 = vpack.c.bf16 %v1100, %v1099
      %v2029 = vpack.c.bf16 %v1102, %v1101
      %v2030 = vpack.c.bf16 %v1104, %v1103
      %v2031 = vpack.c.bf16 %v1106, %v1105
      %v2032 = vpack.c.bf16 %v1108, %v1107
      %v2033 = vpack.c.bf16 %v1110, %v1109
      %v2034 = vpack.c.bf16 %v1112, %v1111
      %v2035 = vpack.c.bf16 %v1114, %v1113
      %v2036 = vpack.c.bf16 %v1116, %v1115
      %v2037 = vpack.c.bf16 %v1118, %v1117
      %v2038 = vpack.c.bf16 %v1120, %v1119
      %v2039 = vpack.c.bf16 %v1122, %v1121
      %v2040 = vpack.c.bf16 %v1124, %v1123
      %v2041 = vpack.c.bf16 %v1126, %v1125
      %v2042 = vpack.c.bf16 %v1128, %v1127
      %v2043 = vpack.c.bf16 %v1130, %v1129
      %v2044 = vpack.c.bf16 %v1132, %v1131
      %v2045 = vpack.c.bf16 %v1134, %v1133
      %v2046 = vpack.c.bf16 %v1136, %v1135
      %v2047 = vpack.c.bf16 %v1138, %v1137
      %v2048 = vpack.c.bf16 %v1140, %v1139
      %v2049 = vpack.c.bf16 %v1142, %v1141
      %v2050 = vpack.c.bf16 %v1144, %v1143
      %v2051 = vpack.c.bf16 %v1146, %v1145
      %v2052 = vpack.c.bf16 %v1148, %v1147
      %v2053 = vpack.c.bf16 %v1150, %v1149
      %v2054 = vpack.c.bf16 %v1152, %v1151
      %v2055 = vpack.c.bf16 %v1154, %v1153
      %v2056 = vpack.c.bf16 %v1156, %v1155
      %v2057 = vpack.c.bf16 %v1158, %v1157
      %v2058 = vpack.c.bf16 %v1160, %v1159
      %v2059 = vpack.c.bf16 %v1162, %v1161
      %v2060 = vpack.c.bf16 %v1164, %v1163
      %v2061 = vpack.c.bf16 %v1166, %v1165
      %v2062 = vpack.c.bf16 %v1168, %v1167
      %v2063 = vpack.c.bf16 %v1170, %v1169
      %v2064 = vpack.c.bf16 %v1172, %v1171
      %v2065 = vpack.c.bf16 %v1174, %v1173
      %v2066 = vpack.c.bf16 %v1176, %v1175
      %v2067 = vpack.c.bf16 %v1178, %v1177
      %v2068 = vpack.c.bf16 %v1180, %v1179
      %v2069 = vpack.c.bf16 %v1182, %v1181
      %v2070 = vpack.c.bf16 %v1184, %v1183
      %v2071 = vpack.c.bf16 %v1186, %v1185
      %v2072 = vpack.c.bf16 %v1188, %v1187
      %v2073 = vpack.c.bf16 %v1190, %v1189
      %v2074 = vpack.c.bf16 %v1192, %v1191
      %v2075 = vpack.c.bf16 %v1194, %v1193
      %v2076 = vpack.c.bf16 %v1196, %v1195
      %v2077 = vpack.c.bf16 %v1198, %v1197
      %v2078 = vpack.c.bf16 %v1200, %v1199
      %v2079 = vpack.c.bf16 %v1202, %v1201
      %v2080 = vpack.c.bf16 %v1204, %v1203
      %v2081 = vpack.c.bf16 %v1206, %v1205
      %v2082 = vpack.c.bf16 %v1208, %v1207
      %v2083 = vpack.c.bf16 %v1210, %v1209
      %v2084 = vpack.c.bf16 %v1212, %v1211
      %v2085 = vpack.c.bf16 %v1214, %v1213
      %v2086 = vpack.c.bf16 %v1216, %v1215
      %v2087 = vpack.c.bf16 %v1218, %v1217
      %v2088 = vpack.c.bf16 %v1220, %v1219
      %v2089 = vpack.c.bf16 %v1222, %v1221
      %v2090 = vpack.c.bf16 %v1224, %v1223
      %v2091 = vpack.c.bf16 %v1226, %v1225
      %v2092 = vpack.c.bf16 %v1228, %v1227
      %v2093 = vpack.c.bf16 %v1230, %v1229
      %v2094 = vpack.c.bf16 %v1232, %v1231
      %v2095 = vpack.c.bf16 %v1234, %v1233
      %v2096 = vpack.c.bf16 %v1236, %v1235
      %v2097 = vpack.c.bf16 %v1238, %v1237
      %v2098 = vpack.c.bf16 %v1240, %v1239
      %v2099 = vpack.c.bf16 %v1242, %v1241
      %v2100 = vpack.c.bf16 %v1244, %v1243
      %v2101 = vpack.c.bf16 %v1246, %v1245
      %v2102 = vpack.c.bf16 %v1248, %v1247
      %v2103 = vpack.c.bf16 %v1250, %v1249
      %v2104 = vpack.c.bf16 %v1252, %v1251
      %v2105 = vpack.c.bf16 %v1254, %v1253
      %v2106 = vpack.c.bf16 %v1256, %v1255
      %v2107 = vpack.c.bf16 %v1258, %v1257
      %v2108 = vpack.c.bf16 %v1260, %v1259
      %v2109 = vpack.c.bf16 %v1262, %v1261
      %v2110 = vpack.c.bf16 %v1264, %v1263
      %v2111 = vpack.c.bf16 %v1266, %v1265
      %v2112 = vpack.c.bf16 %v1268, %v1267
      %v2113 = vpack.c.bf16 %v1270, %v1269
      %v2114 = vpack.c.bf16 %v1272, %v1271
      %v2115 = vpack.c.bf16 %v1274, %v1273
      %v2116 = vpack.c.bf16 %v1276, %v1275
      %v2117 = vpack.c.bf16 %v1278, %v1277
      %v2118 = vpack.c.bf16 %v1280, %v1279
      %v2119 = vpack.c.bf16 %v1282, %v1281
      %v2120 = vpack.c.bf16 %v1284, %v1283
      %v2121 = vpack.c.bf16 %v1286, %v1285
      %v2122 = vpack.c.bf16 %v1288, %v1287
      %v2123 = vpack.c.bf16 %v1290, %v1289
      %v2124 = vpack.c.bf16 %v1292, %v1291
      %v2125 = vpack.c.bf16 %v1294, %v1293
      %v2126 = vpack.c.bf16 %v1296, %v1295
      %v2127 = vpack.c.bf16 %v1298, %v1297
      %v2128 = vpack.c.bf16 %v1300, %v1299
      %v2129 = vpack.c.bf16 %v1302, %v1301
      %v2130 = vpack.c.bf16 %v1304, %v1303
      %v2131 = vpack.c.bf16 %v1306, %v1305
      %v2132 = vpack.c.bf16 %v1308, %v1307
      %v2133 = vpack.c.bf16 %v1310, %v1309
      %v2134 = vpack.c.bf16 %v1312, %v1311
      %v2135 = vpack.c.bf16 %v1314, %v1313
      %v2136 = vpack.c.bf16 %v1316, %v1315
      %v2137 = vpack.c.bf16 %v1318, %v1317
      %v2138 = vpack.c.bf16 %v1320, %v1319
      %v2139 = vpack.c.bf16 %v1322, %v1321
      %v2140 = vpack.c.bf16 %v1324, %v1323
      %v2141 = vpack.c.bf16 %v1326, %v1325
      %v2142 = vpack.c.bf16 %v1328, %v1327
      %v2143 = vpack.c.bf16 %v1330, %v1329
      %v2144 = vpack.c.bf16 %v1332, %v1331
      %v2145 = vpack.c.bf16 %v1334, %v1333
      %v2146 = vpack.c.bf16 %v1336, %v1335
      %v2147 = vpack.c.bf16 %v1338, %v1337
      %v2148 = vpack.c.bf16 %v1340, %v1339
      %v2149 = vpack.c.bf16 %v1342, %v1341
      %v2150 = vpack.c.bf16 %v1344, %v1343
      %v2151 = vpack.c.bf16 %v1346, %v1345
      %v2152 = vpack.c.bf16 %v1348, %v1347
      %v2153 = vpack.c.bf16 %v1350, %v1349
      %v2154 = vpack.c.bf16 %v1352, %v1351
      %v2155 = vpack.c.bf16 %v1354, %v1353
      %v2156 = vpack.c.bf16 %v1356, %v1355
      %v2157 = vpack.c.bf16 %v1358, %v1357
      %v2158 = vpack.c.bf16 %v1360, %v1359
      %v2159 = vpack.c.bf16 %v1362, %v1361
      %v2160 = vpack.c.bf16 %v1364, %v1363
      %v2161 = vpack.c.bf16 %v1366, %v1365
      %v2162 = vpack.c.bf16 %v1368, %v1367
      %v2163 = vpack.c.bf16 %v1370, %v1369
      %v2164 = vpack.c.bf16 %v1372, %v1371
      %v2165 = vpack.c.bf16 %v1374, %v1373
      %v2166 = vpack.c.bf16 %v1376, %v1375
      %v2167 = vpack.c.bf16 %v1378, %v1377
      %v2168 = vpack.c.bf16 %v1380, %v1379
      %v2169 = vpack.c.bf16 %v1382, %v1381
      %v2170 = vpack.c.bf16 %v1384, %v1383
      %v2171 = vpack.c.bf16 %v1386, %v1385
      %v2172 = vpack.c.bf16 %v1388, %v1387
      %v2173 = vpack.c.bf16 %v1390, %v1389
      %v2174 = vpack.c.bf16 %v1392, %v1391
      %v2175 = vpack.c.bf16 %v1394, %v1393
      %v2176 = vpack.c.bf16 %v1396, %v1395
      %v2177 = vpack.c.bf16 %v1398, %v1397
      %v2178 = vpack.c.bf16 %v1400, %v1399
      %v2179 = vpack.c.bf16 %v1402, %v1401
      %v2180 = vpack.c.bf16 %v1404, %v1403
      %v2181 = vpack.c.bf16 %v1406, %v1405
      %v2182 = vpack.c.bf16 %v1408, %v1407
      %v2183 = vpack.c.bf16 %v1410, %v1409
      %v2184 = vpack.c.bf16 %v1412, %v1411
      %v2185 = vpack.c.bf16 %v1414, %v1413
      %v2186 = vpack.c.bf16 %v1416, %v1415
      %v2187 = vpack.c.bf16 %v1418, %v1417
      %v2188 = vpack.c.bf16 %v1420, %v1419
      %v2189 = vpack.c.bf16 %v1422, %v1421
      %v2190 = vpack.c.bf16 %v1424, %v1423
      %v2191 = vpack.c.bf16 %v1426, %v1425
      %v2192 = vpack.c.bf16 %v1428, %v1427
      %v2193 = vpack.c.bf16 %v1430, %v1429
      %v2194 = vpack.c.bf16 %v1432, %v1431
      %v2195 = vpack.c.bf16 %v1434, %v1433
      %v2196 = vpack.c.bf16 %v1436, %v1435
      %v2197 = vpack.c.bf16 %v1438, %v1437
      %v2198 = vpack.c.bf16 %v1440, %v1439
      %v2199 = vpack.c.bf16 %v1442, %v1441
      %v2200 = vpack.c.bf16 %v1444, %v1443
      %v2201 = vpack.c.bf16 %v1446, %v1445
      %v2202 = vpack.c.bf16 %v1448, %v1447
      %v2203 = vpack.c.bf16 %v1450, %v1449
      %v2204 = vpack.c.bf16 %v1452, %v1451
      %v2205 = vpack.c.bf16 %v1454, %v1453
      %v2206 = vpack.c.bf16 %v1456, %v1455
      %v2207 = vpack.c.bf16 %v1458, %v1457
      %v2208 = vpack.c.bf16 %v1460, %v1459
      %v2209 = vpack.c.bf16 %v1462, %v1461
      %v2210 = vpack.c.bf16 %v1464, %v1463
      %v2211 = vpack.c.bf16 %v1466, %v1465
      %v2212 = vpack.c.bf16 %v1468, %v1467
      %v2213 = vpack.c.bf16 %v1470, %v1469
      %v2214 = vpack.c.bf16 %v1472, %v1471
      %v2215 = vpack.c.bf16 %v1474, %v1473
      %v2216 = vpack.c.bf16 %v1476, %v1475
      %v2217 = vpack.c.bf16 %v1478, %v1477
      %v2218 = vpack.c.bf16 %v1480, %v1479
      %v2219 = vpack.c.bf16 %v1482, %v1481
      %v2220 = vpack.c.bf16 %v1484, %v1483
      %v2221 = vpack.c.bf16 %v1486, %v1485
      %v2222 = vpack.c.bf16 %v1488, %v1487
      %v2223 = vpack.c.bf16 %v1490, %v1489
      %v2224 = vpack.c.bf16 %v1492, %v1491
      %v2225 = vpack.c.bf16 %v1494, %v1493
      %v2226 = vpack.c.bf16 %v1496, %v1495
      %v2227 = vpack.c.bf16 %v1498, %v1497
      %v2228 = vpack.c.bf16 %v1500, %v1499
      %v2229 = vpack.c.bf16 %v1502, %v1501
      %v2230 = vpack.c.bf16 %v1504, %v1503
      %v2231 = vpack.c.bf16 %v1506, %v1505
      %v2232 = vpack.c.bf16 %v1508, %v1507
      %v2233 = vpack.c.bf16 %v1510, %v1509
      %v2234 = vpack.c.bf16 %v1512, %v1511
      %v2235 = vpack.c.bf16 %v1514, %v1513
      %v2236 = vpack.c.bf16 %v1516, %v1515
      %v2237 = vpack.c.bf16 %v1518, %v1517
      %v2238 = vpack.c.bf16 %v1520, %v1519
      %v2239 = vpack.c.bf16 %v1522, %v1521
      %v2240 = vpack.c.bf16 %v1524, %v1523
      %v2241 = vpack.c.bf16 %v1526, %v1525
      %v2242 = vpack.c.bf16 %v1528, %v1527
      %v2243 = vpack.c.bf16 %v1530, %v1529
      %v2244 = vpack.c.bf16 %v1532, %v1531
      %v2245 = vpack.c.bf16 %v1534, %v1533
      %v2246 = vpack.c.bf16 %v1536, %v1535
      %v2247 = vpack.c.bf16 %v1538, %v1537
      %v2248 = vpack.c.bf16 %v1540, %v1539
      %v2249 = vpack.c.bf16 %v1542, %v1541
      %v2250 = vpack.c.bf16 %v1544, %v1543
      %v2251 = vpack.c.bf16 %v1546, %v1545
      %v2252 = vpack.c.bf16 %v1548, %v1547
      %v2253 = vpack.c.bf16 %v1550, %v1549
      %v2254 = vpack.c.bf16 %v1552, %v1551
      %v2255 = vpack.c.bf16 %v1554, %v1553
      %v2256 = vpack.c.bf16 %v1556, %v1555
      %v2257 = vpack.c.bf16 %v1558, %v1557
      %v2258 = vpack.c.bf16 %v1560, %v1559
      %v2259 = vpack.c.bf16 %v1562, %v1561
      %v2260 = vpack.c.bf16 %v1564, %v1563
      %v2261 = vpack.c.bf16 %v1566, %v1565
      %v2262 = vpack.c.bf16 %v1568, %v1567
      %v2263 = vpack.c.bf16 %v1570, %v1569
      %v2264 = vpack.c.bf16 %v1572, %v1571
      %v2265 = vpack.c.bf16 %v1574, %v1573
      %v2266 = vpack.c.bf16 %v1576, %v1575
      %v2267 = vpack.c.bf16 %v1578, %v1577
      %v2268 = vpack.c.bf16 %v1580, %v1579
      %v2269 = vpack.c.bf16 %v1582, %v1581
      %v2270 = vpack.c.bf16 %v1584, %v1583
      %v2271 = vpack.c.bf16 %v1586, %v1585
      %v2272 = vpack.c.bf16 %v1588, %v1587
      %v2273 = vpack.c.bf16 %v1590, %v1589
      %v2274 = vpack.c.bf16 %v1592, %v1591
      %v2275 = vpack.c.bf16 %v1594, %v1593
      %v2276 = vpack.c.bf16 %v1596, %v1595
      %v2277 = vpack.c.bf16 %v1598, %v1597
      %v2278 = vpack.c.bf16 %v1600, %v1599
      %v2279 = vpack.c.bf16 %v1602, %v1601
      %v2280 = vpack.c.bf16 %v1604, %v1603
      %v2281 = vpack.c.bf16 %v1606, %v1605
      %v2282 = vld [vmem:[%s1] sm:$0xff]
      %v2283 = vld [vmem:[%s1 + $0x8] sm:$0xff]
      %v2284 = vld [vmem:[%s1 + $0x10] sm:$0xff]
      %v2285 = vld [vmem:[%s1 + $0x18] sm:$0xff]
      %v2286 = vld [vmem:[%s1 + $0x20] sm:$0xff]
      %v2287 = vld [vmem:[%s1 + $0x28] sm:$0xff]
      %v2288 = vld [vmem:[%s1 + $0x30] sm:$0xff]
      %v2289 = vld [vmem:[%s1 + $0x38] sm:$0xff]
      %v2290 = vld [vmem:[%s1 + $0x40] sm:$0xff]
      %v2291 = vld [vmem:[%s1 + $0x48] sm:$0xff]
      %v2292 = vld [vmem:[%s1 + $0x50] sm:$0xff]
      %v2293 = vld [vmem:[%s1 + $0x58] sm:$0xff]
      %v2294 = vld [vmem:[%s1 + $0x60] sm:$0xff]
      %v2295 = vld [vmem:[%s1 + $0x68] sm:$0xff]
      %v2296 = vld [vmem:[%s1 + $0x70] sm:$0xff]
      %v2297 = vld [vmem:[%s1 + $0x78] sm:$0xff]
      %v2298 = vld [vmem:[%s1 + $0x80] sm:$0xff]
      %v2299 = vld [vmem:[%s1 + $0x88] sm:$0xff]
      %v2300 = vld [vmem:[%s1 + $0x90] sm:$0xff]
      %v2301 = vld [vmem:[%s1 + $0x98] sm:$0xff]
      %v2302 = vld [vmem:[%s1 + $0xa0] sm:$0xff]
      %v2303 = vld [vmem:[%s1 + $0xa8] sm:$0xff]
      %v2304 = vld [vmem:[%s1 + $0xb0] sm:$0xff]
      %v2305 = vld [vmem:[%s1 + $0xb8] sm:$0xff]
      %v2306 = vld [vmem:[%s1 + $0xc0] sm:$0xff]
      %v2307 = vld [vmem:[%s1 + $0xc8] sm:$0xff]
      %v2308 = vld [vmem:[%s1 + $0xd0] sm:$0xff]
      %v2309 = vld [vmem:[%s1 + $0xd8] sm:$0xff]
      %v2310 = vld [vmem:[%s1 + $0xe0] sm:$0xff]
      %v2311 = vld [vmem:[%s1 + $0xe8] sm:$0xff]
      %v2312 = vld [vmem:[%s1 + $0xf0] sm:$0xff]
      %v2313 = vld [vmem:[%s1 + $0xf8] sm:$0xff]
      %v2314 = vld [vmem:[%s1 + $0x100] sm:$0xff]
      %v2315 = vld [vmem:[%s1 + $0x108] sm:$0xff]
      %v2316 = vld [vmem:[%s1 + $0x110] sm:$0xff]
      %v2317 = vld [vmem:[%s1 + $0x118] sm:$0xff]
      %v2318 = vld [vmem:[%s1 + $0x120] sm:$0xff]
      %v2319 = vld [vmem:[%s1 + $0x128] sm:$0xff]
      %v2320 = vld [vmem:[%s1 + $0x130] sm:$0xff]
      %v2321 = vld [vmem:[%s1 + $0x138] sm:$0xff]
      %v2322 = vld [vmem:[%s1 + $0x140] sm:$0xff]
      %v2323 = vld [vmem:[%s1 + $0x148] sm:$0xff]
      %v2324 = vld [vmem:[%s1 + $0x150] sm:$0xf]
      %v2325 = vld [vmem:[%s1 + $0x154] sm:$0xff]
      %v2326 = vld [vmem:[%s1 + $0x15c] sm:$0xff]
      %v2327 = vld [vmem:[%s1 + $0x164] sm:$0xff]
      %v2328 = vld [vmem:[%s1 + $0x16c] sm:$0xff]
      %v2329 = vld [vmem:[%s1 + $0x174] sm:$0xff]
      %v2330 = vld [vmem:[%s1 + $0x17c] sm:$0xff]
      %v2331 = vld [vmem:[%s1 + $0x184] sm:$0xff]
      %v2332 = vld [vmem:[%s1 + $0x18c] sm:$0xff]
      %v2333 = vld [vmem:[%s1 + $0x194] sm:$0xff]
      %v2334 = vld [vmem:[%s1 + $0x19c] sm:$0xff]
      %v2335 = vld [vmem:[%s1 + $0x1a4] sm:$0xff]
      %v2336 = vld [vmem:[%s1 + $0x1ac] sm:$0xff]
      %v2337 = vld [vmem:[%s1 + $0x1b4] sm:$0xff]
      %v2338 = vld [vmem:[%s1 + $0x1bc] sm:$0xff]
      %v2339 = vld [vmem:[%s1 + $0x1c4] sm:$0xff]
      %v2340 = vld [vmem:[%s1 + $0x1cc] sm:$0xff]
      %v2341 = vld [vmem:[%s1 + $0x1d4] sm:$0xff]
      %v2342 = vld [vmem:[%s1 + $0x1dc] sm:$0xff]
      %v2343 = vld [vmem:[%s1 + $0x1e4] sm:$0xff]
      %v2344 = vld [vmem:[%s1 + $0x1ec] sm:$0xff]
      %v2345 = vld [vmem:[%s1 + $0x1f4] sm:$0xff]
      %v2346 = vld [vmem:[%s1 + $0x1fc] sm:$0xff]
      %v2347 = vld [vmem:[%s1 + $0x204] sm:$0xff]
      %v2348 = vld [vmem:[%s1 + $0x20c] sm:$0xff]
      %v2349 = vld [vmem:[%s1 + $0x214] sm:$0xff]
      %v2350 = vld [vmem:[%s1 + $0x21c] sm:$0xff]
      %v2351 = vld [vmem:[%s1 + $0x224] sm:$0xff]
      %v2352 = vld [vmem:[%s1 + $0x22c] sm:$0xff]
      %v2353 = vld [vmem:[%s1 + $0x234] sm:$0xff]
      %v2354 = vld [vmem:[%s1 + $0x23c] sm:$0xff]
      %v2355 = vld [vmem:[%s1 + $0x244] sm:$0xff]
      %v2356 = vld [vmem:[%s1 + $0x24c] sm:$0xff]
      %v2357 = vld [vmem:[%s1 + $0x254] sm:$0xff]
      %v2358 = vld [vmem:[%s1 + $0x25c] sm:$0xff]
      %v2359 = vld [vmem:[%s1 + $0x264] sm:$0xff]
      %v2360 = vld [vmem:[%s1 + $0x26c] sm:$0xff]
      %v2361 = vld [vmem:[%s1 + $0x274] sm:$0xff]
      %v2362 = vld [vmem:[%s1 + $0x27c] sm:$0xff]
      %v2363 = vld [vmem:[%s1 + $0x284] sm:$0xff]
      %v2364 = vld [vmem:[%s1 + $0x28c] sm:$0xff]
      %v2365 = vld [vmem:[%s1 + $0x294] sm:$0xff]
      %v2366 = vld [vmem:[%s1 + $0x29c] sm:$0xff]
      %v2367 = vld [vmem:[%s1 + $0x2a4] sm:$0xf]
      %v2368 = vld [vmem:[%s1 + $0x2a8] sm:$0xff]
      %v2369 = vld [vmem:[%s1 + $0x2b0] sm:$0xff]
      %v2370 = vld [vmem:[%s1 + $0x2b8] sm:$0xff]
      %v2371 = vld [vmem:[%s1 + $0x2c0] sm:$0xff]
      %v2372 = vld [vmem:[%s1 + $0x2c8] sm:$0xff]
      %v2373 = vld [vmem:[%s1 + $0x2d0] sm:$0xff]
      %v2374 = vld [vmem:[%s1 + $0x2d8] sm:$0xff]
      %v2375 = vld [vmem:[%s1 + $0x2e0] sm:$0xff]
      %v2376 = vld [vmem:[%s1 + $0x2e8] sm:$0xff]
      %v2377 = vld [vmem:[%s1 + $0x2f0] sm:$0xff]
      %v2378 = vld [vmem:[%s1 + $0x2f8] sm:$0xff]
      %v2379 = vld [vmem:[%s1 + $0x300] sm:$0xff]
      %v2380 = vld [vmem:[%s1 + $0x308] sm:$0xff]
      %v2381 = vld [vmem:[%s1 + $0x310] sm:$0xff]
      %v2382 = vld [vmem:[%s1 + $0x318] sm:$0xff]
      %v2383 = vld [vmem:[%s1 + $0x320] sm:$0xff]
      %v2384 = vld [vmem:[%s1 + $0x328] sm:$0xff]
      %v2385 = vld [vmem:[%s1 + $0x330] sm:$0xff]
      %v2386 = vld [vmem:[%s1 + $0x338] sm:$0xff]
      %v2387 = vld [vmem:[%s1 + $0x340] sm:$0xff]
      %v2388 = vld [vmem:[%s1 + $0x348] sm:$0xff]
      %v2389 = vld [vmem:[%s1 + $0x350] sm:$0xff]
      %v2390 = vld [vmem:[%s1 + $0x358] sm:$0xff]
      %v2391 = vld [vmem:[%s1 + $0x360] sm:$0xff]
      %v2392 = vld [vmem:[%s1 + $0x368] sm:$0xff]
      %v2393 = vld [vmem:[%s1 + $0x370] sm:$0xff]
      %v2394 = vld [vmem:[%s1 + $0x378] sm:$0xff]
      %v2395 = vld [vmem:[%s1 + $0x380] sm:$0xff]
      %v2396 = vld [vmem:[%s1 + $0x388] sm:$0xff]
      %v2397 = vld [vmem:[%s1 + $0x390] sm:$0xff]
      %v2398 = vld [vmem:[%s1 + $0x398] sm:$0xff]
      %v2399 = vld [vmem:[%s1 + $0x3a0] sm:$0xff]
      %v2400 = vld [vmem:[%s1 + $0x3a8] sm:$0xff]
      %v2401 = vld [vmem:[%s1 + $0x3b0] sm:$0xff]
      %v2402 = vld [vmem:[%s1 + $0x3b8] sm:$0xff]
      %v2403 = vld [vmem:[%s1 + $0x3c0] sm:$0xff]
      %v2404 = vld [vmem:[%s1 + $0x3c8] sm:$0xff]
      %v2405 = vld [vmem:[%s1 + $0x3d0] sm:$0xff]
      %v2406 = vld [vmem:[%s1 + $0x3d8] sm:$0xff]
      %v2407 = vld [vmem:[%s1 + $0x3e0] sm:$0xff]
      %v2408 = vld [vmem:[%s1 + $0x3e8] sm:$0xff]
      %v2409 = vld [vmem:[%s1 + $0x3f0] sm:$0xff]
      %v2410 = vld [vmem:[%s1 + $0x3f8] sm:$0xf]
      %v2411 = vld [vmem:[%s1 + $0x3fc] sm:$0xff]
      %v2412 = vld [vmem:[%s1 + $0x404] sm:$0xff]
      %v2413 = vld [vmem:[%s1 + $0x40c] sm:$0xff]
      %v2414 = vld [vmem:[%s1 + $0x414] sm:$0xff]
      %v2415 = vld [vmem:[%s1 + $0x41c] sm:$0xff]
      %v2416 = vld [vmem:[%s1 + $0x424] sm:$0xff]
      %v2417 = vld [vmem:[%s1 + $0x42c] sm:$0xff]
      %v2418 = vld [vmem:[%s1 + $0x434] sm:$0xff]
      %v2419 = vld [vmem:[%s1 + $0x43c] sm:$0xff]
      %v2420 = vld [vmem:[%s1 + $0x444] sm:$0xff]
      %v2421 = vld [vmem:[%s1 + $0x44c] sm:$0xff]
      %v2422 = vld [vmem:[%s1 + $0x454] sm:$0xff]
      %v2423 = vld [vmem:[%s1 + $0x45c] sm:$0xff]
      %v2424 = vld [vmem:[%s1 + $0x464] sm:$0xff]
      %v2425 = vld [vmem:[%s1 + $0x46c] sm:$0xff]
      %v2426 = vld [vmem:[%s1 + $0x474] sm:$0xff]
      %v2427 = vld [vmem:[%s1 + $0x47c] sm:$0xff]
      %v2428 = vld [vmem:[%s1 + $0x484] sm:$0xff]
      %v2429 = vld [vmem:[%s1 + $0x48c] sm:$0xff]
      %v2430 = vld [vmem:[%s1 + $0x494] sm:$0xff]
      %v2431 = vld [vmem:[%s1 + $0x49c] sm:$0xff]
      %v2432 = vld [vmem:[%s1 + $0x4a4] sm:$0xff]
      %v2433 = vld [vmem:[%s1 + $0x4ac] sm:$0xff]
      %v2434 = vld [vmem:[%s1 + $0x4b4] sm:$0xff]
      %v2435 = vld [vmem:[%s1 + $0x4bc] sm:$0xff]
      %v2436 = vld [vmem:[%s1 + $0x4c4] sm:$0xff]
      %v2437 = vld [vmem:[%s1 + $0x4cc] sm:$0xff]
      %v2438 = vld [vmem:[%s1 + $0x4d4] sm:$0xff]
      %v2439 = vld [vmem:[%s1 + $0x4dc] sm:$0xff]
      %v2440 = vld [vmem:[%s1 + $0x4e4] sm:$0xff]
      %v2441 = vld [vmem:[%s1 + $0x4ec] sm:$0xff]
      %v2442 = vld [vmem:[%s1 + $0x4f4] sm:$0xff]
      %v2443 = vld [vmem:[%s1 + $0x4fc] sm:$0xff]
      %v2444 = vld [vmem:[%s1 + $0x504] sm:$0xff]
      %v2445 = vld [vmem:[%s1 + $0x50c] sm:$0xff]
      %v2446 = vld [vmem:[%s1 + $0x514] sm:$0xff]
      %v2447 = vld [vmem:[%s1 + $0x51c] sm:$0xff]
      %v2448 = vld [vmem:[%s1 + $0x524] sm:$0xff]
      %v2449 = vld [vmem:[%s1 + $0x52c] sm:$0xff]
      %v2450 = vld [vmem:[%s1 + $0x534] sm:$0xff]
      %v2451 = vld [vmem:[%s1 + $0x53c] sm:$0xff]
      %v2452 = vld [vmem:[%s1 + $0x544] sm:$0xff]
      %v2453 = vld [vmem:[%s1 + $0x54c] sm:$0xf]
      %v2454 = vld [vmem:[%s1 + $0x550] sm:$0xff]
      %v2455 = vld [vmem:[%s1 + $0x558] sm:$0xff]
      %v2456 = vld [vmem:[%s1 + $0x560] sm:$0xff]
      %v2457 = vld [vmem:[%s1 + $0x568] sm:$0xff]
      %v2458 = vld [vmem:[%s1 + $0x570] sm:$0xff]
      %v2459 = vld [vmem:[%s1 + $0x578] sm:$0xff]
      %v2460 = vld [vmem:[%s1 + $0x580] sm:$0xff]
      %v2461 = vld [vmem:[%s1 + $0x588] sm:$0xff]
      %v2462 = vld [vmem:[%s1 + $0x590] sm:$0xff]
      %v2463 = vld [vmem:[%s1 + $0x598] sm:$0xff]
      %v2464 = vld [vmem:[%s1 + $0x5a0] sm:$0xff]
      %v2465 = vld [vmem:[%s1 + $0x5a8] sm:$0xff]
      %v2466 = vld [vmem:[%s1 + $0x5b0] sm:$0xff]
      %v2467 = vld [vmem:[%s1 + $0x5b8] sm:$0xff]
      %v2468 = vld [vmem:[%s1 + $0x5c0] sm:$0xff]
      %v2469 = vld [vmem:[%s1 + $0x5c8] sm:$0xff]
      %v2470 = vld [vmem:[%s1 + $0x5d0] sm:$0xff]
      %v2471 = vld [vmem:[%s1 + $0x5d8] sm:$0xff]
      %v2472 = vld [vmem:[%s1 + $0x5e0] sm:$0xff]
      %v2473 = vld [vmem:[%s1 + $0x5e8] sm:$0xff]
      %v2474 = vld [vmem:[%s1 + $0x5f0] sm:$0xff]
      %v2475 = vld [vmem:[%s1 + $0x5f8] sm:$0xff]
      %v2476 = vld [vmem:[%s1 + $0x600] sm:$0xff]
      %v2477 = vld [vmem:[%s1 + $0x608] sm:$0xff]
      %v2478 = vld [vmem:[%s1 + $0x610] sm:$0xff]
      %v2479 = vld [vmem:[%s1 + $0x618] sm:$0xff]
      %v2480 = vld [vmem:[%s1 + $0x620] sm:$0xff]
      %v2481 = vld [vmem:[%s1 + $0x628] sm:$0xff]
      %v2482 = vld [vmem:[%s1 + $0x630] sm:$0xff]
      %v2483 = vld [vmem:[%s1 + $0x638] sm:$0xff]
      %v2484 = vld [vmem:[%s1 + $0x640] sm:$0xff]
      %v2485 = vld [vmem:[%s1 + $0x648] sm:$0xff]
      %v2486 = vld [vmem:[%s1 + $0x650] sm:$0xff]
      %v2487 = vld [vmem:[%s1 + $0x658] sm:$0xff]
      %v2488 = vld [vmem:[%s1 + $0x660] sm:$0xff]
      %v2489 = vld [vmem:[%s1 + $0x668] sm:$0xff]
      %v2490 = vld [vmem:[%s1 + $0x670] sm:$0xff]
      %v2491 = vld [vmem:[%s1 + $0x678] sm:$0xff]
      %v2492 = vld [vmem:[%s1 + $0x680] sm:$0xff]
      %v2493 = vld [vmem:[%s1 + $0x688] sm:$0xff]
      %v2494 = vld [vmem:[%s1 + $0x690] sm:$0xff]
      %v2495 = vld [vmem:[%s1 + $0x698] sm:$0xff]
      %v2496 = vld [vmem:[%s1 + $0x6a0] sm:$0xf]
      %v2497 = vld [vmem:[%s1 + $0x6a4] sm:$0xff]
      %v2498 = vld [vmem:[%s1 + $0x6ac] sm:$0xff]
      %v2499 = vld [vmem:[%s1 + $0x6b4] sm:$0xff]
      %v2500 = vld [vmem:[%s1 + $0x6bc] sm:$0xff]
      %v2501 = vld [vmem:[%s1 + $0x6c4] sm:$0xff]
      %v2502 = vld [vmem:[%s1 + $0x6cc] sm:$0xff]
      %v2503 = vld [vmem:[%s1 + $0x6d4] sm:$0xff]
      %v2504 = vld [vmem:[%s1 + $0x6dc] sm:$0xff]
      %v2505 = vld [vmem:[%s1 + $0x6e4] sm:$0xff]
      %v2506 = vld [vmem:[%s1 + $0x6ec] sm:$0xff]
      %v2507 = vld [vmem:[%s1 + $0x6f4] sm:$0xff]
      %v2508 = vld [vmem:[%s1 + $0x6fc] sm:$0xff]
      %v2509 = vld [vmem:[%s1 + $0x704] sm:$0xff]
      %v2510 = vld [vmem:[%s1 + $0x70c] sm:$0xff]
      %v2511 = vld [vmem:[%s1 + $0x714] sm:$0xff]
      %v2512 = vld [vmem:[%s1 + $0x71c] sm:$0xff]
      %v2513 = vld [vmem:[%s1 + $0x724] sm:$0xff]
      %v2514 = vld [vmem:[%s1 + $0x72c] sm:$0xff]
      %v2515 = vld [vmem:[%s1 + $0x734] sm:$0xff]
      %v2516 = vld [vmem:[%s1 + $0x73c] sm:$0xff]
      %v2517 = vld [vmem:[%s1 + $0x744] sm:$0xff]
      %v2518 = vld [vmem:[%s1 + $0x74c] sm:$0xff]
      %v2519 = vld [vmem:[%s1 + $0x754] sm:$0xff]
      %v2520 = vld [vmem:[%s1 + $0x75c] sm:$0xff]
      %v2521 = vld [vmem:[%s1 + $0x764] sm:$0xff]
      %v2522 = vld [vmem:[%s1 + $0x76c] sm:$0xff]
      %v2523 = vld [vmem:[%s1 + $0x774] sm:$0xff]
      %v2524 = vld [vmem:[%s1 + $0x77c] sm:$0xff]
      %v2525 = vld [vmem:[%s1 + $0x784] sm:$0xff]
      %v2526 = vld [vmem:[%s1 + $0x78c] sm:$0xff]
      %v2527 = vld [vmem:[%s1 + $0x794] sm:$0xff]
      %v2528 = vld [vmem:[%s1 + $0x79c] sm:$0xff]
      %v2529 = vld [vmem:[%s1 + $0x7a4] sm:$0xff]
      %v2530 = vld [vmem:[%s1 + $0x7ac] sm:$0xff]
      %v2531 = vld [vmem:[%s1 + $0x7b4] sm:$0xff]
      %v2532 = vld [vmem:[%s1 + $0x7bc] sm:$0xff]
      %v2533 = vld [vmem:[%s1 + $0x7c4] sm:$0xff]
      %v2534 = vld [vmem:[%s1 + $0x7cc] sm:$0xff]
      %v2535 = vld [vmem:[%s1 + $0x7d4] sm:$0xff]
      %v2536 = vld [vmem:[%s1 + $0x7dc] sm:$0xff]
      %v2537 = vld [vmem:[%s1 + $0x7e4] sm:$0xff]
      %v2538 = vld [vmem:[%s1 + $0x7ec] sm:$0xff]
      %v2539 = vld [vmem:[%s1 + $0x7f4] sm:$0xf]
      %v2540 = vld [vmem:[%s1 + $0x7f8] sm:$0xff]
      %v2541 = vld [vmem:[%s1 + $0x800] sm:$0xff]
      %v2542 = vld [vmem:[%s1 + $0x808] sm:$0xff]
      %v2543 = vld [vmem:[%s1 + $0x810] sm:$0xff]
      %v2544 = vld [vmem:[%s1 + $0x818] sm:$0xff]
      %v2545 = vld [vmem:[%s1 + $0x820] sm:$0xff]
      %v2546 = vld [vmem:[%s1 + $0x828] sm:$0xff]
      %v2547 = vld [vmem:[%s1 + $0x830] sm:$0xff]
      %v2548 = vld [vmem:[%s1 + $0x838] sm:$0xff]
      %v2549 = vld [vmem:[%s1 + $0x840] sm:$0xff]
      %v2550 = vld [vmem:[%s1 + $0x848] sm:$0xff]
      %v2551 = vld [vmem:[%s1 + $0x850] sm:$0xff]
      %v2552 = vld [vmem:[%s1 + $0x858] sm:$0xff]
      %v2553 = vld [vmem:[%s1 + $0x860] sm:$0xff]
      %v2554 = vld [vmem:[%s1 + $0x868] sm:$0xff]
      %v2555 = vld [vmem:[%s1 + $0x870] sm:$0xff]
      %v2556 = vld [vmem:[%s1 + $0x878] sm:$0xff]
      %v2557 = vld [vmem:[%s1 + $0x880] sm:$0xff]
      %v2558 = vld [vmem:[%s1 + $0x888] sm:$0xff]
      %v2559 = vld [vmem:[%s1 + $0x890] sm:$0xff]
      %v2560 = vld [vmem:[%s1 + $0x898] sm:$0xff]
      %v2561 = vld [vmem:[%s1 + $0x8a0] sm:$0xff]
      %v2562 = vld [vmem:[%s1 + $0x8a8] sm:$0xff]
      %v2563 = vld [vmem:[%s1 + $0x8b0] sm:$0xff]
      %v2564 = vld [vmem:[%s1 + $0x8b8] sm:$0xff]
      %v2565 = vld [vmem:[%s1 + $0x8c0] sm:$0xff]
      %v2566 = vld [vmem:[%s1 + $0x8c8] sm:$0xff]
      %v2567 = vld [vmem:[%s1 + $0x8d0] sm:$0xff]
      %v2568 = vld [vmem:[%s1 + $0x8d8] sm:$0xff]
      %v2569 = vld [vmem:[%s1 + $0x8e0] sm:$0xff]
      %v2570 = vld [vmem:[%s1 + $0x8e8] sm:$0xff]
      %v2571 = vld [vmem:[%s1 + $0x8f0] sm:$0xff]
      %v2572 = vld [vmem:[%s1 + $0x8f8] sm:$0xff]
      %v2573 = vld [vmem:[%s1 + $0x900] sm:$0xff]
      %v2574 = vld [vmem:[%s1 + $0x908] sm:$0xff]
      %v2575 = vld [vmem:[%s1 + $0x910] sm:$0xff]
      %v2576 = vld [vmem:[%s1 + $0x918] sm:$0xff]
      %v2577 = vld [vmem:[%s1 + $0x920] sm:$0xff]
      %v2578 = vld [vmem:[%s1 + $0x928] sm:$0xff]
      %v2579 = vld [vmem:[%s1 + $0x930] sm:$0xff]
      %v2580 = vld [vmem:[%s1 + $0x938] sm:$0xff]
      %v2581 = vld [vmem:[%s1 + $0x940] sm:$0xff]
      %v2582 = vld [vmem:[%s1 + $0x948] sm:$0xf]
      %v2583 = vld [vmem:[%s1 + $0x94c] sm:$0xff]
      %v2584 = vld [vmem:[%s1 + $0x954] sm:$0xff]
      %v2585 = vld [vmem:[%s1 + $0x95c] sm:$0xff]
      %v2586 = vld [vmem:[%s1 + $0x964] sm:$0xff]
      %v2587 = vld [vmem:[%s1 + $0x96c] sm:$0xff]
      %v2588 = vld [vmem:[%s1 + $0x974] sm:$0xff]
      %v2589 = vld [vmem:[%s1 + $0x97c] sm:$0xff]
      %v2590 = vld [vmem:[%s1 + $0x984] sm:$0xff]
      %v2591 = vld [vmem:[%s1 + $0x98c] sm:$0xff]
      %v2592 = vld [vmem:[%s1 + $0x994] sm:$0xff]
      %v2593 = vld [vmem:[%s1 + $0x99c] sm:$0xff]
      %v2594 = vld [vmem:[%s1 + $0x9a4] sm:$0xff]
      %v2595 = vld [vmem:[%s1 + $0x9ac] sm:$0xff]
      %v2596 = vld [vmem:[%s1 + $0x9b4] sm:$0xff]
      %v2597 = vld [vmem:[%s1 + $0x9bc] sm:$0xff]
      %v2598 = vld [vmem:[%s1 + $0x9c4] sm:$0xff]
      %v2599 = vld [vmem:[%s1 + $0x9cc] sm:$0xff]
      %v2600 = vld [vmem:[%s1 + $0x9d4] sm:$0xff]
      %v2601 = vld [vmem:[%s1 + $0x9dc] sm:$0xff]
      %v2602 = vld [vmem:[%s1 + $0x9e4] sm:$0xff]
      %v2603 = vld [vmem:[%s1 + $0x9ec] sm:$0xff]
      %v2604 = vld [vmem:[%s1 + $0x9f4] sm:$0xff]
      %v2605 = vld [vmem:[%s1 + $0x9fc] sm:$0xff]
      %v2606 = vld [vmem:[%s1 + $0xa04] sm:$0xff]
      %v2607 = vld [vmem:[%s1 + $0xa0c] sm:$0xff]
      %v2608 = vld [vmem:[%s1 + $0xa14] sm:$0xff]
      %v2609 = vld [vmem:[%s1 + $0xa1c] sm:$0xff]
      %v2610 = vld [vmem:[%s1 + $0xa24] sm:$0xff]
      %v2611 = vld [vmem:[%s1 + $0xa2c] sm:$0xff]
      %v2612 = vld [vmem:[%s1 + $0xa34] sm:$0xff]
      %v2613 = vld [vmem:[%s1 + $0xa3c] sm:$0xff]
      %v2614 = vld [vmem:[%s1 + $0xa44] sm:$0xff]
      %v2615 = vld [vmem:[%s1 + $0xa4c] sm:$0xff]
      %v2616 = vld [vmem:[%s1 + $0xa54] sm:$0xff]
      %v2617 = vld [vmem:[%s1 + $0xa5c] sm:$0xff]
      %v2618 = vld [vmem:[%s1 + $0xa64] sm:$0xff]
      %v2619 = vld [vmem:[%s1 + $0xa6c] sm:$0xff]
      %v2620 = vld [vmem:[%s1 + $0xa74] sm:$0xff]
      %v2621 = vld [vmem:[%s1 + $0xa7c] sm:$0xff]
      %v2622 = vld [vmem:[%s1 + $0xa84] sm:$0xff]
      %v2623 = vld [vmem:[%s1 + $0xa8c] sm:$0xff]
      %v2624 = vld [vmem:[%s1 + $0xa94] sm:$0xff]
      %v2625 = vld [vmem:[%s1 + $0xa9c] sm:$0xf]
      %v2626 = vld [vmem:[%s1 + $0xaa0] sm:$0xff]
      %v2627 = vld [vmem:[%s1 + $0xaa8] sm:$0xff]
      %v2628 = vld [vmem:[%s1 + $0xab0] sm:$0xff]
      %v2629 = vld [vmem:[%s1 + $0xab8] sm:$0xff]
      %v2630 = vld [vmem:[%s1 + $0xac0] sm:$0xff]
      %v2631 = vld [vmem:[%s1 + $0xac8] sm:$0xff]
      %v2632 = vld [vmem:[%s1 + $0xad0] sm:$0xff]
      %v2633 = vld [vmem:[%s1 + $0xad8] sm:$0xff]
      %v2634 = vld [vmem:[%s1 + $0xae0] sm:$0xff]
      %v2635 = vld [vmem:[%s1 + $0xae8] sm:$0xff]
      %v2636 = vld [vmem:[%s1 + $0xaf0] sm:$0xff]
      %v2637 = vld [vmem:[%s1 + $0xaf8] sm:$0xff]
      %v2638 = vld [vmem:[%s1 + $0xb00] sm:$0xff]
      %v2639 = vld [vmem:[%s1 + $0xb08] sm:$0xff]
      %v2640 = vld [vmem:[%s1 + $0xb10] sm:$0xff]
      %v2641 = vld [vmem:[%s1 + $0xb18] sm:$0xff]
      %v2642 = vld [vmem:[%s1 + $0xb20] sm:$0xff]
      %v2643 = vld [vmem:[%s1 + $0xb28] sm:$0xff]
      %v2644 = vld [vmem:[%s1 + $0xb30] sm:$0xff]
      %v2645 = vld [vmem:[%s1 + $0xb38] sm:$0xff]
      %v2646 = vld [vmem:[%s1 + $0xb40] sm:$0xff]
      %v2647 = vld [vmem:[%s1 + $0xb48] sm:$0xff]
      %v2648 = vld [vmem:[%s1 + $0xb50] sm:$0xff]
      %v2649 = vld [vmem:[%s1 + $0xb58] sm:$0xff]
      %v2650 = vld [vmem:[%s1 + $0xb60] sm:$0xff]
      %v2651 = vld [vmem:[%s1 + $0xb68] sm:$0xff]
      %v2652 = vld [vmem:[%s1 + $0xb70] sm:$0xff]
      %v2653 = vld [vmem:[%s1 + $0xb78] sm:$0xff]
      %v2654 = vld [vmem:[%s1 + $0xb80] sm:$0xff]
      %v2655 = vld [vmem:[%s1 + $0xb88] sm:$0xff]
      %v2656 = vld [vmem:[%s1 + $0xb90] sm:$0xff]
      %v2657 = vld [vmem:[%s1 + $0xb98] sm:$0xff]
      %v2658 = vld [vmem:[%s1 + $0xba0] sm:$0xff]
      %v2659 = vld [vmem:[%s1 + $0xba8] sm:$0xff]
      %v2660 = vld [vmem:[%s1 + $0xbb0] sm:$0xff]
      %v2661 = vld [vmem:[%s1 + $0xbb8] sm:$0xff]
      %v2662 = vld [vmem:[%s1 + $0xbc0] sm:$0xff]
      %v2663 = vld [vmem:[%s1 + $0xbc8] sm:$0xff]
      %v2664 = vld [vmem:[%s1 + $0xbd0] sm:$0xff]
      %v2665 = vld [vmem:[%s1 + $0xbd8] sm:$0xff]
      %v2666 = vld [vmem:[%s1 + $0xbe0] sm:$0xff]
      %v2667 = vld [vmem:[%s1 + $0xbe8] sm:$0xff]
      %v2668 = vld [vmem:[%s1 + $0xbf0] sm:$0xf]
      %v2669 = vld [vmem:[%s1 + $0xbf4] sm:$0xff]
      %v2670 = vld [vmem:[%s1 + $0xbfc] sm:$0xff]
      %v2671 = vld [vmem:[%s1 + $0xc04] sm:$0xff]
      %v2672 = vld [vmem:[%s1 + $0xc0c] sm:$0xff]
      %v2673 = vld [vmem:[%s1 + $0xc14] sm:$0xff]
      %v2674 = vld [vmem:[%s1 + $0xc1c] sm:$0xff]
      %v2675 = vld [vmem:[%s1 + $0xc24] sm:$0xff]
      %v2676 = vld [vmem:[%s1 + $0xc2c] sm:$0xff]
      %v2677 = vld [vmem:[%s1 + $0xc34] sm:$0xff]
      %v2678 = vld [vmem:[%s1 + $0xc3c] sm:$0xff]
      %v2679 = vld [vmem:[%s1 + $0xc44] sm:$0xff]
      %v2680 = vld [vmem:[%s1 + $0xc4c] sm:$0xff]
      %v2681 = vld [vmem:[%s1 + $0xc54] sm:$0xff]
      %v2682 = vld [vmem:[%s1 + $0xc5c] sm:$0xff]
      %v2683 = vld [vmem:[%s1 + $0xc64] sm:$0xff]
      %v2684 = vld [vmem:[%s1 + $0xc6c] sm:$0xff]
      %v2685 = vld [vmem:[%s1 + $0xc74] sm:$0xff]
      %v2686 = vld [vmem:[%s1 + $0xc7c] sm:$0xff]
      %v2687 = vld [vmem:[%s1 + $0xc84] sm:$0xff]
      %v2688 = vld [vmem:[%s1 + $0xc8c] sm:$0xff]
      %v2689 = vld [vmem:[%s1 + $0xc94] sm:$0xff]
      %v2690 = vld [vmem:[%s1 + $0xc9c] sm:$0xff]
      %v2691 = vld [vmem:[%s1 + $0xca4] sm:$0xff]
      %v2692 = vld [vmem:[%s1 + $0xcac] sm:$0xff]
      %v2693 = vld [vmem:[%s1 + $0xcb4] sm:$0xff]
      %v2694 = vld [vmem:[%s1 + $0xcbc] sm:$0xff]
      %v2695 = vld [vmem:[%s1 + $0xcc4] sm:$0xff]
      %v2696 = vld [vmem:[%s1 + $0xccc] sm:$0xff]
      %v2697 = vld [vmem:[%s1 + $0xcd4] sm:$0xff]
      %v2698 = vld [vmem:[%s1 + $0xcdc] sm:$0xff]
      %v2699 = vld [vmem:[%s1 + $0xce4] sm:$0xff]
      %v2700 = vld [vmem:[%s1 + $0xcec] sm:$0xff]
      %v2701 = vld [vmem:[%s1 + $0xcf4] sm:$0xff]
      %v2702 = vld [vmem:[%s1 + $0xcfc] sm:$0xff]
      %v2703 = vld [vmem:[%s1 + $0xd04] sm:$0xff]
      %v2704 = vld [vmem:[%s1 + $0xd0c] sm:$0xff]
      %v2705 = vld [vmem:[%s1 + $0xd14] sm:$0xff]
      %v2706 = vld [vmem:[%s1 + $0xd1c] sm:$0xff]
      %v2707 = vld [vmem:[%s1 + $0xd24] sm:$0xff]
      %v2708 = vld [vmem:[%s1 + $0xd2c] sm:$0xff]
      %v2709 = vld [vmem:[%s1 + $0xd34] sm:$0xff]
      %v2710 = vld [vmem:[%s1 + $0xd3c] sm:$0xff]
      %v2711 = vld [vmem:[%s1 + $0xd44] sm:$0xf]
      %v2712 = vld [vmem:[%s1 + $0xd48] sm:$0xff]
      %v2713 = vld [vmem:[%s1 + $0xd50] sm:$0xff]
      %v2714 = vld [vmem:[%s1 + $0xd58] sm:$0xff]
      %v2715 = vld [vmem:[%s1 + $0xd60] sm:$0xff]
      %v2716 = vld [vmem:[%s1 + $0xd68] sm:$0xff]
      %v2717 = vld [vmem:[%s1 + $0xd70] sm:$0xff]
      %v2718 = vld [vmem:[%s1 + $0xd78] sm:$0xff]
      %v2719 = vld [vmem:[%s1 + $0xd80] sm:$0xff]
      %v2720 = vld [vmem:[%s1 + $0xd88] sm:$0xff]
      %v2721 = vld [vmem:[%s1 + $0xd90] sm:$0xff]
      %v2722 = vld [vmem:[%s1 + $0xd98] sm:$0xff]
      %v2723 = vld [vmem:[%s1 + $0xda0] sm:$0xff]
      %v2724 = vld [vmem:[%s1 + $0xda8] sm:$0xff]
      %v2725 = vld [vmem:[%s1 + $0xdb0] sm:$0xff]
      %v2726 = vld [vmem:[%s1 + $0xdb8] sm:$0xff]
      %v2727 = vld [vmem:[%s1 + $0xdc0] sm:$0xff]
      %v2728 = vld [vmem:[%s1 + $0xdc8] sm:$0xff]
      %v2729 = vld [vmem:[%s1 + $0xdd0] sm:$0xff]
      %v2730 = vld [vmem:[%s1 + $0xdd8] sm:$0xff]
      %v2731 = vld [vmem:[%s1 + $0xde0] sm:$0xff]
      %v2732 = vld [vmem:[%s1 + $0xde8] sm:$0xff]
      %v2733 = vld [vmem:[%s1 + $0xdf0] sm:$0xff]
      %v2734 = vld [vmem:[%s1 + $0xdf8] sm:$0xff]
      %v2735 = vld [vmem:[%s1 + $0xe00] sm:$0xff]
      %v2736 = vld [vmem:[%s1 + $0xe08] sm:$0xff]
      %v2737 = vld [vmem:[%s1 + $0xe10] sm:$0xff]
      %v2738 = vld [vmem:[%s1 + $0xe18] sm:$0xff]
      %v2739 = vld [vmem:[%s1 + $0xe20] sm:$0xff]
      %v2740 = vld [vmem:[%s1 + $0xe28] sm:$0xff]
      %v2741 = vld [vmem:[%s1 + $0xe30] sm:$0xff]
      %v2742 = vld [vmem:[%s1 + $0xe38] sm:$0xff]
      %v2743 = vld [vmem:[%s1 + $0xe40] sm:$0xff]
      %v2744 = vld [vmem:[%s1 + $0xe48] sm:$0xff]
      %v2745 = vld [vmem:[%s1 + $0xe50] sm:$0xff]
      %v2746 = vld [vmem:[%s1 + $0xe58] sm:$0xff]
      %v2747 = vld [vmem:[%s1 + $0xe60] sm:$0xff]
      %v2748 = vld [vmem:[%s1 + $0xe68] sm:$0xff]
      %v2749 = vld [vmem:[%s1 + $0xe70] sm:$0xff]
      %v2750 = vld [vmem:[%s1 + $0xe78] sm:$0xff]
      %v2751 = vld [vmem:[%s1 + $0xe80] sm:$0xff]
      %v2752 = vld [vmem:[%s1 + $0xe88] sm:$0xff]
      %v2753 = vld [vmem:[%s1 + $0xe90] sm:$0xff]
      %v2754 = vld [vmem:[%s1 + $0xe98] sm:$0xf]
      %v2755 = vld [vmem:[%s1 + $0xe9c] sm:$0xff]
      %v2756 = vld [vmem:[%s1 + $0xea4] sm:$0xff]
      %v2757 = vld [vmem:[%s1 + $0xeac] sm:$0xff]
      %v2758 = vld [vmem:[%s1 + $0xeb4] sm:$0xff]
      %v2759 = vld [vmem:[%s1 + $0xebc] sm:$0xff]
      %v2760 = vld [vmem:[%s1 + $0xec4] sm:$0xff]
      %v2761 = vld [vmem:[%s1 + $0xecc] sm:$0xff]
      %v2762 = vld [vmem:[%s1 + $0xed4] sm:$0xff]
      %v2763 = vld [vmem:[%s1 + $0xedc] sm:$0xff]
      %v2764 = vld [vmem:[%s1 + $0xee4] sm:$0xff]
      %v2765 = vld [vmem:[%s1 + $0xeec] sm:$0xff]
      %v2766 = vld [vmem:[%s1 + $0xef4] sm:$0xff]
      %v2767 = vld [vmem:[%s1 + $0xefc] sm:$0xff]
      %v2768 = vld [vmem:[%s1 + $0xf04] sm:$0xff]
      %v2769 = vld [vmem:[%s1 + $0xf0c] sm:$0xff]
      %v2770 = vld [vmem:[%s1 + $0xf14] sm:$0xff]
      %v2771 = vld [vmem:[%s1 + $0xf1c] sm:$0xff]
      %v2772 = vld [vmem:[%s1 + $0xf24] sm:$0xff]
      %v2773 = vld [vmem:[%s1 + $0xf2c] sm:$0xff]
      %v2774 = vld [vmem:[%s1 + $0xf34] sm:$0xff]
      %v2775 = vld [vmem:[%s1 + $0xf3c] sm:$0xff]
      %v2776 = vld [vmem:[%s1 + $0xf44] sm:$0xff]
      %v2777 = vld [vmem:[%s1 + $0xf4c] sm:$0xff]
      %v2778 = vld [vmem:[%s1 + $0xf54] sm:$0xff]
      %v2779 = vld [vmem:[%s1 + $0xf5c] sm:$0xff]
      %v2780 = vld [vmem:[%s1 + $0xf64] sm:$0xff]
      %v2781 = vld [vmem:[%s1 + $0xf6c] sm:$0xff]
      %v2782 = vld [vmem:[%s1 + $0xf74] sm:$0xff]
      %v2783 = vld [vmem:[%s1 + $0xf7c] sm:$0xff]
      %v2784 = vld [vmem:[%s1 + $0xf84] sm:$0xff]
      %v2785 = vld [vmem:[%s1 + $0xf8c] sm:$0xff]
      %v2786 = vld [vmem:[%s1 + $0xf94] sm:$0xff]
      %v2787 = vld [vmem:[%s1 + $0xf9c] sm:$0xff]
      %v2788 = vld [vmem:[%s1 + $0xfa4] sm:$0xff]
      %v2789 = vld [vmem:[%s1 + $0xfac] sm:$0xff]
      %v2790 = vld [vmem:[%s1 + $0xfb4] sm:$0xff]
      %v2791 = vld [vmem:[%s1 + $0xfbc] sm:$0xff]
      %v2792 = vld [vmem:[%s1 + $0xfc4] sm:$0xff]
      %v2793 = vld [vmem:[%s1 + $0xfcc] sm:$0xff]
      %v2794 = vld [vmem:[%s1 + $0xfd4] sm:$0xff]
      %v2795 = vld [vmem:[%s1 + $0xfdc] sm:$0xff]
      %v2796 = vld [vmem:[%s1 + $0xfe4] sm:$0xff]
      %v2797 = vld [vmem:[%s1 + $0xfec] sm:$0xf]
      %v2798 = vld [vmem:[%s1 + $0xff0] sm:$0xff]
      %v2799 = vld [vmem:[%s1 + $0xff8] sm:$0xff]
      %v2800 = vld [vmem:[%s1 + $0x1000] sm:$0xff]
      %v2801 = vld [vmem:[%s1 + $0x1008] sm:$0xff]
      %v2802 = vld [vmem:[%s1 + $0x1010] sm:$0xff]
      %v2803 = vld [vmem:[%s1 + $0x1018] sm:$0xff]
      %v2804 = vld [vmem:[%s1 + $0x1020] sm:$0xff]
      %v2805 = vld [vmem:[%s1 + $0x1028] sm:$0xff]
      %v2806 = vld [vmem:[%s1 + $0x1030] sm:$0xff]
      %v2807 = vld [vmem:[%s1 + $0x1038] sm:$0xff]
      %v2808 = vld [vmem:[%s1 + $0x1040] sm:$0xff]
      %v2809 = vld [vmem:[%s1 + $0x1048] sm:$0xff]
      %v2810 = vld [vmem:[%s1 + $0x1050] sm:$0xff]
      %v2811 = vld [vmem:[%s1 + $0x1058] sm:$0xff]
      %v2812 = vld [vmem:[%s1 + $0x1060] sm:$0xff]
      %v2813 = vld [vmem:[%s1 + $0x1068] sm:$0xff]
      %v2814 = vld [vmem:[%s1 + $0x1070] sm:$0xff]
      %v2815 = vld [vmem:[%s1 + $0x1078] sm:$0xff]
      %v2816 = vld [vmem:[%s1 + $0x1080] sm:$0xff]
      %v2817 = vld [vmem:[%s1 + $0x1088] sm:$0xff]
      %v2818 = vld [vmem:[%s1 + $0x1090] sm:$0xff]
      %v2819 = vld [vmem:[%s1 + $0x1098] sm:$0xff]
      %v2820 = vld [vmem:[%s1 + $0x10a0] sm:$0xff]
      %v2821 = vld [vmem:[%s1 + $0x10a8] sm:$0xff]
      %v2822 = vld [vmem:[%s1 + $0x10b0] sm:$0xff]
      %v2823 = vld [vmem:[%s1 + $0x10b8] sm:$0xff]
      %v2824 = vld [vmem:[%s1 + $0x10c0] sm:$0xff]
      %v2825 = vld [vmem:[%s1 + $0x10c8] sm:$0xff]
      %v2826 = vld [vmem:[%s1 + $0x10d0] sm:$0xff]
      %v2827 = vld [vmem:[%s1 + $0x10d8] sm:$0xff]
      %v2828 = vld [vmem:[%s1 + $0x10e0] sm:$0xff]
      %v2829 = vld [vmem:[%s1 + $0x10e8] sm:$0xff]
      %v2830 = vld [vmem:[%s1 + $0x10f0] sm:$0xff]
      %v2831 = vld [vmem:[%s1 + $0x10f8] sm:$0xff]
      %v2832 = vld [vmem:[%s1 + $0x1100] sm:$0xff]
      %v2833 = vld [vmem:[%s1 + $0x1108] sm:$0xff]
      %v2834 = vld [vmem:[%s1 + $0x1110] sm:$0xff]
      %v2835 = vld [vmem:[%s1 + $0x1118] sm:$0xff]
      %v2836 = vld [vmem:[%s1 + $0x1120] sm:$0xff]
      %v2837 = vld [vmem:[%s1 + $0x1128] sm:$0xff]
      %v2838 = vld [vmem:[%s1 + $0x1130] sm:$0xff]
      %v2839 = vld [vmem:[%s1 + $0x1138] sm:$0xff]
      %v2840 = vld [vmem:[%s1 + $0x1140] sm:$0xf]
      %v2841 = vld [vmem:[%s1 + $0x1144] sm:$0xff]
      %v2842 = vld [vmem:[%s1 + $0x114c] sm:$0xff]
      %v2843 = vld [vmem:[%s1 + $0x1154] sm:$0xff]
      %v2844 = vld [vmem:[%s1 + $0x115c] sm:$0xff]
      %v2845 = vld [vmem:[%s1 + $0x1164] sm:$0xff]
      %v2846 = vld [vmem:[%s1 + $0x116c] sm:$0xff]
      %v2847 = vld [vmem:[%s1 + $0x1174] sm:$0xff]
      %v2848 = vld [vmem:[%s1 + $0x117c] sm:$0xff]
      %v2849 = vld [vmem:[%s1 + $0x1184] sm:$0xff]
      %v2850 = vld [vmem:[%s1 + $0x118c] sm:$0xff]
      %v2851 = vld [vmem:[%s1 + $0x1194] sm:$0xff]
      %v2852 = vld [vmem:[%s1 + $0x119c] sm:$0xff]
      %v2853 = vld [vmem:[%s1 + $0x11a4] sm:$0xff]
      %v2854 = vld [vmem:[%s1 + $0x11ac] sm:$0xff]
      %v2855 = vld [vmem:[%s1 + $0x11b4] sm:$0xff]
      %v2856 = vld [vmem:[%s1 + $0x11bc] sm:$0xff]
      %v2857 = vld [vmem:[%s1 + $0x11c4] sm:$0xff]
      %v2858 = vld [vmem:[%s1 + $0x11cc] sm:$0xff]
      %v2859 = vld [vmem:[%s1 + $0x11d4] sm:$0xff]
      %v2860 = vld [vmem:[%s1 + $0x11dc] sm:$0xff]
      %v2861 = vld [vmem:[%s1 + $0x11e4] sm:$0xff]
      %v2862 = vld [vmem:[%s1 + $0x11ec] sm:$0xff]
      %v2863 = vld [vmem:[%s1 + $0x11f4] sm:$0xff]
      %v2864 = vld [vmem:[%s1 + $0x11fc] sm:$0xff]
      %v2865 = vld [vmem:[%s1 + $0x1204] sm:$0xff]
      %v2866 = vld [vmem:[%s1 + $0x120c] sm:$0xff]
      %v2867 = vld [vmem:[%s1 + $0x1214] sm:$0xff]
      %v2868 = vld [vmem:[%s1 + $0x121c] sm:$0xff]
      %v2869 = vld [vmem:[%s1 + $0x1224] sm:$0xff]
      %v2870 = vld [vmem:[%s1 + $0x122c] sm:$0xff]
      %v2871 = vld [vmem:[%s1 + $0x1234] sm:$0xff]
      %v2872 = vld [vmem:[%s1 + $0x123c] sm:$0xff]
      %v2873 = vld [vmem:[%s1 + $0x1244] sm:$0xff]
      %v2874 = vld [vmem:[%s1 + $0x124c] sm:$0xff]
      %v2875 = vld [vmem:[%s1 + $0x1254] sm:$0xff]
      %v2876 = vld [vmem:[%s1 + $0x125c] sm:$0xff]
      %v2877 = vld [vmem:[%s1 + $0x1264] sm:$0xff]
      %v2878 = vld [vmem:[%s1 + $0x126c] sm:$0xff]
      %v2879 = vld [vmem:[%s1 + $0x1274] sm:$0xff]
      %v2880 = vld [vmem:[%s1 + $0x127c] sm:$0xff]
      %v2881 = vld [vmem:[%s1 + $0x1284] sm:$0xff]
      %v2882 = vld [vmem:[%s1 + $0x128c] sm:$0xff]
      %v2883 = vld [vmem:[%s1 + $0x1294] sm:$0xf]
      %v2884 = vld [vmem:[%s1 + $0x1298] sm:$0xff]
      %v2885 = vld [vmem:[%s1 + $0x12a0] sm:$0xff]
      %v2886 = vld [vmem:[%s1 + $0x12a8] sm:$0xff]
      %v2887 = vld [vmem:[%s1 + $0x12b0] sm:$0xff]
      %v2888 = vld [vmem:[%s1 + $0x12b8] sm:$0xff]
      %v2889 = vld [vmem:[%s1 + $0x12c0] sm:$0xff]
      %v2890 = vld [vmem:[%s1 + $0x12c8] sm:$0xff]
      %v2891 = vld [vmem:[%s1 + $0x12d0] sm:$0xff]
      %v2892 = vld [vmem:[%s1 + $0x12d8] sm:$0xff]
      %v2893 = vld [vmem:[%s1 + $0x12e0] sm:$0xff]
      %v2894 = vld [vmem:[%s1 + $0x12e8] sm:$0xff]
      %v2895 = vld [vmem:[%s1 + $0x12f0] sm:$0xff]
      %v2896 = vld [vmem:[%s1 + $0x12f8] sm:$0xff]
      %v2897 = vld [vmem:[%s1 + $0x1300] sm:$0xff]
      %v2898 = vld [vmem:[%s1 + $0x1308] sm:$0xff]
      %v2899 = vld [vmem:[%s1 + $0x1310] sm:$0xff]
      %v2900 = vld [vmem:[%s1 + $0x1318] sm:$0xff]
      %v2901 = vld [vmem:[%s1 + $0x1320] sm:$0xff]
      %v2902 = vld [vmem:[%s1 + $0x1328] sm:$0xff]
      %v2903 = vld [vmem:[%s1 + $0x1330] sm:$0xff]
      %v2904 = vld [vmem:[%s1 + $0x1338] sm:$0xff]
      %v2905 = vld [vmem:[%s1 + $0x1340] sm:$0xff]
      %v2906 = vld [vmem:[%s1 + $0x1348] sm:$0xff]
      %v2907 = vld [vmem:[%s1 + $0x1350] sm:$0xff]
      %v2908 = vld [vmem:[%s1 + $0x1358] sm:$0xff]
      %v2909 = vld [vmem:[%s1 + $0x1360] sm:$0xff]
      %v2910 = vld [vmem:[%s1 + $0x1368] sm:$0xff]
      %v2911 = vld [vmem:[%s1 + $0x1370] sm:$0xff]
      %v2912 = vld [vmem:[%s1 + $0x1378] sm:$0xff]
      %v2913 = vld [vmem:[%s1 + $0x1380] sm:$0xff]
      %v2914 = vld [vmem:[%s1 + $0x1388] sm:$0xff]
      %v2915 = vld [vmem:[%s1 + $0x1390] sm:$0xff]
      %v2916 = vld [vmem:[%s1 + $0x1398] sm:$0xff]
      %v2917 = vld [vmem:[%s1 + $0x13a0] sm:$0xff]
      %v2918 = vld [vmem:[%s1 + $0x13a8] sm:$0xff]
      %v2919 = vld [vmem:[%s1 + $0x13b0] sm:$0xff]
      %v2920 = vld [vmem:[%s1 + $0x13b8] sm:$0xff]
      %v2921 = vld [vmem:[%s1 + $0x13c0] sm:$0xff]
      %v2922 = vld [vmem:[%s1 + $0x13c8] sm:$0xff]
      %v2923 = vld [vmem:[%s1 + $0x13d0] sm:$0xff]
      %v2924 = vld [vmem:[%s1 + $0x13d8] sm:$0xff]
      %v2925 = vld [vmem:[%s1 + $0x13e0] sm:$0xff]
      %v2926 = vld [vmem:[%s1 + $0x13e8] sm:$0xf]
      %v2927 = vld [vmem:[%s1 + $0x13ec] sm:$0xff]
      %v2928 = vld [vmem:[%s1 + $0x13f4] sm:$0xff]
      %v2929 = vld [vmem:[%s1 + $0x13fc] sm:$0xff]
      %v2930 = vld [vmem:[%s1 + $0x1404] sm:$0xff]
      %v2931 = vld [vmem:[%s1 + $0x140c] sm:$0xff]
      %v2932 = vld [vmem:[%s1 + $0x1414] sm:$0xff]
      %v2933 = vld [vmem:[%s1 + $0x141c] sm:$0xff]
      %v2934 = vld [vmem:[%s1 + $0x1424] sm:$0xff]
      %v2935 = vld [vmem:[%s1 + $0x142c] sm:$0xff]
      %v2936 = vld [vmem:[%s1 + $0x1434] sm:$0xff]
      %v2937 = vld [vmem:[%s1 + $0x143c] sm:$0xff]
      %v2938 = vld [vmem:[%s1 + $0x1444] sm:$0xff]
      %v2939 = vld [vmem:[%s1 + $0x144c] sm:$0xff]
      %v2940 = vld [vmem:[%s1 + $0x1454] sm:$0xff]
      %v2941 = vld [vmem:[%s1 + $0x145c] sm:$0xff]
      %v2942 = vld [vmem:[%s1 + $0x1464] sm:$0xff]
      %v2943 = vld [vmem:[%s1 + $0x146c] sm:$0xff]
      %v2944 = vld [vmem:[%s1 + $0x1474] sm:$0xff]
      %v2945 = vld [vmem:[%s1 + $0x147c] sm:$0xff]
      %v2946 = vld [vmem:[%s1 + $0x1484] sm:$0xff]
      %v2947 = vld [vmem:[%s1 + $0x148c] sm:$0xff]
      %v2948 = vld [vmem:[%s1 + $0x1494] sm:$0xff]
      %v2949 = vld [vmem:[%s1 + $0x149c] sm:$0xff]
      %v2950 = vld [vmem:[%s1 + $0x14a4] sm:$0xff]
      %v2951 = vld [vmem:[%s1 + $0x14ac] sm:$0xff]
      %v2952 = vld [vmem:[%s1 + $0x14b4] sm:$0xff]
      %v2953 = vld [vmem:[%s1 + $0x14bc] sm:$0xff]
      %v2954 = vld [vmem:[%s1 + $0x14c4] sm:$0xff]
      %v2955 = vld [vmem:[%s1 + $0x14cc] sm:$0xff]
      %v2956 = vld [vmem:[%s1 + $0x14d4] sm:$0xff]
      %v2957 = vld [vmem:[%s1 + $0x14dc] sm:$0xff]
      %v2958 = vld [vmem:[%s1 + $0x14e4] sm:$0xff]
      %v2959 = vld [vmem:[%s1 + $0x14ec] sm:$0xff]
      %v2960 = vld [vmem:[%s1 + $0x14f4] sm:$0xff]
      %v2961 = vld [vmem:[%s1 + $0x14fc] sm:$0xff]
      %v2962 = vld [vmem:[%s1 + $0x1504] sm:$0xff]
      %v2963 = vld [vmem:[%s1 + $0x150c] sm:$0xff]
      %v2964 = vld [vmem:[%s1 + $0x1514] sm:$0xff]
      %v2965 = vld [vmem:[%s1 + $0x151c] sm:$0xff]
      %v2966 = vld [vmem:[%s1 + $0x1524] sm:$0xff]
      %v2967 = vld [vmem:[%s1 + $0x152c] sm:$0xff]
      %v2968 = vld [vmem:[%s1 + $0x1534] sm:$0xff]
      %v2969 = vld [vmem:[%s1 + $0x153c] sm:$0xf]
      %v2970 = vld [vmem:[%s2] sm:$0xff]
      %v2971 = vld [vmem:[%s2 + $0x8] sm:$0xff]
      %v2972 = vld [vmem:[%s2 + $0x10] sm:$0xff]
      %v2973 = vld [vmem:[%s2 + $0x18] sm:$0xff]
      %v2974 = vld [vmem:[%s2 + $0x20] sm:$0xff]
      %v2975 = vld [vmem:[%s2 + $0x28] sm:$0xff]
      %v2976 = vld [vmem:[%s2 + $0x30] sm:$0xff]
      %v2977 = vld [vmem:[%s2 + $0x38] sm:$0xff]
      %v2978 = vld [vmem:[%s2 + $0x40] sm:$0xff]
      %v2979 = vld [vmem:[%s2 + $0x48] sm:$0xff]
      %v2980 = vld [vmem:[%s2 + $0x50] sm:$0xff]
      %v2981 = vld [vmem:[%s2 + $0x58] sm:$0xff]
      %v2982 = vld [vmem:[%s2 + $0x60] sm:$0xff]
      %v2983 = vld [vmem:[%s2 + $0x68] sm:$0xff]
      %v2984 = vld [vmem:[%s2 + $0x70] sm:$0xff]
      %v2985 = vld [vmem:[%s2 + $0x78] sm:$0xff]
      %2987 = vset.pattern.permute.xlu0 0
      %2988 = vperm.xlu0 %2987, %v2970
      %v2989 = vpop.permute.xlu0 %2988
      %2992 = vset.pattern.permute.xlu0 0
      %2993 = vperm.xlu0 %2992, %v2971
      %v2994 = vpop.permute.xlu0 %2993
      %2997 = vset.pattern.permute.xlu0 0
      %2998 = vperm.xlu0 %2997, %v2972
      %v2999 = vpop.permute.xlu0 %2998
      %3002 = vset.pattern.permute.xlu0 0
      %3003 = vperm.xlu0 %3002, %v2973
      %v3004 = vpop.permute.xlu0 %3003
      %3007 = vset.pattern.permute.xlu0 0
      %3008 = vperm.xlu0 %3007, %v2974
      %v3009 = vpop.permute.xlu0 %3008
      %3012 = vset.pattern.permute.xlu0 0
      %3013 = vperm.xlu0 %3012, %v2975
      %v3014 = vpop.permute.xlu0 %3013
      %3017 = vset.pattern.permute.xlu0 0
      %3018 = vperm.xlu0 %3017, %v2976
      %v3019 = vpop.permute.xlu0 %3018
      %3022 = vset.pattern.permute.xlu0 0
      %3023 = vperm.xlu0 %3022, %v2977
      %v3024 = vpop.permute.xlu0 %3023
      %3027 = vset.pattern.permute.xlu0 0
      %3028 = vperm.xlu0 %3027, %v2978
      %v3029 = vpop.permute.xlu0 %3028
      %3032 = vset.pattern.permute.xlu0 0
      %3033 = vperm.xlu0 %3032, %v2979
      %v3034 = vpop.permute.xlu0 %3033
      %3037 = vset.pattern.permute.xlu0 0
      %3038 = vperm.xlu0 %3037, %v2980
      %v3039 = vpop.permute.xlu0 %3038
      %3042 = vset.pattern.permute.xlu0 0
      %3043 = vperm.xlu0 %3042, %v2981
      %v3044 = vpop.permute.xlu0 %3043
      %3047 = vset.pattern.permute.xlu0 0
      %3048 = vperm.xlu0 %3047, %v2982
      %v3049 = vpop.permute.xlu0 %3048
      %3052 = vset.pattern.permute.xlu0 0
      %3053 = vperm.xlu0 %3052, %v2983
      %v3054 = vpop.permute.xlu0 %3053
      %3057 = vset.pattern.permute.xlu0 0
      %3058 = vperm.xlu0 %3057, %v2984
      %v3059 = vpop.permute.xlu0 %3058
      %3062 = vset.pattern.permute.xlu0 0
      %3063 = vperm.xlu0 %3062, %v2985
      %v3064 = vpop.permute.xlu0 %3063
      %v3754 = vunpack.c.l.b16 %v2282
      %v3755 = vunpack.c.h.b16 %v2282
      %v3756 = vunpack.c.l.b16 %v2283
      %v3757 = vunpack.c.h.b16 %v2283
      %v3758 = vunpack.c.l.b16 %v2284
      %v3759 = vunpack.c.h.b16 %v2284
      %v3760 = vunpack.c.l.b16 %v2285
      %v3761 = vunpack.c.h.b16 %v2285
      %v3762 = vunpack.c.l.b16 %v2286
      %v3763 = vunpack.c.h.b16 %v2286
      %v3764 = vunpack.c.l.b16 %v2287
      %v3765 = vunpack.c.h.b16 %v2287
      %v3766 = vunpack.c.l.b16 %v2288
      %v3767 = vunpack.c.h.b16 %v2288
      %v3768 = vunpack.c.l.b16 %v2289
      %v3769 = vunpack.c.h.b16 %v2289
      %v3770 = vunpack.c.l.b16 %v2290
      %v3771 = vunpack.c.h.b16 %v2290
      %v3772 = vunpack.c.l.b16 %v2291
      %v3773 = vunpack.c.h.b16 %v2291
      %v3774 = vunpack.c.l.b16 %v2292
      %v3775 = vunpack.c.h.b16 %v2292
      %v3776 = vunpack.c.l.b16 %v2293
      %v3777 = vunpack.c.h.b16 %v2293
      %v3778 = vunpack.c.l.b16 %v2294
      %v3779 = vunpack.c.h.b16 %v2294
      %v3780 = vunpack.c.l.b16 %v2295
      %v3781 = vunpack.c.h.b16 %v2295
      %v3782 = vunpack.c.l.b16 %v2296
      %v3783 = vunpack.c.h.b16 %v2296
      %v3784 = vunpack.c.l.b16 %v2297
      %v3785 = vunpack.c.h.b16 %v2297
      %v3786 = vunpack.c.l.b16 %v2298
      %v3787 = vunpack.c.h.b16 %v2298
      %v3788 = vunpack.c.l.b16 %v2299
      %v3789 = vunpack.c.h.b16 %v2299
      %v3790 = vunpack.c.l.b16 %v2300
      %v3791 = vunpack.c.h.b16 %v2300
      %v3792 = vunpack.c.l.b16 %v2301
      %v3793 = vunpack.c.h.b16 %v2301
      %v3794 = vunpack.c.l.b16 %v2302
      %v3795 = vunpack.c.h.b16 %v2302
      %v3796 = vunpack.c.l.b16 %v2303
      %v3797 = vunpack.c.h.b16 %v2303
      %v3798 = vunpack.c.l.b16 %v2304
      %v3799 = vunpack.c.h.b16 %v2304
      %v3800 = vunpack.c.l.b16 %v2305
      %v3801 = vunpack.c.h.b16 %v2305
      %v3802 = vunpack.c.l.b16 %v2306
      %v3803 = vunpack.c.h.b16 %v2306
      %v3804 = vunpack.c.l.b16 %v2307
      %v3805 = vunpack.c.h.b16 %v2307
      %v3806 = vunpack.c.l.b16 %v2308
      %v3807 = vunpack.c.h.b16 %v2308
      %v3808 = vunpack.c.l.b16 %v2309
      %v3809 = vunpack.c.h.b16 %v2309
      %v3810 = vunpack.c.l.b16 %v2310
      %v3811 = vunpack.c.h.b16 %v2310
      %v3812 = vunpack.c.l.b16 %v2311
      %v3813 = vunpack.c.h.b16 %v2311
      %v3814 = vunpack.c.l.b16 %v2312
      %v3815 = vunpack.c.h.b16 %v2312
      %v3816 = vunpack.c.l.b16 %v2313
      %v3817 = vunpack.c.h.b16 %v2313
      %v3818 = vunpack.c.l.b16 %v2314
      %v3819 = vunpack.c.h.b16 %v2314
      %v3820 = vunpack.c.l.b16 %v2315
      %v3821 = vunpack.c.h.b16 %v2315
      %v3822 = vunpack.c.l.b16 %v2316
      %v3823 = vunpack.c.h.b16 %v2316
      %v3824 = vunpack.c.l.b16 %v2317
      %v3825 = vunpack.c.h.b16 %v2317
      %v3826 = vunpack.c.l.b16 %v2318
      %v3827 = vunpack.c.h.b16 %v2318
      %v3828 = vunpack.c.l.b16 %v2319
      %v3829 = vunpack.c.h.b16 %v2319
      %v3830 = vunpack.c.l.b16 %v2320
      %v3831 = vunpack.c.h.b16 %v2320
      %v3832 = vunpack.c.l.b16 %v2321
      %v3833 = vunpack.c.h.b16 %v2321
      %v3834 = vunpack.c.l.b16 %v2322
      %v3835 = vunpack.c.h.b16 %v2322
      %v3836 = vunpack.c.l.b16 %v2323
      %v3837 = vunpack.c.h.b16 %v2323
      %v3838 = vunpack.c.l.b16 %v2324
      %v3839 = vunpack.c.l.b16 %v2325
      %v3840 = vunpack.c.h.b16 %v2325
      %v3841 = vunpack.c.l.b16 %v2326
      %v3842 = vunpack.c.h.b16 %v2326
      %v3843 = vunpack.c.l.b16 %v2327
      %v3844 = vunpack.c.h.b16 %v2327
      %v3845 = vunpack.c.l.b16 %v2328
      %v3846 = vunpack.c.h.b16 %v2328
      %v3847 = vunpack.c.l.b16 %v2329
      %v3848 = vunpack.c.h.b16 %v2329
      %v3849 = vunpack.c.l.b16 %v2330
      %v3850 = vunpack.c.h.b16 %v2330
      %v3851 = vunpack.c.l.b16 %v2331
      %v3852 = vunpack.c.h.b16 %v2331
      %v3853 = vunpack.c.l.b16 %v2332
      %v3854 = vunpack.c.h.b16 %v2332
      %v3855 = vunpack.c.l.b16 %v2333
      %v3856 = vunpack.c.h.b16 %v2333
      %v3857 = vunpack.c.l.b16 %v2334
      %v3858 = vunpack.c.h.b16 %v2334
      %v3859 = vunpack.c.l.b16 %v2335
      %v3860 = vunpack.c.h.b16 %v2335
      %v3861 = vunpack.c.l.b16 %v2336
      %v3862 = vunpack.c.h.b16 %v2336
      %v3863 = vunpack.c.l.b16 %v2337
      %v3864 = vunpack.c.h.b16 %v2337
      %v3865 = vunpack.c.l.b16 %v2338
      %v3866 = vunpack.c.h.b16 %v2338
      %v3867 = vunpack.c.l.b16 %v2339
      %v3868 = vunpack.c.h.b16 %v2339
      %v3869 = vunpack.c.l.b16 %v2340
      %v3870 = vunpack.c.h.b16 %v2340
      %v3871 = vunpack.c.l.b16 %v2341
      %v3872 = vunpack.c.h.b16 %v2341
      %v3873 = vunpack.c.l.b16 %v2342
      %v3874 = vunpack.c.h.b16 %v2342
      %v3875 = vunpack.c.l.b16 %v2343
      %v3876 = vunpack.c.h.b16 %v2343
      %v3877 = vunpack.c.l.b16 %v2344
      %v3878 = vunpack.c.h.b16 %v2344
      %v3879 = vunpack.c.l.b16 %v2345
      %v3880 = vunpack.c.h.b16 %v2345
      %v3881 = vunpack.c.l.b16 %v2346
      %v3882 = vunpack.c.h.b16 %v2346
      %v3883 = vunpack.c.l.b16 %v2347
      %v3884 = vunpack.c.h.b16 %v2347
      %v3885 = vunpack.c.l.b16 %v2348
      %v3886 = vunpack.c.h.b16 %v2348
      %v3887 = vunpack.c.l.b16 %v2349
      %v3888 = vunpack.c.h.b16 %v2349
      %v3889 = vunpack.c.l.b16 %v2350
      %v3890 = vunpack.c.h.b16 %v2350
      %v3891 = vunpack.c.l.b16 %v2351
      %v3892 = vunpack.c.h.b16 %v2351
      %v3893 = vunpack.c.l.b16 %v2352
      %v3894 = vunpack.c.h.b16 %v2352
      %v3895 = vunpack.c.l.b16 %v2353
      %v3896 = vunpack.c.h.b16 %v2353
      %v3897 = vunpack.c.l.b16 %v2354
      %v3898 = vunpack.c.h.b16 %v2354
      %v3899 = vunpack.c.l.b16 %v2355
      %v3900 = vunpack.c.h.b16 %v2355
      %v3901 = vunpack.c.l.b16 %v2356
      %v3902 = vunpack.c.h.b16 %v2356
      %v3903 = vunpack.c.l.b16 %v2357
      %v3904 = vunpack.c.h.b16 %v2357
      %v3905 = vunpack.c.l.b16 %v2358
      %v3906 = vunpack.c.h.b16 %v2358
      %v3907 = vunpack.c.l.b16 %v2359
      %v3908 = vunpack.c.h.b16 %v2359
      %v3909 = vunpack.c.l.b16 %v2360
      %v3910 = vunpack.c.h.b16 %v2360
      %v3911 = vunpack.c.l.b16 %v2361
      %v3912 = vunpack.c.h.b16 %v2361
      %v3913 = vunpack.c.l.b16 %v2362
      %v3914 = vunpack.c.h.b16 %v2362
      %v3915 = vunpack.c.l.b16 %v2363
      %v3916 = vunpack.c.h.b16 %v2363
      %v3917 = vunpack.c.l.b16 %v2364
      %v3918 = vunpack.c.h.b16 %v2364
      %v3919 = vunpack.c.l.b16 %v2365
      %v3920 = vunpack.c.h.b16 %v2365
      %v3921 = vunpack.c.l.b16 %v2366
      %v3922 = vunpack.c.h.b16 %v2366
      %v3923 = vunpack.c.l.b16 %v2367
      %v3924 = vunpack.c.l.b16 %v2368
      %v3925 = vunpack.c.h.b16 %v2368
      %v3926 = vunpack.c.l.b16 %v2369
      %v3927 = vunpack.c.h.b16 %v2369
      %v3928 = vunpack.c.l.b16 %v2370
      %v3929 = vunpack.c.h.b16 %v2370
      %v3930 = vunpack.c.l.b16 %v2371
      %v3931 = vunpack.c.h.b16 %v2371
      %v3932 = vunpack.c.l.b16 %v2372
      %v3933 = vunpack.c.h.b16 %v2372
      %v3934 = vunpack.c.l.b16 %v2373
      %v3935 = vunpack.c.h.b16 %v2373
      %v3936 = vunpack.c.l.b16 %v2374
      %v3937 = vunpack.c.h.b16 %v2374
      %v3938 = vunpack.c.l.b16 %v2375
      %v3939 = vunpack.c.h.b16 %v2375
      %v3940 = vunpack.c.l.b16 %v2376
      %v3941 = vunpack.c.h.b16 %v2376
      %v3942 = vunpack.c.l.b16 %v2377
      %v3943 = vunpack.c.h.b16 %v2377
      %v3944 = vunpack.c.l.b16 %v2378
      %v3945 = vunpack.c.h.b16 %v2378
      %v3946 = vunpack.c.l.b16 %v2379
      %v3947 = vunpack.c.h.b16 %v2379
      %v3948 = vunpack.c.l.b16 %v2380
      %v3949 = vunpack.c.h.b16 %v2380
      %v3950 = vunpack.c.l.b16 %v2381
      %v3951 = vunpack.c.h.b16 %v2381
      %v3952 = vunpack.c.l.b16 %v2382
      %v3953 = vunpack.c.h.b16 %v2382
      %v3954 = vunpack.c.l.b16 %v2383
      %v3955 = vunpack.c.h.b16 %v2383
      %v3956 = vunpack.c.l.b16 %v2384
      %v3957 = vunpack.c.h.b16 %v2384
      %v3958 = vunpack.c.l.b16 %v2385
      %v3959 = vunpack.c.h.b16 %v2385
      %v3960 = vunpack.c.l.b16 %v2386
      %v3961 = vunpack.c.h.b16 %v2386
      %v3962 = vunpack.c.l.b16 %v2387
      %v3963 = vunpack.c.h.b16 %v2387
      %v3964 = vunpack.c.l.b16 %v2388
      %v3965 = vunpack.c.h.b16 %v2388
      %v3966 = vunpack.c.l.b16 %v2389
      %v3967 = vunpack.c.h.b16 %v2389
      %v3968 = vunpack.c.l.b16 %v2390
      %v3969 = vunpack.c.h.b16 %v2390
      %v3970 = vunpack.c.l.b16 %v2391
      %v3971 = vunpack.c.h.b16 %v2391
      %v3972 = vunpack.c.l.b16 %v2392
      %v3973 = vunpack.c.h.b16 %v2392
      %v3974 = vunpack.c.l.b16 %v2393
      %v3975 = vunpack.c.h.b16 %v2393
      %v3976 = vunpack.c.l.b16 %v2394
      %v3977 = vunpack.c.h.b16 %v2394
      %v3978 = vunpack.c.l.b16 %v2395
      %v3979 = vunpack.c.h.b16 %v2395
      %v3980 = vunpack.c.l.b16 %v2396
      %v3981 = vunpack.c.h.b16 %v2396
      %v3982 = vunpack.c.l.b16 %v2397
      %v3983 = vunpack.c.h.b16 %v2397
      %v3984 = vunpack.c.l.b16 %v2398
      %v3985 = vunpack.c.h.b16 %v2398
      %v3986 = vunpack.c.l.b16 %v2399
      %v3987 = vunpack.c.h.b16 %v2399
      %v3988 = vunpack.c.l.b16 %v2400
      %v3989 = vunpack.c.h.b16 %v2400
      %v3990 = vunpack.c.l.b16 %v2401
      %v3991 = vunpack.c.h.b16 %v2401
      %v3992 = vunpack.c.l.b16 %v2402
      %v3993 = vunpack.c.h.b16 %v2402
      %v3994 = vunpack.c.l.b16 %v2403
      %v3995 = vunpack.c.h.b16 %v2403
      %v3996 = vunpack.c.l.b16 %v2404
      %v3997 = vunpack.c.h.b16 %v2404
      %v3998 = vunpack.c.l.b16 %v2405
      %v3999 = vunpack.c.h.b16 %v2405
      %v4000 = vunpack.c.l.b16 %v2406
      %v4001 = vunpack.c.h.b16 %v2406
      %v4002 = vunpack.c.l.b16 %v2407
      %v4003 = vunpack.c.h.b16 %v2407
      %v4004 = vunpack.c.l.b16 %v2408
      %v4005 = vunpack.c.h.b16 %v2408
      %v4006 = vunpack.c.l.b16 %v2409
      %v4007 = vunpack.c.h.b16 %v2409
      %v4008 = vunpack.c.l.b16 %v2410
      %v4009 = vunpack.c.l.b16 %v2411
      %v4010 = vunpack.c.h.b16 %v2411
      %v4011 = vunpack.c.l.b16 %v2412
      %v4012 = vunpack.c.h.b16 %v2412
      %v4013 = vunpack.c.l.b16 %v2413
      %v4014 = vunpack.c.h.b16 %v2413
      %v4015 = vunpack.c.l.b16 %v2414
      %v4016 = vunpack.c.h.b16 %v2414
      %v4017 = vunpack.c.l.b16 %v2415
      %v4018 = vunpack.c.h.b16 %v2415
      %v4019 = vunpack.c.l.b16 %v2416
      %v4020 = vunpack.c.h.b16 %v2416
      %v4021 = vunpack.c.l.b16 %v2417
      %v4022 = vunpack.c.h.b16 %v2417
      %v4023 = vunpack.c.l.b16 %v2418
      %v4024 = vunpack.c.h.b16 %v2418
      %v4025 = vunpack.c.l.b16 %v2419
      %v4026 = vunpack.c.h.b16 %v2419
      %v4027 = vunpack.c.l.b16 %v2420
      %v4028 = vunpack.c.h.b16 %v2420
      %v4029 = vunpack.c.l.b16 %v2421
      %v4030 = vunpack.c.h.b16 %v2421
      %v4031 = vunpack.c.l.b16 %v2422
      %v4032 = vunpack.c.h.b16 %v2422
      %v4033 = vunpack.c.l.b16 %v2423
      %v4034 = vunpack.c.h.b16 %v2423
      %v4035 = vunpack.c.l.b16 %v2424
      %v4036 = vunpack.c.h.b16 %v2424
      %v4037 = vunpack.c.l.b16 %v2425
      %v4038 = vunpack.c.h.b16 %v2425
      %v4039 = vunpack.c.l.b16 %v2426
      %v4040 = vunpack.c.h.b16 %v2426
      %v4041 = vunpack.c.l.b16 %v2427
      %v4042 = vunpack.c.h.b16 %v2427
      %v4043 = vunpack.c.l.b16 %v2428
      %v4044 = vunpack.c.h.b16 %v2428
      %v4045 = vunpack.c.l.b16 %v2429
      %v4046 = vunpack.c.h.b16 %v2429
      %v4047 = vunpack.c.l.b16 %v2430
      %v4048 = vunpack.c.h.b16 %v2430
      %v4049 = vunpack.c.l.b16 %v2431
      %v4050 = vunpack.c.h.b16 %v2431
      %v4051 = vunpack.c.l.b16 %v2432
      %v4052 = vunpack.c.h.b16 %v2432
      %v4053 = vunpack.c.l.b16 %v2433
      %v4054 = vunpack.c.h.b16 %v2433
      %v4055 = vunpack.c.l.b16 %v2434
      %v4056 = vunpack.c.h.b16 %v2434
      %v4057 = vunpack.c.l.b16 %v2435
      %v4058 = vunpack.c.h.b16 %v2435
      %v4059 = vunpack.c.l.b16 %v2436
      %v4060 = vunpack.c.h.b16 %v2436
      %v4061 = vunpack.c.l.b16 %v2437
      %v4062 = vunpack.c.h.b16 %v2437
      %v4063 = vunpack.c.l.b16 %v2438
      %v4064 = vunpack.c.h.b16 %v2438
      %v4065 = vunpack.c.l.b16 %v2439
      %v4066 = vunpack.c.h.b16 %v2439
      %v4067 = vunpack.c.l.b16 %v2440
      %v4068 = vunpack.c.h.b16 %v2440
      %v4069 = vunpack.c.l.b16 %v2441
      %v4070 = vunpack.c.h.b16 %v2441
      %v4071 = vunpack.c.l.b16 %v2442
      %v4072 = vunpack.c.h.b16 %v2442
      %v4073 = vunpack.c.l.b16 %v2443
      %v4074 = vunpack.c.h.b16 %v2443
      %v4075 = vunpack.c.l.b16 %v2444
      %v4076 = vunpack.c.h.b16 %v2444
      %v4077 = vunpack.c.l.b16 %v2445
      %v4078 = vunpack.c.h.b16 %v2445
      %v4079 = vunpack.c.l.b16 %v2446
      %v4080 = vunpack.c.h.b16 %v2446
      %v4081 = vunpack.c.l.b16 %v2447
      %v4082 = vunpack.c.h.b16 %v2447
      %v4083 = vunpack.c.l.b16 %v2448
      %v4084 = vunpack.c.h.b16 %v2448
      %v4085 = vunpack.c.l.b16 %v2449
      %v4086 = vunpack.c.h.b16 %v2449
      %v4087 = vunpack.c.l.b16 %v2450
      %v4088 = vunpack.c.h.b16 %v2450
      %v4089 = vunpack.c.l.b16 %v2451
      %v4090 = vunpack.c.h.b16 %v2451
      %v4091 = vunpack.c.l.b16 %v2452
      %v4092 = vunpack.c.h.b16 %v2452
      %v4093 = vunpack.c.l.b16 %v2453
      %v4094 = vunpack.c.l.b16 %v2454
      %v4095 = vunpack.c.h.b16 %v2454
      %v4096 = vunpack.c.l.b16 %v2455
      %v4097 = vunpack.c.h.b16 %v2455
      %v4098 = vunpack.c.l.b16 %v2456
      %v4099 = vunpack.c.h.b16 %v2456
      %v4100 = vunpack.c.l.b16 %v2457
      %v4101 = vunpack.c.h.b16 %v2457
      %v4102 = vunpack.c.l.b16 %v2458
      %v4103 = vunpack.c.h.b16 %v2458
      %v4104 = vunpack.c.l.b16 %v2459
      %v4105 = vunpack.c.h.b16 %v2459
      %v4106 = vunpack.c.l.b16 %v2460
      %v4107 = vunpack.c.h.b16 %v2460
      %v4108 = vunpack.c.l.b16 %v2461
      %v4109 = vunpack.c.h.b16 %v2461
      %v4110 = vunpack.c.l.b16 %v2462
      %v4111 = vunpack.c.h.b16 %v2462
      %v4112 = vunpack.c.l.b16 %v2463
      %v4113 = vunpack.c.h.b16 %v2463
      %v4114 = vunpack.c.l.b16 %v2464
      %v4115 = vunpack.c.h.b16 %v2464
      %v4116 = vunpack.c.l.b16 %v2465
      %v4117 = vunpack.c.h.b16 %v2465
      %v4118 = vunpack.c.l.b16 %v2466
      %v4119 = vunpack.c.h.b16 %v2466
      %v4120 = vunpack.c.l.b16 %v2467
      %v4121 = vunpack.c.h.b16 %v2467
      %v4122 = vunpack.c.l.b16 %v2468
      %v4123 = vunpack.c.h.b16 %v2468
      %v4124 = vunpack.c.l.b16 %v2469
      %v4125 = vunpack.c.h.b16 %v2469
      %v4126 = vunpack.c.l.b16 %v2470
      %v4127 = vunpack.c.h.b16 %v2470
      %v4128 = vunpack.c.l.b16 %v2471
      %v4129 = vunpack.c.h.b16 %v2471
      %v4130 = vunpack.c.l.b16 %v2472
      %v4131 = vunpack.c.h.b16 %v2472
      %v4132 = vunpack.c.l.b16 %v2473
      %v4133 = vunpack.c.h.b16 %v2473
      %v4134 = vunpack.c.l.b16 %v2474
      %v4135 = vunpack.c.h.b16 %v2474
      %v4136 = vunpack.c.l.b16 %v2475
      %v4137 = vunpack.c.h.b16 %v2475
      %v4138 = vunpack.c.l.b16 %v2476
      %v4139 = vunpack.c.h.b16 %v2476
      %v4140 = vunpack.c.l.b16 %v2477
      %v4141 = vunpack.c.h.b16 %v2477
      %v4142 = vunpack.c.l.b16 %v2478
      %v4143 = vunpack.c.h.b16 %v2478
      %v4144 = vunpack.c.l.b16 %v2479
      %v4145 = vunpack.c.h.b16 %v2479
      %v4146 = vunpack.c.l.b16 %v2480
      %v4147 = vunpack.c.h.b16 %v2480
      %v4148 = vunpack.c.l.b16 %v2481
      %v4149 = vunpack.c.h.b16 %v2481
      %v4150 = vunpack.c.l.b16 %v2482
      %v4151 = vunpack.c.h.b16 %v2482
      %v4152 = vunpack.c.l.b16 %v2483
      %v4153 = vunpack.c.h.b16 %v2483
      %v4154 = vunpack.c.l.b16 %v2484
      %v4155 = vunpack.c.h.b16 %v2484
      %v4156 = vunpack.c.l.b16 %v2485
      %v4157 = vunpack.c.h.b16 %v2485
      %v4158 = vunpack.c.l.b16 %v2486
      %v4159 = vunpack.c.h.b16 %v2486
      %v4160 = vunpack.c.l.b16 %v2487
      %v4161 = vunpack.c.h.b16 %v2487
      %v4162 = vunpack.c.l.b16 %v2488
      %v4163 = vunpack.c.h.b16 %v2488
      %v4164 = vunpack.c.l.b16 %v2489
      %v4165 = vunpack.c.h.b16 %v2489
      %v4166 = vunpack.c.l.b16 %v2490
      %v4167 = vunpack.c.h.b16 %v2490
      %v4168 = vunpack.c.l.b16 %v2491
      %v4169 = vunpack.c.h.b16 %v2491
      %v4170 = vunpack.c.l.b16 %v2492
      %v4171 = vunpack.c.h.b16 %v2492
      %v4172 = vunpack.c.l.b16 %v2493
      %v4173 = vunpack.c.h.b16 %v2493
      %v4174 = vunpack.c.l.b16 %v2494
      %v4175 = vunpack.c.h.b16 %v2494
      %v4176 = vunpack.c.l.b16 %v2495
      %v4177 = vunpack.c.h.b16 %v2495
      %v4178 = vunpack.c.l.b16 %v2496
      %v4179 = vunpack.c.l.b16 %v2497
      %v4180 = vunpack.c.h.b16 %v2497
      %v4181 = vunpack.c.l.b16 %v2498
      %v4182 = vunpack.c.h.b16 %v2498
      %v4183 = vunpack.c.l.b16 %v2499
      %v4184 = vunpack.c.h.b16 %v2499
      %v4185 = vunpack.c.l.b16 %v2500
      %v4186 = vunpack.c.h.b16 %v2500
      %v4187 = vunpack.c.l.b16 %v2501
      %v4188 = vunpack.c.h.b16 %v2501
      %v4189 = vunpack.c.l.b16 %v2502
      %v4190 = vunpack.c.h.b16 %v2502
      %v4191 = vunpack.c.l.b16 %v2503
      %v4192 = vunpack.c.h.b16 %v2503
      %v4193 = vunpack.c.l.b16 %v2504
      %v4194 = vunpack.c.h.b16 %v2504
      %v4195 = vunpack.c.l.b16 %v2505
      %v4196 = vunpack.c.h.b16 %v2505
      %v4197 = vunpack.c.l.b16 %v2506
      %v4198 = vunpack.c.h.b16 %v2506
      %v4199 = vunpack.c.l.b16 %v2507
      %v4200 = vunpack.c.h.b16 %v2507
      %v4201 = vunpack.c.l.b16 %v2508
      %v4202 = vunpack.c.h.b16 %v2508
      %v4203 = vunpack.c.l.b16 %v2509
      %v4204 = vunpack.c.h.b16 %v2509
      %v4205 = vunpack.c.l.b16 %v2510
      %v4206 = vunpack.c.h.b16 %v2510
      %v4207 = vunpack.c.l.b16 %v2511
      %v4208 = vunpack.c.h.b16 %v2511
      %v4209 = vunpack.c.l.b16 %v2512
      %v4210 = vunpack.c.h.b16 %v2512
      %v4211 = vunpack.c.l.b16 %v2513
      %v4212 = vunpack.c.h.b16 %v2513
      %v4213 = vunpack.c.l.b16 %v2514
      %v4214 = vunpack.c.h.b16 %v2514
      %v4215 = vunpack.c.l.b16 %v2515
      %v4216 = vunpack.c.h.b16 %v2515
      %v4217 = vunpack.c.l.b16 %v2516
      %v4218 = vunpack.c.h.b16 %v2516
      %v4219 = vunpack.c.l.b16 %v2517
      %v4220 = vunpack.c.h.b16 %v2517
      %v4221 = vunpack.c.l.b16 %v2518
      %v4222 = vunpack.c.h.b16 %v2518
      %v4223 = vunpack.c.l.b16 %v2519
      %v4224 = vunpack.c.h.b16 %v2519
      %v4225 = vunpack.c.l.b16 %v2520
      %v4226 = vunpack.c.h.b16 %v2520
      %v4227 = vunpack.c.l.b16 %v2521
      %v4228 = vunpack.c.h.b16 %v2521
      %v4229 = vunpack.c.l.b16 %v2522
      %v4230 = vunpack.c.h.b16 %v2522
      %v4231 = vunpack.c.l.b16 %v2523
      %v4232 = vunpack.c.h.b16 %v2523
      %v4233 = vunpack.c.l.b16 %v2524
      %v4234 = vunpack.c.h.b16 %v2524
      %v4235 = vunpack.c.l.b16 %v2525
      %v4236 = vunpack.c.h.b16 %v2525
      %v4237 = vunpack.c.l.b16 %v2526
      %v4238 = vunpack.c.h.b16 %v2526
      %v4239 = vunpack.c.l.b16 %v2527
      %v4240 = vunpack.c.h.b16 %v2527
      %v4241 = vunpack.c.l.b16 %v2528
      %v4242 = vunpack.c.h.b16 %v2528
      %v4243 = vunpack.c.l.b16 %v2529
      %v4244 = vunpack.c.h.b16 %v2529
      %v4245 = vunpack.c.l.b16 %v2530
      %v4246 = vunpack.c.h.b16 %v2530
      %v4247 = vunpack.c.l.b16 %v2531
      %v4248 = vunpack.c.h.b16 %v2531
      %v4249 = vunpack.c.l.b16 %v2532
      %v4250 = vunpack.c.h.b16 %v2532
      %v4251 = vunpack.c.l.b16 %v2533
      %v4252 = vunpack.c.h.b16 %v2533
      %v4253 = vunpack.c.l.b16 %v2534
      %v4254 = vunpack.c.h.b16 %v2534
      %v4255 = vunpack.c.l.b16 %v2535
      %v4256 = vunpack.c.h.b16 %v2535
      %v4257 = vunpack.c.l.b16 %v2536
      %v4258 = vunpack.c.h.b16 %v2536
      %v4259 = vunpack.c.l.b16 %v2537
      %v4260 = vunpack.c.h.b16 %v2537
      %v4261 = vunpack.c.l.b16 %v2538
      %v4262 = vunpack.c.h.b16 %v2538
      %v4263 = vunpack.c.l.b16 %v2539
      %v4264 = vunpack.c.l.b16 %v2540
      %v4265 = vunpack.c.h.b16 %v2540
      %v4266 = vunpack.c.l.b16 %v2541
      %v4267 = vunpack.c.h.b16 %v2541
      %v4268 = vunpack.c.l.b16 %v2542
      %v4269 = vunpack.c.h.b16 %v2542
      %v4270 = vunpack.c.l.b16 %v2543
      %v4271 = vunpack.c.h.b16 %v2543
      %v4272 = vunpack.c.l.b16 %v2544
      %v4273 = vunpack.c.h.b16 %v2544
      %v4274 = vunpack.c.l.b16 %v2545
      %v4275 = vunpack.c.h.b16 %v2545
      %v4276 = vunpack.c.l.b16 %v2546
      %v4277 = vunpack.c.h.b16 %v2546
      %v4278 = vunpack.c.l.b16 %v2547
      %v4279 = vunpack.c.h.b16 %v2547
      %v4280 = vunpack.c.l.b16 %v2548
      %v4281 = vunpack.c.h.b16 %v2548
      %v4282 = vunpack.c.l.b16 %v2549
      %v4283 = vunpack.c.h.b16 %v2549
      %v4284 = vunpack.c.l.b16 %v2550
      %v4285 = vunpack.c.h.b16 %v2550
      %v4286 = vunpack.c.l.b16 %v2551
      %v4287 = vunpack.c.h.b16 %v2551
      %v4288 = vunpack.c.l.b16 %v2552
      %v4289 = vunpack.c.h.b16 %v2552
      %v4290 = vunpack.c.l.b16 %v2553
      %v4291 = vunpack.c.h.b16 %v2553
      %v4292 = vunpack.c.l.b16 %v2554
      %v4293 = vunpack.c.h.b16 %v2554
      %v4294 = vunpack.c.l.b16 %v2555
      %v4295 = vunpack.c.h.b16 %v2555
      %v4296 = vunpack.c.l.b16 %v2556
      %v4297 = vunpack.c.h.b16 %v2556
      %v4298 = vunpack.c.l.b16 %v2557
      %v4299 = vunpack.c.h.b16 %v2557
      %v4300 = vunpack.c.l.b16 %v2558
      %v4301 = vunpack.c.h.b16 %v2558
      %v4302 = vunpack.c.l.b16 %v2559
      %v4303 = vunpack.c.h.b16 %v2559
      %v4304 = vunpack.c.l.b16 %v2560
      %v4305 = vunpack.c.h.b16 %v2560
      %v4306 = vunpack.c.l.b16 %v2561
      %v4307 = vunpack.c.h.b16 %v2561
      %v4308 = vunpack.c.l.b16 %v2562
      %v4309 = vunpack.c.h.b16 %v2562
      %v4310 = vunpack.c.l.b16 %v2563
      %v4311 = vunpack.c.h.b16 %v2563
      %v4312 = vunpack.c.l.b16 %v2564
      %v4313 = vunpack.c.h.b16 %v2564
      %v4314 = vunpack.c.l.b16 %v2565
      %v4315 = vunpack.c.h.b16 %v2565
      %v4316 = vunpack.c.l.b16 %v2566
      %v4317 = vunpack.c.h.b16 %v2566
      %v4318 = vunpack.c.l.b16 %v2567
      %v4319 = vunpack.c.h.b16 %v2567
      %v4320 = vunpack.c.l.b16 %v2568
      %v4321 = vunpack.c.h.b16 %v2568
      %v4322 = vunpack.c.l.b16 %v2569
      %v4323 = vunpack.c.h.b16 %v2569
      %v4324 = vunpack.c.l.b16 %v2570
      %v4325 = vunpack.c.h.b16 %v2570
      %v4326 = vunpack.c.l.b16 %v2571
      %v4327 = vunpack.c.h.b16 %v2571
      %v4328 = vunpack.c.l.b16 %v2572
      %v4329 = vunpack.c.h.b16 %v2572
      %v4330 = vunpack.c.l.b16 %v2573
      %v4331 = vunpack.c.h.b16 %v2573
      %v4332 = vunpack.c.l.b16 %v2574
      %v4333 = vunpack.c.h.b16 %v2574
      %v4334 = vunpack.c.l.b16 %v2575
      %v4335 = vunpack.c.h.b16 %v2575
      %v4336 = vunpack.c.l.b16 %v2576
      %v4337 = vunpack.c.h.b16 %v2576
      %v4338 = vunpack.c.l.b16 %v2577
      %v4339 = vunpack.c.h.b16 %v2577
      %v4340 = vunpack.c.l.b16 %v2578
      %v4341 = vunpack.c.h.b16 %v2578
      %v4342 = vunpack.c.l.b16 %v2579
      %v4343 = vunpack.c.h.b16 %v2579
      %v4344 = vunpack.c.l.b16 %v2580
      %v4345 = vunpack.c.h.b16 %v2580
      %v4346 = vunpack.c.l.b16 %v2581
      %v4347 = vunpack.c.h.b16 %v2581
      %v4348 = vunpack.c.l.b16 %v2582
      %v4349 = vunpack.c.l.b16 %v2583
      %v4350 = vunpack.c.h.b16 %v2583
      %v4351 = vunpack.c.l.b16 %v2584
      %v4352 = vunpack.c.h.b16 %v2584
      %v4353 = vunpack.c.l.b16 %v2585
      %v4354 = vunpack.c.h.b16 %v2585
      %v4355 = vunpack.c.l.b16 %v2586
      %v4356 = vunpack.c.h.b16 %v2586
      %v4357 = vunpack.c.l.b16 %v2587
      %v4358 = vunpack.c.h.b16 %v2587
      %v4359 = vunpack.c.l.b16 %v2588
      %v4360 = vunpack.c.h.b16 %v2588
      %v4361 = vunpack.c.l.b16 %v2589
      %v4362 = vunpack.c.h.b16 %v2589
      %v4363 = vunpack.c.l.b16 %v2590
      %v4364 = vunpack.c.h.b16 %v2590
      %v4365 = vunpack.c.l.b16 %v2591
      %v4366 = vunpack.c.h.b16 %v2591
      %v4367 = vunpack.c.l.b16 %v2592
      %v4368 = vunpack.c.h.b16 %v2592
      %v4369 = vunpack.c.l.b16 %v2593
      %v4370 = vunpack.c.h.b16 %v2593
      %v4371 = vunpack.c.l.b16 %v2594
      %v4372 = vunpack.c.h.b16 %v2594
      %v4373 = vunpack.c.l.b16 %v2595
      %v4374 = vunpack.c.h.b16 %v2595
      %v4375 = vunpack.c.l.b16 %v2596
      %v4376 = vunpack.c.h.b16 %v2596
      %v4377 = vunpack.c.l.b16 %v2597
      %v4378 = vunpack.c.h.b16 %v2597
      %v4379 = vunpack.c.l.b16 %v2598
      %v4380 = vunpack.c.h.b16 %v2598
      %v4381 = vunpack.c.l.b16 %v2599
      %v4382 = vunpack.c.h.b16 %v2599
      %v4383 = vunpack.c.l.b16 %v2600
      %v4384 = vunpack.c.h.b16 %v2600
      %v4385 = vunpack.c.l.b16 %v2601
      %v4386 = vunpack.c.h.b16 %v2601
      %v4387 = vunpack.c.l.b16 %v2602
      %v4388 = vunpack.c.h.b16 %v2602
      %v4389 = vunpack.c.l.b16 %v2603
      %v4390 = vunpack.c.h.b16 %v2603
      %v4391 = vunpack.c.l.b16 %v2604
      %v4392 = vunpack.c.h.b16 %v2604
      %v4393 = vunpack.c.l.b16 %v2605
      %v4394 = vunpack.c.h.b16 %v2605
      %v4395 = vunpack.c.l.b16 %v2606
      %v4396 = vunpack.c.h.b16 %v2606
      %v4397 = vunpack.c.l.b16 %v2607
      %v4398 = vunpack.c.h.b16 %v2607
      %v4399 = vunpack.c.l.b16 %v2608
      %v4400 = vunpack.c.h.b16 %v2608
      %v4401 = vunpack.c.l.b16 %v2609
      %v4402 = vunpack.c.h.b16 %v2609
      %v4403 = vunpack.c.l.b16 %v2610
      %v4404 = vunpack.c.h.b16 %v2610
      %v4405 = vunpack.c.l.b16 %v2611
      %v4406 = vunpack.c.h.b16 %v2611
      %v4407 = vunpack.c.l.b16 %v2612
      %v4408 = vunpack.c.h.b16 %v2612
      %v4409 = vunpack.c.l.b16 %v2613
      %v4410 = vunpack.c.h.b16 %v2613
      %v4411 = vunpack.c.l.b16 %v2614
      %v4412 = vunpack.c.h.b16 %v2614
      %v4413 = vunpack.c.l.b16 %v2615
      %v4414 = vunpack.c.h.b16 %v2615
      %v4415 = vunpack.c.l.b16 %v2616
      %v4416 = vunpack.c.h.b16 %v2616
      %v4417 = vunpack.c.l.b16 %v2617
      %v4418 = vunpack.c.h.b16 %v2617
      %v4419 = vunpack.c.l.b16 %v2618
      %v4420 = vunpack.c.h.b16 %v2618
      %v4421 = vunpack.c.l.b16 %v2619
      %v4422 = vunpack.c.h.b16 %v2619
      %v4423 = vunpack.c.l.b16 %v2620
      %v4424 = vunpack.c.h.b16 %v2620
      %v4425 = vunpack.c.l.b16 %v2621
      %v4426 = vunpack.c.h.b16 %v2621
      %v4427 = vunpack.c.l.b16 %v2622
      %v4428 = vunpack.c.h.b16 %v2622
      %v4429 = vunpack.c.l.b16 %v2623
      %v4430 = vunpack.c.h.b16 %v2623
      %v4431 = vunpack.c.l.b16 %v2624
      %v4432 = vunpack.c.h.b16 %v2624
      %v4433 = vunpack.c.l.b16 %v2625
      %v4434 = vunpack.c.l.b16 %v2626
      %v4435 = vunpack.c.h.b16 %v2626
      %v4436 = vunpack.c.l.b16 %v2627
      %v4437 = vunpack.c.h.b16 %v2627
      %v4438 = vunpack.c.l.b16 %v2628
      %v4439 = vunpack.c.h.b16 %v2628
      %v4440 = vunpack.c.l.b16 %v2629
      %v4441 = vunpack.c.h.b16 %v2629
      %v4442 = vunpack.c.l.b16 %v2630
      %v4443 = vunpack.c.h.b16 %v2630
      %v4444 = vunpack.c.l.b16 %v2631
      %v4445 = vunpack.c.h.b16 %v2631
      %v4446 = vunpack.c.l.b16 %v2632
      %v4447 = vunpack.c.h.b16 %v2632
      %v4448 = vunpack.c.l.b16 %v2633
      %v4449 = vunpack.c.h.b16 %v2633
      %v4450 = vunpack.c.l.b16 %v2634
      %v4451 = vunpack.c.h.b16 %v2634
      %v4452 = vunpack.c.l.b16 %v2635
      %v4453 = vunpack.c.h.b16 %v2635
      %v4454 = vunpack.c.l.b16 %v2636
      %v4455 = vunpack.c.h.b16 %v2636
      %v4456 = vunpack.c.l.b16 %v2637
      %v4457 = vunpack.c.h.b16 %v2637
      %v4458 = vunpack.c.l.b16 %v2638
      %v4459 = vunpack.c.h.b16 %v2638
      %v4460 = vunpack.c.l.b16 %v2639
      %v4461 = vunpack.c.h.b16 %v2639
      %v4462 = vunpack.c.l.b16 %v2640
      %v4463 = vunpack.c.h.b16 %v2640
      %v4464 = vunpack.c.l.b16 %v2641
      %v4465 = vunpack.c.h.b16 %v2641
      %v4466 = vunpack.c.l.b16 %v2642
      %v4467 = vunpack.c.h.b16 %v2642
      %v4468 = vunpack.c.l.b16 %v2643
      %v4469 = vunpack.c.h.b16 %v2643
      %v4470 = vunpack.c.l.b16 %v2644
      %v4471 = vunpack.c.h.b16 %v2644
      %v4472 = vunpack.c.l.b16 %v2645
      %v4473 = vunpack.c.h.b16 %v2645
      %v4474 = vunpack.c.l.b16 %v2646
      %v4475 = vunpack.c.h.b16 %v2646
      %v4476 = vunpack.c.l.b16 %v2647
      %v4477 = vunpack.c.h.b16 %v2647
      %v4478 = vunpack.c.l.b16 %v2648
      %v4479 = vunpack.c.h.b16 %v2648
      %v4480 = vunpack.c.l.b16 %v2649
      %v4481 = vunpack.c.h.b16 %v2649
      %v4482 = vunpack.c.l.b16 %v2650
      %v4483 = vunpack.c.h.b16 %v2650
      %v4484 = vunpack.c.l.b16 %v2651
      %v4485 = vunpack.c.h.b16 %v2651
      %v4486 = vunpack.c.l.b16 %v2652
      %v4487 = vunpack.c.h.b16 %v2652
      %v4488 = vunpack.c.l.b16 %v2653
      %v4489 = vunpack.c.h.b16 %v2653
      %v4490 = vunpack.c.l.b16 %v2654
      %v4491 = vunpack.c.h.b16 %v2654
      %v4492 = vunpack.c.l.b16 %v2655
      %v4493 = vunpack.c.h.b16 %v2655
      %v4494 = vunpack.c.l.b16 %v2656
      %v4495 = vunpack.c.h.b16 %v2656
      %v4496 = vunpack.c.l.b16 %v2657
      %v4497 = vunpack.c.h.b16 %v2657
      %v4498 = vunpack.c.l.b16 %v2658
      %v4499 = vunpack.c.h.b16 %v2658
      %v4500 = vunpack.c.l.b16 %v2659
      %v4501 = vunpack.c.h.b16 %v2659
      %v4502 = vunpack.c.l.b16 %v2660
      %v4503 = vunpack.c.h.b16 %v2660
      %v4504 = vunpack.c.l.b16 %v2661
      %v4505 = vunpack.c.h.b16 %v2661
      %v4506 = vunpack.c.l.b16 %v2662
      %v4507 = vunpack.c.h.b16 %v2662
      %v4508 = vunpack.c.l.b16 %v2663
      %v4509 = vunpack.c.h.b16 %v2663
      %v4510 = vunpack.c.l.b16 %v2664
      %v4511 = vunpack.c.h.b16 %v2664
      %v4512 = vunpack.c.l.b16 %v2665
      %v4513 = vunpack.c.h.b16 %v2665
      %v4514 = vunpack.c.l.b16 %v2666
      %v4515 = vunpack.c.h.b16 %v2666
      %v4516 = vunpack.c.l.b16 %v2667
      %v4517 = vunpack.c.h.b16 %v2667
      %v4518 = vunpack.c.l.b16 %v2668
      %v4519 = vunpack.c.l.b16 %v2669
      %v4520 = vunpack.c.h.b16 %v2669
      %v4521 = vunpack.c.l.b16 %v2670
      %v4522 = vunpack.c.h.b16 %v2670
      %v4523 = vunpack.c.l.b16 %v2671
      %v4524 = vunpack.c.h.b16 %v2671
      %v4525 = vunpack.c.l.b16 %v2672
      %v4526 = vunpack.c.h.b16 %v2672
      %v4527 = vunpack.c.l.b16 %v2673
      %v4528 = vunpack.c.h.b16 %v2673
      %v4529 = vunpack.c.l.b16 %v2674
      %v4530 = vunpack.c.h.b16 %v2674
      %v4531 = vunpack.c.l.b16 %v2675
      %v4532 = vunpack.c.h.b16 %v2675
      %v4533 = vunpack.c.l.b16 %v2676
      %v4534 = vunpack.c.h.b16 %v2676
      %v4535 = vunpack.c.l.b16 %v2677
      %v4536 = vunpack.c.h.b16 %v2677
      %v4537 = vunpack.c.l.b16 %v2678
      %v4538 = vunpack.c.h.b16 %v2678
      %v4539 = vunpack.c.l.b16 %v2679
      %v4540 = vunpack.c.h.b16 %v2679
      %v4541 = vunpack.c.l.b16 %v2680
      %v4542 = vunpack.c.h.b16 %v2680
      %v4543 = vunpack.c.l.b16 %v2681
      %v4544 = vunpack.c.h.b16 %v2681
      %v4545 = vunpack.c.l.b16 %v2682
      %v4546 = vunpack.c.h.b16 %v2682
      %v4547 = vunpack.c.l.b16 %v2683
      %v4548 = vunpack.c.h.b16 %v2683
      %v4549 = vunpack.c.l.b16 %v2684
      %v4550 = vunpack.c.h.b16 %v2684
      %v4551 = vunpack.c.l.b16 %v2685
      %v4552 = vunpack.c.h.b16 %v2685
      %v4553 = vunpack.c.l.b16 %v2686
      %v4554 = vunpack.c.h.b16 %v2686
      %v4555 = vunpack.c.l.b16 %v2687
      %v4556 = vunpack.c.h.b16 %v2687
      %v4557 = vunpack.c.l.b16 %v2688
      %v4558 = vunpack.c.h.b16 %v2688
      %v4559 = vunpack.c.l.b16 %v2689
      %v4560 = vunpack.c.h.b16 %v2689
      %v4561 = vunpack.c.l.b16 %v2690
      %v4562 = vunpack.c.h.b16 %v2690
      %v4563 = vunpack.c.l.b16 %v2691
      %v4564 = vunpack.c.h.b16 %v2691
      %v4565 = vunpack.c.l.b16 %v2692
      %v4566 = vunpack.c.h.b16 %v2692
      %v4567 = vunpack.c.l.b16 %v2693
      %v4568 = vunpack.c.h.b16 %v2693
      %v4569 = vunpack.c.l.b16 %v2694
      %v4570 = vunpack.c.h.b16 %v2694
      %v4571 = vunpack.c.l.b16 %v2695
      %v4572 = vunpack.c.h.b16 %v2695
      %v4573 = vunpack.c.l.b16 %v2696
      %v4574 = vunpack.c.h.b16 %v2696
      %v4575 = vunpack.c.l.b16 %v2697
      %v4576 = vunpack.c.h.b16 %v2697
      %v4577 = vunpack.c.l.b16 %v2698
      %v4578 = vunpack.c.h.b16 %v2698
      %v4579 = vunpack.c.l.b16 %v2699
      %v4580 = vunpack.c.h.b16 %v2699
      %v4581 = vunpack.c.l.b16 %v2700
      %v4582 = vunpack.c.h.b16 %v2700
      %v4583 = vunpack.c.l.b16 %v2701
      %v4584 = vunpack.c.h.b16 %v2701
      %v4585 = vunpack.c.l.b16 %v2702
      %v4586 = vunpack.c.h.b16 %v2702
      %v4587 = vunpack.c.l.b16 %v2703
      %v4588 = vunpack.c.h.b16 %v2703
      %v4589 = vunpack.c.l.b16 %v2704
      %v4590 = vunpack.c.h.b16 %v2704
      %v4591 = vunpack.c.l.b16 %v2705
      %v4592 = vunpack.c.h.b16 %v2705
      %v4593 = vunpack.c.l.b16 %v2706
      %v4594 = vunpack.c.h.b16 %v2706
      %v4595 = vunpack.c.l.b16 %v2707
      %v4596 = vunpack.c.h.b16 %v2707
      %v4597 = vunpack.c.l.b16 %v2708
      %v4598 = vunpack.c.h.b16 %v2708
      %v4599 = vunpack.c.l.b16 %v2709
      %v4600 = vunpack.c.h.b16 %v2709
      %v4601 = vunpack.c.l.b16 %v2710
      %v4602 = vunpack.c.h.b16 %v2710
      %v4603 = vunpack.c.l.b16 %v2711
      %v4604 = vunpack.c.l.b16 %v2712
      %v4605 = vunpack.c.h.b16 %v2712
      %v4606 = vunpack.c.l.b16 %v2713
      %v4607 = vunpack.c.h.b16 %v2713
      %v4608 = vunpack.c.l.b16 %v2714
      %v4609 = vunpack.c.h.b16 %v2714
      %v4610 = vunpack.c.l.b16 %v2715
      %v4611 = vunpack.c.h.b16 %v2715
      %v4612 = vunpack.c.l.b16 %v2716
      %v4613 = vunpack.c.h.b16 %v2716
      %v4614 = vunpack.c.l.b16 %v2717
      %v4615 = vunpack.c.h.b16 %v2717
      %v4616 = vunpack.c.l.b16 %v2718
      %v4617 = vunpack.c.h.b16 %v2718
      %v4618 = vunpack.c.l.b16 %v2719
      %v4619 = vunpack.c.h.b16 %v2719
      %v4620 = vunpack.c.l.b16 %v2720
      %v4621 = vunpack.c.h.b16 %v2720
      %v4622 = vunpack.c.l.b16 %v2721
      %v4623 = vunpack.c.h.b16 %v2721
      %v4624 = vunpack.c.l.b16 %v2722
      %v4625 = vunpack.c.h.b16 %v2722
      %v4626 = vunpack.c.l.b16 %v2723
      %v4627 = vunpack.c.h.b16 %v2723
      %v4628 = vunpack.c.l.b16 %v2724
      %v4629 = vunpack.c.h.b16 %v2724
      %v4630 = vunpack.c.l.b16 %v2725
      %v4631 = vunpack.c.h.b16 %v2725
      %v4632 = vunpack.c.l.b16 %v2726
      %v4633 = vunpack.c.h.b16 %v2726
      %v4634 = vunpack.c.l.b16 %v2727
      %v4635 = vunpack.c.h.b16 %v2727
      %v4636 = vunpack.c.l.b16 %v2728
      %v4637 = vunpack.c.h.b16 %v2728
      %v4638 = vunpack.c.l.b16 %v2729
      %v4639 = vunpack.c.h.b16 %v2729
      %v4640 = vunpack.c.l.b16 %v2730
      %v4641 = vunpack.c.h.b16 %v2730
      %v4642 = vunpack.c.l.b16 %v2731
      %v4643 = vunpack.c.h.b16 %v2731
      %v4644 = vunpack.c.l.b16 %v2732
      %v4645 = vunpack.c.h.b16 %v2732
      %v4646 = vunpack.c.l.b16 %v2733
      %v4647 = vunpack.c.h.b16 %v2733
      %v4648 = vunpack.c.l.b16 %v2734
      %v4649 = vunpack.c.h.b16 %v2734
      %v4650 = vunpack.c.l.b16 %v2735
      %v4651 = vunpack.c.h.b16 %v2735
      %v4652 = vunpack.c.l.b16 %v2736
      %v4653 = vunpack.c.h.b16 %v2736
      %v4654 = vunpack.c.l.b16 %v2737
      %v4655 = vunpack.c.h.b16 %v2737
      %v4656 = vunpack.c.l.b16 %v2738
      %v4657 = vunpack.c.h.b16 %v2738
      %v4658 = vunpack.c.l.b16 %v2739
      %v4659 = vunpack.c.h.b16 %v2739
      %v4660 = vunpack.c.l.b16 %v2740
      %v4661 = vunpack.c.h.b16 %v2740
      %v4662 = vunpack.c.l.b16 %v2741
      %v4663 = vunpack.c.h.b16 %v2741
      %v4664 = vunpack.c.l.b16 %v2742
      %v4665 = vunpack.c.h.b16 %v2742
      %v4666 = vunpack.c.l.b16 %v2743
      %v4667 = vunpack.c.h.b16 %v2743
      %v4668 = vunpack.c.l.b16 %v2744
      %v4669 = vunpack.c.h.b16 %v2744
      %v4670 = vunpack.c.l.b16 %v2745
      %v4671 = vunpack.c.h.b16 %v2745
      %v4672 = vunpack.c.l.b16 %v2746
      %v4673 = vunpack.c.h.b16 %v2746
      %v4674 = vunpack.c.l.b16 %v2747
      %v4675 = vunpack.c.h.b16 %v2747
      %v4676 = vunpack.c.l.b16 %v2748
      %v4677 = vunpack.c.h.b16 %v2748
      %v4678 = vunpack.c.l.b16 %v2749
      %v4679 = vunpack.c.h.b16 %v2749
      %v4680 = vunpack.c.l.b16 %v2750
      %v4681 = vunpack.c.h.b16 %v2750
      %v4682 = vunpack.c.l.b16 %v2751
      %v4683 = vunpack.c.h.b16 %v2751
      %v4684 = vunpack.c.l.b16 %v2752
      %v4685 = vunpack.c.h.b16 %v2752
      %v4686 = vunpack.c.l.b16 %v2753
      %v4687 = vunpack.c.h.b16 %v2753
      %v4688 = vunpack.c.l.b16 %v2754
      %v4689 = vunpack.c.l.b16 %v2755
      %v4690 = vunpack.c.h.b16 %v2755
      %v4691 = vunpack.c.l.b16 %v2756
      %v4692 = vunpack.c.h.b16 %v2756
      %v4693 = vunpack.c.l.b16 %v2757
      %v4694 = vunpack.c.h.b16 %v2757
      %v4695 = vunpack.c.l.b16 %v2758
      %v4696 = vunpack.c.h.b16 %v2758
      %v4697 = vunpack.c.l.b16 %v2759
      %v4698 = vunpack.c.h.b16 %v2759
      %v4699 = vunpack.c.l.b16 %v2760
      %v4700 = vunpack.c.h.b16 %v2760
      %v4701 = vunpack.c.l.b16 %v2761
      %v4702 = vunpack.c.h.b16 %v2761
      %v4703 = vunpack.c.l.b16 %v2762
      %v4704 = vunpack.c.h.b16 %v2762
      %v4705 = vunpack.c.l.b16 %v2763
      %v4706 = vunpack.c.h.b16 %v2763
      %v4707 = vunpack.c.l.b16 %v2764
      %v4708 = vunpack.c.h.b16 %v2764
      %v4709 = vunpack.c.l.b16 %v2765
      %v4710 = vunpack.c.h.b16 %v2765
      %v4711 = vunpack.c.l.b16 %v2766
      %v4712 = vunpack.c.h.b16 %v2766
      %v4713 = vunpack.c.l.b16 %v2767
      %v4714 = vunpack.c.h.b16 %v2767
      %v4715 = vunpack.c.l.b16 %v2768
      %v4716 = vunpack.c.h.b16 %v2768
      %v4717 = vunpack.c.l.b16 %v2769
      %v4718 = vunpack.c.h.b16 %v2769
      %v4719 = vunpack.c.l.b16 %v2770
      %v4720 = vunpack.c.h.b16 %v2770
      %v4721 = vunpack.c.l.b16 %v2771
      %v4722 = vunpack.c.h.b16 %v2771
      %v4723 = vunpack.c.l.b16 %v2772
      %v4724 = vunpack.c.h.b16 %v2772
      %v4725 = vunpack.c.l.b16 %v2773
      %v4726 = vunpack.c.h.b16 %v2773
      %v4727 = vunpack.c.l.b16 %v2774
      %v4728 = vunpack.c.h.b16 %v2774
      %v4729 = vunpack.c.l.b16 %v2775
      %v4730 = vunpack.c.h.b16 %v2775
      %v4731 = vunpack.c.l.b16 %v2776
      %v4732 = vunpack.c.h.b16 %v2776
      %v4733 = vunpack.c.l.b16 %v2777
      %v4734 = vunpack.c.h.b16 %v2777
      %v4735 = vunpack.c.l.b16 %v2778
      %v4736 = vunpack.c.h.b16 %v2778
      %v4737 = vunpack.c.l.b16 %v2779
      %v4738 = vunpack.c.h.b16 %v2779
      %v4739 = vunpack.c.l.b16 %v2780
      %v4740 = vunpack.c.h.b16 %v2780
      %v4741 = vunpack.c.l.b16 %v2781
      %v4742 = vunpack.c.h.b16 %v2781
      %v4743 = vunpack.c.l.b16 %v2782
      %v4744 = vunpack.c.h.b16 %v2782
      %v4745 = vunpack.c.l.b16 %v2783
      %v4746 = vunpack.c.h.b16 %v2783
      %v4747 = vunpack.c.l.b16 %v2784
      %v4748 = vunpack.c.h.b16 %v2784
      %v4749 = vunpack.c.l.b16 %v2785
      %v4750 = vunpack.c.h.b16 %v2785
      %v4751 = vunpack.c.l.b16 %v2786
      %v4752 = vunpack.c.h.b16 %v2786
      %v4753 = vunpack.c.l.b16 %v2787
      %v4754 = vunpack.c.h.b16 %v2787
      %v4755 = vunpack.c.l.b16 %v2788
      %v4756 = vunpack.c.h.b16 %v2788
      %v4757 = vunpack.c.l.b16 %v2789
      %v4758 = vunpack.c.h.b16 %v2789
      %v4759 = vunpack.c.l.b16 %v2790
      %v4760 = vunpack.c.h.b16 %v2790
      %v4761 = vunpack.c.l.b16 %v2791
      %v4762 = vunpack.c.h.b16 %v2791
      %v4763 = vunpack.c.l.b16 %v2792
      %v4764 = vunpack.c.h.b16 %v2792
      %v4765 = vunpack.c.l.b16 %v2793
      %v4766 = vunpack.c.h.b16 %v2793
      %v4767 = vunpack.c.l.b16 %v2794
      %v4768 = vunpack.c.h.b16 %v2794
      %v4769 = vunpack.c.l.b16 %v2795
      %v4770 = vunpack.c.h.b16 %v2795
      %v4771 = vunpack.c.l.b16 %v2796
      %v4772 = vunpack.c.h.b16 %v2796
      %v4773 = vunpack.c.l.b16 %v2797
      %v4774 = vunpack.c.l.b16 %v2798
      %v4775 = vunpack.c.h.b16 %v2798
      %v4776 = vunpack.c.l.b16 %v2799
      %v4777 = vunpack.c.h.b16 %v2799
      %v4778 = vunpack.c.l.b16 %v2800
      %v4779 = vunpack.c.h.b16 %v2800
      %v4780 = vunpack.c.l.b16 %v2801
      %v4781 = vunpack.c.h.b16 %v2801
      %v4782 = vunpack.c.l.b16 %v2802
      %v4783 = vunpack.c.h.b16 %v2802
      %v4784 = vunpack.c.l.b16 %v2803
      %v4785 = vunpack.c.h.b16 %v2803
      %v4786 = vunpack.c.l.b16 %v2804
      %v4787 = vunpack.c.h.b16 %v2804
      %v4788 = vunpack.c.l.b16 %v2805
      %v4789 = vunpack.c.h.b16 %v2805
      %v4790 = vunpack.c.l.b16 %v2806
      %v4791 = vunpack.c.h.b16 %v2806
      %v4792 = vunpack.c.l.b16 %v2807
      %v4793 = vunpack.c.h.b16 %v2807
      %v4794 = vunpack.c.l.b16 %v2808
      %v4795 = vunpack.c.h.b16 %v2808
      %v4796 = vunpack.c.l.b16 %v2809
      %v4797 = vunpack.c.h.b16 %v2809
      %v4798 = vunpack.c.l.b16 %v2810
      %v4799 = vunpack.c.h.b16 %v2810
      %v4800 = vunpack.c.l.b16 %v2811
      %v4801 = vunpack.c.h.b16 %v2811
      %v4802 = vunpack.c.l.b16 %v2812
      %v4803 = vunpack.c.h.b16 %v2812
      %v4804 = vunpack.c.l.b16 %v2813
      %v4805 = vunpack.c.h.b16 %v2813
      %v4806 = vunpack.c.l.b16 %v2814
      %v4807 = vunpack.c.h.b16 %v2814
      %v4808 = vunpack.c.l.b16 %v2815
      %v4809 = vunpack.c.h.b16 %v2815
      %v4810 = vunpack.c.l.b16 %v2816
      %v4811 = vunpack.c.h.b16 %v2816
      %v4812 = vunpack.c.l.b16 %v2817
      %v4813 = vunpack.c.h.b16 %v2817
      %v4814 = vunpack.c.l.b16 %v2818
      %v4815 = vunpack.c.h.b16 %v2818
      %v4816 = vunpack.c.l.b16 %v2819
      %v4817 = vunpack.c.h.b16 %v2819
      %v4818 = vunpack.c.l.b16 %v2820
      %v4819 = vunpack.c.h.b16 %v2820
      %v4820 = vunpack.c.l.b16 %v2821
      %v4821 = vunpack.c.h.b16 %v2821
      %v4822 = vunpack.c.l.b16 %v2822
      %v4823 = vunpack.c.h.b16 %v2822
      %v4824 = vunpack.c.l.b16 %v2823
      %v4825 = vunpack.c.h.b16 %v2823
      %v4826 = vunpack.c.l.b16 %v2824
      %v4827 = vunpack.c.h.b16 %v2824
      %v4828 = vunpack.c.l.b16 %v2825
      %v4829 = vunpack.c.h.b16 %v2825
      %v4830 = vunpack.c.l.b16 %v2826
      %v4831 = vunpack.c.h.b16 %v2826
      %v4832 = vunpack.c.l.b16 %v2827
      %v4833 = vunpack.c.h.b16 %v2827
      %v4834 = vunpack.c.l.b16 %v2828
      %v4835 = vunpack.c.h.b16 %v2828
      %v4836 = vunpack.c.l.b16 %v2829
      %v4837 = vunpack.c.h.b16 %v2829
      %v4838 = vunpack.c.l.b16 %v2830
      %v4839 = vunpack.c.h.b16 %v2830
      %v4840 = vunpack.c.l.b16 %v2831
      %v4841 = vunpack.c.h.b16 %v2831
      %v4842 = vunpack.c.l.b16 %v2832
      %v4843 = vunpack.c.h.b16 %v2832
      %v4844 = vunpack.c.l.b16 %v2833
      %v4845 = vunpack.c.h.b16 %v2833
      %v4846 = vunpack.c.l.b16 %v2834
      %v4847 = vunpack.c.h.b16 %v2834
      %v4848 = vunpack.c.l.b16 %v2835
      %v4849 = vunpack.c.h.b16 %v2835
      %v4850 = vunpack.c.l.b16 %v2836
      %v4851 = vunpack.c.h.b16 %v2836
      %v4852 = vunpack.c.l.b16 %v2837
      %v4853 = vunpack.c.h.b16 %v2837
      %v4854 = vunpack.c.l.b16 %v2838
      %v4855 = vunpack.c.h.b16 %v2838
      %v4856 = vunpack.c.l.b16 %v2839
      %v4857 = vunpack.c.h.b16 %v2839
      %v4858 = vunpack.c.l.b16 %v2840
      %v4859 = vunpack.c.l.b16 %v2841
      %v4860 = vunpack.c.h.b16 %v2841
      %v4861 = vunpack.c.l.b16 %v2842
      %v4862 = vunpack.c.h.b16 %v2842
      %v4863 = vunpack.c.l.b16 %v2843
      %v4864 = vunpack.c.h.b16 %v2843
      %v4865 = vunpack.c.l.b16 %v2844
      %v4866 = vunpack.c.h.b16 %v2844
      %v4867 = vunpack.c.l.b16 %v2845
      %v4868 = vunpack.c.h.b16 %v2845
      %v4869 = vunpack.c.l.b16 %v2846
      %v4870 = vunpack.c.h.b16 %v2846
      %v4871 = vunpack.c.l.b16 %v2847
      %v4872 = vunpack.c.h.b16 %v2847
      %v4873 = vunpack.c.l.b16 %v2848
      %v4874 = vunpack.c.h.b16 %v2848
      %v4875 = vunpack.c.l.b16 %v2849
      %v4876 = vunpack.c.h.b16 %v2849
      %v4877 = vunpack.c.l.b16 %v2850
      %v4878 = vunpack.c.h.b16 %v2850
      %v4879 = vunpack.c.l.b16 %v2851
      %v4880 = vunpack.c.h.b16 %v2851
      %v4881 = vunpack.c.l.b16 %v2852
      %v4882 = vunpack.c.h.b16 %v2852
      %v4883 = vunpack.c.l.b16 %v2853
      %v4884 = vunpack.c.h.b16 %v2853
      %v4885 = vunpack.c.l.b16 %v2854
      %v4886 = vunpack.c.h.b16 %v2854
      %v4887 = vunpack.c.l.b16 %v2855
      %v4888 = vunpack.c.h.b16 %v2855
      %v4889 = vunpack.c.l.b16 %v2856
      %v4890 = vunpack.c.h.b16 %v2856
      %v4891 = vunpack.c.l.b16 %v2857
      %v4892 = vunpack.c.h.b16 %v2857
      %v4893 = vunpack.c.l.b16 %v2858
      %v4894 = vunpack.c.h.b16 %v2858
      %v4895 = vunpack.c.l.b16 %v2859
      %v4896 = vunpack.c.h.b16 %v2859
      %v4897 = vunpack.c.l.b16 %v2860
      %v4898 = vunpack.c.h.b16 %v2860
      %v4899 = vunpack.c.l.b16 %v2861
      %v4900 = vunpack.c.h.b16 %v2861
      %v4901 = vunpack.c.l.b16 %v2862
      %v4902 = vunpack.c.h.b16 %v2862
      %v4903 = vunpack.c.l.b16 %v2863
      %v4904 = vunpack.c.h.b16 %v2863
      %v4905 = vunpack.c.l.b16 %v2864
      %v4906 = vunpack.c.h.b16 %v2864
      %v4907 = vunpack.c.l.b16 %v2865
      %v4908 = vunpack.c.h.b16 %v2865
      %v4909 = vunpack.c.l.b16 %v2866
      %v4910 = vunpack.c.h.b16 %v2866
      %v4911 = vunpack.c.l.b16 %v2867
      %v4912 = vunpack.c.h.b16 %v2867
      %v4913 = vunpack.c.l.b16 %v2868
      %v4914 = vunpack.c.h.b16 %v2868
      %v4915 = vunpack.c.l.b16 %v2869
      %v4916 = vunpack.c.h.b16 %v2869
      %v4917 = vunpack.c.l.b16 %v2870
      %v4918 = vunpack.c.h.b16 %v2870
      %v4919 = vunpack.c.l.b16 %v2871
      %v4920 = vunpack.c.h.b16 %v2871
      %v4921 = vunpack.c.l.b16 %v2872
      %v4922 = vunpack.c.h.b16 %v2872
      %v4923 = vunpack.c.l.b16 %v2873
      %v4924 = vunpack.c.h.b16 %v2873
      %v4925 = vunpack.c.l.b16 %v2874
      %v4926 = vunpack.c.h.b16 %v2874
      %v4927 = vunpack.c.l.b16 %v2875
      %v4928 = vunpack.c.h.b16 %v2875
      %v4929 = vunpack.c.l.b16 %v2876
      %v4930 = vunpack.c.h.b16 %v2876
      %v4931 = vunpack.c.l.b16 %v2877
      %v4932 = vunpack.c.h.b16 %v2877
      %v4933 = vunpack.c.l.b16 %v2878
      %v4934 = vunpack.c.h.b16 %v2878
      %v4935 = vunpack.c.l.b16 %v2879
      %v4936 = vunpack.c.h.b16 %v2879
      %v4937 = vunpack.c.l.b16 %v2880
      %v4938 = vunpack.c.h.b16 %v2880
      %v4939 = vunpack.c.l.b16 %v2881
      %v4940 = vunpack.c.h.b16 %v2881
      %v4941 = vunpack.c.l.b16 %v2882
      %v4942 = vunpack.c.h.b16 %v2882
      %v4943 = vunpack.c.l.b16 %v2883
      %v4944 = vunpack.c.l.b16 %v2884
      %v4945 = vunpack.c.h.b16 %v2884
      %v4946 = vunpack.c.l.b16 %v2885
      %v4947 = vunpack.c.h.b16 %v2885
      %v4948 = vunpack.c.l.b16 %v2886
      %v4949 = vunpack.c.h.b16 %v2886
      %v4950 = vunpack.c.l.b16 %v2887
      %v4951 = vunpack.c.h.b16 %v2887
      %v4952 = vunpack.c.l.b16 %v2888
      %v4953 = vunpack.c.h.b16 %v2888
      %v4954 = vunpack.c.l.b16 %v2889
      %v4955 = vunpack.c.h.b16 %v2889
      %v4956 = vunpack.c.l.b16 %v2890
      %v4957 = vunpack.c.h.b16 %v2890
      %v4958 = vunpack.c.l.b16 %v2891
      %v4959 = vunpack.c.h.b16 %v2891
      %v4960 = vunpack.c.l.b16 %v2892
      %v4961 = vunpack.c.h.b16 %v2892
      %v4962 = vunpack.c.l.b16 %v2893
      %v4963 = vunpack.c.h.b16 %v2893
      %v4964 = vunpack.c.l.b16 %v2894
      %v4965 = vunpack.c.h.b16 %v2894
      %v4966 = vunpack.c.l.b16 %v2895
      %v4967 = vunpack.c.h.b16 %v2895
      %v4968 = vunpack.c.l.b16 %v2896
      %v4969 = vunpack.c.h.b16 %v2896
      %v4970 = vunpack.c.l.b16 %v2897
      %v4971 = vunpack.c.h.b16 %v2897
      %v4972 = vunpack.c.l.b16 %v2898
      %v4973 = vunpack.c.h.b16 %v2898
      %v4974 = vunpack.c.l.b16 %v2899
      %v4975 = vunpack.c.h.b16 %v2899
      %v4976 = vunpack.c.l.b16 %v2900
      %v4977 = vunpack.c.h.b16 %v2900
      %v4978 = vunpack.c.l.b16 %v2901
      %v4979 = vunpack.c.h.b16 %v2901
      %v4980 = vunpack.c.l.b16 %v2902
      %v4981 = vunpack.c.h.b16 %v2902
      %v4982 = vunpack.c.l.b16 %v2903
      %v4983 = vunpack.c.h.b16 %v2903
      %v4984 = vunpack.c.l.b16 %v2904
      %v4985 = vunpack.c.h.b16 %v2904
      %v4986 = vunpack.c.l.b16 %v2905
      %v4987 = vunpack.c.h.b16 %v2905
      %v4988 = vunpack.c.l.b16 %v2906
      %v4989 = vunpack.c.h.b16 %v2906
      %v4990 = vunpack.c.l.b16 %v2907
      %v4991 = vunpack.c.h.b16 %v2907
      %v4992 = vunpack.c.l.b16 %v2908
      %v4993 = vunpack.c.h.b16 %v2908
      %v4994 = vunpack.c.l.b16 %v2909
      %v4995 = vunpack.c.h.b16 %v2909
      %v4996 = vunpack.c.l.b16 %v2910
      %v4997 = vunpack.c.h.b16 %v2910
      %v4998 = vunpack.c.l.b16 %v2911
      %v4999 = vunpack.c.h.b16 %v2911
      %v5000 = vunpack.c.l.b16 %v2912
      %v5001 = vunpack.c.h.b16 %v2912
      %v5002 = vunpack.c.l.b16 %v2913
      %v5003 = vunpack.c.h.b16 %v2913
      %v5004 = vunpack.c.l.b16 %v2914
      %v5005 = vunpack.c.h.b16 %v2914
      %v5006 = vunpack.c.l.b16 %v2915
      %v5007 = vunpack.c.h.b16 %v2915
      %v5008 = vunpack.c.l.b16 %v2916
      %v5009 = vunpack.c.h.b16 %v2916
      %v5010 = vunpack.c.l.b16 %v2917
      %v5011 = vunpack.c.h.b16 %v2917
      %v5012 = vunpack.c.l.b16 %v2918
      %v5013 = vunpack.c.h.b16 %v2918
      %v5014 = vunpack.c.l.b16 %v2919
      %v5015 = vunpack.c.h.b16 %v2919
      %v5016 = vunpack.c.l.b16 %v2920
      %v5017 = vunpack.c.h.b16 %v2920
      %v5018 = vunpack.c.l.b16 %v2921
      %v5019 = vunpack.c.h.b16 %v2921
      %v5020 = vunpack.c.l.b16 %v2922
      %v5021 = vunpack.c.h.b16 %v2922
      %v5022 = vunpack.c.l.b16 %v2923
      %v5023 = vunpack.c.h.b16 %v2923
      %v5024 = vunpack.c.l.b16 %v2924
      %v5025 = vunpack.c.h.b16 %v2924
      %v5026 = vunpack.c.l.b16 %v2925
      %v5027 = vunpack.c.h.b16 %v2925
      %v5028 = vunpack.c.l.b16 %v2926
      %v5029 = vunpack.c.l.b16 %v2927
      %v5030 = vunpack.c.h.b16 %v2927
      %v5031 = vunpack.c.l.b16 %v2928
      %v5032 = vunpack.c.h.b16 %v2928
      %v5033 = vunpack.c.l.b16 %v2929
      %v5034 = vunpack.c.h.b16 %v2929
      %v5035 = vunpack.c.l.b16 %v2930
      %v5036 = vunpack.c.h.b16 %v2930
      %v5037 = vunpack.c.l.b16 %v2931
      %v5038 = vunpack.c.h.b16 %v2931
      %v5039 = vunpack.c.l.b16 %v2932
      %v5040 = vunpack.c.h.b16 %v2932
      %v5041 = vunpack.c.l.b16 %v2933
      %v5042 = vunpack.c.h.b16 %v2933
      %v5043 = vunpack.c.l.b16 %v2934
      %v5044 = vunpack.c.h.b16 %v2934
      %v5045 = vunpack.c.l.b16 %v2935
      %v5046 = vunpack.c.h.b16 %v2935
      %v5047 = vunpack.c.l.b16 %v2936
      %v5048 = vunpack.c.h.b16 %v2936
      %v5049 = vunpack.c.l.b16 %v2937
      %v5050 = vunpack.c.h.b16 %v2937
      %v5051 = vunpack.c.l.b16 %v2938
      %v5052 = vunpack.c.h.b16 %v2938
      %v5053 = vunpack.c.l.b16 %v2939
      %v5054 = vunpack.c.h.b16 %v2939
      %v5055 = vunpack.c.l.b16 %v2940
      %v5056 = vunpack.c.h.b16 %v2940
      %v5057 = vunpack.c.l.b16 %v2941
      %v5058 = vunpack.c.h.b16 %v2941
      %v5059 = vunpack.c.l.b16 %v2942
      %v5060 = vunpack.c.h.b16 %v2942
      %v5061 = vunpack.c.l.b16 %v2943
      %v5062 = vunpack.c.h.b16 %v2943
      %v5063 = vunpack.c.l.b16 %v2944
      %v5064 = vunpack.c.h.b16 %v2944
      %v5065 = vunpack.c.l.b16 %v2945
      %v5066 = vunpack.c.h.b16 %v2945
      %v5067 = vunpack.c.l.b16 %v2946
      %v5068 = vunpack.c.h.b16 %v2946
      %v5069 = vunpack.c.l.b16 %v2947
      %v5070 = vunpack.c.h.b16 %v2947
      %v5071 = vunpack.c.l.b16 %v2948
      %v5072 = vunpack.c.h.b16 %v2948
      %v5073 = vunpack.c.l.b16 %v2949
      %v5074 = vunpack.c.h.b16 %v2949
      %v5075 = vunpack.c.l.b16 %v2950
      %v5076 = vunpack.c.h.b16 %v2950
      %v5077 = vunpack.c.l.b16 %v2951
      %v5078 = vunpack.c.h.b16 %v2951
      %v5079 = vunpack.c.l.b16 %v2952
      %v5080 = vunpack.c.h.b16 %v2952
      %v5081 = vunpack.c.l.b16 %v2953
      %v5082 = vunpack.c.h.b16 %v2953
      %v5083 = vunpack.c.l.b16 %v2954
      %v5084 = vunpack.c.h.b16 %v2954
      %v5085 = vunpack.c.l.b16 %v2955
      %v5086 = vunpack.c.h.b16 %v2955
      %v5087 = vunpack.c.l.b16 %v2956
      %v5088 = vunpack.c.h.b16 %v2956
      %v5089 = vunpack.c.l.b16 %v2957
      %v5090 = vunpack.c.h.b16 %v2957
      %v5091 = vunpack.c.l.b16 %v2958
      %v5092 = vunpack.c.h.b16 %v2958
      %v5093 = vunpack.c.l.b16 %v2959
      %v5094 = vunpack.c.h.b16 %v2959
      %v5095 = vunpack.c.l.b16 %v2960
      %v5096 = vunpack.c.h.b16 %v2960
      %v5097 = vunpack.c.l.b16 %v2961
      %v5098 = vunpack.c.h.b16 %v2961
      %v5099 = vunpack.c.l.b16 %v2962
      %v5100 = vunpack.c.h.b16 %v2962
      %v5101 = vunpack.c.l.b16 %v2963
      %v5102 = vunpack.c.h.b16 %v2963
      %v5103 = vunpack.c.l.b16 %v2964
      %v5104 = vunpack.c.h.b16 %v2964
      %v5105 = vunpack.c.l.b16 %v2965
      %v5106 = vunpack.c.h.b16 %v2965
      %v5107 = vunpack.c.l.b16 %v2966
      %v5108 = vunpack.c.h.b16 %v2966
      %v5109 = vunpack.c.l.b16 %v2967
      %v5110 = vunpack.c.h.b16 %v2967
      %v5111 = vunpack.c.l.b16 %v2968
      %v5112 = vunpack.c.h.b16 %v2968
      %v5113 = vunpack.c.l.b16 %v2969
      %v5114 = vpack.c.b16 %v3839, %v3754
      %v5115 = vpack.c.b16 %v3840, %v3755
      %v5116 = vpack.c.b16 %v3841, %v3756
      %v5117 = vpack.c.b16 %v3842, %v3757
      %v5118 = vpack.c.b16 %v3843, %v3758
      %v5119 = vpack.c.b16 %v3844, %v3759
      %v5120 = vpack.c.b16 %v3845, %v3760
      %v5121 = vpack.c.b16 %v3846, %v3761
      %v5122 = vpack.c.b16 %v3847, %v3762
      %v5123 = vpack.c.b16 %v3848, %v3763
      %v5124 = vpack.c.b16 %v3849, %v3764
      %v5125 = vpack.c.b16 %v3850, %v3765
      %v5126 = vpack.c.b16 %v3851, %v3766
      %v5127 = vpack.c.b16 %v3852, %v3767
      %v5128 = vpack.c.b16 %v3853, %v3768
      %v5129 = vpack.c.b16 %v3854, %v3769
      %v5130 = vpack.c.b16 %v3855, %v3770
      %v5131 = vpack.c.b16 %v3856, %v3771
      %v5132 = vpack.c.b16 %v3857, %v3772
      %v5133 = vpack.c.b16 %v3858, %v3773
      %v5134 = vpack.c.b16 %v3859, %v3774
      %v5135 = vpack.c.b16 %v3860, %v3775
      %v5136 = vpack.c.b16 %v3861, %v3776
      %v5137 = vpack.c.b16 %v3862, %v3777
      %v5138 = vpack.c.b16 %v3863, %v3778
      %v5139 = vpack.c.b16 %v3864, %v3779
      %v5140 = vpack.c.b16 %v3865, %v3780
      %v5141 = vpack.c.b16 %v3866, %v3781
      %v5142 = vpack.c.b16 %v3867, %v3782
      %v5143 = vpack.c.b16 %v3868, %v3783
      %v5144 = vpack.c.b16 %v3869, %v3784
      %v5145 = vpack.c.b16 %v3870, %v3785
      %v5146 = vpack.c.b16 %v3871, %v3786
      %v5147 = vpack.c.b16 %v3872, %v3787
      %v5148 = vpack.c.b16 %v3873, %v3788
      %v5149 = vpack.c.b16 %v3874, %v3789
      %v5150 = vpack.c.b16 %v3875, %v3790
      %v5151 = vpack.c.b16 %v3876, %v3791
      %v5152 = vpack.c.b16 %v3877, %v3792
      %v5153 = vpack.c.b16 %v3878, %v3793
      %v5154 = vpack.c.b16 %v3879, %v3794
      %v5155 = vpack.c.b16 %v3880, %v3795
      %v5156 = vpack.c.b16 %v3881, %v3796
      %v5157 = vpack.c.b16 %v3882, %v3797
      %v5158 = vpack.c.b16 %v3883, %v3798
      %v5159 = vpack.c.b16 %v3884, %v3799
      %v5160 = vpack.c.b16 %v3885, %v3800
      %v5161 = vpack.c.b16 %v3886, %v3801
      %v5162 = vpack.c.b16 %v3887, %v3802
      %v5163 = vpack.c.b16 %v3888, %v3803
      %v5164 = vpack.c.b16 %v3889, %v3804
      %v5165 = vpack.c.b16 %v3890, %v3805
      %v5166 = vpack.c.b16 %v3891, %v3806
      %v5167 = vpack.c.b16 %v3892, %v3807
      %v5168 = vpack.c.b16 %v3893, %v3808
      %v5169 = vpack.c.b16 %v3894, %v3809
      %v5170 = vpack.c.b16 %v3895, %v3810
      %v5171 = vpack.c.b16 %v3896, %v3811
      %v5172 = vpack.c.b16 %v3897, %v3812
      %v5173 = vpack.c.b16 %v3898, %v3813
      %v5174 = vpack.c.b16 %v3899, %v3814
      %v5175 = vpack.c.b16 %v3900, %v3815
      %v5176 = vpack.c.b16 %v3901, %v3816
      %v5177 = vpack.c.b16 %v3902, %v3817
      %v5178 = vpack.c.b16 %v3903, %v3818
      %v5179 = vpack.c.b16 %v3904, %v3819
      %v5180 = vpack.c.b16 %v3905, %v3820
      %v5181 = vpack.c.b16 %v3906, %v3821
      %v5182 = vpack.c.b16 %v3907, %v3822
      %v5183 = vpack.c.b16 %v3908, %v3823
      %v5184 = vpack.c.b16 %v3909, %v3824
      %v5185 = vpack.c.b16 %v3910, %v3825
      %v5186 = vpack.c.b16 %v3911, %v3826
      %v5187 = vpack.c.b16 %v3912, %v3827
      %v5188 = vpack.c.b16 %v3913, %v3828
      %v5189 = vpack.c.b16 %v3914, %v3829
      %v5190 = vpack.c.b16 %v3915, %v3830
      %v5191 = vpack.c.b16 %v3916, %v3831
      %v5192 = vpack.c.b16 %v3917, %v3832
      %v5193 = vpack.c.b16 %v3918, %v3833
      %v5194 = vpack.c.b16 %v3919, %v3834
      %v5195 = vpack.c.b16 %v3920, %v3835
      %v5196 = vpack.c.b16 %v3921, %v3836
      %v5197 = vpack.c.b16 %v3922, %v3837
      %v5198 = vpack.c.b16 %v3923, %v3838
      %v5199 = vpack.c.b16 %v4009, %v3924
      %v5200 = vpack.c.b16 %v4010, %v3925
      %v5201 = vpack.c.b16 %v4011, %v3926
      %v5202 = vpack.c.b16 %v4012, %v3927
      %v5203 = vpack.c.b16 %v4013, %v3928
      %v5204 = vpack.c.b16 %v4014, %v3929
      %v5205 = vpack.c.b16 %v4015, %v3930
      %v5206 = vpack.c.b16 %v4016, %v3931
      %v5207 = vpack.c.b16 %v4017, %v3932
      %v5208 = vpack.c.b16 %v4018, %v3933
      %v5209 = vpack.c.b16 %v4019, %v3934
      %v5210 = vpack.c.b16 %v4020, %v3935
      %v5211 = vpack.c.b16 %v4021, %v3936
      %v5212 = vpack.c.b16 %v4022, %v3937
      %v5213 = vpack.c.b16 %v4023, %v3938
      %v5214 = vpack.c.b16 %v4024, %v3939
      %v5215 = vpack.c.b16 %v4025, %v3940
      %v5216 = vpack.c.b16 %v4026, %v3941
      %v5217 = vpack.c.b16 %v4027, %v3942
      %v5218 = vpack.c.b16 %v4028, %v3943
      %v5219 = vpack.c.b16 %v4029, %v3944
      %v5220 = vpack.c.b16 %v4030, %v3945
      %v5221 = vpack.c.b16 %v4031, %v3946
      %v5222 = vpack.c.b16 %v4032, %v3947
      %v5223 = vpack.c.b16 %v4033, %v3948
      %v5224 = vpack.c.b16 %v4034, %v3949
      %v5225 = vpack.c.b16 %v4035, %v3950
      %v5226 = vpack.c.b16 %v4036, %v3951
      %v5227 = vpack.c.b16 %v4037, %v3952
      %v5228 = vpack.c.b16 %v4038, %v3953
      %v5229 = vpack.c.b16 %v4039, %v3954
      %v5230 = vpack.c.b16 %v4040, %v3955
      %v5231 = vpack.c.b16 %v4041, %v3956
      %v5232 = vpack.c.b16 %v4042, %v3957
      %v5233 = vpack.c.b16 %v4043, %v3958
      %v5234 = vpack.c.b16 %v4044, %v3959
      %v5235 = vpack.c.b16 %v4045, %v3960
      %v5236 = vpack.c.b16 %v4046, %v3961
      %v5237 = vpack.c.b16 %v4047, %v3962
      %v5238 = vpack.c.b16 %v4048, %v3963
      %v5239 = vpack.c.b16 %v4049, %v3964
      %v5240 = vpack.c.b16 %v4050, %v3965
      %v5241 = vpack.c.b16 %v4051, %v3966
      %v5242 = vpack.c.b16 %v4052, %v3967
      %v5243 = vpack.c.b16 %v4053, %v3968
      %v5244 = vpack.c.b16 %v4054, %v3969
      %v5245 = vpack.c.b16 %v4055, %v3970
      %v5246 = vpack.c.b16 %v4056, %v3971
      %v5247 = vpack.c.b16 %v4057, %v3972
      %v5248 = vpack.c.b16 %v4058, %v3973
      %v5249 = vpack.c.b16 %v4059, %v3974
      %v5250 = vpack.c.b16 %v4060, %v3975
      %v5251 = vpack.c.b16 %v4061, %v3976
      %v5252 = vpack.c.b16 %v4062, %v3977
      %v5253 = vpack.c.b16 %v4063, %v3978
      %v5254 = vpack.c.b16 %v4064, %v3979
      %v5255 = vpack.c.b16 %v4065, %v3980
      %v5256 = vpack.c.b16 %v4066, %v3981
      %v5257 = vpack.c.b16 %v4067, %v3982
      %v5258 = vpack.c.b16 %v4068, %v3983
      %v5259 = vpack.c.b16 %v4069, %v3984
      %v5260 = vpack.c.b16 %v4070, %v3985
      %v5261 = vpack.c.b16 %v4071, %v3986
      %v5262 = vpack.c.b16 %v4072, %v3987
      %v5263 = vpack.c.b16 %v4073, %v3988
      %v5264 = vpack.c.b16 %v4074, %v3989
      %v5265 = vpack.c.b16 %v4075, %v3990
      %v5266 = vpack.c.b16 %v4076, %v3991
      %v5267 = vpack.c.b16 %v4077, %v3992
      %v5268 = vpack.c.b16 %v4078, %v3993
      %v5269 = vpack.c.b16 %v4079, %v3994
      %v5270 = vpack.c.b16 %v4080, %v3995
      %v5271 = vpack.c.b16 %v4081, %v3996
      %v5272 = vpack.c.b16 %v4082, %v3997
      %v5273 = vpack.c.b16 %v4083, %v3998
      %v5274 = vpack.c.b16 %v4084, %v3999
      %v5275 = vpack.c.b16 %v4085, %v4000
      %v5276 = vpack.c.b16 %v4086, %v4001
      %v5277 = vpack.c.b16 %v4087, %v4002
      %v5278 = vpack.c.b16 %v4088, %v4003
      %v5279 = vpack.c.b16 %v4089, %v4004
      %v5280 = vpack.c.b16 %v4090, %v4005
      %v5281 = vpack.c.b16 %v4091, %v4006
      %v5282 = vpack.c.b16 %v4092, %v4007
      %v5283 = vpack.c.b16 %v4093, %v4008
      %v5284 = vpack.c.b16 %v4179, %v4094
      %v5285 = vpack.c.b16 %v4180, %v4095
      %v5286 = vpack.c.b16 %v4181, %v4096
      %v5287 = vpack.c.b16 %v4182, %v4097
      %v5288 = vpack.c.b16 %v4183, %v4098
      %v5289 = vpack.c.b16 %v4184, %v4099
      %v5290 = vpack.c.b16 %v4185, %v4100
      %v5291 = vpack.c.b16 %v4186, %v4101
      %v5292 = vpack.c.b16 %v4187, %v4102
      %v5293 = vpack.c.b16 %v4188, %v4103
      %v5294 = vpack.c.b16 %v4189, %v4104
      %v5295 = vpack.c.b16 %v4190, %v4105
      %v5296 = vpack.c.b16 %v4191, %v4106
      %v5297 = vpack.c.b16 %v4192, %v4107
      %v5298 = vpack.c.b16 %v4193, %v4108
      %v5299 = vpack.c.b16 %v4194, %v4109
      %v5300 = vpack.c.b16 %v4195, %v4110
      %v5301 = vpack.c.b16 %v4196, %v4111
      %v5302 = vpack.c.b16 %v4197, %v4112
      %v5303 = vpack.c.b16 %v4198, %v4113
      %v5304 = vpack.c.b16 %v4199, %v4114
      %v5305 = vpack.c.b16 %v4200, %v4115
      %v5306 = vpack.c.b16 %v4201, %v4116
      %v5307 = vpack.c.b16 %v4202, %v4117
      %v5308 = vpack.c.b16 %v4203, %v4118
      %v5309 = vpack.c.b16 %v4204, %v4119
      %v5310 = vpack.c.b16 %v4205, %v4120
      %v5311 = vpack.c.b16 %v4206, %v4121
      %v5312 = vpack.c.b16 %v4207, %v4122
      %v5313 = vpack.c.b16 %v4208, %v4123
      %v5314 = vpack.c.b16 %v4209, %v4124
      %v5315 = vpack.c.b16 %v4210, %v4125
      %v5316 = vpack.c.b16 %v4211, %v4126
      %v5317 = vpack.c.b16 %v4212, %v4127
      %v5318 = vpack.c.b16 %v4213, %v4128
      %v5319 = vpack.c.b16 %v4214, %v4129
      %v5320 = vpack.c.b16 %v4215, %v4130
      %v5321 = vpack.c.b16 %v4216, %v4131
      %v5322 = vpack.c.b16 %v4217, %v4132
      %v5323 = vpack.c.b16 %v4218, %v4133
      %v5324 = vpack.c.b16 %v4219, %v4134
      %v5325 = vpack.c.b16 %v4220, %v4135
      %v5326 = vpack.c.b16 %v4221, %v4136
      %v5327 = vpack.c.b16 %v4222, %v4137
      %v5328 = vpack.c.b16 %v4223, %v4138
      %v5329 = vpack.c.b16 %v4224, %v4139
      %v5330 = vpack.c.b16 %v4225, %v4140
      %v5331 = vpack.c.b16 %v4226, %v4141
      %v5332 = vpack.c.b16 %v4227, %v4142
      %v5333 = vpack.c.b16 %v4228, %v4143
      %v5334 = vpack.c.b16 %v4229, %v4144
      %v5335 = vpack.c.b16 %v4230, %v4145
      %v5336 = vpack.c.b16 %v4231, %v4146
      %v5337 = vpack.c.b16 %v4232, %v4147
      %v5338 = vpack.c.b16 %v4233, %v4148
      %v5339 = vpack.c.b16 %v4234, %v4149
      %v5340 = vpack.c.b16 %v4235, %v4150
      %v5341 = vpack.c.b16 %v4236, %v4151
      %v5342 = vpack.c.b16 %v4237, %v4152
      %v5343 = vpack.c.b16 %v4238, %v4153
      %v5344 = vpack.c.b16 %v4239, %v4154
      %v5345 = vpack.c.b16 %v4240, %v4155
      %v5346 = vpack.c.b16 %v4241, %v4156
      %v5347 = vpack.c.b16 %v4242, %v4157
      %v5348 = vpack.c.b16 %v4243, %v4158
      %v5349 = vpack.c.b16 %v4244, %v4159
      %v5350 = vpack.c.b16 %v4245, %v4160
      %v5351 = vpack.c.b16 %v4246, %v4161
      %v5352 = vpack.c.b16 %v4247, %v4162
      %v5353 = vpack.c.b16 %v4248, %v4163
      %v5354 = vpack.c.b16 %v4249, %v4164
      %v5355 = vpack.c.b16 %v4250, %v4165
      %v5356 = vpack.c.b16 %v4251, %v4166
      %v5357 = vpack.c.b16 %v4252, %v4167
      %v5358 = vpack.c.b16 %v4253, %v4168
      %v5359 = vpack.c.b16 %v4254, %v4169
      %v5360 = vpack.c.b16 %v4255, %v4170
      %v5361 = vpack.c.b16 %v4256, %v4171
      %v5362 = vpack.c.b16 %v4257, %v4172
      %v5363 = vpack.c.b16 %v4258, %v4173
      %v5364 = vpack.c.b16 %v4259, %v4174
      %v5365 = vpack.c.b16 %v4260, %v4175
      %v5366 = vpack.c.b16 %v4261, %v4176
      %v5367 = vpack.c.b16 %v4262, %v4177
      %v5368 = vpack.c.b16 %v4263, %v4178
      %v5369 = vpack.c.b16 %v4349, %v4264
      %v5370 = vpack.c.b16 %v4350, %v4265
      %v5371 = vpack.c.b16 %v4351, %v4266
      %v5372 = vpack.c.b16 %v4352, %v4267
      %v5373 = vpack.c.b16 %v4353, %v4268
      %v5374 = vpack.c.b16 %v4354, %v4269
      %v5375 = vpack.c.b16 %v4355, %v4270
      %v5376 = vpack.c.b16 %v4356, %v4271
      %v5377 = vpack.c.b16 %v4357, %v4272
      %v5378 = vpack.c.b16 %v4358, %v4273
      %v5379 = vpack.c.b16 %v4359, %v4274
      %v5380 = vpack.c.b16 %v4360, %v4275
      %v5381 = vpack.c.b16 %v4361, %v4276
      %v5382 = vpack.c.b16 %v4362, %v4277
      %v5383 = vpack.c.b16 %v4363, %v4278
      %v5384 = vpack.c.b16 %v4364, %v4279
      %v5385 = vpack.c.b16 %v4365, %v4280
      %v5386 = vpack.c.b16 %v4366, %v4281
      %v5387 = vpack.c.b16 %v4367, %v4282
      %v5388 = vpack.c.b16 %v4368, %v4283
      %v5389 = vpack.c.b16 %v4369, %v4284
      %v5390 = vpack.c.b16 %v4370, %v4285
      %v5391 = vpack.c.b16 %v4371, %v4286
      %v5392 = vpack.c.b16 %v4372, %v4287
      %v5393 = vpack.c.b16 %v4373, %v4288
      %v5394 = vpack.c.b16 %v4374, %v4289
      %v5395 = vpack.c.b16 %v4375, %v4290
      %v5396 = vpack.c.b16 %v4376, %v4291
      %v5397 = vpack.c.b16 %v4377, %v4292
      %v5398 = vpack.c.b16 %v4378, %v4293
      %v5399 = vpack.c.b16 %v4379, %v4294
      %v5400 = vpack.c.b16 %v4380, %v4295
      %v5401 = vpack.c.b16 %v4381, %v4296
      %v5402 = vpack.c.b16 %v4382, %v4297
      %v5403 = vpack.c.b16 %v4383, %v4298
      %v5404 = vpack.c.b16 %v4384, %v4299
      %v5405 = vpack.c.b16 %v4385, %v4300
      %v5406 = vpack.c.b16 %v4386, %v4301
      %v5407 = vpack.c.b16 %v4387, %v4302
      %v5408 = vpack.c.b16 %v4388, %v4303
      %v5409 = vpack.c.b16 %v4389, %v4304
      %v5410 = vpack.c.b16 %v4390, %v4305
      %v5411 = vpack.c.b16 %v4391, %v4306
      %v5412 = vpack.c.b16 %v4392, %v4307
      %v5413 = vpack.c.b16 %v4393, %v4308
      %v5414 = vpack.c.b16 %v4394, %v4309
      %v5415 = vpack.c.b16 %v4395, %v4310
      %v5416 = vpack.c.b16 %v4396, %v4311
      %v5417 = vpack.c.b16 %v4397, %v4312
      %v5418 = vpack.c.b16 %v4398, %v4313
      %v5419 = vpack.c.b16 %v4399, %v4314
      %v5420 = vpack.c.b16 %v4400, %v4315
      %v5421 = vpack.c.b16 %v4401, %v4316
      %v5422 = vpack.c.b16 %v4402, %v4317
      %v5423 = vpack.c.b16 %v4403, %v4318
      %v5424 = vpack.c.b16 %v4404, %v4319
      %v5425 = vpack.c.b16 %v4405, %v4320
      %v5426 = vpack.c.b16 %v4406, %v4321
      %v5427 = vpack.c.b16 %v4407, %v4322
      %v5428 = vpack.c.b16 %v4408, %v4323
      %v5429 = vpack.c.b16 %v4409, %v4324
      %v5430 = vpack.c.b16 %v4410, %v4325
      %v5431 = vpack.c.b16 %v4411, %v4326
      %v5432 = vpack.c.b16 %v4412, %v4327
      %v5433 = vpack.c.b16 %v4413, %v4328
      %v5434 = vpack.c.b16 %v4414, %v4329
      %v5435 = vpack.c.b16 %v4415, %v4330
      %v5436 = vpack.c.b16 %v4416, %v4331
      %v5437 = vpack.c.b16 %v4417, %v4332
      %v5438 = vpack.c.b16 %v4418, %v4333
      %v5439 = vpack.c.b16 %v4419, %v4334
      %v5440 = vpack.c.b16 %v4420, %v4335
      %v5441 = vpack.c.b16 %v4421, %v4336
      %v5442 = vpack.c.b16 %v4422, %v4337
      %v5443 = vpack.c.b16 %v4423, %v4338
      %v5444 = vpack.c.b16 %v4424, %v4339
      %v5445 = vpack.c.b16 %v4425, %v4340
      %v5446 = vpack.c.b16 %v4426, %v4341
      %v5447 = vpack.c.b16 %v4427, %v4342
      %v5448 = vpack.c.b16 %v4428, %v4343
      %v5449 = vpack.c.b16 %v4429, %v4344
      %v5450 = vpack.c.b16 %v4430, %v4345
      %v5451 = vpack.c.b16 %v4431, %v4346
      %v5452 = vpack.c.b16 %v4432, %v4347
      %v5453 = vpack.c.b16 %v4433, %v4348
      %v5454 = vpack.c.b16 %v4519, %v4434
      %v5455 = vpack.c.b16 %v4520, %v4435
      %v5456 = vpack.c.b16 %v4521, %v4436
      %v5457 = vpack.c.b16 %v4522, %v4437
      %v5458 = vpack.c.b16 %v4523, %v4438
      %v5459 = vpack.c.b16 %v4524, %v4439
      %v5460 = vpack.c.b16 %v4525, %v4440
      %v5461 = vpack.c.b16 %v4526, %v4441
      %v5462 = vpack.c.b16 %v4527, %v4442
      %v5463 = vpack.c.b16 %v4528, %v4443
      %v5464 = vpack.c.b16 %v4529, %v4444
      %v5465 = vpack.c.b16 %v4530, %v4445
      %v5466 = vpack.c.b16 %v4531, %v4446
      %v5467 = vpack.c.b16 %v4532, %v4447
      %v5468 = vpack.c.b16 %v4533, %v4448
      %v5469 = vpack.c.b16 %v4534, %v4449
      %v5470 = vpack.c.b16 %v4535, %v4450
      %v5471 = vpack.c.b16 %v4536, %v4451
      %v5472 = vpack.c.b16 %v4537, %v4452
      %v5473 = vpack.c.b16 %v4538, %v4453
      %v5474 = vpack.c.b16 %v4539, %v4454
      %v5475 = vpack.c.b16 %v4540, %v4455
      %v5476 = vpack.c.b16 %v4541, %v4456
      %v5477 = vpack.c.b16 %v4542, %v4457
      %v5478 = vpack.c.b16 %v4543, %v4458
      %v5479 = vpack.c.b16 %v4544, %v4459
      %v5480 = vpack.c.b16 %v4545, %v4460
      %v5481 = vpack.c.b16 %v4546, %v4461
      %v5482 = vpack.c.b16 %v4547, %v4462
      %v5483 = vpack.c.b16 %v4548, %v4463
      %v5484 = vpack.c.b16 %v4549, %v4464
      %v5485 = vpack.c.b16 %v4550, %v4465
      %v5486 = vpack.c.b16 %v4551, %v4466
      %v5487 = vpack.c.b16 %v4552, %v4467
      %v5488 = vpack.c.b16 %v4553, %v4468
      %v5489 = vpack.c.b16 %v4554, %v4469
      %v5490 = vpack.c.b16 %v4555, %v4470
      %v5491 = vpack.c.b16 %v4556, %v4471
      %v5492 = vpack.c.b16 %v4557, %v4472
      %v5493 = vpack.c.b16 %v4558, %v4473
      %v5494 = vpack.c.b16 %v4559, %v4474
      %v5495 = vpack.c.b16 %v4560, %v4475
      %v5496 = vpack.c.b16 %v4561, %v4476
      %v5497 = vpack.c.b16 %v4562, %v4477
      %v5498 = vpack.c.b16 %v4563, %v4478
      %v5499 = vpack.c.b16 %v4564, %v4479
      %v5500 = vpack.c.b16 %v4565, %v4480
      %v5501 = vpack.c.b16 %v4566, %v4481
      %v5502 = vpack.c.b16 %v4567, %v4482
      %v5503 = vpack.c.b16 %v4568, %v4483
      %v5504 = vpack.c.b16 %v4569, %v4484
      %v5505 = vpack.c.b16 %v4570, %v4485
      %v5506 = vpack.c.b16 %v4571, %v4486
      %v5507 = vpack.c.b16 %v4572, %v4487
      %v5508 = vpack.c.b16 %v4573, %v4488
      %v5509 = vpack.c.b16 %v4574, %v4489
      %v5510 = vpack.c.b16 %v4575, %v4490
      %v5511 = vpack.c.b16 %v4576, %v4491
      %v5512 = vpack.c.b16 %v4577, %v4492
      %v5513 = vpack.c.b16 %v4578, %v4493
      %v5514 = vpack.c.b16 %v4579, %v4494
      %v5515 = vpack.c.b16 %v4580, %v4495
      %v5516 = vpack.c.b16 %v4581, %v4496
      %v5517 = vpack.c.b16 %v4582, %v4497
      %v5518 = vpack.c.b16 %v4583, %v4498
      %v5519 = vpack.c.b16 %v4584, %v4499
      %v5520 = vpack.c.b16 %v4585, %v4500
      %v5521 = vpack.c.b16 %v4586, %v4501
      %v5522 = vpack.c.b16 %v4587, %v4502
      %v5523 = vpack.c.b16 %v4588, %v4503
      %v5524 = vpack.c.b16 %v4589, %v4504
      %v5525 = vpack.c.b16 %v4590, %v4505
      %v5526 = vpack.c.b16 %v4591, %v4506
      %v5527 = vpack.c.b16 %v4592, %v4507
      %v5528 = vpack.c.b16 %v4593, %v4508
      %v5529 = vpack.c.b16 %v4594, %v4509
      %v5530 = vpack.c.b16 %v4595, %v4510
      %v5531 = vpack.c.b16 %v4596, %v4511
      %v5532 = vpack.c.b16 %v4597, %v4512
      %v5533 = vpack.c.b16 %v4598, %v4513
      %v5534 = vpack.c.b16 %v4599, %v4514
      %v5535 = vpack.c.b16 %v4600, %v4515
      %v5536 = vpack.c.b16 %v4601, %v4516
      %v5537 = vpack.c.b16 %v4602, %v4517
      %v5538 = vpack.c.b16 %v4603, %v4518
      %v5539 = vpack.c.b16 %v4689, %v4604
      %v5540 = vpack.c.b16 %v4690, %v4605
      %v5541 = vpack.c.b16 %v4691, %v4606
      %v5542 = vpack.c.b16 %v4692, %v4607
      %v5543 = vpack.c.b16 %v4693, %v4608
      %v5544 = vpack.c.b16 %v4694, %v4609
      %v5545 = vpack.c.b16 %v4695, %v4610
      %v5546 = vpack.c.b16 %v4696, %v4611
      %v5547 = vpack.c.b16 %v4697, %v4612
      %v5548 = vpack.c.b16 %v4698, %v4613
      %v5549 = vpack.c.b16 %v4699, %v4614
      %v5550 = vpack.c.b16 %v4700, %v4615
      %v5551 = vpack.c.b16 %v4701, %v4616
      %v5552 = vpack.c.b16 %v4702, %v4617
      %v5553 = vpack.c.b16 %v4703, %v4618
      %v5554 = vpack.c.b16 %v4704, %v4619
      %v5555 = vpack.c.b16 %v4705, %v4620
      %v5556 = vpack.c.b16 %v4706, %v4621
      %v5557 = vpack.c.b16 %v4707, %v4622
      %v5558 = vpack.c.b16 %v4708, %v4623
      %v5559 = vpack.c.b16 %v4709, %v4624
      %v5560 = vpack.c.b16 %v4710, %v4625
      %v5561 = vpack.c.b16 %v4711, %v4626
      %v5562 = vpack.c.b16 %v4712, %v4627
      %v5563 = vpack.c.b16 %v4713, %v4628
      %v5564 = vpack.c.b16 %v4714, %v4629
      %v5565 = vpack.c.b16 %v4715, %v4630
      %v5566 = vpack.c.b16 %v4716, %v4631
      %v5567 = vpack.c.b16 %v4717, %v4632
      %v5568 = vpack.c.b16 %v4718, %v4633
      %v5569 = vpack.c.b16 %v4719, %v4634
      %v5570 = vpack.c.b16 %v4720, %v4635
      %v5571 = vpack.c.b16 %v4721, %v4636
      %v5572 = vpack.c.b16 %v4722, %v4637
      %v5573 = vpack.c.b16 %v4723, %v4638
      %v5574 = vpack.c.b16 %v4724, %v4639
      %v5575 = vpack.c.b16 %v4725, %v4640
      %v5576 = vpack.c.b16 %v4726, %v4641
      %v5577 = vpack.c.b16 %v4727, %v4642
      %v5578 = vpack.c.b16 %v4728, %v4643
      %v5579 = vpack.c.b16 %v4729, %v4644
      %v5580 = vpack.c.b16 %v4730, %v4645
      %v5581 = vpack.c.b16 %v4731, %v4646
      %v5582 = vpack.c.b16 %v4732, %v4647
      %v5583 = vpack.c.b16 %v4733, %v4648
      %v5584 = vpack.c.b16 %v4734, %v4649
      %v5585 = vpack.c.b16 %v4735, %v4650
      %v5586 = vpack.c.b16 %v4736, %v4651
      %v5587 = vpack.c.b16 %v4737, %v4652
      %v5588 = vpack.c.b16 %v4738, %v4653
      %v5589 = vpack.c.b16 %v4739, %v4654
      %v5590 = vpack.c.b16 %v4740, %v4655
      %v5591 = vpack.c.b16 %v4741, %v4656
      %v5592 = vpack.c.b16 %v4742, %v4657
      %v5593 = vpack.c.b16 %v4743, %v4658
      %v5594 = vpack.c.b16 %v4744, %v4659
      %v5595 = vpack.c.b16 %v4745, %v4660
      %v5596 = vpack.c.b16 %v4746, %v4661
      %v5597 = vpack.c.b16 %v4747, %v4662
      %v5598 = vpack.c.b16 %v4748, %v4663
      %v5599 = vpack.c.b16 %v4749, %v4664
      %v5600 = vpack.c.b16 %v4750, %v4665
      %v5601 = vpack.c.b16 %v4751, %v4666
      %v5602 = vpack.c.b16 %v4752, %v4667
      %v5603 = vpack.c.b16 %v4753, %v4668
      %v5604 = vpack.c.b16 %v4754, %v4669
      %v5605 = vpack.c.b16 %v4755, %v4670
      %v5606 = vpack.c.b16 %v4756, %v4671
      %v5607 = vpack.c.b16 %v4757, %v4672
      %v5608 = vpack.c.b16 %v4758, %v4673
      %v5609 = vpack.c.b16 %v4759, %v4674
      %v5610 = vpack.c.b16 %v4760, %v4675
      %v5611 = vpack.c.b16 %v4761, %v4676
      %v5612 = vpack.c.b16 %v4762, %v4677
      %v5613 = vpack.c.b16 %v4763, %v4678
      %v5614 = vpack.c.b16 %v4764, %v4679
      %v5615 = vpack.c.b16 %v4765, %v4680
      %v5616 = vpack.c.b16 %v4766, %v4681
      %v5617 = vpack.c.b16 %v4767, %v4682
      %v5618 = vpack.c.b16 %v4768, %v4683
      %v5619 = vpack.c.b16 %v4769, %v4684
      %v5620 = vpack.c.b16 %v4770, %v4685
      %v5621 = vpack.c.b16 %v4771, %v4686
      %v5622 = vpack.c.b16 %v4772, %v4687
      %v5623 = vpack.c.b16 %v4773, %v4688
      %v5624 = vpack.c.b16 %v4859, %v4774
      %v5625 = vpack.c.b16 %v4860, %v4775
      %v5626 = vpack.c.b16 %v4861, %v4776
      %v5627 = vpack.c.b16 %v4862, %v4777
      %v5628 = vpack.c.b16 %v4863, %v4778
      %v5629 = vpack.c.b16 %v4864, %v4779
      %v5630 = vpack.c.b16 %v4865, %v4780
      %v5631 = vpack.c.b16 %v4866, %v4781
      %v5632 = vpack.c.b16 %v4867, %v4782
      %v5633 = vpack.c.b16 %v4868, %v4783
      %v5634 = vpack.c.b16 %v4869, %v4784
      %v5635 = vpack.c.b16 %v4870, %v4785
      %v5636 = vpack.c.b16 %v4871, %v4786
      %v5637 = vpack.c.b16 %v4872, %v4787
      %v5638 = vpack.c.b16 %v4873, %v4788
      %v5639 = vpack.c.b16 %v4874, %v4789
      %v5640 = vpack.c.b16 %v4875, %v4790
      %v5641 = vpack.c.b16 %v4876, %v4791
      %v5642 = vpack.c.b16 %v4877, %v4792
      %v5643 = vpack.c.b16 %v4878, %v4793
      %v5644 = vpack.c.b16 %v4879, %v4794
      %v5645 = vpack.c.b16 %v4880, %v4795
      %v5646 = vpack.c.b16 %v4881, %v4796
      %v5647 = vpack.c.b16 %v4882, %v4797
      %v5648 = vpack.c.b16 %v4883, %v4798
      %v5649 = vpack.c.b16 %v4884, %v4799
      %v5650 = vpack.c.b16 %v4885, %v4800
      %v5651 = vpack.c.b16 %v4886, %v4801
      %v5652 = vpack.c.b16 %v4887, %v4802
      %v5653 = vpack.c.b16 %v4888, %v4803
      %v5654 = vpack.c.b16 %v4889, %v4804
      %v5655 = vpack.c.b16 %v4890, %v4805
      %v5656 = vpack.c.b16 %v4891, %v4806
      %v5657 = vpack.c.b16 %v4892, %v4807
      %v5658 = vpack.c.b16 %v4893, %v4808
      %v5659 = vpack.c.b16 %v4894, %v4809
      %v5660 = vpack.c.b16 %v4895, %v4810
      %v5661 = vpack.c.b16 %v4896, %v4811
      %v5662 = vpack.c.b16 %v4897, %v4812
      %v5663 = vpack.c.b16 %v4898, %v4813
      %v5664 = vpack.c.b16 %v4899, %v4814
      %v5665 = vpack.c.b16 %v4900, %v4815
      %v5666 = vpack.c.b16 %v4901, %v4816
      %v5667 = vpack.c.b16 %v4902, %v4817
      %v5668 = vpack.c.b16 %v4903, %v4818
      %v5669 = vpack.c.b16 %v4904, %v4819
      %v5670 = vpack.c.b16 %v4905, %v4820
      %v5671 = vpack.c.b16 %v4906, %v4821
      %v5672 = vpack.c.b16 %v4907, %v4822
      %v5673 = vpack.c.b16 %v4908, %v4823
      %v5674 = vpack.c.b16 %v4909, %v4824
      %v5675 = vpack.c.b16 %v4910, %v4825
      %v5676 = vpack.c.b16 %v4911, %v4826
      %v5677 = vpack.c.b16 %v4912, %v4827
      %v5678 = vpack.c.b16 %v4913, %v4828
      %v5679 = vpack.c.b16 %v4914, %v4829
      %v5680 = vpack.c.b16 %v4915, %v4830
      %v5681 = vpack.c.b16 %v4916, %v4831
      %v5682 = vpack.c.b16 %v4917, %v4832
      %v5683 = vpack.c.b16 %v4918, %v4833
      %v5684 = vpack.c.b16 %v4919, %v4834
      %v5685 = vpack.c.b16 %v4920, %v4835
      %v5686 = vpack.c.b16 %v4921, %v4836
      %v5687 = vpack.c.b16 %v4922, %v4837
      %v5688 = vpack.c.b16 %v4923, %v4838
      %v5689 = vpack.c.b16 %v4924, %v4839
      %v5690 = vpack.c.b16 %v4925, %v4840
      %v5691 = vpack.c.b16 %v4926, %v4841
      %v5692 = vpack.c.b16 %v4927, %v4842
      %v5693 = vpack.c.b16 %v4928, %v4843
      %v5694 = vpack.c.b16 %v4929, %v4844
      %v5695 = vpack.c.b16 %v4930, %v4845
      %v5696 = vpack.c.b16 %v4931, %v4846
      %v5697 = vpack.c.b16 %v4932, %v4847
      %v5698 = vpack.c.b16 %v4933, %v4848
      %v5699 = vpack.c.b16 %v4934, %v4849
      %v5700 = vpack.c.b16 %v4935, %v4850
      %v5701 = vpack.c.b16 %v4936, %v4851
      %v5702 = vpack.c.b16 %v4937, %v4852
      %v5703 = vpack.c.b16 %v4938, %v4853
      %v5704 = vpack.c.b16 %v4939, %v4854
      %v5705 = vpack.c.b16 %v4940, %v4855
      %v5706 = vpack.c.b16 %v4941, %v4856
      %v5707 = vpack.c.b16 %v4942, %v4857
      %v5708 = vpack.c.b16 %v4943, %v4858
      %v5709 = vpack.c.b16 %v5029, %v4944
      %v5710 = vpack.c.b16 %v5030, %v4945
      %v5711 = vpack.c.b16 %v5031, %v4946
      %v5712 = vpack.c.b16 %v5032, %v4947
      %v5713 = vpack.c.b16 %v5033, %v4948
      %v5714 = vpack.c.b16 %v5034, %v4949
      %v5715 = vpack.c.b16 %v5035, %v4950
      %v5716 = vpack.c.b16 %v5036, %v4951
      %v5717 = vpack.c.b16 %v5037, %v4952
      %v5718 = vpack.c.b16 %v5038, %v4953
      %v5719 = vpack.c.b16 %v5039, %v4954
      %v5720 = vpack.c.b16 %v5040, %v4955
      %v5721 = vpack.c.b16 %v5041, %v4956
      %v5722 = vpack.c.b16 %v5042, %v4957
      %v5723 = vpack.c.b16 %v5043, %v4958
      %v5724 = vpack.c.b16 %v5044, %v4959
      %v5725 = vpack.c.b16 %v5045, %v4960
      %v5726 = vpack.c.b16 %v5046, %v4961
      %v5727 = vpack.c.b16 %v5047, %v4962
      %v5728 = vpack.c.b16 %v5048, %v4963
      %v5729 = vpack.c.b16 %v5049, %v4964
      %v5730 = vpack.c.b16 %v5050, %v4965
      %v5731 = vpack.c.b16 %v5051, %v4966
      %v5732 = vpack.c.b16 %v5052, %v4967
      %v5733 = vpack.c.b16 %v5053, %v4968
      %v5734 = vpack.c.b16 %v5054, %v4969
      %v5735 = vpack.c.b16 %v5055, %v4970
      %v5736 = vpack.c.b16 %v5056, %v4971
      %v5737 = vpack.c.b16 %v5057, %v4972
      %v5738 = vpack.c.b16 %v5058, %v4973
      %v5739 = vpack.c.b16 %v5059, %v4974
      %v5740 = vpack.c.b16 %v5060, %v4975
      %v5741 = vpack.c.b16 %v5061, %v4976
      %v5742 = vpack.c.b16 %v5062, %v4977
      %v5743 = vpack.c.b16 %v5063, %v4978
      %v5744 = vpack.c.b16 %v5064, %v4979
      %v5745 = vpack.c.b16 %v5065, %v4980
      %v5746 = vpack.c.b16 %v5066, %v4981
      %v5747 = vpack.c.b16 %v5067, %v4982
      %v5748 = vpack.c.b16 %v5068, %v4983
      %v5749 = vpack.c.b16 %v5069, %v4984
      %v5750 = vpack.c.b16 %v5070, %v4985
      %v5751 = vpack.c.b16 %v5071, %v4986
      %v5752 = vpack.c.b16 %v5072, %v4987
      %v5753 = vpack.c.b16 %v5073, %v4988
      %v5754 = vpack.c.b16 %v5074, %v4989
      %v5755 = vpack.c.b16 %v5075, %v4990
      %v5756 = vpack.c.b16 %v5076, %v4991
      %v5757 = vpack.c.b16 %v5077, %v4992
      %v5758 = vpack.c.b16 %v5078, %v4993
      %v5759 = vpack.c.b16 %v5079, %v4994
      %v5760 = vpack.c.b16 %v5080, %v4995
      %v5761 = vpack.c.b16 %v5081, %v4996
      %v5762 = vpack.c.b16 %v5082, %v4997
      %v5763 = vpack.c.b16 %v5083, %v4998
      %v5764 = vpack.c.b16 %v5084, %v4999
      %v5765 = vpack.c.b16 %v5085, %v5000
      %v5766 = vpack.c.b16 %v5086, %v5001
      %v5767 = vpack.c.b16 %v5087, %v5002
      %v5768 = vpack.c.b16 %v5088, %v5003
      %v5769 = vpack.c.b16 %v5089, %v5004
      %v5770 = vpack.c.b16 %v5090, %v5005
      %v5771 = vpack.c.b16 %v5091, %v5006
      %v5772 = vpack.c.b16 %v5092, %v5007
      %v5773 = vpack.c.b16 %v5093, %v5008
      %v5774 = vpack.c.b16 %v5094, %v5009
      %v5775 = vpack.c.b16 %v5095, %v5010
      %v5776 = vpack.c.b16 %v5096, %v5011
      %v5777 = vpack.c.b16 %v5097, %v5012
      %v5778 = vpack.c.b16 %v5098, %v5013
      %v5779 = vpack.c.b16 %v5099, %v5014
      %v5780 = vpack.c.b16 %v5100, %v5015
      %v5781 = vpack.c.b16 %v5101, %v5016
      %v5782 = vpack.c.b16 %v5102, %v5017
      %v5783 = vpack.c.b16 %v5103, %v5018
      %v5784 = vpack.c.b16 %v5104, %v5019
      %v5785 = vpack.c.b16 %v5105, %v5020
      %v5786 = vpack.c.b16 %v5106, %v5021
      %v5787 = vpack.c.b16 %v5107, %v5022
      %v5788 = vpack.c.b16 %v5108, %v5023
      %v5789 = vpack.c.b16 %v5109, %v5024
      %v5790 = vpack.c.b16 %v5110, %v5025
      %v5791 = vpack.c.b16 %v5111, %v5026
      %v5792 = vpack.c.b16 %v5112, %v5027
      %v5793 = vpack.c.b16 %v5113, %v5028
      %vm6466 = vcmask 392192
      %v6468 = vsel %vm6466, %v5198, 0
      %v6471 = vsel %vm6466, %v5283, 0
      %v6474 = vsel %vm6466, %v5368, 0
      %v6477 = vsel %vm6466, %v5453, 0
      %v6480 = vsel %vm6466, %v5538, 0
      %v6483 = vsel %vm6466, %v5623, 0
      %v6486 = vsel %vm6466, %v5708, 0
      %v6489 = vsel %vm6466, %v5793, 0
      %6491 = vmatprep.subr.bf16.mxu0 0
      %6492 = vmatpush1.bf16.msra.mxu0 %v1614
      %6493 = vmatprep.subr.bf16.mxu0 0
      %6494 = vmatpush1.bf16.msra.mxu0 %v1613
      %6495 = vmatprep.subr.bf16.mxu0 0
      %6496 = vmatpush1.bf16.msra.mxu0 %v1612
      %6497 = vmatprep.subr.bf16.mxu0 0
      %6498 = vmatpush1.bf16.msra.mxu0 %v1611
      %6499 = vmatprep.subr.bf16.mxu0 0
      %6500 = vmatpush1.bf16.msra.mxu0 %v1610
      %6501 = vmatprep.subr.bf16.mxu0 0
      %6502 = vmatpush1.bf16.msra.mxu0 %v1609
      %6503 = vmatprep.subr.bf16.mxu0 0
      %6504 = vmatpush1.bf16.msra.mxu0 %v1608
      %6505 = vmatprep.subr.bf16.mxu0 0
      %6506 = vmatpush1.bf16.msra.mxu0 %v1607
      %6507 = vmatprep.subr.bf16.mxu0 0
      %6508 = vmatpush2.bf16.msra.mxu0 %v1622
      %6509 = vmatprep.subr.bf16.mxu0 0
      %6510 = vmatpush2.bf16.msra.mxu0 %v1621
      %6511 = vmatprep.subr.bf16.mxu0 0
      %6512 = vmatpush2.bf16.msra.mxu0 %v1620
      %6513 = vmatprep.subr.bf16.mxu0 0
      %6514 = vmatpush2.bf16.msra.mxu0 %v1619
      %6515 = vmatprep.subr.bf16.mxu0 0
      %6516 = vmatpush2.bf16.msra.mxu0 %v1618
      %6517 = vmatprep.subr.bf16.mxu0 0
      %6518 = vmatpush2.bf16.msra.mxu0 %v1617
      %6519 = vmatprep.subr.bf16.mxu0 0
      %6520 = vmatpush2.bf16.msra.mxu0 %v1616
      %6521 = vmatprep.subr.bf16.mxu0 0
      %6522 = vmatpush2.bf16.msra.mxu0 %v1615
      %6523 = vmatprep.mubr.bf16.mxu0 %v5115
      %6524 = vmatmul.mubr.bf16.gmra.mxu0 %v5114
      %v6525 = vpop.f32.mrf.mxu0
      %v6526 = vadd.f32 %v2989, %v6525
      %v6527 = vpop.f32.mrf.mxu0
      %v6528 = vpop.f32.mrf.mxu0
      %v6529 = vadd.f32 %v2994, %v6528
      %v6530 = vpop.f32.mrf.mxu0
      %6531 = vmatprep.mubr.bf16.mxu0 %v5200
      %6532 = vmatmul.mubr.bf16.gmra.mxu0 %v5199
      %v6533 = vpop.f32.mrf.mxu0
      %v6534 = vadd.f32 %v2999, %v6533
      %v6535 = vpop.f32.mrf.mxu0
      %v6536 = vpop.f32.mrf.mxu0
      %v6537 = vadd.f32 %v3004, %v6536
      %v6538 = vpop.f32.mrf.mxu0
      %6539 = vmatprep.mubr.bf16.mxu0 %v5285
      %6540 = vmatmul.mubr.bf16.gmra.mxu0 %v5284
      %v6541 = vpop.f32.mrf.mxu0
      %v6542 = vadd.f32 %v3009, %v6541
      %v6543 = vpop.f32.mrf.mxu0
      %v6544 = vpop.f32.mrf.mxu0
      %v6545 = vadd.f32 %v3014, %v6544
      %v6546 = vpop.f32.mrf.mxu0
      %6547 = vmatprep.mubr.bf16.mxu0 %v5370
      %6548 = vmatmul.mubr.bf16.gmra.mxu0 %v5369
      %v6549 = vpop.f32.mrf.mxu0
      %v6550 = vadd.f32 %v3019, %v6549
      %v6551 = vpop.f32.mrf.mxu0
      %v6552 = vpop.f32.mrf.mxu0
      %v6553 = vadd.f32 %v3024, %v6552
      %v6554 = vpop.f32.mrf.mxu0
      %6555 = vmatprep.mubr.bf16.mxu0 %v5455
      %6556 = vmatmul.mubr.bf16.gmra.mxu0 %v5454
      %v6557 = vpop.f32.mrf.mxu0
      %v6558 = vadd.f32 %v3029, %v6557
      %v6559 = vpop.f32.mrf.mxu0
      %v6560 = vpop.f32.mrf.mxu0
      %v6561 = vadd.f32 %v3034, %v6560
      %v6562 = vpop.f32.mrf.mxu0
      %6563 = vmatprep.mubr.bf16.mxu0 %v5540
      %6564 = vmatmul.mubr.bf16.gmra.mxu0 %v5539
      %v6565 = vpop.f32.mrf.mxu0
      %v6566 = vadd.f32 %v3039, %v6565
      %v6567 = vpop.f32.mrf.mxu0
      %v6568 = vpop.f32.mrf.mxu0
      %v6569 = vadd.f32 %v3044, %v6568
      %v6570 = vpop.f32.mrf.mxu0
      %6571 = vmatprep.mubr.bf16.mxu0 %v5625
      %6572 = vmatmul.mubr.bf16.gmra.mxu0 %v5624
      %v6573 = vpop.f32.mrf.mxu0
      %v6574 = vadd.f32 %v3049, %v6573
      %v6575 = vpop.f32.mrf.mxu0
      %v6576 = vpop.f32.mrf.mxu0
      %v6577 = vadd.f32 %v3054, %v6576
      %v6578 = vpop.f32.mrf.mxu0
      %6579 = vmatprep.mubr.bf16.mxu0 %v5710
      %6580 = vmatmul.mubr.bf16.gmra.mxu0 %v5709
      %v6581 = vpop.f32.mrf.mxu0
      %v6582 = vadd.f32 %v3059, %v6581
      %v6583 = vpop.f32.mrf.mxu0
      %v6584 = vpop.f32.mrf.mxu0
      %v6585 = vadd.f32 %v3064, %v6584
      %v6586 = vpop.f32.mrf.mxu0
      %6587 = vdwg.mxu0
      %6588 = vmatprep.subr.bf16.mxu0 0
      %6589 = vmatpush1.bf16.msra.mxu0 %v1630
      %6590 = vmatprep.subr.bf16.mxu0 0
      %6591 = vmatpush1.bf16.msra.mxu0 %v1629
      %6592 = vmatprep.subr.bf16.mxu0 0
      %6593 = vmatpush1.bf16.msra.mxu0 %v1628
      %6594 = vmatprep.subr.bf16.mxu0 0
      %6595 = vmatpush1.bf16.msra.mxu0 %v1627
      %6596 = vmatprep.subr.bf16.mxu0 0
      %6597 = vmatpush1.bf16.msra.mxu0 %v1626
      %6598 = vmatprep.subr.bf16.mxu0 0
      %6599 = vmatpush1.bf16.msra.mxu0 %v1625
      %6600 = vmatprep.subr.bf16.mxu0 0
      %6601 = vmatpush1.bf16.msra.mxu0 %v1624
      %6602 = vmatprep.subr.bf16.mxu0 0
      %6603 = vmatpush1.bf16.msra.mxu0 %v1623
      %6604 = vmatprep.subr.bf16.mxu0 0
      %6605 = vmatpush2.bf16.msra.mxu0 %v1638
      %6606 = vmatprep.subr.bf16.mxu0 0
      %6607 = vmatpush2.bf16.msra.mxu0 %v1637
      %6608 = vmatprep.subr.bf16.mxu0 0
      %6609 = vmatpush2.bf16.msra.mxu0 %v1636
      %6610 = vmatprep.subr.bf16.mxu0 0
      %6611 = vmatpush2.bf16.msra.mxu0 %v1635
      %6612 = vmatprep.subr.bf16.mxu0 0
      %6613 = vmatpush2.bf16.msra.mxu0 %v1634
      %6614 = vmatprep.subr.bf16.mxu0 0
      %6615 = vmatpush2.bf16.msra.mxu0 %v1633
      %6616 = vmatprep.subr.bf16.mxu0 0
      %6617 = vmatpush2.bf16.msra.mxu0 %v1632
      %6618 = vmatprep.subr.bf16.mxu0 0
      %6619 = vmatpush2.bf16.msra.mxu0 %v1631
      %6620 = vmatprep.mubr.bf16.mxu0 %v5117
      %6621 = vmatmul.mubr.bf16.gmra.mxu0 %v5116
      %v6622 = vpop.f32.mrf.mxu0
      %v6623 = vadd.f32 %v6526, %v6622
      %v6624 = vpop.f32.mrf.mxu0
      %v6625 = vpop.f32.mrf.mxu0
      %v6626 = vadd.f32 %v6529, %v6625
      %v6627 = vpop.f32.mrf.mxu0
      %6628 = vmatprep.mubr.bf16.mxu0 %v5202
      %6629 = vmatmul.mubr.bf16.gmra.mxu0 %v5201
      %v6630 = vpop.f32.mrf.mxu0
      %v6631 = vadd.f32 %v6534, %v6630
      %v6632 = vpop.f32.mrf.mxu0
      %v6633 = vpop.f32.mrf.mxu0
      %v6634 = vadd.f32 %v6537, %v6633
      %v6635 = vpop.f32.mrf.mxu0
      %6636 = vmatprep.mubr.bf16.mxu0 %v5287
      %6637 = vmatmul.mubr.bf16.gmra.mxu0 %v5286
      %v6638 = vpop.f32.mrf.mxu0
      %v6639 = vadd.f32 %v6542, %v6638
      %v6640 = vpop.f32.mrf.mxu0
      %v6641 = vpop.f32.mrf.mxu0
      %v6642 = vadd.f32 %v6545, %v6641
      %v6643 = vpop.f32.mrf.mxu0
      %6644 = vmatprep.mubr.bf16.mxu0 %v5372
      %6645 = vmatmul.mubr.bf16.gmra.mxu0 %v5371
      %v6646 = vpop.f32.mrf.mxu0
      %v6647 = vadd.f32 %v6550, %v6646
      %v6648 = vpop.f32.mrf.mxu0
      %v6649 = vpop.f32.mrf.mxu0
      %v6650 = vadd.f32 %v6553, %v6649
      %v6651 = vpop.f32.mrf.mxu0
      %6652 = vmatprep.mubr.bf16.mxu0 %v5457
      %6653 = vmatmul.mubr.bf16.gmra.mxu0 %v5456
      %v6654 = vpop.f32.mrf.mxu0
      %v6655 = vadd.f32 %v6558, %v6654
      %v6656 = vpop.f32.mrf.mxu0
      %v6657 = vpop.f32.mrf.mxu0
      %v6658 = vadd.f32 %v6561, %v6657
      %v6659 = vpop.f32.mrf.mxu0
      %6660 = vmatprep.mubr.bf16.mxu0 %v5542
      %6661 = vmatmul.mubr.bf16.gmra.mxu0 %v5541
      %v6662 = vpop.f32.mrf.mxu0
      %v6663 = vadd.f32 %v6566, %v6662
      %v6664 = vpop.f32.mrf.mxu0
      %v6665 = vpop.f32.mrf.mxu0
      %v6666 = vadd.f32 %v6569, %v6665
      %v6667 = vpop.f32.mrf.mxu0
      %6668 = vmatprep.mubr.bf16.mxu0 %v5627
      %6669 = vmatmul.mubr.bf16.gmra.mxu0 %v5626
      %v6670 = vpop.f32.mrf.mxu0
      %v6671 = vadd.f32 %v6574, %v6670
      %v6672 = vpop.f32.mrf.mxu0
      %v6673 = vpop.f32.mrf.mxu0
      %v6674 = vadd.f32 %v6577, %v6673
      %v6675 = vpop.f32.mrf.mxu0
      %6676 = vmatprep.mubr.bf16.mxu0 %v5712
      %6677 = vmatmul.mubr.bf16.gmra.mxu0 %v5711
      %v6678 = vpop.f32.mrf.mxu0
      %v6679 = vadd.f32 %v6582, %v6678
      %v6680 = vpop.f32.mrf.mxu0
      %v6681 = vpop.f32.mrf.mxu0
      %v6682 = vadd.f32 %v6585, %v6681
      %v6683 = vpop.f32.mrf.mxu0
      %6684 = vdwg.mxu0
      %6685 = vmatprep.subr.bf16.mxu0 0
      %6686 = vmatpush1.bf16.msra.mxu0 %v1646
      %6687 = vmatprep.subr.bf16.mxu0 0
      %6688 = vmatpush1.bf16.msra.mxu0 %v1645
      %6689 = vmatprep.subr.bf16.mxu0 0
      %6690 = vmatpush1.bf16.msra.mxu0 %v1644
      %6691 = vmatprep.subr.bf16.mxu0 0
      %6692 = vmatpush1.bf16.msra.mxu0 %v1643
      %6693 = vmatprep.subr.bf16.mxu0 0
      %6694 = vmatpush1.bf16.msra.mxu0 %v1642
      %6695 = vmatprep.subr.bf16.mxu0 0
      %6696 = vmatpush1.bf16.msra.mxu0 %v1641
      %6697 = vmatprep.subr.bf16.mxu0 0
      %6698 = vmatpush1.bf16.msra.mxu0 %v1640
      %6699 = vmatprep.subr.bf16.mxu0 0
      %6700 = vmatpush1.bf16.msra.mxu0 %v1639
      %6701 = vmatprep.subr.bf16.mxu0 0
      %6702 = vmatpush2.bf16.msra.mxu0 %v1654
      %6703 = vmatprep.subr.bf16.mxu0 0
      %6704 = vmatpush2.bf16.msra.mxu0 %v1653
      %6705 = vmatprep.subr.bf16.mxu0 0
      %6706 = vmatpush2.bf16.msra.mxu0 %v1652
      %6707 = vmatprep.subr.bf16.mxu0 0
      %6708 = vmatpush2.bf16.msra.mxu0 %v1651
      %6709 = vmatprep.subr.bf16.mxu0 0
      %6710 = vmatpush2.bf16.msra.mxu0 %v1650
      %6711 = vmatprep.subr.bf16.mxu0 0
      %6712 = vmatpush2.bf16.msra.mxu0 %v1649
      %6713 = vmatprep.subr.bf16.mxu0 0
      %6714 = vmatpush2.bf16.msra.mxu0 %v1648
      %6715 = vmatprep.subr.bf16.mxu0 0
      %6716 = vmatpush2.bf16.msra.mxu0 %v1647
      %6717 = vmatprep.mubr.bf16.mxu0 %v5119
      %6718 = vmatmul.mubr.bf16.gmra.mxu0 %v5118
      %v6719 = vpop.f32.mrf.mxu0
      %v6720 = vadd.f32 %v6623, %v6719
      %v6721 = vpop.f32.mrf.mxu0
      %v6722 = vpop.f32.mrf.mxu0
      %v6723 = vadd.f32 %v6626, %v6722
      %v6724 = vpop.f32.mrf.mxu0
      %6725 = vmatprep.mubr.bf16.mxu0 %v5204
      %6726 = vmatmul.mubr.bf16.gmra.mxu0 %v5203
      %v6727 = vpop.f32.mrf.mxu0
      %v6728 = vadd.f32 %v6631, %v6727
      %v6729 = vpop.f32.mrf.mxu0
      %v6730 = vpop.f32.mrf.mxu0
      %v6731 = vadd.f32 %v6634, %v6730
      %v6732 = vpop.f32.mrf.mxu0
      %6733 = vmatprep.mubr.bf16.mxu0 %v5289
      %6734 = vmatmul.mubr.bf16.gmra.mxu0 %v5288
      %v6735 = vpop.f32.mrf.mxu0
      %v6736 = vadd.f32 %v6639, %v6735
      %v6737 = vpop.f32.mrf.mxu0
      %v6738 = vpop.f32.mrf.mxu0
      %v6739 = vadd.f32 %v6642, %v6738
      %v6740 = vpop.f32.mrf.mxu0
      %6741 = vmatprep.mubr.bf16.mxu0 %v5374
      %6742 = vmatmul.mubr.bf16.gmra.mxu0 %v5373
      %v6743 = vpop.f32.mrf.mxu0
      %v6744 = vadd.f32 %v6647, %v6743
      %v6745 = vpop.f32.mrf.mxu0
      %v6746 = vpop.f32.mrf.mxu0
      %v6747 = vadd.f32 %v6650, %v6746
      %v6748 = vpop.f32.mrf.mxu0
      %6749 = vmatprep.mubr.bf16.mxu0 %v5459
      %6750 = vmatmul.mubr.bf16.gmra.mxu0 %v5458
      %v6751 = vpop.f32.mrf.mxu0
      %v6752 = vadd.f32 %v6655, %v6751
      %v6753 = vpop.f32.mrf.mxu0
      %v6754 = vpop.f32.mrf.mxu0
      %v6755 = vadd.f32 %v6658, %v6754
      %v6756 = vpop.f32.mrf.mxu0
      %6757 = vmatprep.mubr.bf16.mxu0 %v5544
      %6758 = vmatmul.mubr.bf16.gmra.mxu0 %v5543
      %v6759 = vpop.f32.mrf.mxu0
      %v6760 = vadd.f32 %v6663, %v6759
      %v6761 = vpop.f32.mrf.mxu0
      %v6762 = vpop.f32.mrf.mxu0
      %v6763 = vadd.f32 %v6666, %v6762
      %v6764 = vpop.f32.mrf.mxu0
      %6765 = vmatprep.mubr.bf16.mxu0 %v5629
      %6766 = vmatmul.mubr.bf16.gmra.mxu0 %v5628
      %v6767 = vpop.f32.mrf.mxu0
      %v6768 = vadd.f32 %v6671, %v6767
      %v6769 = vpop.f32.mrf.mxu0
      %v6770 = vpop.f32.mrf.mxu0
      %v6771 = vadd.f32 %v6674, %v6770
      %v6772 = vpop.f32.mrf.mxu0
      %6773 = vmatprep.mubr.bf16.mxu0 %v5714
      %6774 = vmatmul.mubr.bf16.gmra.mxu0 %v5713
      %v6775 = vpop.f32.mrf.mxu0
      %v6776 = vadd.f32 %v6679, %v6775
      %v6777 = vpop.f32.mrf.mxu0
      %v6778 = vpop.f32.mrf.mxu0
      %v6779 = vadd.f32 %v6682, %v6778
      %v6780 = vpop.f32.mrf.mxu0
      %6781 = vdwg.mxu0
      %6782 = vmatprep.subr.bf16.mxu0 0
      %6783 = vmatpush1.bf16.msra.mxu0 %v1662
      %6784 = vmatprep.subr.bf16.mxu0 0
      %6785 = vmatpush1.bf16.msra.mxu0 %v1661
      %6786 = vmatprep.subr.bf16.mxu0 0
      %6787 = vmatpush1.bf16.msra.mxu0 %v1660
      %6788 = vmatprep.subr.bf16.mxu0 0
      %6789 = vmatpush1.bf16.msra.mxu0 %v1659
      %6790 = vmatprep.subr.bf16.mxu0 0
      %6791 = vmatpush1.bf16.msra.mxu0 %v1658
      %6792 = vmatprep.subr.bf16.mxu0 0
      %6793 = vmatpush1.bf16.msra.mxu0 %v1657
      %6794 = vmatprep.subr.bf16.mxu0 0
      %6795 = vmatpush1.bf16.msra.mxu0 %v1656
      %6796 = vmatprep.subr.bf16.mxu0 0
      %6797 = vmatpush1.bf16.msra.mxu0 %v1655
      %6798 = vmatprep.subr.bf16.mxu0 0
      %6799 = vmatpush2.bf16.msra.mxu0 %v1670
      %6800 = vmatprep.subr.bf16.mxu0 0
      %6801 = vmatpush2.bf16.msra.mxu0 %v1669
      %6802 = vmatprep.subr.bf16.mxu0 0
      %6803 = vmatpush2.bf16.msra.mxu0 %v1668
      %6804 = vmatprep.subr.bf16.mxu0 0
      %6805 = vmatpush2.bf16.msra.mxu0 %v1667
      %6806 = vmatprep.subr.bf16.mxu0 0
      %6807 = vmatpush2.bf16.msra.mxu0 %v1666
      %6808 = vmatprep.subr.bf16.mxu0 0
      %6809 = vmatpush2.bf16.msra.mxu0 %v1665
      %6810 = vmatprep.subr.bf16.mxu0 0
      %6811 = vmatpush2.bf16.msra.mxu0 %v1664
      %6812 = vmatprep.subr.bf16.mxu0 0
      %6813 = vmatpush2.bf16.msra.mxu0 %v1663
      %6814 = vmatprep.mubr.bf16.mxu0 %v5121
      %6815 = vmatmul.mubr.bf16.gmra.mxu0 %v5120
      %v6816 = vpop.f32.mrf.mxu0
      %v6817 = vadd.f32 %v6720, %v6816
      %v6818 = vpop.f32.mrf.mxu0
      %v6819 = vpop.f32.mrf.mxu0
      %v6820 = vadd.f32 %v6723, %v6819
      %v6821 = vpop.f32.mrf.mxu0
      %6822 = vmatprep.mubr.bf16.mxu0 %v5206
      %6823 = vmatmul.mubr.bf16.gmra.mxu0 %v5205
      %v6824 = vpop.f32.mrf.mxu0
      %v6825 = vadd.f32 %v6728, %v6824
      %v6826 = vpop.f32.mrf.mxu0
      %v6827 = vpop.f32.mrf.mxu0
      %v6828 = vadd.f32 %v6731, %v6827
      %v6829 = vpop.f32.mrf.mxu0
      %6830 = vmatprep.mubr.bf16.mxu0 %v5291
      %6831 = vmatmul.mubr.bf16.gmra.mxu0 %v5290
      %v6832 = vpop.f32.mrf.mxu0
      %v6833 = vadd.f32 %v6736, %v6832
      %v6834 = vpop.f32.mrf.mxu0
      %v6835 = vpop.f32.mrf.mxu0
      %v6836 = vadd.f32 %v6739, %v6835
      %v6837 = vpop.f32.mrf.mxu0
      %6838 = vmatprep.mubr.bf16.mxu0 %v5376
      %6839 = vmatmul.mubr.bf16.gmra.mxu0 %v5375
      %v6840 = vpop.f32.mrf.mxu0
      %v6841 = vadd.f32 %v6744, %v6840
      %v6842 = vpop.f32.mrf.mxu0
      %v6843 = vpop.f32.mrf.mxu0
      %v6844 = vadd.f32 %v6747, %v6843
      %v6845 = vpop.f32.mrf.mxu0
      %6846 = vmatprep.mubr.bf16.mxu0 %v5461
      %6847 = vmatmul.mubr.bf16.gmra.mxu0 %v5460
      %v6848 = vpop.f32.mrf.mxu0
      %v6849 = vadd.f32 %v6752, %v6848
      %v6850 = vpop.f32.mrf.mxu0
      %v6851 = vpop.f32.mrf.mxu0
      %v6852 = vadd.f32 %v6755, %v6851
      %v6853 = vpop.f32.mrf.mxu0
      %6854 = vmatprep.mubr.bf16.mxu0 %v5546
      %6855 = vmatmul.mubr.bf16.gmra.mxu0 %v5545
      %v6856 = vpop.f32.mrf.mxu0
      %v6857 = vadd.f32 %v6760, %v6856
      %v6858 = vpop.f32.mrf.mxu0
      %v6859 = vpop.f32.mrf.mxu0
      %v6860 = vadd.f32 %v6763, %v6859
      %v6861 = vpop.f32.mrf.mxu0
      %6862 = vmatprep.mubr.bf16.mxu0 %v5631
      %6863 = vmatmul.mubr.bf16.gmra.mxu0 %v5630
      %v6864 = vpop.f32.mrf.mxu0
      %v6865 = vadd.f32 %v6768, %v6864
      %v6866 = vpop.f32.mrf.mxu0
      %v6867 = vpop.f32.mrf.mxu0
      %v6868 = vadd.f32 %v6771, %v6867
      %v6869 = vpop.f32.mrf.mxu0
      %6870 = vmatprep.mubr.bf16.mxu0 %v5716
      %6871 = vmatmul.mubr.bf16.gmra.mxu0 %v5715
      %v6872 = vpop.f32.mrf.mxu0
      %v6873 = vadd.f32 %v6776, %v6872
      %v6874 = vpop.f32.mrf.mxu0
      %v6875 = vpop.f32.mrf.mxu0
      %v6876 = vadd.f32 %v6779, %v6875
      %v6877 = vpop.f32.mrf.mxu0
      %6878 = vdwg.mxu0
      %6879 = vmatprep.subr.bf16.mxu0 0
      %6880 = vmatpush1.bf16.msra.mxu0 %v1678
      %6881 = vmatprep.subr.bf16.mxu0 0
      %6882 = vmatpush1.bf16.msra.mxu0 %v1677
      %6883 = vmatprep.subr.bf16.mxu0 0
      %6884 = vmatpush1.bf16.msra.mxu0 %v1676
      %6885 = vmatprep.subr.bf16.mxu0 0
      %6886 = vmatpush1.bf16.msra.mxu0 %v1675
      %6887 = vmatprep.subr.bf16.mxu0 0
      %6888 = vmatpush1.bf16.msra.mxu0 %v1674
      %6889 = vmatprep.subr.bf16.mxu0 0
      %6890 = vmatpush1.bf16.msra.mxu0 %v1673
      %6891 = vmatprep.subr.bf16.mxu0 0
      %6892 = vmatpush1.bf16.msra.mxu0 %v1672
      %6893 = vmatprep.subr.bf16.mxu0 0
      %6894 = vmatpush1.bf16.msra.mxu0 %v1671
      %6895 = vmatprep.subr.bf16.mxu0 0
      %6896 = vmatpush2.bf16.msra.mxu0 %v1686
      %6897 = vmatprep.subr.bf16.mxu0 0
      %6898 = vmatpush2.bf16.msra.mxu0 %v1685
      %6899 = vmatprep.subr.bf16.mxu0 0
      %6900 = vmatpush2.bf16.msra.mxu0 %v1684
      %6901 = vmatprep.subr.bf16.mxu0 0
      %6902 = vmatpush2.bf16.msra.mxu0 %v1683
      %6903 = vmatprep.subr.bf16.mxu0 0
      %6904 = vmatpush2.bf16.msra.mxu0 %v1682
      %6905 = vmatprep.subr.bf16.mxu0 0
      %6906 = vmatpush2.bf16.msra.mxu0 %v1681
      %6907 = vmatprep.subr.bf16.mxu0 0
      %6908 = vmatpush2.bf16.msra.mxu0 %v1680
      %6909 = vmatprep.subr.bf16.mxu0 0
      %6910 = vmatpush2.bf16.msra.mxu0 %v1679
      %6911 = vmatprep.mubr.bf16.mxu0 %v5123
      %6912 = vmatmul.mubr.bf16.gmra.mxu0 %v5122
      %v6913 = vpop.f32.mrf.mxu0
      %v6914 = vadd.f32 %v6817, %v6913
      %v6915 = vpop.f32.mrf.mxu0
      %v6916 = vpop.f32.mrf.mxu0
      %v6917 = vadd.f32 %v6820, %v6916
      %v6918 = vpop.f32.mrf.mxu0
      %6919 = vmatprep.mubr.bf16.mxu0 %v5208
      %6920 = vmatmul.mubr.bf16.gmra.mxu0 %v5207
      %v6921 = vpop.f32.mrf.mxu0
      %v6922 = vadd.f32 %v6825, %v6921
      %v6923 = vpop.f32.mrf.mxu0
      %v6924 = vpop.f32.mrf.mxu0
      %v6925 = vadd.f32 %v6828, %v6924
      %v6926 = vpop.f32.mrf.mxu0
      %6927 = vmatprep.mubr.bf16.mxu0 %v5293
      %6928 = vmatmul.mubr.bf16.gmra.mxu0 %v5292
      %v6929 = vpop.f32.mrf.mxu0
      %v6930 = vadd.f32 %v6833, %v6929
      %v6931 = vpop.f32.mrf.mxu0
      %v6932 = vpop.f32.mrf.mxu0
      %v6933 = vadd.f32 %v6836, %v6932
      %v6934 = vpop.f32.mrf.mxu0
      %6935 = vmatprep.mubr.bf16.mxu0 %v5378
      %6936 = vmatmul.mubr.bf16.gmra.mxu0 %v5377
      %v6937 = vpop.f32.mrf.mxu0
      %v6938 = vadd.f32 %v6841, %v6937
      %v6939 = vpop.f32.mrf.mxu0
      %v6940 = vpop.f32.mrf.mxu0
      %v6941 = vadd.f32 %v6844, %v6940
      %v6942 = vpop.f32.mrf.mxu0
      %6943 = vmatprep.mubr.bf16.mxu0 %v5463
      %6944 = vmatmul.mubr.bf16.gmra.mxu0 %v5462
      %v6945 = vpop.f32.mrf.mxu0
      %v6946 = vadd.f32 %v6849, %v6945
      %v6947 = vpop.f32.mrf.mxu0
      %v6948 = vpop.f32.mrf.mxu0
      %v6949 = vadd.f32 %v6852, %v6948
      %v6950 = vpop.f32.mrf.mxu0
      %6951 = vmatprep.mubr.bf16.mxu0 %v5548
      %6952 = vmatmul.mubr.bf16.gmra.mxu0 %v5547
      %v6953 = vpop.f32.mrf.mxu0
      %v6954 = vadd.f32 %v6857, %v6953
      %v6955 = vpop.f32.mrf.mxu0
      %v6956 = vpop.f32.mrf.mxu0
      %v6957 = vadd.f32 %v6860, %v6956
      %v6958 = vpop.f32.mrf.mxu0
      %6959 = vmatprep.mubr.bf16.mxu0 %v5633
      %6960 = vmatmul.mubr.bf16.gmra.mxu0 %v5632
      %v6961 = vpop.f32.mrf.mxu0
      %v6962 = vadd.f32 %v6865, %v6961
      %v6963 = vpop.f32.mrf.mxu0
      %v6964 = vpop.f32.mrf.mxu0
      %v6965 = vadd.f32 %v6868, %v6964
      %v6966 = vpop.f32.mrf.mxu0
      %6967 = vmatprep.mubr.bf16.mxu0 %v5718
      %6968 = vmatmul.mubr.bf16.gmra.mxu0 %v5717
      %v6969 = vpop.f32.mrf.mxu0
      %v6970 = vadd.f32 %v6873, %v6969
      %v6971 = vpop.f32.mrf.mxu0
      %v6972 = vpop.f32.mrf.mxu0
      %v6973 = vadd.f32 %v6876, %v6972
      %v6974 = vpop.f32.mrf.mxu0
      %6975 = vdwg.mxu0
      %6976 = vmatprep.subr.bf16.mxu0 0
      %6977 = vmatpush1.bf16.msra.mxu0 %v1694
      %6978 = vmatprep.subr.bf16.mxu0 0
      %6979 = vmatpush1.bf16.msra.mxu0 %v1693
      %6980 = vmatprep.subr.bf16.mxu0 0
      %6981 = vmatpush1.bf16.msra.mxu0 %v1692
      %6982 = vmatprep.subr.bf16.mxu0 0
      %6983 = vmatpush1.bf16.msra.mxu0 %v1691
      %6984 = vmatprep.subr.bf16.mxu0 0
      %6985 = vmatpush1.bf16.msra.mxu0 %v1690
      %6986 = vmatprep.subr.bf16.mxu0 0
      %6987 = vmatpush1.bf16.msra.mxu0 %v1689
      %6988 = vmatprep.subr.bf16.mxu0 0
      %6989 = vmatpush1.bf16.msra.mxu0 %v1688
      %6990 = vmatprep.subr.bf16.mxu0 0
      %6991 = vmatpush1.bf16.msra.mxu0 %v1687
      %6992 = vmatprep.subr.bf16.mxu0 0
      %6993 = vmatpush2.bf16.msra.mxu0 %v1702
      %6994 = vmatprep.subr.bf16.mxu0 0
      %6995 = vmatpush2.bf16.msra.mxu0 %v1701
      %6996 = vmatprep.subr.bf16.mxu0 0
      %6997 = vmatpush2.bf16.msra.mxu0 %v1700
      %6998 = vmatprep.subr.bf16.mxu0 0
      %6999 = vmatpush2.bf16.msra.mxu0 %v1699
      %7000 = vmatprep.subr.bf16.mxu0 0
      %7001 = vmatpush2.bf16.msra.mxu0 %v1698
      %7002 = vmatprep.subr.bf16.mxu0 0
      %7003 = vmatpush2.bf16.msra.mxu0 %v1697
      %7004 = vmatprep.subr.bf16.mxu0 0
      %7005 = vmatpush2.bf16.msra.mxu0 %v1696
      %7006 = vmatprep.subr.bf16.mxu0 0
      %7007 = vmatpush2.bf16.msra.mxu0 %v1695
      %7008 = vmatprep.mubr.bf16.mxu0 %v5125
      %7009 = vmatmul.mubr.bf16.gmra.mxu0 %v5124
      %v7010 = vpop.f32.mrf.mxu0
      %v7011 = vadd.f32 %v6914, %v7010
      %v7012 = vpop.f32.mrf.mxu0
      %v7013 = vpop.f32.mrf.mxu0
      %v7014 = vadd.f32 %v6917, %v7013
      %v7015 = vpop.f32.mrf.mxu0
      %7016 = vmatprep.mubr.bf16.mxu0 %v5210
      %7017 = vmatmul.mubr.bf16.gmra.mxu0 %v5209
      %v7018 = vpop.f32.mrf.mxu0
      %v7019 = vadd.f32 %v6922, %v7018
      %v7020 = vpop.f32.mrf.mxu0
      %v7021 = vpop.f32.mrf.mxu0
      %v7022 = vadd.f32 %v6925, %v7021
      %v7023 = vpop.f32.mrf.mxu0
      %7024 = vmatprep.mubr.bf16.mxu0 %v5295
      %7025 = vmatmul.mubr.bf16.gmra.mxu0 %v5294
      %v7026 = vpop.f32.mrf.mxu0
      %v7027 = vadd.f32 %v6930, %v7026
      %v7028 = vpop.f32.mrf.mxu0
      %v7029 = vpop.f32.mrf.mxu0
      %v7030 = vadd.f32 %v6933, %v7029
      %v7031 = vpop.f32.mrf.mxu0
      %7032 = vmatprep.mubr.bf16.mxu0 %v5380
      %7033 = vmatmul.mubr.bf16.gmra.mxu0 %v5379
      %v7034 = vpop.f32.mrf.mxu0
      %v7035 = vadd.f32 %v6938, %v7034
      %v7036 = vpop.f32.mrf.mxu0
      %v7037 = vpop.f32.mrf.mxu0
      %v7038 = vadd.f32 %v6941, %v7037
      %v7039 = vpop.f32.mrf.mxu0
      %7040 = vmatprep.mubr.bf16.mxu0 %v5465
      %7041 = vmatmul.mubr.bf16.gmra.mxu0 %v5464
      %v7042 = vpop.f32.mrf.mxu0
      %v7043 = vadd.f32 %v6946, %v7042
      %v7044 = vpop.f32.mrf.mxu0
      %v7045 = vpop.f32.mrf.mxu0
      %v7046 = vadd.f32 %v6949, %v7045
      %v7047 = vpop.f32.mrf.mxu0
      %7048 = vmatprep.mubr.bf16.mxu0 %v5550
      %7049 = vmatmul.mubr.bf16.gmra.mxu0 %v5549
      %v7050 = vpop.f32.mrf.mxu0
      %v7051 = vadd.f32 %v6954, %v7050
      %v7052 = vpop.f32.mrf.mxu0
      %v7053 = vpop.f32.mrf.mxu0
      %v7054 = vadd.f32 %v6957, %v7053
      %v7055 = vpop.f32.mrf.mxu0
      %7056 = vmatprep.mubr.bf16.mxu0 %v5635
      %7057 = vmatmul.mubr.bf16.gmra.mxu0 %v5634
      %v7058 = vpop.f32.mrf.mxu0
      %v7059 = vadd.f32 %v6962, %v7058
      %v7060 = vpop.f32.mrf.mxu0
      %v7061 = vpop.f32.mrf.mxu0
      %v7062 = vadd.f32 %v6965, %v7061
      %v7063 = vpop.f32.mrf.mxu0
      %7064 = vmatprep.mubr.bf16.mxu0 %v5720
      %7065 = vmatmul.mubr.bf16.gmra.mxu0 %v5719
      %v7066 = vpop.f32.mrf.mxu0
      %v7067 = vadd.f32 %v6970, %v7066
      %v7068 = vpop.f32.mrf.mxu0
      %v7069 = vpop.f32.mrf.mxu0
      %v7070 = vadd.f32 %v6973, %v7069
      %v7071 = vpop.f32.mrf.mxu0
      %7072 = vdwg.mxu0
      %7073 = vmatprep.subr.bf16.mxu0 0
      %7074 = vmatpush1.bf16.msra.mxu0 %v1710
      %7075 = vmatprep.subr.bf16.mxu0 0
      %7076 = vmatpush1.bf16.msra.mxu0 %v1709
      %7077 = vmatprep.subr.bf16.mxu0 0
      %7078 = vmatpush1.bf16.msra.mxu0 %v1708
      %7079 = vmatprep.subr.bf16.mxu0 0
      %7080 = vmatpush1.bf16.msra.mxu0 %v1707
      %7081 = vmatprep.subr.bf16.mxu0 0
      %7082 = vmatpush1.bf16.msra.mxu0 %v1706
      %7083 = vmatprep.subr.bf16.mxu0 0
      %7084 = vmatpush1.bf16.msra.mxu0 %v1705
      %7085 = vmatprep.subr.bf16.mxu0 0
      %7086 = vmatpush1.bf16.msra.mxu0 %v1704
      %7087 = vmatprep.subr.bf16.mxu0 0
      %7088 = vmatpush1.bf16.msra.mxu0 %v1703
      %7089 = vmatprep.subr.bf16.mxu0 0
      %7090 = vmatpush2.bf16.msra.mxu0 %v1718
      %7091 = vmatprep.subr.bf16.mxu0 0
      %7092 = vmatpush2.bf16.msra.mxu0 %v1717
      %7093 = vmatprep.subr.bf16.mxu0 0
      %7094 = vmatpush2.bf16.msra.mxu0 %v1716
      %7095 = vmatprep.subr.bf16.mxu0 0
      %7096 = vmatpush2.bf16.msra.mxu0 %v1715
      %7097 = vmatprep.subr.bf16.mxu0 0
      %7098 = vmatpush2.bf16.msra.mxu0 %v1714
      %7099 = vmatprep.subr.bf16.mxu0 0
      %7100 = vmatpush2.bf16.msra.mxu0 %v1713
      %7101 = vmatprep.subr.bf16.mxu0 0
      %7102 = vmatpush2.bf16.msra.mxu0 %v1712
      %7103 = vmatprep.subr.bf16.mxu0 0
      %7104 = vmatpush2.bf16.msra.mxu0 %v1711
      %7105 = vmatprep.mubr.bf16.mxu0 %v5127
      %7106 = vmatmul.mubr.bf16.gmra.mxu0 %v5126
      %v7107 = vpop.f32.mrf.mxu0
      %v7108 = vadd.f32 %v7011, %v7107
      %v7109 = vpop.f32.mrf.mxu0
      %v7110 = vpop.f32.mrf.mxu0
      %v7111 = vadd.f32 %v7014, %v7110
      %v7112 = vpop.f32.mrf.mxu0
      %7113 = vmatprep.mubr.bf16.mxu0 %v5212
      %7114 = vmatmul.mubr.bf16.gmra.mxu0 %v5211
      %v7115 = vpop.f32.mrf.mxu0
      %v7116 = vadd.f32 %v7019, %v7115
      %v7117 = vpop.f32.mrf.mxu0
      %v7118 = vpop.f32.mrf.mxu0
      %v7119 = vadd.f32 %v7022, %v7118
      %v7120 = vpop.f32.mrf.mxu0
      %7121 = vmatprep.mubr.bf16.mxu0 %v5297
      %7122 = vmatmul.mubr.bf16.gmra.mxu0 %v5296
      %v7123 = vpop.f32.mrf.mxu0
      %v7124 = vadd.f32 %v7027, %v7123
      %v7125 = vpop.f32.mrf.mxu0
      %v7126 = vpop.f32.mrf.mxu0
      %v7127 = vadd.f32 %v7030, %v7126
      %v7128 = vpop.f32.mrf.mxu0
      %7129 = vmatprep.mubr.bf16.mxu0 %v5382
      %7130 = vmatmul.mubr.bf16.gmra.mxu0 %v5381
      %v7131 = vpop.f32.mrf.mxu0
      %v7132 = vadd.f32 %v7035, %v7131
      %v7133 = vpop.f32.mrf.mxu0
      %v7134 = vpop.f32.mrf.mxu0
      %v7135 = vadd.f32 %v7038, %v7134
      %v7136 = vpop.f32.mrf.mxu0
      %7137 = vmatprep.mubr.bf16.mxu0 %v5467
      %7138 = vmatmul.mubr.bf16.gmra.mxu0 %v5466
      %v7139 = vpop.f32.mrf.mxu0
      %v7140 = vadd.f32 %v7043, %v7139
      %v7141 = vpop.f32.mrf.mxu0
      %v7142 = vpop.f32.mrf.mxu0
      %v7143 = vadd.f32 %v7046, %v7142
      %v7144 = vpop.f32.mrf.mxu0
      %7145 = vmatprep.mubr.bf16.mxu0 %v5552
      %7146 = vmatmul.mubr.bf16.gmra.mxu0 %v5551
      %v7147 = vpop.f32.mrf.mxu0
      %v7148 = vadd.f32 %v7051, %v7147
      %v7149 = vpop.f32.mrf.mxu0
      %v7150 = vpop.f32.mrf.mxu0
      %v7151 = vadd.f32 %v7054, %v7150
      %v7152 = vpop.f32.mrf.mxu0
      %7153 = vmatprep.mubr.bf16.mxu0 %v5637
      %7154 = vmatmul.mubr.bf16.gmra.mxu0 %v5636
      %v7155 = vpop.f32.mrf.mxu0
      %v7156 = vadd.f32 %v7059, %v7155
      %v7157 = vpop.f32.mrf.mxu0
      %v7158 = vpop.f32.mrf.mxu0
      %v7159 = vadd.f32 %v7062, %v7158
      %v7160 = vpop.f32.mrf.mxu0
      %7161 = vmatprep.mubr.bf16.mxu0 %v5722
      %7162 = vmatmul.mubr.bf16.gmra.mxu0 %v5721
      %v7163 = vpop.f32.mrf.mxu0
      %v7164 = vadd.f32 %v7067, %v7163
      %v7165 = vpop.f32.mrf.mxu0
      %v7166 = vpop.f32.mrf.mxu0
      %v7167 = vadd.f32 %v7070, %v7166
      %v7168 = vpop.f32.mrf.mxu0
      %7169 = vdwg.mxu0
      %7170 = vmatprep.subr.bf16.mxu0 0
      %7171 = vmatpush1.bf16.msra.mxu0 %v1726
      %7172 = vmatprep.subr.bf16.mxu0 0
      %7173 = vmatpush1.bf16.msra.mxu0 %v1725
      %7174 = vmatprep.subr.bf16.mxu0 0
      %7175 = vmatpush1.bf16.msra.mxu0 %v1724
      %7176 = vmatprep.subr.bf16.mxu0 0
      %7177 = vmatpush1.bf16.msra.mxu0 %v1723
      %7178 = vmatprep.subr.bf16.mxu0 0
      %7179 = vmatpush1.bf16.msra.mxu0 %v1722
      %7180 = vmatprep.subr.bf16.mxu0 0
      %7181 = vmatpush1.bf16.msra.mxu0 %v1721
      %7182 = vmatprep.subr.bf16.mxu0 0
      %7183 = vmatpush1.bf16.msra.mxu0 %v1720
      %7184 = vmatprep.subr.bf16.mxu0 0
      %7185 = vmatpush1.bf16.msra.mxu0 %v1719
      %7186 = vmatprep.subr.bf16.mxu0 0
      %7187 = vmatpush2.bf16.msra.mxu0 %v1734
      %7188 = vmatprep.subr.bf16.mxu0 0
      %7189 = vmatpush2.bf16.msra.mxu0 %v1733
      %7190 = vmatprep.subr.bf16.mxu0 0
      %7191 = vmatpush2.bf16.msra.mxu0 %v1732
      %7192 = vmatprep.subr.bf16.mxu0 0
      %7193 = vmatpush2.bf16.msra.mxu0 %v1731
      %7194 = vmatprep.subr.bf16.mxu0 0
      %7195 = vmatpush2.bf16.msra.mxu0 %v1730
      %7196 = vmatprep.subr.bf16.mxu0 0
      %7197 = vmatpush2.bf16.msra.mxu0 %v1729
      %7198 = vmatprep.subr.bf16.mxu0 0
      %7199 = vmatpush2.bf16.msra.mxu0 %v1728
      %7200 = vmatprep.subr.bf16.mxu0 0
      %7201 = vmatpush2.bf16.msra.mxu0 %v1727
      %7202 = vmatprep.mubr.bf16.mxu0 %v5129
      %7203 = vmatmul.mubr.bf16.gmra.mxu0 %v5128
      %v7204 = vpop.f32.mrf.mxu0
      %v7205 = vadd.f32 %v7108, %v7204
      %v7206 = vpop.f32.mrf.mxu0
      %v7207 = vpop.f32.mrf.mxu0
      %v7208 = vadd.f32 %v7111, %v7207
      %v7209 = vpop.f32.mrf.mxu0
      %7210 = vmatprep.mubr.bf16.mxu0 %v5214
      %7211 = vmatmul.mubr.bf16.gmra.mxu0 %v5213
      %v7212 = vpop.f32.mrf.mxu0
      %v7213 = vadd.f32 %v7116, %v7212
      %v7214 = vpop.f32.mrf.mxu0
      %v7215 = vpop.f32.mrf.mxu0
      %v7216 = vadd.f32 %v7119, %v7215
      %v7217 = vpop.f32.mrf.mxu0
      %7218 = vmatprep.mubr.bf16.mxu0 %v5299
      %7219 = vmatmul.mubr.bf16.gmra.mxu0 %v5298
      %v7220 = vpop.f32.mrf.mxu0
      %v7221 = vadd.f32 %v7124, %v7220
      %v7222 = vpop.f32.mrf.mxu0
      %v7223 = vpop.f32.mrf.mxu0
      %v7224 = vadd.f32 %v7127, %v7223
      %v7225 = vpop.f32.mrf.mxu0
      %7226 = vmatprep.mubr.bf16.mxu0 %v5384
      %7227 = vmatmul.mubr.bf16.gmra.mxu0 %v5383
      %v7228 = vpop.f32.mrf.mxu0
      %v7229 = vadd.f32 %v7132, %v7228
      %v7230 = vpop.f32.mrf.mxu0
      %v7231 = vpop.f32.mrf.mxu0
      %v7232 = vadd.f32 %v7135, %v7231
      %v7233 = vpop.f32.mrf.mxu0
      %7234 = vmatprep.mubr.bf16.mxu0 %v5469
      %7235 = vmatmul.mubr.bf16.gmra.mxu0 %v5468
      %v7236 = vpop.f32.mrf.mxu0
      %v7237 = vadd.f32 %v7140, %v7236
      %v7238 = vpop.f32.mrf.mxu0
      %v7239 = vpop.f32.mrf.mxu0
      %v7240 = vadd.f32 %v7143, %v7239
      %v7241 = vpop.f32.mrf.mxu0
      %7242 = vmatprep.mubr.bf16.mxu0 %v5554
      %7243 = vmatmul.mubr.bf16.gmra.mxu0 %v5553
      %v7244 = vpop.f32.mrf.mxu0
      %v7245 = vadd.f32 %v7148, %v7244
      %v7246 = vpop.f32.mrf.mxu0
      %v7247 = vpop.f32.mrf.mxu0
      %v7248 = vadd.f32 %v7151, %v7247
      %v7249 = vpop.f32.mrf.mxu0
      %7250 = vmatprep.mubr.bf16.mxu0 %v5639
      %7251 = vmatmul.mubr.bf16.gmra.mxu0 %v5638
      %v7252 = vpop.f32.mrf.mxu0
      %v7253 = vadd.f32 %v7156, %v7252
      %v7254 = vpop.f32.mrf.mxu0
      %v7255 = vpop.f32.mrf.mxu0
      %v7256 = vadd.f32 %v7159, %v7255
      %v7257 = vpop.f32.mrf.mxu0
      %7258 = vmatprep.mubr.bf16.mxu0 %v5724
      %7259 = vmatmul.mubr.bf16.gmra.mxu0 %v5723
      %v7260 = vpop.f32.mrf.mxu0
      %v7261 = vadd.f32 %v7164, %v7260
      %v7262 = vpop.f32.mrf.mxu0
      %v7263 = vpop.f32.mrf.mxu0
      %v7264 = vadd.f32 %v7167, %v7263
      %v7265 = vpop.f32.mrf.mxu0
      %7266 = vdwg.mxu0
      %7267 = vmatprep.subr.bf16.mxu0 0
      %7268 = vmatpush1.bf16.msra.mxu0 %v1742
      %7269 = vmatprep.subr.bf16.mxu0 0
      %7270 = vmatpush1.bf16.msra.mxu0 %v1741
      %7271 = vmatprep.subr.bf16.mxu0 0
      %7272 = vmatpush1.bf16.msra.mxu0 %v1740
      %7273 = vmatprep.subr.bf16.mxu0 0
      %7274 = vmatpush1.bf16.msra.mxu0 %v1739
      %7275 = vmatprep.subr.bf16.mxu0 0
      %7276 = vmatpush1.bf16.msra.mxu0 %v1738
      %7277 = vmatprep.subr.bf16.mxu0 0
      %7278 = vmatpush1.bf16.msra.mxu0 %v1737
      %7279 = vmatprep.subr.bf16.mxu0 0
      %7280 = vmatpush1.bf16.msra.mxu0 %v1736
      %7281 = vmatprep.subr.bf16.mxu0 0
      %7282 = vmatpush1.bf16.msra.mxu0 %v1735
      %7283 = vmatprep.subr.bf16.mxu0 0
      %7284 = vmatpush2.bf16.msra.mxu0 %v1750
      %7285 = vmatprep.subr.bf16.mxu0 0
      %7286 = vmatpush2.bf16.msra.mxu0 %v1749
      %7287 = vmatprep.subr.bf16.mxu0 0
      %7288 = vmatpush2.bf16.msra.mxu0 %v1748
      %7289 = vmatprep.subr.bf16.mxu0 0
      %7290 = vmatpush2.bf16.msra.mxu0 %v1747
      %7291 = vmatprep.subr.bf16.mxu0 0
      %7292 = vmatpush2.bf16.msra.mxu0 %v1746
      %7293 = vmatprep.subr.bf16.mxu0 0
      %7294 = vmatpush2.bf16.msra.mxu0 %v1745
      %7295 = vmatprep.subr.bf16.mxu0 0
      %7296 = vmatpush2.bf16.msra.mxu0 %v1744
      %7297 = vmatprep.subr.bf16.mxu0 0
      %7298 = vmatpush2.bf16.msra.mxu0 %v1743
      %7299 = vmatprep.mubr.bf16.mxu0 %v5131
      %7300 = vmatmul.mubr.bf16.gmra.mxu0 %v5130
      %v7301 = vpop.f32.mrf.mxu0
      %v7302 = vadd.f32 %v7205, %v7301
      %v7303 = vpop.f32.mrf.mxu0
      %v7304 = vpop.f32.mrf.mxu0
      %v7305 = vadd.f32 %v7208, %v7304
      %v7306 = vpop.f32.mrf.mxu0
      %7307 = vmatprep.mubr.bf16.mxu0 %v5216
      %7308 = vmatmul.mubr.bf16.gmra.mxu0 %v5215
      %v7309 = vpop.f32.mrf.mxu0
      %v7310 = vadd.f32 %v7213, %v7309
      %v7311 = vpop.f32.mrf.mxu0
      %v7312 = vpop.f32.mrf.mxu0
      %v7313 = vadd.f32 %v7216, %v7312
      %v7314 = vpop.f32.mrf.mxu0
      %7315 = vmatprep.mubr.bf16.mxu0 %v5301
      %7316 = vmatmul.mubr.bf16.gmra.mxu0 %v5300
      %v7317 = vpop.f32.mrf.mxu0
      %v7318 = vadd.f32 %v7221, %v7317
      %v7319 = vpop.f32.mrf.mxu0
      %v7320 = vpop.f32.mrf.mxu0
      %v7321 = vadd.f32 %v7224, %v7320
      %v7322 = vpop.f32.mrf.mxu0
      %7323 = vmatprep.mubr.bf16.mxu0 %v5386
      %7324 = vmatmul.mubr.bf16.gmra.mxu0 %v5385
      %v7325 = vpop.f32.mrf.mxu0
      %v7326 = vadd.f32 %v7229, %v7325
      %v7327 = vpop.f32.mrf.mxu0
      %v7328 = vpop.f32.mrf.mxu0
      %v7329 = vadd.f32 %v7232, %v7328
      %v7330 = vpop.f32.mrf.mxu0
      %7331 = vmatprep.mubr.bf16.mxu0 %v5471
      %7332 = vmatmul.mubr.bf16.gmra.mxu0 %v5470
      %v7333 = vpop.f32.mrf.mxu0
      %v7334 = vadd.f32 %v7237, %v7333
      %v7335 = vpop.f32.mrf.mxu0
      %v7336 = vpop.f32.mrf.mxu0
      %v7337 = vadd.f32 %v7240, %v7336
      %v7338 = vpop.f32.mrf.mxu0
      %7339 = vmatprep.mubr.bf16.mxu0 %v5556
      %7340 = vmatmul.mubr.bf16.gmra.mxu0 %v5555
      %v7341 = vpop.f32.mrf.mxu0
      %v7342 = vadd.f32 %v7245, %v7341
      %v7343 = vpop.f32.mrf.mxu0
      %v7344 = vpop.f32.mrf.mxu0
      %v7345 = vadd.f32 %v7248, %v7344
      %v7346 = vpop.f32.mrf.mxu0
      %7347 = vmatprep.mubr.bf16.mxu0 %v5641
      %7348 = vmatmul.mubr.bf16.gmra.mxu0 %v5640
      %v7349 = vpop.f32.mrf.mxu0
      %v7350 = vadd.f32 %v7253, %v7349
      %v7351 = vpop.f32.mrf.mxu0
      %v7352 = vpop.f32.mrf.mxu0
      %v7353 = vadd.f32 %v7256, %v7352
      %v7354 = vpop.f32.mrf.mxu0
      %7355 = vmatprep.mubr.bf16.mxu0 %v5726
      %7356 = vmatmul.mubr.bf16.gmra.mxu0 %v5725
      %v7357 = vpop.f32.mrf.mxu0
      %v7358 = vadd.f32 %v7261, %v7357
      %v7359 = vpop.f32.mrf.mxu0
      %v7360 = vpop.f32.mrf.mxu0
      %v7361 = vadd.f32 %v7264, %v7360
      %v7362 = vpop.f32.mrf.mxu0
      %7363 = vdwg.mxu0
      %7364 = vmatprep.subr.bf16.mxu0 0
      %7365 = vmatpush1.bf16.msra.mxu0 %v1758
      %7366 = vmatprep.subr.bf16.mxu0 0
      %7367 = vmatpush1.bf16.msra.mxu0 %v1757
      %7368 = vmatprep.subr.bf16.mxu0 0
      %7369 = vmatpush1.bf16.msra.mxu0 %v1756
      %7370 = vmatprep.subr.bf16.mxu0 0
      %7371 = vmatpush1.bf16.msra.mxu0 %v1755
      %7372 = vmatprep.subr.bf16.mxu0 0
      %7373 = vmatpush1.bf16.msra.mxu0 %v1754
      %7374 = vmatprep.subr.bf16.mxu0 0
      %7375 = vmatpush1.bf16.msra.mxu0 %v1753
      %7376 = vmatprep.subr.bf16.mxu0 0
      %7377 = vmatpush1.bf16.msra.mxu0 %v1752
      %7378 = vmatprep.subr.bf16.mxu0 0
      %7379 = vmatpush1.bf16.msra.mxu0 %v1751
      %7380 = vmatprep.subr.bf16.mxu0 0
      %7381 = vmatpush2.bf16.msra.mxu0 %v1766
      %7382 = vmatprep.subr.bf16.mxu0 0
      %7383 = vmatpush2.bf16.msra.mxu0 %v1765
      %7384 = vmatprep.subr.bf16.mxu0 0
      %7385 = vmatpush2.bf16.msra.mxu0 %v1764
      %7386 = vmatprep.subr.bf16.mxu0 0
      %7387 = vmatpush2.bf16.msra.mxu0 %v1763
      %7388 = vmatprep.subr.bf16.mxu0 0
      %7389 = vmatpush2.bf16.msra.mxu0 %v1762
      %7390 = vmatprep.subr.bf16.mxu0 0
      %7391 = vmatpush2.bf16.msra.mxu0 %v1761
      %7392 = vmatprep.subr.bf16.mxu0 0
      %7393 = vmatpush2.bf16.msra.mxu0 %v1760
      %7394 = vmatprep.subr.bf16.mxu0 0
      %7395 = vmatpush2.bf16.msra.mxu0 %v1759
      %7396 = vmatprep.mubr.bf16.mxu0 %v5133
      %7397 = vmatmul.mubr.bf16.gmra.mxu0 %v5132
      %v7398 = vpop.f32.mrf.mxu0
      %v7399 = vadd.f32 %v7302, %v7398
      %v7400 = vpop.f32.mrf.mxu0
      %v7401 = vpop.f32.mrf.mxu0
      %v7402 = vadd.f32 %v7305, %v7401
      %v7403 = vpop.f32.mrf.mxu0
      %7404 = vmatprep.mubr.bf16.mxu0 %v5218
      %7405 = vmatmul.mubr.bf16.gmra.mxu0 %v5217
      %v7406 = vpop.f32.mrf.mxu0
      %v7407 = vadd.f32 %v7310, %v7406
      %v7408 = vpop.f32.mrf.mxu0
      %v7409 = vpop.f32.mrf.mxu0
      %v7410 = vadd.f32 %v7313, %v7409
      %v7411 = vpop.f32.mrf.mxu0
      %7412 = vmatprep.mubr.bf16.mxu0 %v5303
      %7413 = vmatmul.mubr.bf16.gmra.mxu0 %v5302
      %v7414 = vpop.f32.mrf.mxu0
      %v7415 = vadd.f32 %v7318, %v7414
      %v7416 = vpop.f32.mrf.mxu0
      %v7417 = vpop.f32.mrf.mxu0
      %v7418 = vadd.f32 %v7321, %v7417
      %v7419 = vpop.f32.mrf.mxu0
      %7420 = vmatprep.mubr.bf16.mxu0 %v5388
      %7421 = vmatmul.mubr.bf16.gmra.mxu0 %v5387
      %v7422 = vpop.f32.mrf.mxu0
      %v7423 = vadd.f32 %v7326, %v7422
      %v7424 = vpop.f32.mrf.mxu0
      %v7425 = vpop.f32.mrf.mxu0
      %v7426 = vadd.f32 %v7329, %v7425
      %v7427 = vpop.f32.mrf.mxu0
      %7428 = vmatprep.mubr.bf16.mxu0 %v5473
      %7429 = vmatmul.mubr.bf16.gmra.mxu0 %v5472
      %v7430 = vpop.f32.mrf.mxu0
      %v7431 = vadd.f32 %v7334, %v7430
      %v7432 = vpop.f32.mrf.mxu0
      %v7433 = vpop.f32.mrf.mxu0
      %v7434 = vadd.f32 %v7337, %v7433
      %v7435 = vpop.f32.mrf.mxu0
      %7436 = vmatprep.mubr.bf16.mxu0 %v5558
      %7437 = vmatmul.mubr.bf16.gmra.mxu0 %v5557
      %v7438 = vpop.f32.mrf.mxu0
      %v7439 = vadd.f32 %v7342, %v7438
      %v7440 = vpop.f32.mrf.mxu0
      %v7441 = vpop.f32.mrf.mxu0
      %v7442 = vadd.f32 %v7345, %v7441
      %v7443 = vpop.f32.mrf.mxu0
      %7444 = vmatprep.mubr.bf16.mxu0 %v5643
      %7445 = vmatmul.mubr.bf16.gmra.mxu0 %v5642
      %v7446 = vpop.f32.mrf.mxu0
      %v7447 = vadd.f32 %v7350, %v7446
      %v7448 = vpop.f32.mrf.mxu0
      %v7449 = vpop.f32.mrf.mxu0
      %v7450 = vadd.f32 %v7353, %v7449
      %v7451 = vpop.f32.mrf.mxu0
      %7452 = vmatprep.mubr.bf16.mxu0 %v5728
      %7453 = vmatmul.mubr.bf16.gmra.mxu0 %v5727
      %v7454 = vpop.f32.mrf.mxu0
      %v7455 = vadd.f32 %v7358, %v7454
      %v7456 = vpop.f32.mrf.mxu0
      %v7457 = vpop.f32.mrf.mxu0
      %v7458 = vadd.f32 %v7361, %v7457
      %v7459 = vpop.f32.mrf.mxu0
      %7460 = vdwg.mxu0
      %7461 = vmatprep.subr.bf16.mxu0 0
      %7462 = vmatpush1.bf16.msra.mxu0 %v1774
      %7463 = vmatprep.subr.bf16.mxu0 0
      %7464 = vmatpush1.bf16.msra.mxu0 %v1773
      %7465 = vmatprep.subr.bf16.mxu0 0
      %7466 = vmatpush1.bf16.msra.mxu0 %v1772
      %7467 = vmatprep.subr.bf16.mxu0 0
      %7468 = vmatpush1.bf16.msra.mxu0 %v1771
      %7469 = vmatprep.subr.bf16.mxu0 0
      %7470 = vmatpush1.bf16.msra.mxu0 %v1770
      %7471 = vmatprep.subr.bf16.mxu0 0
      %7472 = vmatpush1.bf16.msra.mxu0 %v1769
      %7473 = vmatprep.subr.bf16.mxu0 0
      %7474 = vmatpush1.bf16.msra.mxu0 %v1768
      %7475 = vmatprep.subr.bf16.mxu0 0
      %7476 = vmatpush1.bf16.msra.mxu0 %v1767
      %7477 = vmatprep.subr.bf16.mxu0 0
      %7478 = vmatpush2.bf16.msra.mxu0 %v1782
      %7479 = vmatprep.subr.bf16.mxu0 0
      %7480 = vmatpush2.bf16.msra.mxu0 %v1781
      %7481 = vmatprep.subr.bf16.mxu0 0
      %7482 = vmatpush2.bf16.msra.mxu0 %v1780
      %7483 = vmatprep.subr.bf16.mxu0 0
      %7484 = vmatpush2.bf16.msra.mxu0 %v1779
      %7485 = vmatprep.subr.bf16.mxu0 0
      %7486 = vmatpush2.bf16.msra.mxu0 %v1778
      %7487 = vmatprep.subr.bf16.mxu0 0
      %7488 = vmatpush2.bf16.msra.mxu0 %v1777
      %7489 = vmatprep.subr.bf16.mxu0 0
      %7490 = vmatpush2.bf16.msra.mxu0 %v1776
      %7491 = vmatprep.subr.bf16.mxu0 0
      %7492 = vmatpush2.bf16.msra.mxu0 %v1775
      %7493 = vmatprep.mubr.bf16.mxu0 %v5135
      %7494 = vmatmul.mubr.bf16.gmra.mxu0 %v5134
      %v7495 = vpop.f32.mrf.mxu0
      %v7496 = vadd.f32 %v7399, %v7495
      %v7497 = vpop.f32.mrf.mxu0
      %v7498 = vpop.f32.mrf.mxu0
      %v7499 = vadd.f32 %v7402, %v7498
      %v7500 = vpop.f32.mrf.mxu0
      %7501 = vmatprep.mubr.bf16.mxu0 %v5220
      %7502 = vmatmul.mubr.bf16.gmra.mxu0 %v5219
      %v7503 = vpop.f32.mrf.mxu0
      %v7504 = vadd.f32 %v7407, %v7503
      %v7505 = vpop.f32.mrf.mxu0
      %v7506 = vpop.f32.mrf.mxu0
      %v7507 = vadd.f32 %v7410, %v7506
      %v7508 = vpop.f32.mrf.mxu0
      %7509 = vmatprep.mubr.bf16.mxu0 %v5305
      %7510 = vmatmul.mubr.bf16.gmra.mxu0 %v5304
      %v7511 = vpop.f32.mrf.mxu0
      %v7512 = vadd.f32 %v7415, %v7511
      %v7513 = vpop.f32.mrf.mxu0
      %v7514 = vpop.f32.mrf.mxu0
      %v7515 = vadd.f32 %v7418, %v7514
      %v7516 = vpop.f32.mrf.mxu0
      %7517 = vmatprep.mubr.bf16.mxu0 %v5390
      %7518 = vmatmul.mubr.bf16.gmra.mxu0 %v5389
      %v7519 = vpop.f32.mrf.mxu0
      %v7520 = vadd.f32 %v7423, %v7519
      %v7521 = vpop.f32.mrf.mxu0
      %v7522 = vpop.f32.mrf.mxu0
      %v7523 = vadd.f32 %v7426, %v7522
      %v7524 = vpop.f32.mrf.mxu0
      %7525 = vmatprep.mubr.bf16.mxu0 %v5475
      %7526 = vmatmul.mubr.bf16.gmra.mxu0 %v5474
      %v7527 = vpop.f32.mrf.mxu0
      %v7528 = vadd.f32 %v7431, %v7527
      %v7529 = vpop.f32.mrf.mxu0
      %v7530 = vpop.f32.mrf.mxu0
      %v7531 = vadd.f32 %v7434, %v7530
      %v7532 = vpop.f32.mrf.mxu0
      %7533 = vmatprep.mubr.bf16.mxu0 %v5560
      %7534 = vmatmul.mubr.bf16.gmra.mxu0 %v5559
      %v7535 = vpop.f32.mrf.mxu0
      %v7536 = vadd.f32 %v7439, %v7535
      %v7537 = vpop.f32.mrf.mxu0
      %v7538 = vpop.f32.mrf.mxu0
      %v7539 = vadd.f32 %v7442, %v7538
      %v7540 = vpop.f32.mrf.mxu0
      %7541 = vmatprep.mubr.bf16.mxu0 %v5645
      %7542 = vmatmul.mubr.bf16.gmra.mxu0 %v5644
      %v7543 = vpop.f32.mrf.mxu0
      %v7544 = vadd.f32 %v7447, %v7543
      %v7545 = vpop.f32.mrf.mxu0
      %v7546 = vpop.f32.mrf.mxu0
      %v7547 = vadd.f32 %v7450, %v7546
      %v7548 = vpop.f32.mrf.mxu0
      %7549 = vmatprep.mubr.bf16.mxu0 %v5730
      %7550 = vmatmul.mubr.bf16.gmra.mxu0 %v5729
      %v7551 = vpop.f32.mrf.mxu0
      %v7552 = vadd.f32 %v7455, %v7551
      %v7553 = vpop.f32.mrf.mxu0
      %v7554 = vpop.f32.mrf.mxu0
      %v7555 = vadd.f32 %v7458, %v7554
      %v7556 = vpop.f32.mrf.mxu0
      %7557 = vdwg.mxu0
      %7558 = vmatprep.subr.bf16.mxu0 0
      %7559 = vmatpush1.bf16.msra.mxu0 %v1790
      %7560 = vmatprep.subr.bf16.mxu0 0
      %7561 = vmatpush1.bf16.msra.mxu0 %v1789
      %7562 = vmatprep.subr.bf16.mxu0 0
      %7563 = vmatpush1.bf16.msra.mxu0 %v1788
      %7564 = vmatprep.subr.bf16.mxu0 0
      %7565 = vmatpush1.bf16.msra.mxu0 %v1787
      %7566 = vmatprep.subr.bf16.mxu0 0
      %7567 = vmatpush1.bf16.msra.mxu0 %v1786
      %7568 = vmatprep.subr.bf16.mxu0 0
      %7569 = vmatpush1.bf16.msra.mxu0 %v1785
      %7570 = vmatprep.subr.bf16.mxu0 0
      %7571 = vmatpush1.bf16.msra.mxu0 %v1784
      %7572 = vmatprep.subr.bf16.mxu0 0
      %7573 = vmatpush1.bf16.msra.mxu0 %v1783
      %7574 = vmatprep.subr.bf16.mxu0 0
      %7575 = vmatpush2.bf16.msra.mxu0 %v1798
      %7576 = vmatprep.subr.bf16.mxu0 0
      %7577 = vmatpush2.bf16.msra.mxu0 %v1797
      %7578 = vmatprep.subr.bf16.mxu0 0
      %7579 = vmatpush2.bf16.msra.mxu0 %v1796
      %7580 = vmatprep.subr.bf16.mxu0 0
      %7581 = vmatpush2.bf16.msra.mxu0 %v1795
      %7582 = vmatprep.subr.bf16.mxu0 0
      %7583 = vmatpush2.bf16.msra.mxu0 %v1794
      %7584 = vmatprep.subr.bf16.mxu0 0
      %7585 = vmatpush2.bf16.msra.mxu0 %v1793
      %7586 = vmatprep.subr.bf16.mxu0 0
      %7587 = vmatpush2.bf16.msra.mxu0 %v1792
      %7588 = vmatprep.subr.bf16.mxu0 0
      %7589 = vmatpush2.bf16.msra.mxu0 %v1791
      %7590 = vmatprep.mubr.bf16.mxu0 %v5137
      %7591 = vmatmul.mubr.bf16.gmra.mxu0 %v5136
      %v7592 = vpop.f32.mrf.mxu0
      %v7593 = vadd.f32 %v7496, %v7592
      %v7594 = vpop.f32.mrf.mxu0
      %v7595 = vpop.f32.mrf.mxu0
      %v7596 = vadd.f32 %v7499, %v7595
      %v7597 = vpop.f32.mrf.mxu0
      %7598 = vmatprep.mubr.bf16.mxu0 %v5222
      %7599 = vmatmul.mubr.bf16.gmra.mxu0 %v5221
      %v7600 = vpop.f32.mrf.mxu0
      %v7601 = vadd.f32 %v7504, %v7600
      %v7602 = vpop.f32.mrf.mxu0
      %v7603 = vpop.f32.mrf.mxu0
      %v7604 = vadd.f32 %v7507, %v7603
      %v7605 = vpop.f32.mrf.mxu0
      %7606 = vmatprep.mubr.bf16.mxu0 %v5307
      %7607 = vmatmul.mubr.bf16.gmra.mxu0 %v5306
      %v7608 = vpop.f32.mrf.mxu0
      %v7609 = vadd.f32 %v7512, %v7608
      %v7610 = vpop.f32.mrf.mxu0
      %v7611 = vpop.f32.mrf.mxu0
      %v7612 = vadd.f32 %v7515, %v7611
      %v7613 = vpop.f32.mrf.mxu0
      %7614 = vmatprep.mubr.bf16.mxu0 %v5392
      %7615 = vmatmul.mubr.bf16.gmra.mxu0 %v5391
      %v7616 = vpop.f32.mrf.mxu0
      %v7617 = vadd.f32 %v7520, %v7616
      %v7618 = vpop.f32.mrf.mxu0
      %v7619 = vpop.f32.mrf.mxu0
      %v7620 = vadd.f32 %v7523, %v7619
      %v7621 = vpop.f32.mrf.mxu0
      %7622 = vmatprep.mubr.bf16.mxu0 %v5477
      %7623 = vmatmul.mubr.bf16.gmra.mxu0 %v5476
      %v7624 = vpop.f32.mrf.mxu0
      %v7625 = vadd.f32 %v7528, %v7624
      %v7626 = vpop.f32.mrf.mxu0
      %v7627 = vpop.f32.mrf.mxu0
      %v7628 = vadd.f32 %v7531, %v7627
      %v7629 = vpop.f32.mrf.mxu0
      %7630 = vmatprep.mubr.bf16.mxu0 %v5562
      %7631 = vmatmul.mubr.bf16.gmra.mxu0 %v5561
      %v7632 = vpop.f32.mrf.mxu0
      %v7633 = vadd.f32 %v7536, %v7632
      %v7634 = vpop.f32.mrf.mxu0
      %v7635 = vpop.f32.mrf.mxu0
      %v7636 = vadd.f32 %v7539, %v7635
      %v7637 = vpop.f32.mrf.mxu0
      %7638 = vmatprep.mubr.bf16.mxu0 %v5647
      %7639 = vmatmul.mubr.bf16.gmra.mxu0 %v5646
      %v7640 = vpop.f32.mrf.mxu0
      %v7641 = vadd.f32 %v7544, %v7640
      %v7642 = vpop.f32.mrf.mxu0
      %v7643 = vpop.f32.mrf.mxu0
      %v7644 = vadd.f32 %v7547, %v7643
      %v7645 = vpop.f32.mrf.mxu0
      %7646 = vmatprep.mubr.bf16.mxu0 %v5732
      %7647 = vmatmul.mubr.bf16.gmra.mxu0 %v5731
      %v7648 = vpop.f32.mrf.mxu0
      %v7649 = vadd.f32 %v7552, %v7648
      %v7650 = vpop.f32.mrf.mxu0
      %v7651 = vpop.f32.mrf.mxu0
      %v7652 = vadd.f32 %v7555, %v7651
      %v7653 = vpop.f32.mrf.mxu0
      %7654 = vdwg.mxu0
      %7655 = vmatprep.subr.bf16.mxu0 0
      %7656 = vmatpush1.bf16.msra.mxu0 %v1806
      %7657 = vmatprep.subr.bf16.mxu0 0
      %7658 = vmatpush1.bf16.msra.mxu0 %v1805
      %7659 = vmatprep.subr.bf16.mxu0 0
      %7660 = vmatpush1.bf16.msra.mxu0 %v1804
      %7661 = vmatprep.subr.bf16.mxu0 0
      %7662 = vmatpush1.bf16.msra.mxu0 %v1803
      %7663 = vmatprep.subr.bf16.mxu0 0
      %7664 = vmatpush1.bf16.msra.mxu0 %v1802
      %7665 = vmatprep.subr.bf16.mxu0 0
      %7666 = vmatpush1.bf16.msra.mxu0 %v1801
      %7667 = vmatprep.subr.bf16.mxu0 0
      %7668 = vmatpush1.bf16.msra.mxu0 %v1800
      %7669 = vmatprep.subr.bf16.mxu0 0
      %7670 = vmatpush1.bf16.msra.mxu0 %v1799
      %7671 = vmatprep.subr.bf16.mxu0 0
      %7672 = vmatpush2.bf16.msra.mxu0 %v1814
      %7673 = vmatprep.subr.bf16.mxu0 0
      %7674 = vmatpush2.bf16.msra.mxu0 %v1813
      %7675 = vmatprep.subr.bf16.mxu0 0
      %7676 = vmatpush2.bf16.msra.mxu0 %v1812
      %7677 = vmatprep.subr.bf16.mxu0 0
      %7678 = vmatpush2.bf16.msra.mxu0 %v1811
      %7679 = vmatprep.subr.bf16.mxu0 0
      %7680 = vmatpush2.bf16.msra.mxu0 %v1810
      %7681 = vmatprep.subr.bf16.mxu0 0
      %7682 = vmatpush2.bf16.msra.mxu0 %v1809
      %7683 = vmatprep.subr.bf16.mxu0 0
      %7684 = vmatpush2.bf16.msra.mxu0 %v1808
      %7685 = vmatprep.subr.bf16.mxu0 0
      %7686 = vmatpush2.bf16.msra.mxu0 %v1807
      %7687 = vmatprep.mubr.bf16.mxu0 %v5139
      %7688 = vmatmul.mubr.bf16.gmra.mxu0 %v5138
      %v7689 = vpop.f32.mrf.mxu0
      %v7690 = vadd.f32 %v7593, %v7689
      %v7691 = vpop.f32.mrf.mxu0
      %v7692 = vpop.f32.mrf.mxu0
      %v7693 = vadd.f32 %v7596, %v7692
      %v7694 = vpop.f32.mrf.mxu0
      %7695 = vmatprep.mubr.bf16.mxu0 %v5224
      %7696 = vmatmul.mubr.bf16.gmra.mxu0 %v5223
      %v7697 = vpop.f32.mrf.mxu0
      %v7698 = vadd.f32 %v7601, %v7697
      %v7699 = vpop.f32.mrf.mxu0
      %v7700 = vpop.f32.mrf.mxu0
      %v7701 = vadd.f32 %v7604, %v7700
      %v7702 = vpop.f32.mrf.mxu0
      %7703 = vmatprep.mubr.bf16.mxu0 %v5309
      %7704 = vmatmul.mubr.bf16.gmra.mxu0 %v5308
      %v7705 = vpop.f32.mrf.mxu0
      %v7706 = vadd.f32 %v7609, %v7705
      %v7707 = vpop.f32.mrf.mxu0
      %v7708 = vpop.f32.mrf.mxu0
      %v7709 = vadd.f32 %v7612, %v7708
      %v7710 = vpop.f32.mrf.mxu0
      %7711 = vmatprep.mubr.bf16.mxu0 %v5394
      %7712 = vmatmul.mubr.bf16.gmra.mxu0 %v5393
      %v7713 = vpop.f32.mrf.mxu0
      %v7714 = vadd.f32 %v7617, %v7713
      %v7715 = vpop.f32.mrf.mxu0
      %v7716 = vpop.f32.mrf.mxu0
      %v7717 = vadd.f32 %v7620, %v7716
      %v7718 = vpop.f32.mrf.mxu0
      %7719 = vmatprep.mubr.bf16.mxu0 %v5479
      %7720 = vmatmul.mubr.bf16.gmra.mxu0 %v5478
      %v7721 = vpop.f32.mrf.mxu0
      %v7722 = vadd.f32 %v7625, %v7721
      %v7723 = vpop.f32.mrf.mxu0
      %v7724 = vpop.f32.mrf.mxu0
      %v7725 = vadd.f32 %v7628, %v7724
      %v7726 = vpop.f32.mrf.mxu0
      %7727 = vmatprep.mubr.bf16.mxu0 %v5564
      %7728 = vmatmul.mubr.bf16.gmra.mxu0 %v5563
      %v7729 = vpop.f32.mrf.mxu0
      %v7730 = vadd.f32 %v7633, %v7729
      %v7731 = vpop.f32.mrf.mxu0
      %v7732 = vpop.f32.mrf.mxu0
      %v7733 = vadd.f32 %v7636, %v7732
      %v7734 = vpop.f32.mrf.mxu0
      %7735 = vmatprep.mubr.bf16.mxu0 %v5649
      %7736 = vmatmul.mubr.bf16.gmra.mxu0 %v5648
      %v7737 = vpop.f32.mrf.mxu0
      %v7738 = vadd.f32 %v7641, %v7737
      %v7739 = vpop.f32.mrf.mxu0
      %v7740 = vpop.f32.mrf.mxu0
      %v7741 = vadd.f32 %v7644, %v7740
      %v7742 = vpop.f32.mrf.mxu0
      %7743 = vmatprep.mubr.bf16.mxu0 %v5734
      %7744 = vmatmul.mubr.bf16.gmra.mxu0 %v5733
      %v7745 = vpop.f32.mrf.mxu0
      %v7746 = vadd.f32 %v7649, %v7745
      %v7747 = vpop.f32.mrf.mxu0
      %v7748 = vpop.f32.mrf.mxu0
      %v7749 = vadd.f32 %v7652, %v7748
      %v7750 = vpop.f32.mrf.mxu0
      %7751 = vdwg.mxu0
      %7752 = vmatprep.subr.bf16.mxu0 0
      %7753 = vmatpush1.bf16.msra.mxu0 %v1822
      %7754 = vmatprep.subr.bf16.mxu0 0
      %7755 = vmatpush1.bf16.msra.mxu0 %v1821
      %7756 = vmatprep.subr.bf16.mxu0 0
      %7757 = vmatpush1.bf16.msra.mxu0 %v1820
      %7758 = vmatprep.subr.bf16.mxu0 0
      %7759 = vmatpush1.bf16.msra.mxu0 %v1819
      %7760 = vmatprep.subr.bf16.mxu0 0
      %7761 = vmatpush1.bf16.msra.mxu0 %v1818
      %7762 = vmatprep.subr.bf16.mxu0 0
      %7763 = vmatpush1.bf16.msra.mxu0 %v1817
      %7764 = vmatprep.subr.bf16.mxu0 0
      %7765 = vmatpush1.bf16.msra.mxu0 %v1816
      %7766 = vmatprep.subr.bf16.mxu0 0
      %7767 = vmatpush1.bf16.msra.mxu0 %v1815
      %7768 = vmatprep.subr.bf16.mxu0 0
      %7769 = vmatpush2.bf16.msra.mxu0 %v1830
      %7770 = vmatprep.subr.bf16.mxu0 0
      %7771 = vmatpush2.bf16.msra.mxu0 %v1829
      %7772 = vmatprep.subr.bf16.mxu0 0
      %7773 = vmatpush2.bf16.msra.mxu0 %v1828
      %7774 = vmatprep.subr.bf16.mxu0 0
      %7775 = vmatpush2.bf16.msra.mxu0 %v1827
      %7776 = vmatprep.subr.bf16.mxu0 0
      %7777 = vmatpush2.bf16.msra.mxu0 %v1826
      %7778 = vmatprep.subr.bf16.mxu0 0
      %7779 = vmatpush2.bf16.msra.mxu0 %v1825
      %7780 = vmatprep.subr.bf16.mxu0 0
      %7781 = vmatpush2.bf16.msra.mxu0 %v1824
      %7782 = vmatprep.subr.bf16.mxu0 0
      %7783 = vmatpush2.bf16.msra.mxu0 %v1823
      %7784 = vmatprep.mubr.bf16.mxu0 %v5141
      %7785 = vmatmul.mubr.bf16.gmra.mxu0 %v5140
      %v7786 = vpop.f32.mrf.mxu0
      %v7787 = vadd.f32 %v7690, %v7786
      %v7788 = vpop.f32.mrf.mxu0
      %v7789 = vpop.f32.mrf.mxu0
      %v7790 = vadd.f32 %v7693, %v7789
      %v7791 = vpop.f32.mrf.mxu0
      %7792 = vmatprep.mubr.bf16.mxu0 %v5226
      %7793 = vmatmul.mubr.bf16.gmra.mxu0 %v5225
      %v7794 = vpop.f32.mrf.mxu0
      %v7795 = vadd.f32 %v7698, %v7794
      %v7796 = vpop.f32.mrf.mxu0
      %v7797 = vpop.f32.mrf.mxu0
      %v7798 = vadd.f32 %v7701, %v7797
      %v7799 = vpop.f32.mrf.mxu0
      %7800 = vmatprep.mubr.bf16.mxu0 %v5311
      %7801 = vmatmul.mubr.bf16.gmra.mxu0 %v5310
      %v7802 = vpop.f32.mrf.mxu0
      %v7803 = vadd.f32 %v7706, %v7802
      %v7804 = vpop.f32.mrf.mxu0
      %v7805 = vpop.f32.mrf.mxu0
      %v7806 = vadd.f32 %v7709, %v7805
      %v7807 = vpop.f32.mrf.mxu0
      %7808 = vmatprep.mubr.bf16.mxu0 %v5396
      %7809 = vmatmul.mubr.bf16.gmra.mxu0 %v5395
      %v7810 = vpop.f32.mrf.mxu0
      %v7811 = vadd.f32 %v7714, %v7810
      %v7812 = vpop.f32.mrf.mxu0
      %v7813 = vpop.f32.mrf.mxu0
      %v7814 = vadd.f32 %v7717, %v7813
      %v7815 = vpop.f32.mrf.mxu0
      %7816 = vmatprep.mubr.bf16.mxu0 %v5481
      %7817 = vmatmul.mubr.bf16.gmra.mxu0 %v5480
      %v7818 = vpop.f32.mrf.mxu0
      %v7819 = vadd.f32 %v7722, %v7818
      %v7820 = vpop.f32.mrf.mxu0
      %v7821 = vpop.f32.mrf.mxu0
      %v7822 = vadd.f32 %v7725, %v7821
      %v7823 = vpop.f32.mrf.mxu0
      %7824 = vmatprep.mubr.bf16.mxu0 %v5566
      %7825 = vmatmul.mubr.bf16.gmra.mxu0 %v5565
      %v7826 = vpop.f32.mrf.mxu0
      %v7827 = vadd.f32 %v7730, %v7826
      %v7828 = vpop.f32.mrf.mxu0
      %v7829 = vpop.f32.mrf.mxu0
      %v7830 = vadd.f32 %v7733, %v7829
      %v7831 = vpop.f32.mrf.mxu0
      %7832 = vmatprep.mubr.bf16.mxu0 %v5651
      %7833 = vmatmul.mubr.bf16.gmra.mxu0 %v5650
      %v7834 = vpop.f32.mrf.mxu0
      %v7835 = vadd.f32 %v7738, %v7834
      %v7836 = vpop.f32.mrf.mxu0
      %v7837 = vpop.f32.mrf.mxu0
      %v7838 = vadd.f32 %v7741, %v7837
      %v7839 = vpop.f32.mrf.mxu0
      %7840 = vmatprep.mubr.bf16.mxu0 %v5736
      %7841 = vmatmul.mubr.bf16.gmra.mxu0 %v5735
      %v7842 = vpop.f32.mrf.mxu0
      %v7843 = vadd.f32 %v7746, %v7842
      %v7844 = vpop.f32.mrf.mxu0
      %v7845 = vpop.f32.mrf.mxu0
      %v7846 = vadd.f32 %v7749, %v7845
      %v7847 = vpop.f32.mrf.mxu0
      %7848 = vdwg.mxu0
      %7849 = vmatprep.subr.bf16.mxu0 0
      %7850 = vmatpush1.bf16.msra.mxu0 %v1838
      %7851 = vmatprep.subr.bf16.mxu0 0
      %7852 = vmatpush1.bf16.msra.mxu0 %v1837
      %7853 = vmatprep.subr.bf16.mxu0 0
      %7854 = vmatpush1.bf16.msra.mxu0 %v1836
      %7855 = vmatprep.subr.bf16.mxu0 0
      %7856 = vmatpush1.bf16.msra.mxu0 %v1835
      %7857 = vmatprep.subr.bf16.mxu0 0
      %7858 = vmatpush1.bf16.msra.mxu0 %v1834
      %7859 = vmatprep.subr.bf16.mxu0 0
      %7860 = vmatpush1.bf16.msra.mxu0 %v1833
      %7861 = vmatprep.subr.bf16.mxu0 0
      %7862 = vmatpush1.bf16.msra.mxu0 %v1832
      %7863 = vmatprep.subr.bf16.mxu0 0
      %7864 = vmatpush1.bf16.msra.mxu0 %v1831
      %7865 = vmatprep.subr.bf16.mxu0 0
      %7866 = vmatpush2.bf16.msra.mxu0 %v1846
      %7867 = vmatprep.subr.bf16.mxu0 0
      %7868 = vmatpush2.bf16.msra.mxu0 %v1845
      %7869 = vmatprep.subr.bf16.mxu0 0
      %7870 = vmatpush2.bf16.msra.mxu0 %v1844
      %7871 = vmatprep.subr.bf16.mxu0 0
      %7872 = vmatpush2.bf16.msra.mxu0 %v1843
      %7873 = vmatprep.subr.bf16.mxu0 0
      %7874 = vmatpush2.bf16.msra.mxu0 %v1842
      %7875 = vmatprep.subr.bf16.mxu0 0
      %7876 = vmatpush2.bf16.msra.mxu0 %v1841
      %7877 = vmatprep.subr.bf16.mxu0 0
      %7878 = vmatpush2.bf16.msra.mxu0 %v1840
      %7879 = vmatprep.subr.bf16.mxu0 0
      %7880 = vmatpush2.bf16.msra.mxu0 %v1839
      %7881 = vmatprep.mubr.bf16.mxu0 %v5143
      %7882 = vmatmul.mubr.bf16.gmra.mxu0 %v5142
      %v7883 = vpop.f32.mrf.mxu0
      %v7884 = vadd.f32 %v7787, %v7883
      %v7885 = vpop.f32.mrf.mxu0
      %v7886 = vpop.f32.mrf.mxu0
      %v7887 = vadd.f32 %v7790, %v7886
      %v7888 = vpop.f32.mrf.mxu0
      %7889 = vmatprep.mubr.bf16.mxu0 %v5228
      %7890 = vmatmul.mubr.bf16.gmra.mxu0 %v5227
      %v7891 = vpop.f32.mrf.mxu0
      %v7892 = vadd.f32 %v7795, %v7891
      %v7893 = vpop.f32.mrf.mxu0
      %v7894 = vpop.f32.mrf.mxu0
      %v7895 = vadd.f32 %v7798, %v7894
      %v7896 = vpop.f32.mrf.mxu0
      %7897 = vmatprep.mubr.bf16.mxu0 %v5313
      %7898 = vmatmul.mubr.bf16.gmra.mxu0 %v5312
      %v7899 = vpop.f32.mrf.mxu0
      %v7900 = vadd.f32 %v7803, %v7899
      %v7901 = vpop.f32.mrf.mxu0
      %v7902 = vpop.f32.mrf.mxu0
      %v7903 = vadd.f32 %v7806, %v7902
      %v7904 = vpop.f32.mrf.mxu0
      %7905 = vmatprep.mubr.bf16.mxu0 %v5398
      %7906 = vmatmul.mubr.bf16.gmra.mxu0 %v5397
      %v7907 = vpop.f32.mrf.mxu0
      %v7908 = vadd.f32 %v7811, %v7907
      %v7909 = vpop.f32.mrf.mxu0
      %v7910 = vpop.f32.mrf.mxu0
      %v7911 = vadd.f32 %v7814, %v7910
      %v7912 = vpop.f32.mrf.mxu0
      %7913 = vmatprep.mubr.bf16.mxu0 %v5483
      %7914 = vmatmul.mubr.bf16.gmra.mxu0 %v5482
      %v7915 = vpop.f32.mrf.mxu0
      %v7916 = vadd.f32 %v7819, %v7915
      %v7917 = vpop.f32.mrf.mxu0
      %v7918 = vpop.f32.mrf.mxu0
      %v7919 = vadd.f32 %v7822, %v7918
      %v7920 = vpop.f32.mrf.mxu0
      %7921 = vmatprep.mubr.bf16.mxu0 %v5568
      %7922 = vmatmul.mubr.bf16.gmra.mxu0 %v5567
      %v7923 = vpop.f32.mrf.mxu0
      %v7924 = vadd.f32 %v7827, %v7923
      %v7925 = vpop.f32.mrf.mxu0
      %v7926 = vpop.f32.mrf.mxu0
      %v7927 = vadd.f32 %v7830, %v7926
      %v7928 = vpop.f32.mrf.mxu0
      %7929 = vmatprep.mubr.bf16.mxu0 %v5653
      %7930 = vmatmul.mubr.bf16.gmra.mxu0 %v5652
      %v7931 = vpop.f32.mrf.mxu0
      %v7932 = vadd.f32 %v7835, %v7931
      %v7933 = vpop.f32.mrf.mxu0
      %v7934 = vpop.f32.mrf.mxu0
      %v7935 = vadd.f32 %v7838, %v7934
      %v7936 = vpop.f32.mrf.mxu0
      %7937 = vmatprep.mubr.bf16.mxu0 %v5738
      %7938 = vmatmul.mubr.bf16.gmra.mxu0 %v5737
      %v7939 = vpop.f32.mrf.mxu0
      %v7940 = vadd.f32 %v7843, %v7939
      %v7941 = vpop.f32.mrf.mxu0
      %v7942 = vpop.f32.mrf.mxu0
      %v7943 = vadd.f32 %v7846, %v7942
      %v7944 = vpop.f32.mrf.mxu0
      %7945 = vdwg.mxu0
      %7946 = vmatprep.subr.bf16.mxu0 0
      %7947 = vmatpush1.bf16.msra.mxu0 %v1854
      %7948 = vmatprep.subr.bf16.mxu0 0
      %7949 = vmatpush1.bf16.msra.mxu0 %v1853
      %7950 = vmatprep.subr.bf16.mxu0 0
      %7951 = vmatpush1.bf16.msra.mxu0 %v1852
      %7952 = vmatprep.subr.bf16.mxu0 0
      %7953 = vmatpush1.bf16.msra.mxu0 %v1851
      %7954 = vmatprep.subr.bf16.mxu0 0
      %7955 = vmatpush1.bf16.msra.mxu0 %v1850
      %7956 = vmatprep.subr.bf16.mxu0 0
      %7957 = vmatpush1.bf16.msra.mxu0 %v1849
      %7958 = vmatprep.subr.bf16.mxu0 0
      %7959 = vmatpush1.bf16.msra.mxu0 %v1848
      %7960 = vmatprep.subr.bf16.mxu0 0
      %7961 = vmatpush1.bf16.msra.mxu0 %v1847
      %7962 = vmatprep.subr.bf16.mxu0 0
      %7963 = vmatpush2.bf16.msra.mxu0 %v1862
      %7964 = vmatprep.subr.bf16.mxu0 0
      %7965 = vmatpush2.bf16.msra.mxu0 %v1861
      %7966 = vmatprep.subr.bf16.mxu0 0
      %7967 = vmatpush2.bf16.msra.mxu0 %v1860
      %7968 = vmatprep.subr.bf16.mxu0 0
      %7969 = vmatpush2.bf16.msra.mxu0 %v1859
      %7970 = vmatprep.subr.bf16.mxu0 0
      %7971 = vmatpush2.bf16.msra.mxu0 %v1858
      %7972 = vmatprep.subr.bf16.mxu0 0
      %7973 = vmatpush2.bf16.msra.mxu0 %v1857
      %7974 = vmatprep.subr.bf16.mxu0 0
      %7975 = vmatpush2.bf16.msra.mxu0 %v1856
      %7976 = vmatprep.subr.bf16.mxu0 0
      %7977 = vmatpush2.bf16.msra.mxu0 %v1855
      %7978 = vmatprep.mubr.bf16.mxu0 %v5145
      %7979 = vmatmul.mubr.bf16.gmra.mxu0 %v5144
      %v7980 = vpop.f32.mrf.mxu0
      %v7981 = vadd.f32 %v7884, %v7980
      %v7982 = vpop.f32.mrf.mxu0
      %v7983 = vpop.f32.mrf.mxu0
      %v7984 = vadd.f32 %v7887, %v7983
      %v7985 = vpop.f32.mrf.mxu0
      %7986 = vmatprep.mubr.bf16.mxu0 %v5230
      %7987 = vmatmul.mubr.bf16.gmra.mxu0 %v5229
      %v7988 = vpop.f32.mrf.mxu0
      %v7989 = vadd.f32 %v7892, %v7988
      %v7990 = vpop.f32.mrf.mxu0
      %v7991 = vpop.f32.mrf.mxu0
      %v7992 = vadd.f32 %v7895, %v7991
      %v7993 = vpop.f32.mrf.mxu0
      %7994 = vmatprep.mubr.bf16.mxu0 %v5315
      %7995 = vmatmul.mubr.bf16.gmra.mxu0 %v5314
      %v7996 = vpop.f32.mrf.mxu0
      %v7997 = vadd.f32 %v7900, %v7996
      %v7998 = vpop.f32.mrf.mxu0
      %v7999 = vpop.f32.mrf.mxu0
      %v8000 = vadd.f32 %v7903, %v7999
      %v8001 = vpop.f32.mrf.mxu0
      %8002 = vmatprep.mubr.bf16.mxu0 %v5400
      %8003 = vmatmul.mubr.bf16.gmra.mxu0 %v5399
      %v8004 = vpop.f32.mrf.mxu0
      %v8005 = vadd.f32 %v7908, %v8004
      %v8006 = vpop.f32.mrf.mxu0
      %v8007 = vpop.f32.mrf.mxu0
      %v8008 = vadd.f32 %v7911, %v8007
      %v8009 = vpop.f32.mrf.mxu0
      %8010 = vmatprep.mubr.bf16.mxu0 %v5485
      %8011 = vmatmul.mubr.bf16.gmra.mxu0 %v5484
      %v8012 = vpop.f32.mrf.mxu0
      %v8013 = vadd.f32 %v7916, %v8012
      %v8014 = vpop.f32.mrf.mxu0
      %v8015 = vpop.f32.mrf.mxu0
      %v8016 = vadd.f32 %v7919, %v8015
      %v8017 = vpop.f32.mrf.mxu0
      %8018 = vmatprep.mubr.bf16.mxu0 %v5570
      %8019 = vmatmul.mubr.bf16.gmra.mxu0 %v5569
      %v8020 = vpop.f32.mrf.mxu0
      %v8021 = vadd.f32 %v7924, %v8020
      %v8022 = vpop.f32.mrf.mxu0
      %v8023 = vpop.f32.mrf.mxu0
      %v8024 = vadd.f32 %v7927, %v8023
      %v8025 = vpop.f32.mrf.mxu0
      %8026 = vmatprep.mubr.bf16.mxu0 %v5655
      %8027 = vmatmul.mubr.bf16.gmra.mxu0 %v5654
      %v8028 = vpop.f32.mrf.mxu0
      %v8029 = vadd.f32 %v7932, %v8028
      %v8030 = vpop.f32.mrf.mxu0
      %v8031 = vpop.f32.mrf.mxu0
      %v8032 = vadd.f32 %v7935, %v8031
      %v8033 = vpop.f32.mrf.mxu0
      %8034 = vmatprep.mubr.bf16.mxu0 %v5740
      %8035 = vmatmul.mubr.bf16.gmra.mxu0 %v5739
      %v8036 = vpop.f32.mrf.mxu0
      %v8037 = vadd.f32 %v7940, %v8036
      %v8038 = vpop.f32.mrf.mxu0
      %v8039 = vpop.f32.mrf.mxu0
      %v8040 = vadd.f32 %v7943, %v8039
      %v8041 = vpop.f32.mrf.mxu0
      %8042 = vdwg.mxu0
      %8043 = vmatprep.subr.bf16.mxu0 0
      %8044 = vmatpush1.bf16.msra.mxu0 %v1870
      %8045 = vmatprep.subr.bf16.mxu0 0
      %8046 = vmatpush1.bf16.msra.mxu0 %v1869
      %8047 = vmatprep.subr.bf16.mxu0 0
      %8048 = vmatpush1.bf16.msra.mxu0 %v1868
      %8049 = vmatprep.subr.bf16.mxu0 0
      %8050 = vmatpush1.bf16.msra.mxu0 %v1867
      %8051 = vmatprep.subr.bf16.mxu0 0
      %8052 = vmatpush1.bf16.msra.mxu0 %v1866
      %8053 = vmatprep.subr.bf16.mxu0 0
      %8054 = vmatpush1.bf16.msra.mxu0 %v1865
      %8055 = vmatprep.subr.bf16.mxu0 0
      %8056 = vmatpush1.bf16.msra.mxu0 %v1864
      %8057 = vmatprep.subr.bf16.mxu0 0
      %8058 = vmatpush1.bf16.msra.mxu0 %v1863
      %8059 = vmatprep.subr.bf16.mxu0 0
      %8060 = vmatpush2.bf16.msra.mxu0 %v1878
      %8061 = vmatprep.subr.bf16.mxu0 0
      %8062 = vmatpush2.bf16.msra.mxu0 %v1877
      %8063 = vmatprep.subr.bf16.mxu0 0
      %8064 = vmatpush2.bf16.msra.mxu0 %v1876
      %8065 = vmatprep.subr.bf16.mxu0 0
      %8066 = vmatpush2.bf16.msra.mxu0 %v1875
      %8067 = vmatprep.subr.bf16.mxu0 0
      %8068 = vmatpush2.bf16.msra.mxu0 %v1874
      %8069 = vmatprep.subr.bf16.mxu0 0
      %8070 = vmatpush2.bf16.msra.mxu0 %v1873
      %8071 = vmatprep.subr.bf16.mxu0 0
      %8072 = vmatpush2.bf16.msra.mxu0 %v1872
      %8073 = vmatprep.subr.bf16.mxu0 0
      %8074 = vmatpush2.bf16.msra.mxu0 %v1871
      %8075 = vmatprep.mubr.bf16.mxu0 %v5147
      %8076 = vmatmul.mubr.bf16.gmra.mxu0 %v5146
      %v8077 = vpop.f32.mrf.mxu0
      %v8078 = vadd.f32 %v7981, %v8077
      %v8079 = vpop.f32.mrf.mxu0
      %v8080 = vpop.f32.mrf.mxu0
      %v8081 = vadd.f32 %v7984, %v8080
      %v8082 = vpop.f32.mrf.mxu0
      %8083 = vmatprep.mubr.bf16.mxu0 %v5232
      %8084 = vmatmul.mubr.bf16.gmra.mxu0 %v5231
      %v8085 = vpop.f32.mrf.mxu0
      %v8086 = vadd.f32 %v7989, %v8085
      %v8087 = vpop.f32.mrf.mxu0
      %v8088 = vpop.f32.mrf.mxu0
      %v8089 = vadd.f32 %v7992, %v8088
      %v8090 = vpop.f32.mrf.mxu0
      %8091 = vmatprep.mubr.bf16.mxu0 %v5317
      %8092 = vmatmul.mubr.bf16.gmra.mxu0 %v5316
      %v8093 = vpop.f32.mrf.mxu0
      %v8094 = vadd.f32 %v7997, %v8093
      %v8095 = vpop.f32.mrf.mxu0
      %v8096 = vpop.f32.mrf.mxu0
      %v8097 = vadd.f32 %v8000, %v8096
      %v8098 = vpop.f32.mrf.mxu0
      %8099 = vmatprep.mubr.bf16.mxu0 %v5402
      %8100 = vmatmul.mubr.bf16.gmra.mxu0 %v5401
      %v8101 = vpop.f32.mrf.mxu0
      %v8102 = vadd.f32 %v8005, %v8101
      %v8103 = vpop.f32.mrf.mxu0
      %v8104 = vpop.f32.mrf.mxu0
      %v8105 = vadd.f32 %v8008, %v8104
      %v8106 = vpop.f32.mrf.mxu0
      %8107 = vmatprep.mubr.bf16.mxu0 %v5487
      %8108 = vmatmul.mubr.bf16.gmra.mxu0 %v5486
      %v8109 = vpop.f32.mrf.mxu0
      %v8110 = vadd.f32 %v8013, %v8109
      %v8111 = vpop.f32.mrf.mxu0
      %v8112 = vpop.f32.mrf.mxu0
      %v8113 = vadd.f32 %v8016, %v8112
      %v8114 = vpop.f32.mrf.mxu0
      %8115 = vmatprep.mubr.bf16.mxu0 %v5572
      %8116 = vmatmul.mubr.bf16.gmra.mxu0 %v5571
      %v8117 = vpop.f32.mrf.mxu0
      %v8118 = vadd.f32 %v8021, %v8117
      %v8119 = vpop.f32.mrf.mxu0
      %v8120 = vpop.f32.mrf.mxu0
      %v8121 = vadd.f32 %v8024, %v8120
      %v8122 = vpop.f32.mrf.mxu0
      %8123 = vmatprep.mubr.bf16.mxu0 %v5657
      %8124 = vmatmul.mubr.bf16.gmra.mxu0 %v5656
      %v8125 = vpop.f32.mrf.mxu0
      %v8126 = vadd.f32 %v8029, %v8125
      %v8127 = vpop.f32.mrf.mxu0
      %v8128 = vpop.f32.mrf.mxu0
      %v8129 = vadd.f32 %v8032, %v8128
      %v8130 = vpop.f32.mrf.mxu0
      %8131 = vmatprep.mubr.bf16.mxu0 %v5742
      %8132 = vmatmul.mubr.bf16.gmra.mxu0 %v5741
      %v8133 = vpop.f32.mrf.mxu0
      %v8134 = vadd.f32 %v8037, %v8133
      %v8135 = vpop.f32.mrf.mxu0
      %v8136 = vpop.f32.mrf.mxu0
      %v8137 = vadd.f32 %v8040, %v8136
      %v8138 = vpop.f32.mrf.mxu0
      %8139 = vdwg.mxu0
      %8140 = vmatprep.subr.bf16.mxu0 0
      %8141 = vmatpush1.bf16.msra.mxu0 %v1886
      %8142 = vmatprep.subr.bf16.mxu0 0
      %8143 = vmatpush1.bf16.msra.mxu0 %v1885
      %8144 = vmatprep.subr.bf16.mxu0 0
      %8145 = vmatpush1.bf16.msra.mxu0 %v1884
      %8146 = vmatprep.subr.bf16.mxu0 0
      %8147 = vmatpush1.bf16.msra.mxu0 %v1883
      %8148 = vmatprep.subr.bf16.mxu0 0
      %8149 = vmatpush1.bf16.msra.mxu0 %v1882
      %8150 = vmatprep.subr.bf16.mxu0 0
      %8151 = vmatpush1.bf16.msra.mxu0 %v1881
      %8152 = vmatprep.subr.bf16.mxu0 0
      %8153 = vmatpush1.bf16.msra.mxu0 %v1880
      %8154 = vmatprep.subr.bf16.mxu0 0
      %8155 = vmatpush1.bf16.msra.mxu0 %v1879
      %8156 = vmatprep.subr.bf16.mxu0 0
      %8157 = vmatpush2.bf16.msra.mxu0 %v1894
      %8158 = vmatprep.subr.bf16.mxu0 0
      %8159 = vmatpush2.bf16.msra.mxu0 %v1893
      %8160 = vmatprep.subr.bf16.mxu0 0
      %8161 = vmatpush2.bf16.msra.mxu0 %v1892
      %8162 = vmatprep.subr.bf16.mxu0 0
      %8163 = vmatpush2.bf16.msra.mxu0 %v1891
      %8164 = vmatprep.subr.bf16.mxu0 0
      %8165 = vmatpush2.bf16.msra.mxu0 %v1890
      %8166 = vmatprep.subr.bf16.mxu0 0
      %8167 = vmatpush2.bf16.msra.mxu0 %v1889
      %8168 = vmatprep.subr.bf16.mxu0 0
      %8169 = vmatpush2.bf16.msra.mxu0 %v1888
      %8170 = vmatprep.subr.bf16.mxu0 0
      %8171 = vmatpush2.bf16.msra.mxu0 %v1887
      %8172 = vmatprep.mubr.bf16.mxu0 %v5149
      %8173 = vmatmul.mubr.bf16.gmra.mxu0 %v5148
      %v8174 = vpop.f32.mrf.mxu0
      %v8175 = vadd.f32 %v8078, %v8174
      %v8176 = vpop.f32.mrf.mxu0
      %v8177 = vpop.f32.mrf.mxu0
      %v8178 = vadd.f32 %v8081, %v8177
      %v8179 = vpop.f32.mrf.mxu0
      %8180 = vmatprep.mubr.bf16.mxu0 %v5234
      %8181 = vmatmul.mubr.bf16.gmra.mxu0 %v5233
      %v8182 = vpop.f32.mrf.mxu0
      %v8183 = vadd.f32 %v8086, %v8182
      %v8184 = vpop.f32.mrf.mxu0
      %v8185 = vpop.f32.mrf.mxu0
      %v8186 = vadd.f32 %v8089, %v8185
      %v8187 = vpop.f32.mrf.mxu0
      %8188 = vmatprep.mubr.bf16.mxu0 %v5319
      %8189 = vmatmul.mubr.bf16.gmra.mxu0 %v5318
      %v8190 = vpop.f32.mrf.mxu0
      %v8191 = vadd.f32 %v8094, %v8190
      %v8192 = vpop.f32.mrf.mxu0
      %v8193 = vpop.f32.mrf.mxu0
      %v8194 = vadd.f32 %v8097, %v8193
      %v8195 = vpop.f32.mrf.mxu0
      %8196 = vmatprep.mubr.bf16.mxu0 %v5404
      %8197 = vmatmul.mubr.bf16.gmra.mxu0 %v5403
      %v8198 = vpop.f32.mrf.mxu0
      %v8199 = vadd.f32 %v8102, %v8198
      %v8200 = vpop.f32.mrf.mxu0
      %v8201 = vpop.f32.mrf.mxu0
      %v8202 = vadd.f32 %v8105, %v8201
      %v8203 = vpop.f32.mrf.mxu0
      %8204 = vmatprep.mubr.bf16.mxu0 %v5489
      %8205 = vmatmul.mubr.bf16.gmra.mxu0 %v5488
      %v8206 = vpop.f32.mrf.mxu0
      %v8207 = vadd.f32 %v8110, %v8206
      %v8208 = vpop.f32.mrf.mxu0
      %v8209 = vpop.f32.mrf.mxu0
      %v8210 = vadd.f32 %v8113, %v8209
      %v8211 = vpop.f32.mrf.mxu0
      %8212 = vmatprep.mubr.bf16.mxu0 %v5574
      %8213 = vmatmul.mubr.bf16.gmra.mxu0 %v5573
      %v8214 = vpop.f32.mrf.mxu0
      %v8215 = vadd.f32 %v8118, %v8214
      %v8216 = vpop.f32.mrf.mxu0
      %v8217 = vpop.f32.mrf.mxu0
      %v8218 = vadd.f32 %v8121, %v8217
      %v8219 = vpop.f32.mrf.mxu0
      %8220 = vmatprep.mubr.bf16.mxu0 %v5659
      %8221 = vmatmul.mubr.bf16.gmra.mxu0 %v5658
      %v8222 = vpop.f32.mrf.mxu0
      %v8223 = vadd.f32 %v8126, %v8222
      %v8224 = vpop.f32.mrf.mxu0
      %v8225 = vpop.f32.mrf.mxu0
      %v8226 = vadd.f32 %v8129, %v8225
      %v8227 = vpop.f32.mrf.mxu0
      %8228 = vmatprep.mubr.bf16.mxu0 %v5744
      %8229 = vmatmul.mubr.bf16.gmra.mxu0 %v5743
      %v8230 = vpop.f32.mrf.mxu0
      %v8231 = vadd.f32 %v8134, %v8230
      %v8232 = vpop.f32.mrf.mxu0
      %v8233 = vpop.f32.mrf.mxu0
      %v8234 = vadd.f32 %v8137, %v8233
      %v8235 = vpop.f32.mrf.mxu0
      %8236 = vdwg.mxu0
      %8237 = vmatprep.subr.bf16.mxu0 0
      %8238 = vmatpush1.bf16.msra.mxu0 %v1902
      %8239 = vmatprep.subr.bf16.mxu0 0
      %8240 = vmatpush1.bf16.msra.mxu0 %v1901
      %8241 = vmatprep.subr.bf16.mxu0 0
      %8242 = vmatpush1.bf16.msra.mxu0 %v1900
      %8243 = vmatprep.subr.bf16.mxu0 0
      %8244 = vmatpush1.bf16.msra.mxu0 %v1899
      %8245 = vmatprep.subr.bf16.mxu0 0
      %8246 = vmatpush1.bf16.msra.mxu0 %v1898
      %8247 = vmatprep.subr.bf16.mxu0 0
      %8248 = vmatpush1.bf16.msra.mxu0 %v1897
      %8249 = vmatprep.subr.bf16.mxu0 0
      %8250 = vmatpush1.bf16.msra.mxu0 %v1896
      %8251 = vmatprep.subr.bf16.mxu0 0
      %8252 = vmatpush1.bf16.msra.mxu0 %v1895
      %8253 = vmatprep.subr.bf16.mxu0 0
      %8254 = vmatpush2.bf16.msra.mxu0 %v1910
      %8255 = vmatprep.subr.bf16.mxu0 0
      %8256 = vmatpush2.bf16.msra.mxu0 %v1909
      %8257 = vmatprep.subr.bf16.mxu0 0
      %8258 = vmatpush2.bf16.msra.mxu0 %v1908
      %8259 = vmatprep.subr.bf16.mxu0 0
      %8260 = vmatpush2.bf16.msra.mxu0 %v1907
      %8261 = vmatprep.subr.bf16.mxu0 0
      %8262 = vmatpush2.bf16.msra.mxu0 %v1906
      %8263 = vmatprep.subr.bf16.mxu0 0
      %8264 = vmatpush2.bf16.msra.mxu0 %v1905
      %8265 = vmatprep.subr.bf16.mxu0 0
      %8266 = vmatpush2.bf16.msra.mxu0 %v1904
      %8267 = vmatprep.subr.bf16.mxu0 0
      %8268 = vmatpush2.bf16.msra.mxu0 %v1903
      %8269 = vmatprep.mubr.bf16.mxu0 %v5151
      %8270 = vmatmul.mubr.bf16.gmra.mxu0 %v5150
      %v8271 = vpop.f32.mrf.mxu0
      %v8272 = vadd.f32 %v8175, %v8271
      %v8273 = vpop.f32.mrf.mxu0
      %v8274 = vpop.f32.mrf.mxu0
      %v8275 = vadd.f32 %v8178, %v8274
      %v8276 = vpop.f32.mrf.mxu0
      %8277 = vmatprep.mubr.bf16.mxu0 %v5236
      %8278 = vmatmul.mubr.bf16.gmra.mxu0 %v5235
      %v8279 = vpop.f32.mrf.mxu0
      %v8280 = vadd.f32 %v8183, %v8279
      %v8281 = vpop.f32.mrf.mxu0
      %v8282 = vpop.f32.mrf.mxu0
      %v8283 = vadd.f32 %v8186, %v8282
      %v8284 = vpop.f32.mrf.mxu0
      %8285 = vmatprep.mubr.bf16.mxu0 %v5321
      %8286 = vmatmul.mubr.bf16.gmra.mxu0 %v5320
      %v8287 = vpop.f32.mrf.mxu0
      %v8288 = vadd.f32 %v8191, %v8287
      %v8289 = vpop.f32.mrf.mxu0
      %v8290 = vpop.f32.mrf.mxu0
      %v8291 = vadd.f32 %v8194, %v8290
      %v8292 = vpop.f32.mrf.mxu0
      %8293 = vmatprep.mubr.bf16.mxu0 %v5406
      %8294 = vmatmul.mubr.bf16.gmra.mxu0 %v5405
      %v8295 = vpop.f32.mrf.mxu0
      %v8296 = vadd.f32 %v8199, %v8295
      %v8297 = vpop.f32.mrf.mxu0
      %v8298 = vpop.f32.mrf.mxu0
      %v8299 = vadd.f32 %v8202, %v8298
      %v8300 = vpop.f32.mrf.mxu0
      %8301 = vmatprep.mubr.bf16.mxu0 %v5491
      %8302 = vmatmul.mubr.bf16.gmra.mxu0 %v5490
      %v8303 = vpop.f32.mrf.mxu0
      %v8304 = vadd.f32 %v8207, %v8303
      %v8305 = vpop.f32.mrf.mxu0
      %v8306 = vpop.f32.mrf.mxu0
      %v8307 = vadd.f32 %v8210, %v8306
      %v8308 = vpop.f32.mrf.mxu0
      %8309 = vmatprep.mubr.bf16.mxu0 %v5576
      %8310 = vmatmul.mubr.bf16.gmra.mxu0 %v5575
      %v8311 = vpop.f32.mrf.mxu0
      %v8312 = vadd.f32 %v8215, %v8311
      %v8313 = vpop.f32.mrf.mxu0
      %v8314 = vpop.f32.mrf.mxu0
      %v8315 = vadd.f32 %v8218, %v8314
      %v8316 = vpop.f32.mrf.mxu0
      %8317 = vmatprep.mubr.bf16.mxu0 %v5661
      %8318 = vmatmul.mubr.bf16.gmra.mxu0 %v5660
      %v8319 = vpop.f32.mrf.mxu0
      %v8320 = vadd.f32 %v8223, %v8319
      %v8321 = vpop.f32.mrf.mxu0
      %v8322 = vpop.f32.mrf.mxu0
      %v8323 = vadd.f32 %v8226, %v8322
      %v8324 = vpop.f32.mrf.mxu0
      %8325 = vmatprep.mubr.bf16.mxu0 %v5746
      %8326 = vmatmul.mubr.bf16.gmra.mxu0 %v5745
      %v8327 = vpop.f32.mrf.mxu0
      %v8328 = vadd.f32 %v8231, %v8327
      %v8329 = vpop.f32.mrf.mxu0
      %v8330 = vpop.f32.mrf.mxu0
      %v8331 = vadd.f32 %v8234, %v8330
      %v8332 = vpop.f32.mrf.mxu0
      %8333 = vdwg.mxu0
      %8334 = vmatprep.subr.bf16.mxu0 0
      %8335 = vmatpush1.bf16.msra.mxu0 %v1918
      %8336 = vmatprep.subr.bf16.mxu0 0
      %8337 = vmatpush1.bf16.msra.mxu0 %v1917
      %8338 = vmatprep.subr.bf16.mxu0 0
      %8339 = vmatpush1.bf16.msra.mxu0 %v1916
      %8340 = vmatprep.subr.bf16.mxu0 0
      %8341 = vmatpush1.bf16.msra.mxu0 %v1915
      %8342 = vmatprep.subr.bf16.mxu0 0
      %8343 = vmatpush1.bf16.msra.mxu0 %v1914
      %8344 = vmatprep.subr.bf16.mxu0 0
      %8345 = vmatpush1.bf16.msra.mxu0 %v1913
      %8346 = vmatprep.subr.bf16.mxu0 0
      %8347 = vmatpush1.bf16.msra.mxu0 %v1912
      %8348 = vmatprep.subr.bf16.mxu0 0
      %8349 = vmatpush1.bf16.msra.mxu0 %v1911
      %8350 = vmatprep.subr.bf16.mxu0 0
      %8351 = vmatpush2.bf16.msra.mxu0 %v1926
      %8352 = vmatprep.subr.bf16.mxu0 0
      %8353 = vmatpush2.bf16.msra.mxu0 %v1925
      %8354 = vmatprep.subr.bf16.mxu0 0
      %8355 = vmatpush2.bf16.msra.mxu0 %v1924
      %8356 = vmatprep.subr.bf16.mxu0 0
      %8357 = vmatpush2.bf16.msra.mxu0 %v1923
      %8358 = vmatprep.subr.bf16.mxu0 0
      %8359 = vmatpush2.bf16.msra.mxu0 %v1922
      %8360 = vmatprep.subr.bf16.mxu0 0
      %8361 = vmatpush2.bf16.msra.mxu0 %v1921
      %8362 = vmatprep.subr.bf16.mxu0 0
      %8363 = vmatpush2.bf16.msra.mxu0 %v1920
      %8364 = vmatprep.subr.bf16.mxu0 0
      %8365 = vmatpush2.bf16.msra.mxu0 %v1919
      %8366 = vmatprep.mubr.bf16.mxu0 %v5153
      %8367 = vmatmul.mubr.bf16.gmra.mxu0 %v5152
      %v8368 = vpop.f32.mrf.mxu0
      %v8369 = vadd.f32 %v8272, %v8368
      %v8370 = vpop.f32.mrf.mxu0
      %v8371 = vpop.f32.mrf.mxu0
      %v8372 = vadd.f32 %v8275, %v8371
      %v8373 = vpop.f32.mrf.mxu0
      %8374 = vmatprep.mubr.bf16.mxu0 %v5238
      %8375 = vmatmul.mubr.bf16.gmra.mxu0 %v5237
      %v8376 = vpop.f32.mrf.mxu0
      %v8377 = vadd.f32 %v8280, %v8376
      %v8378 = vpop.f32.mrf.mxu0
      %v8379 = vpop.f32.mrf.mxu0
      %v8380 = vadd.f32 %v8283, %v8379
      %v8381 = vpop.f32.mrf.mxu0
      %8382 = vmatprep.mubr.bf16.mxu0 %v5323
      %8383 = vmatmul.mubr.bf16.gmra.mxu0 %v5322
      %v8384 = vpop.f32.mrf.mxu0
      %v8385 = vadd.f32 %v8288, %v8384
      %v8386 = vpop.f32.mrf.mxu0
      %v8387 = vpop.f32.mrf.mxu0
      %v8388 = vadd.f32 %v8291, %v8387
      %v8389 = vpop.f32.mrf.mxu0
      %8390 = vmatprep.mubr.bf16.mxu0 %v5408
      %8391 = vmatmul.mubr.bf16.gmra.mxu0 %v5407
      %v8392 = vpop.f32.mrf.mxu0
      %v8393 = vadd.f32 %v8296, %v8392
      %v8394 = vpop.f32.mrf.mxu0
      %v8395 = vpop.f32.mrf.mxu0
      %v8396 = vadd.f32 %v8299, %v8395
      %v8397 = vpop.f32.mrf.mxu0
      %8398 = vmatprep.mubr.bf16.mxu0 %v5493
      %8399 = vmatmul.mubr.bf16.gmra.mxu0 %v5492
      %v8400 = vpop.f32.mrf.mxu0
      %v8401 = vadd.f32 %v8304, %v8400
      %v8402 = vpop.f32.mrf.mxu0
      %v8403 = vpop.f32.mrf.mxu0
      %v8404 = vadd.f32 %v8307, %v8403
      %v8405 = vpop.f32.mrf.mxu0
      %8406 = vmatprep.mubr.bf16.mxu0 %v5578
      %8407 = vmatmul.mubr.bf16.gmra.mxu0 %v5577
      %v8408 = vpop.f32.mrf.mxu0
      %v8409 = vadd.f32 %v8312, %v8408
      %v8410 = vpop.f32.mrf.mxu0
      %v8411 = vpop.f32.mrf.mxu0
      %v8412 = vadd.f32 %v8315, %v8411
      %v8413 = vpop.f32.mrf.mxu0
      %8414 = vmatprep.mubr.bf16.mxu0 %v5663
      %8415 = vmatmul.mubr.bf16.gmra.mxu0 %v5662
      %v8416 = vpop.f32.mrf.mxu0
      %v8417 = vadd.f32 %v8320, %v8416
      %v8418 = vpop.f32.mrf.mxu0
      %v8419 = vpop.f32.mrf.mxu0
      %v8420 = vadd.f32 %v8323, %v8419
      %v8421 = vpop.f32.mrf.mxu0
      %8422 = vmatprep.mubr.bf16.mxu0 %v5748
      %8423 = vmatmul.mubr.bf16.gmra.mxu0 %v5747
      %v8424 = vpop.f32.mrf.mxu0
      %v8425 = vadd.f32 %v8328, %v8424
      %v8426 = vpop.f32.mrf.mxu0
      %v8427 = vpop.f32.mrf.mxu0
      %v8428 = vadd.f32 %v8331, %v8427
      %v8429 = vpop.f32.mrf.mxu0
      %8430 = vdwg.mxu0
      %8431 = vmatprep.subr.bf16.mxu0 0
      %8432 = vmatpush1.bf16.msra.mxu0 %v1934
      %8433 = vmatprep.subr.bf16.mxu0 0
      %8434 = vmatpush1.bf16.msra.mxu0 %v1933
      %8435 = vmatprep.subr.bf16.mxu0 0
      %8436 = vmatpush1.bf16.msra.mxu0 %v1932
      %8437 = vmatprep.subr.bf16.mxu0 0
      %8438 = vmatpush1.bf16.msra.mxu0 %v1931
      %8439 = vmatprep.subr.bf16.mxu0 0
      %8440 = vmatpush1.bf16.msra.mxu0 %v1930
      %8441 = vmatprep.subr.bf16.mxu0 0
      %8442 = vmatpush1.bf16.msra.mxu0 %v1929
      %8443 = vmatprep.subr.bf16.mxu0 0
      %8444 = vmatpush1.bf16.msra.mxu0 %v1928
      %8445 = vmatprep.subr.bf16.mxu0 0
      %8446 = vmatpush1.bf16.msra.mxu0 %v1927
      %8447 = vmatprep.subr.bf16.mxu0 0
      %8448 = vmatpush2.bf16.msra.mxu0 %v1942
      %8449 = vmatprep.subr.bf16.mxu0 0
      %8450 = vmatpush2.bf16.msra.mxu0 %v1941
      %8451 = vmatprep.subr.bf16.mxu0 0
      %8452 = vmatpush2.bf16.msra.mxu0 %v1940
      %8453 = vmatprep.subr.bf16.mxu0 0
      %8454 = vmatpush2.bf16.msra.mxu0 %v1939
      %8455 = vmatprep.subr.bf16.mxu0 0
      %8456 = vmatpush2.bf16.msra.mxu0 %v1938
      %8457 = vmatprep.subr.bf16.mxu0 0
      %8458 = vmatpush2.bf16.msra.mxu0 %v1937
      %8459 = vmatprep.subr.bf16.mxu0 0
      %8460 = vmatpush2.bf16.msra.mxu0 %v1936
      %8461 = vmatprep.subr.bf16.mxu0 0
      %8462 = vmatpush2.bf16.msra.mxu0 %v1935
      %8463 = vmatprep.mubr.bf16.mxu0 %v5155
      %8464 = vmatmul.mubr.bf16.gmra.mxu0 %v5154
      %v8465 = vpop.f32.mrf.mxu0
      %v8466 = vadd.f32 %v8369, %v8465
      %v8467 = vpop.f32.mrf.mxu0
      %v8468 = vpop.f32.mrf.mxu0
      %v8469 = vadd.f32 %v8372, %v8468
      %v8470 = vpop.f32.mrf.mxu0
      %8471 = vmatprep.mubr.bf16.mxu0 %v5240
      %8472 = vmatmul.mubr.bf16.gmra.mxu0 %v5239
      %v8473 = vpop.f32.mrf.mxu0
      %v8474 = vadd.f32 %v8377, %v8473
      %v8475 = vpop.f32.mrf.mxu0
      %v8476 = vpop.f32.mrf.mxu0
      %v8477 = vadd.f32 %v8380, %v8476
      %v8478 = vpop.f32.mrf.mxu0
      %8479 = vmatprep.mubr.bf16.mxu0 %v5325
      %8480 = vmatmul.mubr.bf16.gmra.mxu0 %v5324
      %v8481 = vpop.f32.mrf.mxu0
      %v8482 = vadd.f32 %v8385, %v8481
      %v8483 = vpop.f32.mrf.mxu0
      %v8484 = vpop.f32.mrf.mxu0
      %v8485 = vadd.f32 %v8388, %v8484
      %v8486 = vpop.f32.mrf.mxu0
      %8487 = vmatprep.mubr.bf16.mxu0 %v5410
      %8488 = vmatmul.mubr.bf16.gmra.mxu0 %v5409
      %v8489 = vpop.f32.mrf.mxu0
      %v8490 = vadd.f32 %v8393, %v8489
      %v8491 = vpop.f32.mrf.mxu0
      %v8492 = vpop.f32.mrf.mxu0
      %v8493 = vadd.f32 %v8396, %v8492
      %v8494 = vpop.f32.mrf.mxu0
      %8495 = vmatprep.mubr.bf16.mxu0 %v5495
      %8496 = vmatmul.mubr.bf16.gmra.mxu0 %v5494
      %v8497 = vpop.f32.mrf.mxu0
      %v8498 = vadd.f32 %v8401, %v8497
      %v8499 = vpop.f32.mrf.mxu0
      %v8500 = vpop.f32.mrf.mxu0
      %v8501 = vadd.f32 %v8404, %v8500
      %v8502 = vpop.f32.mrf.mxu0
      %8503 = vmatprep.mubr.bf16.mxu0 %v5580
      %8504 = vmatmul.mubr.bf16.gmra.mxu0 %v5579
      %v8505 = vpop.f32.mrf.mxu0
      %v8506 = vadd.f32 %v8409, %v8505
      %v8507 = vpop.f32.mrf.mxu0
      %v8508 = vpop.f32.mrf.mxu0
      %v8509 = vadd.f32 %v8412, %v8508
      %v8510 = vpop.f32.mrf.mxu0
      %8511 = vmatprep.mubr.bf16.mxu0 %v5665
      %8512 = vmatmul.mubr.bf16.gmra.mxu0 %v5664
      %v8513 = vpop.f32.mrf.mxu0
      %v8514 = vadd.f32 %v8417, %v8513
      %v8515 = vpop.f32.mrf.mxu0
      %v8516 = vpop.f32.mrf.mxu0
      %v8517 = vadd.f32 %v8420, %v8516
      %v8518 = vpop.f32.mrf.mxu0
      %8519 = vmatprep.mubr.bf16.mxu0 %v5750
      %8520 = vmatmul.mubr.bf16.gmra.mxu0 %v5749
      %v8521 = vpop.f32.mrf.mxu0
      %v8522 = vadd.f32 %v8425, %v8521
      %v8523 = vpop.f32.mrf.mxu0
      %v8524 = vpop.f32.mrf.mxu0
      %v8525 = vadd.f32 %v8428, %v8524
      %v8526 = vpop.f32.mrf.mxu0
      %8527 = vdwg.mxu0
      %8528 = vmatprep.subr.bf16.mxu0 0
      %8529 = vmatpush1.bf16.msra.mxu0 %v1950
      %8530 = vmatprep.subr.bf16.mxu0 0
      %8531 = vmatpush1.bf16.msra.mxu0 %v1949
      %8532 = vmatprep.subr.bf16.mxu0 0
      %8533 = vmatpush1.bf16.msra.mxu0 %v1948
      %8534 = vmatprep.subr.bf16.mxu0 0
      %8535 = vmatpush1.bf16.msra.mxu0 %v1947
      %8536 = vmatprep.subr.bf16.mxu0 0
      %8537 = vmatpush1.bf16.msra.mxu0 %v1946
      %8538 = vmatprep.subr.bf16.mxu0 0
      %8539 = vmatpush1.bf16.msra.mxu0 %v1945
      %8540 = vmatprep.subr.bf16.mxu0 0
      %8541 = vmatpush1.bf16.msra.mxu0 %v1944
      %8542 = vmatprep.subr.bf16.mxu0 0
      %8543 = vmatpush1.bf16.msra.mxu0 %v1943
      %8544 = vmatprep.subr.bf16.mxu0 0
      %8545 = vmatpush2.bf16.msra.mxu0 %v1958
      %8546 = vmatprep.subr.bf16.mxu0 0
      %8547 = vmatpush2.bf16.msra.mxu0 %v1957
      %8548 = vmatprep.subr.bf16.mxu0 0
      %8549 = vmatpush2.bf16.msra.mxu0 %v1956
      %8550 = vmatprep.subr.bf16.mxu0 0
      %8551 = vmatpush2.bf16.msra.mxu0 %v1955
      %8552 = vmatprep.subr.bf16.mxu0 0
      %8553 = vmatpush2.bf16.msra.mxu0 %v1954
      %8554 = vmatprep.subr.bf16.mxu0 0
      %8555 = vmatpush2.bf16.msra.mxu0 %v1953
      %8556 = vmatprep.subr.bf16.mxu0 0
      %8557 = vmatpush2.bf16.msra.mxu0 %v1952
      %8558 = vmatprep.subr.bf16.mxu0 0
      %8559 = vmatpush2.bf16.msra.mxu0 %v1951
      %8560 = vmatprep.mubr.bf16.mxu0 %v5157
      %8561 = vmatmul.mubr.bf16.gmra.mxu0 %v5156
      %v8562 = vpop.f32.mrf.mxu0
      %v8563 = vadd.f32 %v8466, %v8562
      %v8564 = vpop.f32.mrf.mxu0
      %v8565 = vpop.f32.mrf.mxu0
      %v8566 = vadd.f32 %v8469, %v8565
      %v8567 = vpop.f32.mrf.mxu0
      %8568 = vmatprep.mubr.bf16.mxu0 %v5242
      %8569 = vmatmul.mubr.bf16.gmra.mxu0 %v5241
      %v8570 = vpop.f32.mrf.mxu0
      %v8571 = vadd.f32 %v8474, %v8570
      %v8572 = vpop.f32.mrf.mxu0
      %v8573 = vpop.f32.mrf.mxu0
      %v8574 = vadd.f32 %v8477, %v8573
      %v8575 = vpop.f32.mrf.mxu0
      %8576 = vmatprep.mubr.bf16.mxu0 %v5327
      %8577 = vmatmul.mubr.bf16.gmra.mxu0 %v5326
      %v8578 = vpop.f32.mrf.mxu0
      %v8579 = vadd.f32 %v8482, %v8578
      %v8580 = vpop.f32.mrf.mxu0
      %v8581 = vpop.f32.mrf.mxu0
      %v8582 = vadd.f32 %v8485, %v8581
      %v8583 = vpop.f32.mrf.mxu0
      %8584 = vmatprep.mubr.bf16.mxu0 %v5412
      %8585 = vmatmul.mubr.bf16.gmra.mxu0 %v5411
      %v8586 = vpop.f32.mrf.mxu0
      %v8587 = vadd.f32 %v8490, %v8586
      %v8588 = vpop.f32.mrf.mxu0
      %v8589 = vpop.f32.mrf.mxu0
      %v8590 = vadd.f32 %v8493, %v8589
      %v8591 = vpop.f32.mrf.mxu0
      %8592 = vmatprep.mubr.bf16.mxu0 %v5497
      %8593 = vmatmul.mubr.bf16.gmra.mxu0 %v5496
      %v8594 = vpop.f32.mrf.mxu0
      %v8595 = vadd.f32 %v8498, %v8594
      %v8596 = vpop.f32.mrf.mxu0
      %v8597 = vpop.f32.mrf.mxu0
      %v8598 = vadd.f32 %v8501, %v8597
      %v8599 = vpop.f32.mrf.mxu0
      %8600 = vmatprep.mubr.bf16.mxu0 %v5582
      %8601 = vmatmul.mubr.bf16.gmra.mxu0 %v5581
      %v8602 = vpop.f32.mrf.mxu0
      %v8603 = vadd.f32 %v8506, %v8602
      %v8604 = vpop.f32.mrf.mxu0
      %v8605 = vpop.f32.mrf.mxu0
      %v8606 = vadd.f32 %v8509, %v8605
      %v8607 = vpop.f32.mrf.mxu0
      %8608 = vmatprep.mubr.bf16.mxu0 %v5667
      %8609 = vmatmul.mubr.bf16.gmra.mxu0 %v5666
      %v8610 = vpop.f32.mrf.mxu0
      %v8611 = vadd.f32 %v8514, %v8610
      %v8612 = vpop.f32.mrf.mxu0
      %v8613 = vpop.f32.mrf.mxu0
      %v8614 = vadd.f32 %v8517, %v8613
      %v8615 = vpop.f32.mrf.mxu0
      %8616 = vmatprep.mubr.bf16.mxu0 %v5752
      %8617 = vmatmul.mubr.bf16.gmra.mxu0 %v5751
      %v8618 = vpop.f32.mrf.mxu0
      %v8619 = vadd.f32 %v8522, %v8618
      %v8620 = vpop.f32.mrf.mxu0
      %v8621 = vpop.f32.mrf.mxu0
      %v8622 = vadd.f32 %v8525, %v8621
      %v8623 = vpop.f32.mrf.mxu0
      %8624 = vdwg.mxu0
      %8625 = vmatprep.subr.bf16.mxu0 0
      %8626 = vmatpush1.bf16.msra.mxu0 %v1966
      %8627 = vmatprep.subr.bf16.mxu0 0
      %8628 = vmatpush1.bf16.msra.mxu0 %v1965
      %8629 = vmatprep.subr.bf16.mxu0 0
      %8630 = vmatpush1.bf16.msra.mxu0 %v1964
      %8631 = vmatprep.subr.bf16.mxu0 0
      %8632 = vmatpush1.bf16.msra.mxu0 %v1963
      %8633 = vmatprep.subr.bf16.mxu0 0
      %8634 = vmatpush1.bf16.msra.mxu0 %v1962
      %8635 = vmatprep.subr.bf16.mxu0 0
      %8636 = vmatpush1.bf16.msra.mxu0 %v1961
      %8637 = vmatprep.subr.bf16.mxu0 0
      %8638 = vmatpush1.bf16.msra.mxu0 %v1960
      %8639 = vmatprep.subr.bf16.mxu0 0
      %8640 = vmatpush1.bf16.msra.mxu0 %v1959
      %8641 = vmatprep.subr.bf16.mxu0 0
      %8642 = vmatpush2.bf16.msra.mxu0 %v1974
      %8643 = vmatprep.subr.bf16.mxu0 0
      %8644 = vmatpush2.bf16.msra.mxu0 %v1973
      %8645 = vmatprep.subr.bf16.mxu0 0
      %8646 = vmatpush2.bf16.msra.mxu0 %v1972
      %8647 = vmatprep.subr.bf16.mxu0 0
      %8648 = vmatpush2.bf16.msra.mxu0 %v1971
      %8649 = vmatprep.subr.bf16.mxu0 0
      %8650 = vmatpush2.bf16.msra.mxu0 %v1970
      %8651 = vmatprep.subr.bf16.mxu0 0
      %8652 = vmatpush2.bf16.msra.mxu0 %v1969
      %8653 = vmatprep.subr.bf16.mxu0 0
      %8654 = vmatpush2.bf16.msra.mxu0 %v1968
      %8655 = vmatprep.subr.bf16.mxu0 0
      %8656 = vmatpush2.bf16.msra.mxu0 %v1967
      %8657 = vmatprep.mubr.bf16.mxu0 %v5159
      %8658 = vmatmul.mubr.bf16.gmra.mxu0 %v5158
      %v8659 = vpop.f32.mrf.mxu0
      %v8660 = vadd.f32 %v8563, %v8659
      %v8661 = vpop.f32.mrf.mxu0
      %v8662 = vpop.f32.mrf.mxu0
      %v8663 = vadd.f32 %v8566, %v8662
      %v8664 = vpop.f32.mrf.mxu0
      %8665 = vmatprep.mubr.bf16.mxu0 %v5244
      %8666 = vmatmul.mubr.bf16.gmra.mxu0 %v5243
      %v8667 = vpop.f32.mrf.mxu0
      %v8668 = vadd.f32 %v8571, %v8667
      %v8669 = vpop.f32.mrf.mxu0
      %v8670 = vpop.f32.mrf.mxu0
      %v8671 = vadd.f32 %v8574, %v8670
      %v8672 = vpop.f32.mrf.mxu0
      %8673 = vmatprep.mubr.bf16.mxu0 %v5329
      %8674 = vmatmul.mubr.bf16.gmra.mxu0 %v5328
      %v8675 = vpop.f32.mrf.mxu0
      %v8676 = vadd.f32 %v8579, %v8675
      %v8677 = vpop.f32.mrf.mxu0
      %v8678 = vpop.f32.mrf.mxu0
      %v8679 = vadd.f32 %v8582, %v8678
      %v8680 = vpop.f32.mrf.mxu0
      %8681 = vmatprep.mubr.bf16.mxu0 %v5414
      %8682 = vmatmul.mubr.bf16.gmra.mxu0 %v5413
      %v8683 = vpop.f32.mrf.mxu0
      %v8684 = vadd.f32 %v8587, %v8683
      %v8685 = vpop.f32.mrf.mxu0
      %v8686 = vpop.f32.mrf.mxu0
      %v8687 = vadd.f32 %v8590, %v8686
      %v8688 = vpop.f32.mrf.mxu0
      %8689 = vmatprep.mubr.bf16.mxu0 %v5499
      %8690 = vmatmul.mubr.bf16.gmra.mxu0 %v5498
      %v8691 = vpop.f32.mrf.mxu0
      %v8692 = vadd.f32 %v8595, %v8691
      %v8693 = vpop.f32.mrf.mxu0
      %v8694 = vpop.f32.mrf.mxu0
      %v8695 = vadd.f32 %v8598, %v8694
      %v8696 = vpop.f32.mrf.mxu0
      %8697 = vmatprep.mubr.bf16.mxu0 %v5584
      %8698 = vmatmul.mubr.bf16.gmra.mxu0 %v5583
      %v8699 = vpop.f32.mrf.mxu0
      %v8700 = vadd.f32 %v8603, %v8699
      %v8701 = vpop.f32.mrf.mxu0
      %v8702 = vpop.f32.mrf.mxu0
      %v8703 = vadd.f32 %v8606, %v8702
      %v8704 = vpop.f32.mrf.mxu0
      %8705 = vmatprep.mubr.bf16.mxu0 %v5669
      %8706 = vmatmul.mubr.bf16.gmra.mxu0 %v5668
      %v8707 = vpop.f32.mrf.mxu0
      %v8708 = vadd.f32 %v8611, %v8707
      %v8709 = vpop.f32.mrf.mxu0
      %v8710 = vpop.f32.mrf.mxu0
      %v8711 = vadd.f32 %v8614, %v8710
      %v8712 = vpop.f32.mrf.mxu0
      %8713 = vmatprep.mubr.bf16.mxu0 %v5754
      %8714 = vmatmul.mubr.bf16.gmra.mxu0 %v5753
      %v8715 = vpop.f32.mrf.mxu0
      %v8716 = vadd.f32 %v8619, %v8715
      %v8717 = vpop.f32.mrf.mxu0
      %v8718 = vpop.f32.mrf.mxu0
      %v8719 = vadd.f32 %v8622, %v8718
      %v8720 = vpop.f32.mrf.mxu0
      %8721 = vdwg.mxu0
      %8722 = vmatprep.subr.bf16.mxu0 0
      %8723 = vmatpush1.bf16.msra.mxu0 %v1982
      %8724 = vmatprep.subr.bf16.mxu0 0
      %8725 = vmatpush1.bf16.msra.mxu0 %v1981
      %8726 = vmatprep.subr.bf16.mxu0 0
      %8727 = vmatpush1.bf16.msra.mxu0 %v1980
      %8728 = vmatprep.subr.bf16.mxu0 0
      %8729 = vmatpush1.bf16.msra.mxu0 %v1979
      %8730 = vmatprep.subr.bf16.mxu0 0
      %8731 = vmatpush1.bf16.msra.mxu0 %v1978
      %8732 = vmatprep.subr.bf16.mxu0 0
      %8733 = vmatpush1.bf16.msra.mxu0 %v1977
      %8734 = vmatprep.subr.bf16.mxu0 0
      %8735 = vmatpush1.bf16.msra.mxu0 %v1976
      %8736 = vmatprep.subr.bf16.mxu0 0
      %8737 = vmatpush1.bf16.msra.mxu0 %v1975
      %8738 = vmatprep.subr.bf16.mxu0 0
      %8739 = vmatpush2.bf16.msra.mxu0 %v1990
      %8740 = vmatprep.subr.bf16.mxu0 0
      %8741 = vmatpush2.bf16.msra.mxu0 %v1989
      %8742 = vmatprep.subr.bf16.mxu0 0
      %8743 = vmatpush2.bf16.msra.mxu0 %v1988
      %8744 = vmatprep.subr.bf16.mxu0 0
      %8745 = vmatpush2.bf16.msra.mxu0 %v1987
      %8746 = vmatprep.subr.bf16.mxu0 0
      %8747 = vmatpush2.bf16.msra.mxu0 %v1986
      %8748 = vmatprep.subr.bf16.mxu0 0
      %8749 = vmatpush2.bf16.msra.mxu0 %v1985
      %8750 = vmatprep.subr.bf16.mxu0 0
      %8751 = vmatpush2.bf16.msra.mxu0 %v1984
      %8752 = vmatprep.subr.bf16.mxu0 0
      %8753 = vmatpush2.bf16.msra.mxu0 %v1983
      %8754 = vmatprep.mubr.bf16.mxu0 %v5161
      %8755 = vmatmul.mubr.bf16.gmra.mxu0 %v5160
      %v8756 = vpop.f32.mrf.mxu0
      %v8757 = vadd.f32 %v8660, %v8756
      %v8758 = vpop.f32.mrf.mxu0
      %v8759 = vpop.f32.mrf.mxu0
      %v8760 = vadd.f32 %v8663, %v8759
      %v8761 = vpop.f32.mrf.mxu0
      %8762 = vmatprep.mubr.bf16.mxu0 %v5246
      %8763 = vmatmul.mubr.bf16.gmra.mxu0 %v5245
      %v8764 = vpop.f32.mrf.mxu0
      %v8765 = vadd.f32 %v8668, %v8764
      %v8766 = vpop.f32.mrf.mxu0
      %v8767 = vpop.f32.mrf.mxu0
      %v8768 = vadd.f32 %v8671, %v8767
      %v8769 = vpop.f32.mrf.mxu0
      %8770 = vmatprep.mubr.bf16.mxu0 %v5331
      %8771 = vmatmul.mubr.bf16.gmra.mxu0 %v5330
      %v8772 = vpop.f32.mrf.mxu0
      %v8773 = vadd.f32 %v8676, %v8772
      %v8774 = vpop.f32.mrf.mxu0
      %v8775 = vpop.f32.mrf.mxu0
      %v8776 = vadd.f32 %v8679, %v8775
      %v8777 = vpop.f32.mrf.mxu0
      %8778 = vmatprep.mubr.bf16.mxu0 %v5416
      %8779 = vmatmul.mubr.bf16.gmra.mxu0 %v5415
      %v8780 = vpop.f32.mrf.mxu0
      %v8781 = vadd.f32 %v8684, %v8780
      %v8782 = vpop.f32.mrf.mxu0
      %v8783 = vpop.f32.mrf.mxu0
      %v8784 = vadd.f32 %v8687, %v8783
      %v8785 = vpop.f32.mrf.mxu0
      %8786 = vmatprep.mubr.bf16.mxu0 %v5501
      %8787 = vmatmul.mubr.bf16.gmra.mxu0 %v5500
      %v8788 = vpop.f32.mrf.mxu0
      %v8789 = vadd.f32 %v8692, %v8788
      %v8790 = vpop.f32.mrf.mxu0
      %v8791 = vpop.f32.mrf.mxu0
      %v8792 = vadd.f32 %v8695, %v8791
      %v8793 = vpop.f32.mrf.mxu0
      %8794 = vmatprep.mubr.bf16.mxu0 %v5586
      %8795 = vmatmul.mubr.bf16.gmra.mxu0 %v5585
      %v8796 = vpop.f32.mrf.mxu0
      %v8797 = vadd.f32 %v8700, %v8796
      %v8798 = vpop.f32.mrf.mxu0
      %v8799 = vpop.f32.mrf.mxu0
      %v8800 = vadd.f32 %v8703, %v8799
      %v8801 = vpop.f32.mrf.mxu0
      %8802 = vmatprep.mubr.bf16.mxu0 %v5671
      %8803 = vmatmul.mubr.bf16.gmra.mxu0 %v5670
      %v8804 = vpop.f32.mrf.mxu0
      %v8805 = vadd.f32 %v8708, %v8804
      %v8806 = vpop.f32.mrf.mxu0
      %v8807 = vpop.f32.mrf.mxu0
      %v8808 = vadd.f32 %v8711, %v8807
      %v8809 = vpop.f32.mrf.mxu0
      %8810 = vmatprep.mubr.bf16.mxu0 %v5756
      %8811 = vmatmul.mubr.bf16.gmra.mxu0 %v5755
      %v8812 = vpop.f32.mrf.mxu0
      %v8813 = vadd.f32 %v8716, %v8812
      %v8814 = vpop.f32.mrf.mxu0
      %v8815 = vpop.f32.mrf.mxu0
      %v8816 = vadd.f32 %v8719, %v8815
      %v8817 = vpop.f32.mrf.mxu0
      %8818 = vdwg.mxu0
      %8819 = vmatprep.subr.bf16.mxu0 0
      %8820 = vmatpush1.bf16.msra.mxu0 %v1998
      %8821 = vmatprep.subr.bf16.mxu0 0
      %8822 = vmatpush1.bf16.msra.mxu0 %v1997
      %8823 = vmatprep.subr.bf16.mxu0 0
      %8824 = vmatpush1.bf16.msra.mxu0 %v1996
      %8825 = vmatprep.subr.bf16.mxu0 0
      %8826 = vmatpush1.bf16.msra.mxu0 %v1995
      %8827 = vmatprep.subr.bf16.mxu0 0
      %8828 = vmatpush1.bf16.msra.mxu0 %v1994
      %8829 = vmatprep.subr.bf16.mxu0 0
      %8830 = vmatpush1.bf16.msra.mxu0 %v1993
      %8831 = vmatprep.subr.bf16.mxu0 0
      %8832 = vmatpush1.bf16.msra.mxu0 %v1992
      %8833 = vmatprep.subr.bf16.mxu0 0
      %8834 = vmatpush1.bf16.msra.mxu0 %v1991
      %8835 = vmatprep.subr.bf16.mxu0 0
      %8836 = vmatpush2.bf16.msra.mxu0 %v2006
      %8837 = vmatprep.subr.bf16.mxu0 0
      %8838 = vmatpush2.bf16.msra.mxu0 %v2005
      %8839 = vmatprep.subr.bf16.mxu0 0
      %8840 = vmatpush2.bf16.msra.mxu0 %v2004
      %8841 = vmatprep.subr.bf16.mxu0 0
      %8842 = vmatpush2.bf16.msra.mxu0 %v2003
      %8843 = vmatprep.subr.bf16.mxu0 0
      %8844 = vmatpush2.bf16.msra.mxu0 %v2002
      %8845 = vmatprep.subr.bf16.mxu0 0
      %8846 = vmatpush2.bf16.msra.mxu0 %v2001
      %8847 = vmatprep.subr.bf16.mxu0 0
      %8848 = vmatpush2.bf16.msra.mxu0 %v2000
      %8849 = vmatprep.subr.bf16.mxu0 0
      %8850 = vmatpush2.bf16.msra.mxu0 %v1999
      %8851 = vmatprep.mubr.bf16.mxu0 %v5163
      %8852 = vmatmul.mubr.bf16.gmra.mxu0 %v5162
      %v8853 = vpop.f32.mrf.mxu0
      %v8854 = vadd.f32 %v8757, %v8853
      %v8855 = vpop.f32.mrf.mxu0
      %v8856 = vpop.f32.mrf.mxu0
      %v8857 = vadd.f32 %v8760, %v8856
      %v8858 = vpop.f32.mrf.mxu0
      %8859 = vmatprep.mubr.bf16.mxu0 %v5248
      %8860 = vmatmul.mubr.bf16.gmra.mxu0 %v5247
      %v8861 = vpop.f32.mrf.mxu0
      %v8862 = vadd.f32 %v8765, %v8861
      %v8863 = vpop.f32.mrf.mxu0
      %v8864 = vpop.f32.mrf.mxu0
      %v8865 = vadd.f32 %v8768, %v8864
      %v8866 = vpop.f32.mrf.mxu0
      %8867 = vmatprep.mubr.bf16.mxu0 %v5333
      %8868 = vmatmul.mubr.bf16.gmra.mxu0 %v5332
      %v8869 = vpop.f32.mrf.mxu0
      %v8870 = vadd.f32 %v8773, %v8869
      %v8871 = vpop.f32.mrf.mxu0
      %v8872 = vpop.f32.mrf.mxu0
      %v8873 = vadd.f32 %v8776, %v8872
      %v8874 = vpop.f32.mrf.mxu0
      %8875 = vmatprep.mubr.bf16.mxu0 %v5418
      %8876 = vmatmul.mubr.bf16.gmra.mxu0 %v5417
      %v8877 = vpop.f32.mrf.mxu0
      %v8878 = vadd.f32 %v8781, %v8877
      %v8879 = vpop.f32.mrf.mxu0
      %v8880 = vpop.f32.mrf.mxu0
      %v8881 = vadd.f32 %v8784, %v8880
      %v8882 = vpop.f32.mrf.mxu0
      %8883 = vmatprep.mubr.bf16.mxu0 %v5503
      %8884 = vmatmul.mubr.bf16.gmra.mxu0 %v5502
      %v8885 = vpop.f32.mrf.mxu0
      %v8886 = vadd.f32 %v8789, %v8885
      %v8887 = vpop.f32.mrf.mxu0
      %v8888 = vpop.f32.mrf.mxu0
      %v8889 = vadd.f32 %v8792, %v8888
      %v8890 = vpop.f32.mrf.mxu0
      %8891 = vmatprep.mubr.bf16.mxu0 %v5588
      %8892 = vmatmul.mubr.bf16.gmra.mxu0 %v5587
      %v8893 = vpop.f32.mrf.mxu0
      %v8894 = vadd.f32 %v8797, %v8893
      %v8895 = vpop.f32.mrf.mxu0
      %v8896 = vpop.f32.mrf.mxu0
      %v8897 = vadd.f32 %v8800, %v8896
      %v8898 = vpop.f32.mrf.mxu0
      %8899 = vmatprep.mubr.bf16.mxu0 %v5673
      %8900 = vmatmul.mubr.bf16.gmra.mxu0 %v5672
      %v8901 = vpop.f32.mrf.mxu0
      %v8902 = vadd.f32 %v8805, %v8901
      %v8903 = vpop.f32.mrf.mxu0
      %v8904 = vpop.f32.mrf.mxu0
      %v8905 = vadd.f32 %v8808, %v8904
      %v8906 = vpop.f32.mrf.mxu0
      %8907 = vmatprep.mubr.bf16.mxu0 %v5758
      %8908 = vmatmul.mubr.bf16.gmra.mxu0 %v5757
      %v8909 = vpop.f32.mrf.mxu0
      %v8910 = vadd.f32 %v8813, %v8909
      %v8911 = vpop.f32.mrf.mxu0
      %v8912 = vpop.f32.mrf.mxu0
      %v8913 = vadd.f32 %v8816, %v8912
      %v8914 = vpop.f32.mrf.mxu0
      %8915 = vdwg.mxu0
      %8916 = vmatprep.subr.bf16.mxu0 0
      %8917 = vmatpush1.bf16.msra.mxu0 %v2014
      %8918 = vmatprep.subr.bf16.mxu0 0
      %8919 = vmatpush1.bf16.msra.mxu0 %v2013
      %8920 = vmatprep.subr.bf16.mxu0 0
      %8921 = vmatpush1.bf16.msra.mxu0 %v2012
      %8922 = vmatprep.subr.bf16.mxu0 0
      %8923 = vmatpush1.bf16.msra.mxu0 %v2011
      %8924 = vmatprep.subr.bf16.mxu0 0
      %8925 = vmatpush1.bf16.msra.mxu0 %v2010
      %8926 = vmatprep.subr.bf16.mxu0 0
      %8927 = vmatpush1.bf16.msra.mxu0 %v2009
      %8928 = vmatprep.subr.bf16.mxu0 0
      %8929 = vmatpush1.bf16.msra.mxu0 %v2008
      %8930 = vmatprep.subr.bf16.mxu0 0
      %8931 = vmatpush1.bf16.msra.mxu0 %v2007
      %8932 = vmatprep.subr.bf16.mxu0 0
      %8933 = vmatpush2.bf16.msra.mxu0 %v2022
      %8934 = vmatprep.subr.bf16.mxu0 0
      %8935 = vmatpush2.bf16.msra.mxu0 %v2021
      %8936 = vmatprep.subr.bf16.mxu0 0
      %8937 = vmatpush2.bf16.msra.mxu0 %v2020
      %8938 = vmatprep.subr.bf16.mxu0 0
      %8939 = vmatpush2.bf16.msra.mxu0 %v2019
      %8940 = vmatprep.subr.bf16.mxu0 0
      %8941 = vmatpush2.bf16.msra.mxu0 %v2018
      %8942 = vmatprep.subr.bf16.mxu0 0
      %8943 = vmatpush2.bf16.msra.mxu0 %v2017
      %8944 = vmatprep.subr.bf16.mxu0 0
      %8945 = vmatpush2.bf16.msra.mxu0 %v2016
      %8946 = vmatprep.subr.bf16.mxu0 0
      %8947 = vmatpush2.bf16.msra.mxu0 %v2015
      %8948 = vmatprep.mubr.bf16.mxu0 %v5165
      %8949 = vmatmul.mubr.bf16.gmra.mxu0 %v5164
      %v8950 = vpop.f32.mrf.mxu0
      %v8951 = vadd.f32 %v8854, %v8950
      %v8952 = vpop.f32.mrf.mxu0
      %v8953 = vpop.f32.mrf.mxu0
      %v8954 = vadd.f32 %v8857, %v8953
      %v8955 = vpop.f32.mrf.mxu0
      %8956 = vmatprep.mubr.bf16.mxu0 %v5250
      %8957 = vmatmul.mubr.bf16.gmra.mxu0 %v5249
      %v8958 = vpop.f32.mrf.mxu0
      %v8959 = vadd.f32 %v8862, %v8958
      %v8960 = vpop.f32.mrf.mxu0
      %v8961 = vpop.f32.mrf.mxu0
      %v8962 = vadd.f32 %v8865, %v8961
      %v8963 = vpop.f32.mrf.mxu0
      %8964 = vmatprep.mubr.bf16.mxu0 %v5335
      %8965 = vmatmul.mubr.bf16.gmra.mxu0 %v5334
      %v8966 = vpop.f32.mrf.mxu0
      %v8967 = vadd.f32 %v8870, %v8966
      %v8968 = vpop.f32.mrf.mxu0
      %v8969 = vpop.f32.mrf.mxu0
      %v8970 = vadd.f32 %v8873, %v8969
      %v8971 = vpop.f32.mrf.mxu0
      %8972 = vmatprep.mubr.bf16.mxu0 %v5420
      %8973 = vmatmul.mubr.bf16.gmra.mxu0 %v5419
      %v8974 = vpop.f32.mrf.mxu0
      %v8975 = vadd.f32 %v8878, %v8974
      %v8976 = vpop.f32.mrf.mxu0
      %v8977 = vpop.f32.mrf.mxu0
      %v8978 = vadd.f32 %v8881, %v8977
      %v8979 = vpop.f32.mrf.mxu0
      %8980 = vmatprep.mubr.bf16.mxu0 %v5505
      %8981 = vmatmul.mubr.bf16.gmra.mxu0 %v5504
      %v8982 = vpop.f32.mrf.mxu0
      %v8983 = vadd.f32 %v8886, %v8982
      %v8984 = vpop.f32.mrf.mxu0
      %v8985 = vpop.f32.mrf.mxu0
      %v8986 = vadd.f32 %v8889, %v8985
      %v8987 = vpop.f32.mrf.mxu0
      %8988 = vmatprep.mubr.bf16.mxu0 %v5590
      %8989 = vmatmul.mubr.bf16.gmra.mxu0 %v5589
      %v8990 = vpop.f32.mrf.mxu0
      %v8991 = vadd.f32 %v8894, %v8990
      %v8992 = vpop.f32.mrf.mxu0
      %v8993 = vpop.f32.mrf.mxu0
      %v8994 = vadd.f32 %v8897, %v8993
      %v8995 = vpop.f32.mrf.mxu0
      %8996 = vmatprep.mubr.bf16.mxu0 %v5675
      %8997 = vmatmul.mubr.bf16.gmra.mxu0 %v5674
      %v8998 = vpop.f32.mrf.mxu0
      %v8999 = vadd.f32 %v8902, %v8998
      %v9000 = vpop.f32.mrf.mxu0
      %v9001 = vpop.f32.mrf.mxu0
      %v9002 = vadd.f32 %v8905, %v9001
      %v9003 = vpop.f32.mrf.mxu0
      %9004 = vmatprep.mubr.bf16.mxu0 %v5760
      %9005 = vmatmul.mubr.bf16.gmra.mxu0 %v5759
      %v9006 = vpop.f32.mrf.mxu0
      %v9007 = vadd.f32 %v8910, %v9006
      %v9008 = vpop.f32.mrf.mxu0
      %v9009 = vpop.f32.mrf.mxu0
      %v9010 = vadd.f32 %v8913, %v9009
      %v9011 = vpop.f32.mrf.mxu0
      %9012 = vdwg.mxu0
      %9013 = vmatprep.subr.bf16.mxu0 0
      %9014 = vmatpush1.bf16.msra.mxu0 %v2030
      %9015 = vmatprep.subr.bf16.mxu0 0
      %9016 = vmatpush1.bf16.msra.mxu0 %v2029
      %9017 = vmatprep.subr.bf16.mxu0 0
      %9018 = vmatpush1.bf16.msra.mxu0 %v2028
      %9019 = vmatprep.subr.bf16.mxu0 0
      %9020 = vmatpush1.bf16.msra.mxu0 %v2027
      %9021 = vmatprep.subr.bf16.mxu0 0
      %9022 = vmatpush1.bf16.msra.mxu0 %v2026
      %9023 = vmatprep.subr.bf16.mxu0 0
      %9024 = vmatpush1.bf16.msra.mxu0 %v2025
      %9025 = vmatprep.subr.bf16.mxu0 0
      %9026 = vmatpush1.bf16.msra.mxu0 %v2024
      %9027 = vmatprep.subr.bf16.mxu0 0
      %9028 = vmatpush1.bf16.msra.mxu0 %v2023
      %9029 = vmatprep.subr.bf16.mxu0 0
      %9030 = vmatpush2.bf16.msra.mxu0 %v2038
      %9031 = vmatprep.subr.bf16.mxu0 0
      %9032 = vmatpush2.bf16.msra.mxu0 %v2037
      %9033 = vmatprep.subr.bf16.mxu0 0
      %9034 = vmatpush2.bf16.msra.mxu0 %v2036
      %9035 = vmatprep.subr.bf16.mxu0 0
      %9036 = vmatpush2.bf16.msra.mxu0 %v2035
      %9037 = vmatprep.subr.bf16.mxu0 0
      %9038 = vmatpush2.bf16.msra.mxu0 %v2034
      %9039 = vmatprep.subr.bf16.mxu0 0
      %9040 = vmatpush2.bf16.msra.mxu0 %v2033
      %9041 = vmatprep.subr.bf16.mxu0 0
      %9042 = vmatpush2.bf16.msra.mxu0 %v2032
      %9043 = vmatprep.subr.bf16.mxu0 0
      %9044 = vmatpush2.bf16.msra.mxu0 %v2031
      %9045 = vmatprep.mubr.bf16.mxu0 %v5167
      %9046 = vmatmul.mubr.bf16.gmra.mxu0 %v5166
      %v9047 = vpop.f32.mrf.mxu0
      %v9048 = vadd.f32 %v8951, %v9047
      %v9049 = vpop.f32.mrf.mxu0
      %v9050 = vpop.f32.mrf.mxu0
      %v9051 = vadd.f32 %v8954, %v9050
      %v9052 = vpop.f32.mrf.mxu0
      %9053 = vmatprep.mubr.bf16.mxu0 %v5252
      %9054 = vmatmul.mubr.bf16.gmra.mxu0 %v5251
      %v9055 = vpop.f32.mrf.mxu0
      %v9056 = vadd.f32 %v8959, %v9055
      %v9057 = vpop.f32.mrf.mxu0
      %v9058 = vpop.f32.mrf.mxu0
      %v9059 = vadd.f32 %v8962, %v9058
      %v9060 = vpop.f32.mrf.mxu0
      %9061 = vmatprep.mubr.bf16.mxu0 %v5337
      %9062 = vmatmul.mubr.bf16.gmra.mxu0 %v5336
      %v9063 = vpop.f32.mrf.mxu0
      %v9064 = vadd.f32 %v8967, %v9063
      %v9065 = vpop.f32.mrf.mxu0
      %v9066 = vpop.f32.mrf.mxu0
      %v9067 = vadd.f32 %v8970, %v9066
      %v9068 = vpop.f32.mrf.mxu0
      %9069 = vmatprep.mubr.bf16.mxu0 %v5422
      %9070 = vmatmul.mubr.bf16.gmra.mxu0 %v5421
      %v9071 = vpop.f32.mrf.mxu0
      %v9072 = vadd.f32 %v8975, %v9071
      %v9073 = vpop.f32.mrf.mxu0
      %v9074 = vpop.f32.mrf.mxu0
      %v9075 = vadd.f32 %v8978, %v9074
      %v9076 = vpop.f32.mrf.mxu0
      %9077 = vmatprep.mubr.bf16.mxu0 %v5507
      %9078 = vmatmul.mubr.bf16.gmra.mxu0 %v5506
      %v9079 = vpop.f32.mrf.mxu0
      %v9080 = vadd.f32 %v8983, %v9079
      %v9081 = vpop.f32.mrf.mxu0
      %v9082 = vpop.f32.mrf.mxu0
      %v9083 = vadd.f32 %v8986, %v9082
      %v9084 = vpop.f32.mrf.mxu0
      %9085 = vmatprep.mubr.bf16.mxu0 %v5592
      %9086 = vmatmul.mubr.bf16.gmra.mxu0 %v5591
      %v9087 = vpop.f32.mrf.mxu0
      %v9088 = vadd.f32 %v8991, %v9087
      %v9089 = vpop.f32.mrf.mxu0
      %v9090 = vpop.f32.mrf.mxu0
      %v9091 = vadd.f32 %v8994, %v9090
      %v9092 = vpop.f32.mrf.mxu0
      %9093 = vmatprep.mubr.bf16.mxu0 %v5677
      %9094 = vmatmul.mubr.bf16.gmra.mxu0 %v5676
      %v9095 = vpop.f32.mrf.mxu0
      %v9096 = vadd.f32 %v8999, %v9095
      %v9097 = vpop.f32.mrf.mxu0
      %v9098 = vpop.f32.mrf.mxu0
      %v9099 = vadd.f32 %v9002, %v9098
      %v9100 = vpop.f32.mrf.mxu0
      %9101 = vmatprep.mubr.bf16.mxu0 %v5762
      %9102 = vmatmul.mubr.bf16.gmra.mxu0 %v5761
      %v9103 = vpop.f32.mrf.mxu0
      %v9104 = vadd.f32 %v9007, %v9103
      %v9105 = vpop.f32.mrf.mxu0
      %v9106 = vpop.f32.mrf.mxu0
      %v9107 = vadd.f32 %v9010, %v9106
      %v9108 = vpop.f32.mrf.mxu0
      %9109 = vdwg.mxu0
      %9110 = vmatprep.subr.bf16.mxu0 0
      %9111 = vmatpush1.bf16.msra.mxu0 %v2046
      %9112 = vmatprep.subr.bf16.mxu0 0
      %9113 = vmatpush1.bf16.msra.mxu0 %v2045
      %9114 = vmatprep.subr.bf16.mxu0 0
      %9115 = vmatpush1.bf16.msra.mxu0 %v2044
      %9116 = vmatprep.subr.bf16.mxu0 0
      %9117 = vmatpush1.bf16.msra.mxu0 %v2043
      %9118 = vmatprep.subr.bf16.mxu0 0
      %9119 = vmatpush1.bf16.msra.mxu0 %v2042
      %9120 = vmatprep.subr.bf16.mxu0 0
      %9121 = vmatpush1.bf16.msra.mxu0 %v2041
      %9122 = vmatprep.subr.bf16.mxu0 0
      %9123 = vmatpush1.bf16.msra.mxu0 %v2040
      %9124 = vmatprep.subr.bf16.mxu0 0
      %9125 = vmatpush1.bf16.msra.mxu0 %v2039
      %9126 = vmatprep.subr.bf16.mxu0 0
      %9127 = vmatpush2.bf16.msra.mxu0 %v2054
      %9128 = vmatprep.subr.bf16.mxu0 0
      %9129 = vmatpush2.bf16.msra.mxu0 %v2053
      %9130 = vmatprep.subr.bf16.mxu0 0
      %9131 = vmatpush2.bf16.msra.mxu0 %v2052
      %9132 = vmatprep.subr.bf16.mxu0 0
      %9133 = vmatpush2.bf16.msra.mxu0 %v2051
      %9134 = vmatprep.subr.bf16.mxu0 0
      %9135 = vmatpush2.bf16.msra.mxu0 %v2050
      %9136 = vmatprep.subr.bf16.mxu0 0
      %9137 = vmatpush2.bf16.msra.mxu0 %v2049
      %9138 = vmatprep.subr.bf16.mxu0 0
      %9139 = vmatpush2.bf16.msra.mxu0 %v2048
      %9140 = vmatprep.subr.bf16.mxu0 0
      %9141 = vmatpush2.bf16.msra.mxu0 %v2047
      %9142 = vmatprep.mubr.bf16.mxu0 %v5169
      %9143 = vmatmul.mubr.bf16.gmra.mxu0 %v5168
      %v9144 = vpop.f32.mrf.mxu0
      %v9145 = vadd.f32 %v9048, %v9144
      %v9146 = vpop.f32.mrf.mxu0
      %v9147 = vpop.f32.mrf.mxu0
      %v9148 = vadd.f32 %v9051, %v9147
      %v9149 = vpop.f32.mrf.mxu0
      %9150 = vmatprep.mubr.bf16.mxu0 %v5254
      %9151 = vmatmul.mubr.bf16.gmra.mxu0 %v5253
      %v9152 = vpop.f32.mrf.mxu0
      %v9153 = vadd.f32 %v9056, %v9152
      %v9154 = vpop.f32.mrf.mxu0
      %v9155 = vpop.f32.mrf.mxu0
      %v9156 = vadd.f32 %v9059, %v9155
      %v9157 = vpop.f32.mrf.mxu0
      %9158 = vmatprep.mubr.bf16.mxu0 %v5339
      %9159 = vmatmul.mubr.bf16.gmra.mxu0 %v5338
      %v9160 = vpop.f32.mrf.mxu0
      %v9161 = vadd.f32 %v9064, %v9160
      %v9162 = vpop.f32.mrf.mxu0
      %v9163 = vpop.f32.mrf.mxu0
      %v9164 = vadd.f32 %v9067, %v9163
      %v9165 = vpop.f32.mrf.mxu0
      %9166 = vmatprep.mubr.bf16.mxu0 %v5424
      %9167 = vmatmul.mubr.bf16.gmra.mxu0 %v5423
      %v9168 = vpop.f32.mrf.mxu0
      %v9169 = vadd.f32 %v9072, %v9168
      %v9170 = vpop.f32.mrf.mxu0
      %v9171 = vpop.f32.mrf.mxu0
      %v9172 = vadd.f32 %v9075, %v9171
      %v9173 = vpop.f32.mrf.mxu0
      %9174 = vmatprep.mubr.bf16.mxu0 %v5509
      %9175 = vmatmul.mubr.bf16.gmra.mxu0 %v5508
      %v9176 = vpop.f32.mrf.mxu0
      %v9177 = vadd.f32 %v9080, %v9176
      %v9178 = vpop.f32.mrf.mxu0
      %v9179 = vpop.f32.mrf.mxu0
      %v9180 = vadd.f32 %v9083, %v9179
      %v9181 = vpop.f32.mrf.mxu0
      %9182 = vmatprep.mubr.bf16.mxu0 %v5594
      %9183 = vmatmul.mubr.bf16.gmra.mxu0 %v5593
      %v9184 = vpop.f32.mrf.mxu0
      %v9185 = vadd.f32 %v9088, %v9184
      %v9186 = vpop.f32.mrf.mxu0
      %v9187 = vpop.f32.mrf.mxu0
      %v9188 = vadd.f32 %v9091, %v9187
      %v9189 = vpop.f32.mrf.mxu0
      %9190 = vmatprep.mubr.bf16.mxu0 %v5679
      %9191 = vmatmul.mubr.bf16.gmra.mxu0 %v5678
      %v9192 = vpop.f32.mrf.mxu0
      %v9193 = vadd.f32 %v9096, %v9192
      %v9194 = vpop.f32.mrf.mxu0
      %v9195 = vpop.f32.mrf.mxu0
      %v9196 = vadd.f32 %v9099, %v9195
      %v9197 = vpop.f32.mrf.mxu0
      %9198 = vmatprep.mubr.bf16.mxu0 %v5764
      %9199 = vmatmul.mubr.bf16.gmra.mxu0 %v5763
      %v9200 = vpop.f32.mrf.mxu0
      %v9201 = vadd.f32 %v9104, %v9200
      %v9202 = vpop.f32.mrf.mxu0
      %v9203 = vpop.f32.mrf.mxu0
      %v9204 = vadd.f32 %v9107, %v9203
      %v9205 = vpop.f32.mrf.mxu0
      %9206 = vdwg.mxu0
      %9207 = vmatprep.subr.bf16.mxu0 0
      %9208 = vmatpush1.bf16.msra.mxu0 %v2062
      %9209 = vmatprep.subr.bf16.mxu0 0
      %9210 = vmatpush1.bf16.msra.mxu0 %v2061
      %9211 = vmatprep.subr.bf16.mxu0 0
      %9212 = vmatpush1.bf16.msra.mxu0 %v2060
      %9213 = vmatprep.subr.bf16.mxu0 0
      %9214 = vmatpush1.bf16.msra.mxu0 %v2059
      %9215 = vmatprep.subr.bf16.mxu0 0
      %9216 = vmatpush1.bf16.msra.mxu0 %v2058
      %9217 = vmatprep.subr.bf16.mxu0 0
      %9218 = vmatpush1.bf16.msra.mxu0 %v2057
      %9219 = vmatprep.subr.bf16.mxu0 0
      %9220 = vmatpush1.bf16.msra.mxu0 %v2056
      %9221 = vmatprep.subr.bf16.mxu0 0
      %9222 = vmatpush1.bf16.msra.mxu0 %v2055
      %9223 = vmatprep.subr.bf16.mxu0 0
      %9224 = vmatpush2.bf16.msra.mxu0 %v2070
      %9225 = vmatprep.subr.bf16.mxu0 0
      %9226 = vmatpush2.bf16.msra.mxu0 %v2069
      %9227 = vmatprep.subr.bf16.mxu0 0
      %9228 = vmatpush2.bf16.msra.mxu0 %v2068
      %9229 = vmatprep.subr.bf16.mxu0 0
      %9230 = vmatpush2.bf16.msra.mxu0 %v2067
      %9231 = vmatprep.subr.bf16.mxu0 0
      %9232 = vmatpush2.bf16.msra.mxu0 %v2066
      %9233 = vmatprep.subr.bf16.mxu0 0
      %9234 = vmatpush2.bf16.msra.mxu0 %v2065
      %9235 = vmatprep.subr.bf16.mxu0 0
      %9236 = vmatpush2.bf16.msra.mxu0 %v2064
      %9237 = vmatprep.subr.bf16.mxu0 0
      %9238 = vmatpush2.bf16.msra.mxu0 %v2063
      %9239 = vmatprep.mubr.bf16.mxu0 %v5171
      %9240 = vmatmul.mubr.bf16.gmra.mxu0 %v5170
      %v9241 = vpop.f32.mrf.mxu0
      %v9242 = vadd.f32 %v9145, %v9241
      %v9243 = vpop.f32.mrf.mxu0
      %v9244 = vpop.f32.mrf.mxu0
      %v9245 = vadd.f32 %v9148, %v9244
      %v9246 = vpop.f32.mrf.mxu0
      %9247 = vmatprep.mubr.bf16.mxu0 %v5256
      %9248 = vmatmul.mubr.bf16.gmra.mxu0 %v5255
      %v9249 = vpop.f32.mrf.mxu0
      %v9250 = vadd.f32 %v9153, %v9249
      %v9251 = vpop.f32.mrf.mxu0
      %v9252 = vpop.f32.mrf.mxu0
      %v9253 = vadd.f32 %v9156, %v9252
      %v9254 = vpop.f32.mrf.mxu0
      %9255 = vmatprep.mubr.bf16.mxu0 %v5341
      %9256 = vmatmul.mubr.bf16.gmra.mxu0 %v5340
      %v9257 = vpop.f32.mrf.mxu0
      %v9258 = vadd.f32 %v9161, %v9257
      %v9259 = vpop.f32.mrf.mxu0
      %v9260 = vpop.f32.mrf.mxu0
      %v9261 = vadd.f32 %v9164, %v9260
      %v9262 = vpop.f32.mrf.mxu0
      %9263 = vmatprep.mubr.bf16.mxu0 %v5426
      %9264 = vmatmul.mubr.bf16.gmra.mxu0 %v5425
      %v9265 = vpop.f32.mrf.mxu0
      %v9266 = vadd.f32 %v9169, %v9265
      %v9267 = vpop.f32.mrf.mxu0
      %v9268 = vpop.f32.mrf.mxu0
      %v9269 = vadd.f32 %v9172, %v9268
      %v9270 = vpop.f32.mrf.mxu0
      %9271 = vmatprep.mubr.bf16.mxu0 %v5511
      %9272 = vmatmul.mubr.bf16.gmra.mxu0 %v5510
      %v9273 = vpop.f32.mrf.mxu0
      %v9274 = vadd.f32 %v9177, %v9273
      %v9275 = vpop.f32.mrf.mxu0
      %v9276 = vpop.f32.mrf.mxu0
      %v9277 = vadd.f32 %v9180, %v9276
      %v9278 = vpop.f32.mrf.mxu0
      %9279 = vmatprep.mubr.bf16.mxu0 %v5596
      %9280 = vmatmul.mubr.bf16.gmra.mxu0 %v5595
      %v9281 = vpop.f32.mrf.mxu0
      %v9282 = vadd.f32 %v9185, %v9281
      %v9283 = vpop.f32.mrf.mxu0
      %v9284 = vpop.f32.mrf.mxu0
      %v9285 = vadd.f32 %v9188, %v9284
      %v9286 = vpop.f32.mrf.mxu0
      %9287 = vmatprep.mubr.bf16.mxu0 %v5681
      %9288 = vmatmul.mubr.bf16.gmra.mxu0 %v5680
      %v9289 = vpop.f32.mrf.mxu0
      %v9290 = vadd.f32 %v9193, %v9289
      %v9291 = vpop.f32.mrf.mxu0
      %v9292 = vpop.f32.mrf.mxu0
      %v9293 = vadd.f32 %v9196, %v9292
      %v9294 = vpop.f32.mrf.mxu0
      %9295 = vmatprep.mubr.bf16.mxu0 %v5766
      %9296 = vmatmul.mubr.bf16.gmra.mxu0 %v5765
      %v9297 = vpop.f32.mrf.mxu0
      %v9298 = vadd.f32 %v9201, %v9297
      %v9299 = vpop.f32.mrf.mxu0
      %v9300 = vpop.f32.mrf.mxu0
      %v9301 = vadd.f32 %v9204, %v9300
      %v9302 = vpop.f32.mrf.mxu0
      %9303 = vdwg.mxu0
      %9304 = vmatprep.subr.bf16.mxu0 0
      %9305 = vmatpush1.bf16.msra.mxu0 %v2078
      %9306 = vmatprep.subr.bf16.mxu0 0
      %9307 = vmatpush1.bf16.msra.mxu0 %v2077
      %9308 = vmatprep.subr.bf16.mxu0 0
      %9309 = vmatpush1.bf16.msra.mxu0 %v2076
      %9310 = vmatprep.subr.bf16.mxu0 0
      %9311 = vmatpush1.bf16.msra.mxu0 %v2075
      %9312 = vmatprep.subr.bf16.mxu0 0
      %9313 = vmatpush1.bf16.msra.mxu0 %v2074
      %9314 = vmatprep.subr.bf16.mxu0 0
      %9315 = vmatpush1.bf16.msra.mxu0 %v2073
      %9316 = vmatprep.subr.bf16.mxu0 0
      %9317 = vmatpush1.bf16.msra.mxu0 %v2072
      %9318 = vmatprep.subr.bf16.mxu0 0
      %9319 = vmatpush1.bf16.msra.mxu0 %v2071
      %9320 = vmatprep.subr.bf16.mxu0 0
      %9321 = vmatpush2.bf16.msra.mxu0 %v2086
      %9322 = vmatprep.subr.bf16.mxu0 0
      %9323 = vmatpush2.bf16.msra.mxu0 %v2085
      %9324 = vmatprep.subr.bf16.mxu0 0
      %9325 = vmatpush2.bf16.msra.mxu0 %v2084
      %9326 = vmatprep.subr.bf16.mxu0 0
      %9327 = vmatpush2.bf16.msra.mxu0 %v2083
      %9328 = vmatprep.subr.bf16.mxu0 0
      %9329 = vmatpush2.bf16.msra.mxu0 %v2082
      %9330 = vmatprep.subr.bf16.mxu0 0
      %9331 = vmatpush2.bf16.msra.mxu0 %v2081
      %9332 = vmatprep.subr.bf16.mxu0 0
      %9333 = vmatpush2.bf16.msra.mxu0 %v2080
      %9334 = vmatprep.subr.bf16.mxu0 0
      %9335 = vmatpush2.bf16.msra.mxu0 %v2079
      %9336 = vmatprep.mubr.bf16.mxu0 %v5173
      %9337 = vmatmul.mubr.bf16.gmra.mxu0 %v5172
      %v9338 = vpop.f32.mrf.mxu0
      %v9339 = vadd.f32 %v9242, %v9338
      %v9340 = vpop.f32.mrf.mxu0
      %v9341 = vpop.f32.mrf.mxu0
      %v9342 = vadd.f32 %v9245, %v9341
      %v9343 = vpop.f32.mrf.mxu0
      %9344 = vmatprep.mubr.bf16.mxu0 %v5258
      %9345 = vmatmul.mubr.bf16.gmra.mxu0 %v5257
      %v9346 = vpop.f32.mrf.mxu0
      %v9347 = vadd.f32 %v9250, %v9346
      %v9348 = vpop.f32.mrf.mxu0
      %v9349 = vpop.f32.mrf.mxu0
      %v9350 = vadd.f32 %v9253, %v9349
      %v9351 = vpop.f32.mrf.mxu0
      %9352 = vmatprep.mubr.bf16.mxu0 %v5343
      %9353 = vmatmul.mubr.bf16.gmra.mxu0 %v5342
      %v9354 = vpop.f32.mrf.mxu0
      %v9355 = vadd.f32 %v9258, %v9354
      %v9356 = vpop.f32.mrf.mxu0
      %v9357 = vpop.f32.mrf.mxu0
      %v9358 = vadd.f32 %v9261, %v9357
      %v9359 = vpop.f32.mrf.mxu0
      %9360 = vmatprep.mubr.bf16.mxu0 %v5428
      %9361 = vmatmul.mubr.bf16.gmra.mxu0 %v5427
      %v9362 = vpop.f32.mrf.mxu0
      %v9363 = vadd.f32 %v9266, %v9362
      %v9364 = vpop.f32.mrf.mxu0
      %v9365 = vpop.f32.mrf.mxu0
      %v9366 = vadd.f32 %v9269, %v9365
      %v9367 = vpop.f32.mrf.mxu0
      %9368 = vmatprep.mubr.bf16.mxu0 %v5513
      %9369 = vmatmul.mubr.bf16.gmra.mxu0 %v5512
      %v9370 = vpop.f32.mrf.mxu0
      %v9371 = vadd.f32 %v9274, %v9370
      %v9372 = vpop.f32.mrf.mxu0
      %v9373 = vpop.f32.mrf.mxu0
      %v9374 = vadd.f32 %v9277, %v9373
      %v9375 = vpop.f32.mrf.mxu0
      %9376 = vmatprep.mubr.bf16.mxu0 %v5598
      %9377 = vmatmul.mubr.bf16.gmra.mxu0 %v5597
      %v9378 = vpop.f32.mrf.mxu0
      %v9379 = vadd.f32 %v9282, %v9378
      %v9380 = vpop.f32.mrf.mxu0
      %v9381 = vpop.f32.mrf.mxu0
      %v9382 = vadd.f32 %v9285, %v9381
      %v9383 = vpop.f32.mrf.mxu0
      %9384 = vmatprep.mubr.bf16.mxu0 %v5683
      %9385 = vmatmul.mubr.bf16.gmra.mxu0 %v5682
      %v9386 = vpop.f32.mrf.mxu0
      %v9387 = vadd.f32 %v9290, %v9386
      %v9388 = vpop.f32.mrf.mxu0
      %v9389 = vpop.f32.mrf.mxu0
      %v9390 = vadd.f32 %v9293, %v9389
      %v9391 = vpop.f32.mrf.mxu0
      %9392 = vmatprep.mubr.bf16.mxu0 %v5768
      %9393 = vmatmul.mubr.bf16.gmra.mxu0 %v5767
      %v9394 = vpop.f32.mrf.mxu0
      %v9395 = vadd.f32 %v9298, %v9394
      %v9396 = vpop.f32.mrf.mxu0
      %v9397 = vpop.f32.mrf.mxu0
      %v9398 = vadd.f32 %v9301, %v9397
      %v9399 = vpop.f32.mrf.mxu0
      %9400 = vdwg.mxu0
      %9401 = vmatprep.subr.bf16.mxu0 0
      %9402 = vmatpush1.bf16.msra.mxu0 %v2094
      %9403 = vmatprep.subr.bf16.mxu0 0
      %9404 = vmatpush1.bf16.msra.mxu0 %v2093
      %9405 = vmatprep.subr.bf16.mxu0 0
      %9406 = vmatpush1.bf16.msra.mxu0 %v2092
      %9407 = vmatprep.subr.bf16.mxu0 0
      %9408 = vmatpush1.bf16.msra.mxu0 %v2091
      %9409 = vmatprep.subr.bf16.mxu0 0
      %9410 = vmatpush1.bf16.msra.mxu0 %v2090
      %9411 = vmatprep.subr.bf16.mxu0 0
      %9412 = vmatpush1.bf16.msra.mxu0 %v2089
      %9413 = vmatprep.subr.bf16.mxu0 0
      %9414 = vmatpush1.bf16.msra.mxu0 %v2088
      %9415 = vmatprep.subr.bf16.mxu0 0
      %9416 = vmatpush1.bf16.msra.mxu0 %v2087
      %9417 = vmatprep.subr.bf16.mxu0 0
      %9418 = vmatpush2.bf16.msra.mxu0 %v2102
      %9419 = vmatprep.subr.bf16.mxu0 0
      %9420 = vmatpush2.bf16.msra.mxu0 %v2101
      %9421 = vmatprep.subr.bf16.mxu0 0
      %9422 = vmatpush2.bf16.msra.mxu0 %v2100
      %9423 = vmatprep.subr.bf16.mxu0 0
      %9424 = vmatpush2.bf16.msra.mxu0 %v2099
      %9425 = vmatprep.subr.bf16.mxu0 0
      %9426 = vmatpush2.bf16.msra.mxu0 %v2098
      %9427 = vmatprep.subr.bf16.mxu0 0
      %9428 = vmatpush2.bf16.msra.mxu0 %v2097
      %9429 = vmatprep.subr.bf16.mxu0 0
      %9430 = vmatpush2.bf16.msra.mxu0 %v2096
      %9431 = vmatprep.subr.bf16.mxu0 0
      %9432 = vmatpush2.bf16.msra.mxu0 %v2095
      %9433 = vmatprep.mubr.bf16.mxu0 %v5175
      %9434 = vmatmul.mubr.bf16.gmra.mxu0 %v5174
      %v9435 = vpop.f32.mrf.mxu0
      %v9436 = vadd.f32 %v9339, %v9435
      %v9437 = vpop.f32.mrf.mxu0
      %v9438 = vpop.f32.mrf.mxu0
      %v9439 = vadd.f32 %v9342, %v9438
      %v9440 = vpop.f32.mrf.mxu0
      %9441 = vmatprep.mubr.bf16.mxu0 %v5260
      %9442 = vmatmul.mubr.bf16.gmra.mxu0 %v5259
      %v9443 = vpop.f32.mrf.mxu0
      %v9444 = vadd.f32 %v9347, %v9443
      %v9445 = vpop.f32.mrf.mxu0
      %v9446 = vpop.f32.mrf.mxu0
      %v9447 = vadd.f32 %v9350, %v9446
      %v9448 = vpop.f32.mrf.mxu0
      %9449 = vmatprep.mubr.bf16.mxu0 %v5345
      %9450 = vmatmul.mubr.bf16.gmra.mxu0 %v5344
      %v9451 = vpop.f32.mrf.mxu0
      %v9452 = vadd.f32 %v9355, %v9451
      %v9453 = vpop.f32.mrf.mxu0
      %v9454 = vpop.f32.mrf.mxu0
      %v9455 = vadd.f32 %v9358, %v9454
      %v9456 = vpop.f32.mrf.mxu0
      %9457 = vmatprep.mubr.bf16.mxu0 %v5430
      %9458 = vmatmul.mubr.bf16.gmra.mxu0 %v5429
      %v9459 = vpop.f32.mrf.mxu0
      %v9460 = vadd.f32 %v9363, %v9459
      %v9461 = vpop.f32.mrf.mxu0
      %v9462 = vpop.f32.mrf.mxu0
      %v9463 = vadd.f32 %v9366, %v9462
      %v9464 = vpop.f32.mrf.mxu0
      %9465 = vmatprep.mubr.bf16.mxu0 %v5515
      %9466 = vmatmul.mubr.bf16.gmra.mxu0 %v5514
      %v9467 = vpop.f32.mrf.mxu0
      %v9468 = vadd.f32 %v9371, %v9467
      %v9469 = vpop.f32.mrf.mxu0
      %v9470 = vpop.f32.mrf.mxu0
      %v9471 = vadd.f32 %v9374, %v9470
      %v9472 = vpop.f32.mrf.mxu0
      %9473 = vmatprep.mubr.bf16.mxu0 %v5600
      %9474 = vmatmul.mubr.bf16.gmra.mxu0 %v5599
      %v9475 = vpop.f32.mrf.mxu0
      %v9476 = vadd.f32 %v9379, %v9475
      %v9477 = vpop.f32.mrf.mxu0
      %v9478 = vpop.f32.mrf.mxu0
      %v9479 = vadd.f32 %v9382, %v9478
      %v9480 = vpop.f32.mrf.mxu0
      %9481 = vmatprep.mubr.bf16.mxu0 %v5685
      %9482 = vmatmul.mubr.bf16.gmra.mxu0 %v5684
      %v9483 = vpop.f32.mrf.mxu0
      %v9484 = vadd.f32 %v9387, %v9483
      %v9485 = vpop.f32.mrf.mxu0
      %v9486 = vpop.f32.mrf.mxu0
      %v9487 = vadd.f32 %v9390, %v9486
      %v9488 = vpop.f32.mrf.mxu0
      %9489 = vmatprep.mubr.bf16.mxu0 %v5770
      %9490 = vmatmul.mubr.bf16.gmra.mxu0 %v5769
      %v9491 = vpop.f32.mrf.mxu0
      %v9492 = vadd.f32 %v9395, %v9491
      %v9493 = vpop.f32.mrf.mxu0
      %v9494 = vpop.f32.mrf.mxu0
      %v9495 = vadd.f32 %v9398, %v9494
      %v9496 = vpop.f32.mrf.mxu0
      %9497 = vdwg.mxu0
      %9498 = vmatprep.subr.bf16.mxu0 0
      %9499 = vmatpush1.bf16.msra.mxu0 %v2110
      %9500 = vmatprep.subr.bf16.mxu0 0
      %9501 = vmatpush1.bf16.msra.mxu0 %v2109
      %9502 = vmatprep.subr.bf16.mxu0 0
      %9503 = vmatpush1.bf16.msra.mxu0 %v2108
      %9504 = vmatprep.subr.bf16.mxu0 0
      %9505 = vmatpush1.bf16.msra.mxu0 %v2107
      %9506 = vmatprep.subr.bf16.mxu0 0
      %9507 = vmatpush1.bf16.msra.mxu0 %v2106
      %9508 = vmatprep.subr.bf16.mxu0 0
      %9509 = vmatpush1.bf16.msra.mxu0 %v2105
      %9510 = vmatprep.subr.bf16.mxu0 0
      %9511 = vmatpush1.bf16.msra.mxu0 %v2104
      %9512 = vmatprep.subr.bf16.mxu0 0
      %9513 = vmatpush1.bf16.msra.mxu0 %v2103
      %9514 = vmatprep.subr.bf16.mxu0 0
      %9515 = vmatpush2.bf16.msra.mxu0 %v2118
      %9516 = vmatprep.subr.bf16.mxu0 0
      %9517 = vmatpush2.bf16.msra.mxu0 %v2117
      %9518 = vmatprep.subr.bf16.mxu0 0
      %9519 = vmatpush2.bf16.msra.mxu0 %v2116
      %9520 = vmatprep.subr.bf16.mxu0 0
      %9521 = vmatpush2.bf16.msra.mxu0 %v2115
      %9522 = vmatprep.subr.bf16.mxu0 0
      %9523 = vmatpush2.bf16.msra.mxu0 %v2114
      %9524 = vmatprep.subr.bf16.mxu0 0
      %9525 = vmatpush2.bf16.msra.mxu0 %v2113
      %9526 = vmatprep.subr.bf16.mxu0 0
      %9527 = vmatpush2.bf16.msra.mxu0 %v2112
      %9528 = vmatprep.subr.bf16.mxu0 0
      %9529 = vmatpush2.bf16.msra.mxu0 %v2111
      %9530 = vmatprep.mubr.bf16.mxu0 %v5177
      %9531 = vmatmul.mubr.bf16.gmra.mxu0 %v5176
      %v9532 = vpop.f32.mrf.mxu0
      %v9533 = vadd.f32 %v9436, %v9532
      %v9534 = vpop.f32.mrf.mxu0
      %v9535 = vpop.f32.mrf.mxu0
      %v9536 = vadd.f32 %v9439, %v9535
      %v9537 = vpop.f32.mrf.mxu0
      %9538 = vmatprep.mubr.bf16.mxu0 %v5262
      %9539 = vmatmul.mubr.bf16.gmra.mxu0 %v5261
      %v9540 = vpop.f32.mrf.mxu0
      %v9541 = vadd.f32 %v9444, %v9540
      %v9542 = vpop.f32.mrf.mxu0
      %v9543 = vpop.f32.mrf.mxu0
      %v9544 = vadd.f32 %v9447, %v9543
      %v9545 = vpop.f32.mrf.mxu0
      %9546 = vmatprep.mubr.bf16.mxu0 %v5347
      %9547 = vmatmul.mubr.bf16.gmra.mxu0 %v5346
      %v9548 = vpop.f32.mrf.mxu0
      %v9549 = vadd.f32 %v9452, %v9548
      %v9550 = vpop.f32.mrf.mxu0
      %v9551 = vpop.f32.mrf.mxu0
      %v9552 = vadd.f32 %v9455, %v9551
      %v9553 = vpop.f32.mrf.mxu0
      %9554 = vmatprep.mubr.bf16.mxu0 %v5432
      %9555 = vmatmul.mubr.bf16.gmra.mxu0 %v5431
      %v9556 = vpop.f32.mrf.mxu0
      %v9557 = vadd.f32 %v9460, %v9556
      %v9558 = vpop.f32.mrf.mxu0
      %v9559 = vpop.f32.mrf.mxu0
      %v9560 = vadd.f32 %v9463, %v9559
      %v9561 = vpop.f32.mrf.mxu0
      %9562 = vmatprep.mubr.bf16.mxu0 %v5517
      %9563 = vmatmul.mubr.bf16.gmra.mxu0 %v5516
      %v9564 = vpop.f32.mrf.mxu0
      %v9565 = vadd.f32 %v9468, %v9564
      %v9566 = vpop.f32.mrf.mxu0
      %v9567 = vpop.f32.mrf.mxu0
      %v9568 = vadd.f32 %v9471, %v9567
      %v9569 = vpop.f32.mrf.mxu0
      %9570 = vmatprep.mubr.bf16.mxu0 %v5602
      %9571 = vmatmul.mubr.bf16.gmra.mxu0 %v5601
      %v9572 = vpop.f32.mrf.mxu0
      %v9573 = vadd.f32 %v9476, %v9572
      %v9574 = vpop.f32.mrf.mxu0
      %v9575 = vpop.f32.mrf.mxu0
      %v9576 = vadd.f32 %v9479, %v9575
      %v9577 = vpop.f32.mrf.mxu0
      %9578 = vmatprep.mubr.bf16.mxu0 %v5687
      %9579 = vmatmul.mubr.bf16.gmra.mxu0 %v5686
      %v9580 = vpop.f32.mrf.mxu0
      %v9581 = vadd.f32 %v9484, %v9580
      %v9582 = vpop.f32.mrf.mxu0
      %v9583 = vpop.f32.mrf.mxu0
      %v9584 = vadd.f32 %v9487, %v9583
      %v9585 = vpop.f32.mrf.mxu0
      %9586 = vmatprep.mubr.bf16.mxu0 %v5772
      %9587 = vmatmul.mubr.bf16.gmra.mxu0 %v5771
      %v9588 = vpop.f32.mrf.mxu0
      %v9589 = vadd.f32 %v9492, %v9588
      %v9590 = vpop.f32.mrf.mxu0
      %v9591 = vpop.f32.mrf.mxu0
      %v9592 = vadd.f32 %v9495, %v9591
      %v9593 = vpop.f32.mrf.mxu0
      %9594 = vdwg.mxu0
      %9595 = vmatprep.subr.bf16.mxu0 0
      %9596 = vmatpush1.bf16.msra.mxu0 %v2126
      %9597 = vmatprep.subr.bf16.mxu0 0
      %9598 = vmatpush1.bf16.msra.mxu0 %v2125
      %9599 = vmatprep.subr.bf16.mxu0 0
      %9600 = vmatpush1.bf16.msra.mxu0 %v2124
      %9601 = vmatprep.subr.bf16.mxu0 0
      %9602 = vmatpush1.bf16.msra.mxu0 %v2123
      %9603 = vmatprep.subr.bf16.mxu0 0
      %9604 = vmatpush1.bf16.msra.mxu0 %v2122
      %9605 = vmatprep.subr.bf16.mxu0 0
      %9606 = vmatpush1.bf16.msra.mxu0 %v2121
      %9607 = vmatprep.subr.bf16.mxu0 0
      %9608 = vmatpush1.bf16.msra.mxu0 %v2120
      %9609 = vmatprep.subr.bf16.mxu0 0
      %9610 = vmatpush1.bf16.msra.mxu0 %v2119
      %9611 = vmatprep.subr.bf16.mxu0 0
      %9612 = vmatpush2.bf16.msra.mxu0 %v2134
      %9613 = vmatprep.subr.bf16.mxu0 0
      %9614 = vmatpush2.bf16.msra.mxu0 %v2133
      %9615 = vmatprep.subr.bf16.mxu0 0
      %9616 = vmatpush2.bf16.msra.mxu0 %v2132
      %9617 = vmatprep.subr.bf16.mxu0 0
      %9618 = vmatpush2.bf16.msra.mxu0 %v2131
      %9619 = vmatprep.subr.bf16.mxu0 0
      %9620 = vmatpush2.bf16.msra.mxu0 %v2130
      %9621 = vmatprep.subr.bf16.mxu0 0
      %9622 = vmatpush2.bf16.msra.mxu0 %v2129
      %9623 = vmatprep.subr.bf16.mxu0 0
      %9624 = vmatpush2.bf16.msra.mxu0 %v2128
      %9625 = vmatprep.subr.bf16.mxu0 0
      %9626 = vmatpush2.bf16.msra.mxu0 %v2127
      %9627 = vmatprep.mubr.bf16.mxu0 %v5179
      %9628 = vmatmul.mubr.bf16.gmra.mxu0 %v5178
      %v9629 = vpop.f32.mrf.mxu0
      %v9630 = vadd.f32 %v9533, %v9629
      %v9631 = vpop.f32.mrf.mxu0
      %v9632 = vpop.f32.mrf.mxu0
      %v9633 = vadd.f32 %v9536, %v9632
      %v9634 = vpop.f32.mrf.mxu0
      %9635 = vmatprep.mubr.bf16.mxu0 %v5264
      %9636 = vmatmul.mubr.bf16.gmra.mxu0 %v5263
      %v9637 = vpop.f32.mrf.mxu0
      %v9638 = vadd.f32 %v9541, %v9637
      %v9639 = vpop.f32.mrf.mxu0
      %v9640 = vpop.f32.mrf.mxu0
      %v9641 = vadd.f32 %v9544, %v9640
      %v9642 = vpop.f32.mrf.mxu0
      %9643 = vmatprep.mubr.bf16.mxu0 %v5349
      %9644 = vmatmul.mubr.bf16.gmra.mxu0 %v5348
      %v9645 = vpop.f32.mrf.mxu0
      %v9646 = vadd.f32 %v9549, %v9645
      %v9647 = vpop.f32.mrf.mxu0
      %v9648 = vpop.f32.mrf.mxu0
      %v9649 = vadd.f32 %v9552, %v9648
      %v9650 = vpop.f32.mrf.mxu0
      %9651 = vmatprep.mubr.bf16.mxu0 %v5434
      %9652 = vmatmul.mubr.bf16.gmra.mxu0 %v5433
      %v9653 = vpop.f32.mrf.mxu0
      %v9654 = vadd.f32 %v9557, %v9653
      %v9655 = vpop.f32.mrf.mxu0
      %v9656 = vpop.f32.mrf.mxu0
      %v9657 = vadd.f32 %v9560, %v9656
      %v9658 = vpop.f32.mrf.mxu0
      %9659 = vmatprep.mubr.bf16.mxu0 %v5519
      %9660 = vmatmul.mubr.bf16.gmra.mxu0 %v5518
      %v9661 = vpop.f32.mrf.mxu0
      %v9662 = vadd.f32 %v9565, %v9661
      %v9663 = vpop.f32.mrf.mxu0
      %v9664 = vpop.f32.mrf.mxu0
      %v9665 = vadd.f32 %v9568, %v9664
      %v9666 = vpop.f32.mrf.mxu0
      %9667 = vmatprep.mubr.bf16.mxu0 %v5604
      %9668 = vmatmul.mubr.bf16.gmra.mxu0 %v5603
      %v9669 = vpop.f32.mrf.mxu0
      %v9670 = vadd.f32 %v9573, %v9669
      %v9671 = vpop.f32.mrf.mxu0
      %v9672 = vpop.f32.mrf.mxu0
      %v9673 = vadd.f32 %v9576, %v9672
      %v9674 = vpop.f32.mrf.mxu0
      %9675 = vmatprep.mubr.bf16.mxu0 %v5689
      %9676 = vmatmul.mubr.bf16.gmra.mxu0 %v5688
      %v9677 = vpop.f32.mrf.mxu0
      %v9678 = vadd.f32 %v9581, %v9677
      %v9679 = vpop.f32.mrf.mxu0
      %v9680 = vpop.f32.mrf.mxu0
      %v9681 = vadd.f32 %v9584, %v9680
      %v9682 = vpop.f32.mrf.mxu0
      %9683 = vmatprep.mubr.bf16.mxu0 %v5774
      %9684 = vmatmul.mubr.bf16.gmra.mxu0 %v5773
      %v9685 = vpop.f32.mrf.mxu0
      %v9686 = vadd.f32 %v9589, %v9685
      %v9687 = vpop.f32.mrf.mxu0
      %v9688 = vpop.f32.mrf.mxu0
      %v9689 = vadd.f32 %v9592, %v9688
      %v9690 = vpop.f32.mrf.mxu0
      %9691 = vdwg.mxu0
      %9692 = vmatprep.subr.bf16.mxu0 0
      %9693 = vmatpush1.bf16.msra.mxu0 %v2142
      %9694 = vmatprep.subr.bf16.mxu0 0
      %9695 = vmatpush1.bf16.msra.mxu0 %v2141
      %9696 = vmatprep.subr.bf16.mxu0 0
      %9697 = vmatpush1.bf16.msra.mxu0 %v2140
      %9698 = vmatprep.subr.bf16.mxu0 0
      %9699 = vmatpush1.bf16.msra.mxu0 %v2139
      %9700 = vmatprep.subr.bf16.mxu0 0
      %9701 = vmatpush1.bf16.msra.mxu0 %v2138
      %9702 = vmatprep.subr.bf16.mxu0 0
      %9703 = vmatpush1.bf16.msra.mxu0 %v2137
      %9704 = vmatprep.subr.bf16.mxu0 0
      %9705 = vmatpush1.bf16.msra.mxu0 %v2136
      %9706 = vmatprep.subr.bf16.mxu0 0
      %9707 = vmatpush1.bf16.msra.mxu0 %v2135
      %9708 = vmatprep.subr.bf16.mxu0 0
      %9709 = vmatpush2.bf16.msra.mxu0 %v2150
      %9710 = vmatprep.subr.bf16.mxu0 0
      %9711 = vmatpush2.bf16.msra.mxu0 %v2149
      %9712 = vmatprep.subr.bf16.mxu0 0
      %9713 = vmatpush2.bf16.msra.mxu0 %v2148
      %9714 = vmatprep.subr.bf16.mxu0 0
      %9715 = vmatpush2.bf16.msra.mxu0 %v2147
      %9716 = vmatprep.subr.bf16.mxu0 0
      %9717 = vmatpush2.bf16.msra.mxu0 %v2146
      %9718 = vmatprep.subr.bf16.mxu0 0
      %9719 = vmatpush2.bf16.msra.mxu0 %v2145
      %9720 = vmatprep.subr.bf16.mxu0 0
      %9721 = vmatpush2.bf16.msra.mxu0 %v2144
      %9722 = vmatprep.subr.bf16.mxu0 0
      %9723 = vmatpush2.bf16.msra.mxu0 %v2143
      %9724 = vmatprep.mubr.bf16.mxu0 %v5181
      %9725 = vmatmul.mubr.bf16.gmra.mxu0 %v5180
      %v9726 = vpop.f32.mrf.mxu0
      %v9727 = vadd.f32 %v9630, %v9726
      %v9728 = vpop.f32.mrf.mxu0
      %v9729 = vpop.f32.mrf.mxu0
      %v9730 = vadd.f32 %v9633, %v9729
      %v9731 = vpop.f32.mrf.mxu0
      %9732 = vmatprep.mubr.bf16.mxu0 %v5266
      %9733 = vmatmul.mubr.bf16.gmra.mxu0 %v5265
      %v9734 = vpop.f32.mrf.mxu0
      %v9735 = vadd.f32 %v9638, %v9734
      %v9736 = vpop.f32.mrf.mxu0
      %v9737 = vpop.f32.mrf.mxu0
      %v9738 = vadd.f32 %v9641, %v9737
      %v9739 = vpop.f32.mrf.mxu0
      %9740 = vmatprep.mubr.bf16.mxu0 %v5351
      %9741 = vmatmul.mubr.bf16.gmra.mxu0 %v5350
      %v9742 = vpop.f32.mrf.mxu0
      %v9743 = vadd.f32 %v9646, %v9742
      %v9744 = vpop.f32.mrf.mxu0
      %v9745 = vpop.f32.mrf.mxu0
      %v9746 = vadd.f32 %v9649, %v9745
      %v9747 = vpop.f32.mrf.mxu0
      %9748 = vmatprep.mubr.bf16.mxu0 %v5436
      %9749 = vmatmul.mubr.bf16.gmra.mxu0 %v5435
      %v9750 = vpop.f32.mrf.mxu0
      %v9751 = vadd.f32 %v9654, %v9750
      %v9752 = vpop.f32.mrf.mxu0
      %v9753 = vpop.f32.mrf.mxu0
      %v9754 = vadd.f32 %v9657, %v9753
      %v9755 = vpop.f32.mrf.mxu0
      %9756 = vmatprep.mubr.bf16.mxu0 %v5521
      %9757 = vmatmul.mubr.bf16.gmra.mxu0 %v5520
      %v9758 = vpop.f32.mrf.mxu0
      %v9759 = vadd.f32 %v9662, %v9758
      %v9760 = vpop.f32.mrf.mxu0
      %v9761 = vpop.f32.mrf.mxu0
      %v9762 = vadd.f32 %v9665, %v9761
      %v9763 = vpop.f32.mrf.mxu0
      %9764 = vmatprep.mubr.bf16.mxu0 %v5606
      %9765 = vmatmul.mubr.bf16.gmra.mxu0 %v5605
      %v9766 = vpop.f32.mrf.mxu0
      %v9767 = vadd.f32 %v9670, %v9766
      %v9768 = vpop.f32.mrf.mxu0
      %v9769 = vpop.f32.mrf.mxu0
      %v9770 = vadd.f32 %v9673, %v9769
      %v9771 = vpop.f32.mrf.mxu0
      %9772 = vmatprep.mubr.bf16.mxu0 %v5691
      %9773 = vmatmul.mubr.bf16.gmra.mxu0 %v5690
      %v9774 = vpop.f32.mrf.mxu0
      %v9775 = vadd.f32 %v9678, %v9774
      %v9776 = vpop.f32.mrf.mxu0
      %v9777 = vpop.f32.mrf.mxu0
      %v9778 = vadd.f32 %v9681, %v9777
      %v9779 = vpop.f32.mrf.mxu0
      %9780 = vmatprep.mubr.bf16.mxu0 %v5776
      %9781 = vmatmul.mubr.bf16.gmra.mxu0 %v5775
      %v9782 = vpop.f32.mrf.mxu0
      %v9783 = vadd.f32 %v9686, %v9782
      %v9784 = vpop.f32.mrf.mxu0
      %v9785 = vpop.f32.mrf.mxu0
      %v9786 = vadd.f32 %v9689, %v9785
      %v9787 = vpop.f32.mrf.mxu0
      %9788 = vdwg.mxu0
      %9789 = vmatprep.subr.bf16.mxu0 0
      %9790 = vmatpush1.bf16.msra.mxu0 %v2158
      %9791 = vmatprep.subr.bf16.mxu0 0
      %9792 = vmatpush1.bf16.msra.mxu0 %v2157
      %9793 = vmatprep.subr.bf16.mxu0 0
      %9794 = vmatpush1.bf16.msra.mxu0 %v2156
      %9795 = vmatprep.subr.bf16.mxu0 0
      %9796 = vmatpush1.bf16.msra.mxu0 %v2155
      %9797 = vmatprep.subr.bf16.mxu0 0
      %9798 = vmatpush1.bf16.msra.mxu0 %v2154
      %9799 = vmatprep.subr.bf16.mxu0 0
      %9800 = vmatpush1.bf16.msra.mxu0 %v2153
      %9801 = vmatprep.subr.bf16.mxu0 0
      %9802 = vmatpush1.bf16.msra.mxu0 %v2152
      %9803 = vmatprep.subr.bf16.mxu0 0
      %9804 = vmatpush1.bf16.msra.mxu0 %v2151
      %9805 = vmatprep.subr.bf16.mxu0 0
      %9806 = vmatpush2.bf16.msra.mxu0 %v2166
      %9807 = vmatprep.subr.bf16.mxu0 0
      %9808 = vmatpush2.bf16.msra.mxu0 %v2165
      %9809 = vmatprep.subr.bf16.mxu0 0
      %9810 = vmatpush2.bf16.msra.mxu0 %v2164
      %9811 = vmatprep.subr.bf16.mxu0 0
      %9812 = vmatpush2.bf16.msra.mxu0 %v2163
      %9813 = vmatprep.subr.bf16.mxu0 0
      %9814 = vmatpush2.bf16.msra.mxu0 %v2162
      %9815 = vmatprep.subr.bf16.mxu0 0
      %9816 = vmatpush2.bf16.msra.mxu0 %v2161
      %9817 = vmatprep.subr.bf16.mxu0 0
      %9818 = vmatpush2.bf16.msra.mxu0 %v2160
      %9819 = vmatprep.subr.bf16.mxu0 0
      %9820 = vmatpush2.bf16.msra.mxu0 %v2159
      %9821 = vmatprep.mubr.bf16.mxu0 %v5183
      %9822 = vmatmul.mubr.bf16.gmra.mxu0 %v5182
      %v9823 = vpop.f32.mrf.mxu0
      %v9824 = vadd.f32 %v9727, %v9823
      %v9825 = vpop.f32.mrf.mxu0
      %v9826 = vpop.f32.mrf.mxu0
      %v9827 = vadd.f32 %v9730, %v9826
      %v9828 = vpop.f32.mrf.mxu0
      %9829 = vmatprep.mubr.bf16.mxu0 %v5268
      %9830 = vmatmul.mubr.bf16.gmra.mxu0 %v5267
      %v9831 = vpop.f32.mrf.mxu0
      %v9832 = vadd.f32 %v9735, %v9831
      %v9833 = vpop.f32.mrf.mxu0
      %v9834 = vpop.f32.mrf.mxu0
      %v9835 = vadd.f32 %v9738, %v9834
      %v9836 = vpop.f32.mrf.mxu0
      %9837 = vmatprep.mubr.bf16.mxu0 %v5353
      %9838 = vmatmul.mubr.bf16.gmra.mxu0 %v5352
      %v9839 = vpop.f32.mrf.mxu0
      %v9840 = vadd.f32 %v9743, %v9839
      %v9841 = vpop.f32.mrf.mxu0
      %v9842 = vpop.f32.mrf.mxu0
      %v9843 = vadd.f32 %v9746, %v9842
      %v9844 = vpop.f32.mrf.mxu0
      %9845 = vmatprep.mubr.bf16.mxu0 %v5438
      %9846 = vmatmul.mubr.bf16.gmra.mxu0 %v5437
      %v9847 = vpop.f32.mrf.mxu0
      %v9848 = vadd.f32 %v9751, %v9847
      %v9849 = vpop.f32.mrf.mxu0
      %v9850 = vpop.f32.mrf.mxu0
      %v9851 = vadd.f32 %v9754, %v9850
      %v9852 = vpop.f32.mrf.mxu0
      %9853 = vmatprep.mubr.bf16.mxu0 %v5523
      %9854 = vmatmul.mubr.bf16.gmra.mxu0 %v5522
      %v9855 = vpop.f32.mrf.mxu0
      %v9856 = vadd.f32 %v9759, %v9855
      %v9857 = vpop.f32.mrf.mxu0
      %v9858 = vpop.f32.mrf.mxu0
      %v9859 = vadd.f32 %v9762, %v9858
      %v9860 = vpop.f32.mrf.mxu0
      %9861 = vmatprep.mubr.bf16.mxu0 %v5608
      %9862 = vmatmul.mubr.bf16.gmra.mxu0 %v5607
      %v9863 = vpop.f32.mrf.mxu0
      %v9864 = vadd.f32 %v9767, %v9863
      %v9865 = vpop.f32.mrf.mxu0
      %v9866 = vpop.f32.mrf.mxu0
      %v9867 = vadd.f32 %v9770, %v9866
      %v9868 = vpop.f32.mrf.mxu0
      %9869 = vmatprep.mubr.bf16.mxu0 %v5693
      %9870 = vmatmul.mubr.bf16.gmra.mxu0 %v5692
      %v9871 = vpop.f32.mrf.mxu0
      %v9872 = vadd.f32 %v9775, %v9871
      %v9873 = vpop.f32.mrf.mxu0
      %v9874 = vpop.f32.mrf.mxu0
      %v9875 = vadd.f32 %v9778, %v9874
      %v9876 = vpop.f32.mrf.mxu0
      %9877 = vmatprep.mubr.bf16.mxu0 %v5778
      %9878 = vmatmul.mubr.bf16.gmra.mxu0 %v5777
      %v9879 = vpop.f32.mrf.mxu0
      %v9880 = vadd.f32 %v9783, %v9879
      %v9881 = vpop.f32.mrf.mxu0
      %v9882 = vpop.f32.mrf.mxu0
      %v9883 = vadd.f32 %v9786, %v9882
      %v9884 = vpop.f32.mrf.mxu0
      %9885 = vdwg.mxu0
      %9886 = vmatprep.subr.bf16.mxu0 0
      %9887 = vmatpush1.bf16.msra.mxu0 %v2174
      %9888 = vmatprep.subr.bf16.mxu0 0
      %9889 = vmatpush1.bf16.msra.mxu0 %v2173
      %9890 = vmatprep.subr.bf16.mxu0 0
      %9891 = vmatpush1.bf16.msra.mxu0 %v2172
      %9892 = vmatprep.subr.bf16.mxu0 0
      %9893 = vmatpush1.bf16.msra.mxu0 %v2171
      %9894 = vmatprep.subr.bf16.mxu0 0
      %9895 = vmatpush1.bf16.msra.mxu0 %v2170
      %9896 = vmatprep.subr.bf16.mxu0 0
      %9897 = vmatpush1.bf16.msra.mxu0 %v2169
      %9898 = vmatprep.subr.bf16.mxu0 0
      %9899 = vmatpush1.bf16.msra.mxu0 %v2168
      %9900 = vmatprep.subr.bf16.mxu0 0
      %9901 = vmatpush1.bf16.msra.mxu0 %v2167
      %9902 = vmatprep.subr.bf16.mxu0 0
      %9903 = vmatpush2.bf16.msra.mxu0 %v2182
      %9904 = vmatprep.subr.bf16.mxu0 0
      %9905 = vmatpush2.bf16.msra.mxu0 %v2181
      %9906 = vmatprep.subr.bf16.mxu0 0
      %9907 = vmatpush2.bf16.msra.mxu0 %v2180
      %9908 = vmatprep.subr.bf16.mxu0 0
      %9909 = vmatpush2.bf16.msra.mxu0 %v2179
      %9910 = vmatprep.subr.bf16.mxu0 0
      %9911 = vmatpush2.bf16.msra.mxu0 %v2178
      %9912 = vmatprep.subr.bf16.mxu0 0
      %9913 = vmatpush2.bf16.msra.mxu0 %v2177
      %9914 = vmatprep.subr.bf16.mxu0 0
      %9915 = vmatpush2.bf16.msra.mxu0 %v2176
      %9916 = vmatprep.subr.bf16.mxu0 0
      %9917 = vmatpush2.bf16.msra.mxu0 %v2175
      %9918 = vmatprep.mubr.bf16.mxu0 %v5185
      %9919 = vmatmul.mubr.bf16.gmra.mxu0 %v5184
      %v9920 = vpop.f32.mrf.mxu0
      %v9921 = vadd.f32 %v9824, %v9920
      %v9922 = vpop.f32.mrf.mxu0
      %v9923 = vpop.f32.mrf.mxu0
      %v9924 = vadd.f32 %v9827, %v9923
      %v9925 = vpop.f32.mrf.mxu0
      %9926 = vmatprep.mubr.bf16.mxu0 %v5270
      %9927 = vmatmul.mubr.bf16.gmra.mxu0 %v5269
      %v9928 = vpop.f32.mrf.mxu0
      %v9929 = vadd.f32 %v9832, %v9928
      %v9930 = vpop.f32.mrf.mxu0
      %v9931 = vpop.f32.mrf.mxu0
      %v9932 = vadd.f32 %v9835, %v9931
      %v9933 = vpop.f32.mrf.mxu0
      %9934 = vmatprep.mubr.bf16.mxu0 %v5355
      %9935 = vmatmul.mubr.bf16.gmra.mxu0 %v5354
      %v9936 = vpop.f32.mrf.mxu0
      %v9937 = vadd.f32 %v9840, %v9936
      %v9938 = vpop.f32.mrf.mxu0
      %v9939 = vpop.f32.mrf.mxu0
      %v9940 = vadd.f32 %v9843, %v9939
      %v9941 = vpop.f32.mrf.mxu0
      %9942 = vmatprep.mubr.bf16.mxu0 %v5440
      %9943 = vmatmul.mubr.bf16.gmra.mxu0 %v5439
      %v9944 = vpop.f32.mrf.mxu0
      %v9945 = vadd.f32 %v9848, %v9944
      %v9946 = vpop.f32.mrf.mxu0
      %v9947 = vpop.f32.mrf.mxu0
      %v9948 = vadd.f32 %v9851, %v9947
      %v9949 = vpop.f32.mrf.mxu0
      %9950 = vmatprep.mubr.bf16.mxu0 %v5525
      %9951 = vmatmul.mubr.bf16.gmra.mxu0 %v5524
      %v9952 = vpop.f32.mrf.mxu0
      %v9953 = vadd.f32 %v9856, %v9952
      %v9954 = vpop.f32.mrf.mxu0
      %v9955 = vpop.f32.mrf.mxu0
      %v9956 = vadd.f32 %v9859, %v9955
      %v9957 = vpop.f32.mrf.mxu0
      %9958 = vmatprep.mubr.bf16.mxu0 %v5610
      %9959 = vmatmul.mubr.bf16.gmra.mxu0 %v5609
      %v9960 = vpop.f32.mrf.mxu0
      %v9961 = vadd.f32 %v9864, %v9960
      %v9962 = vpop.f32.mrf.mxu0
      %v9963 = vpop.f32.mrf.mxu0
      %v9964 = vadd.f32 %v9867, %v9963
      %v9965 = vpop.f32.mrf.mxu0
      %9966 = vmatprep.mubr.bf16.mxu0 %v5695
      %9967 = vmatmul.mubr.bf16.gmra.mxu0 %v5694
      %v9968 = vpop.f32.mrf.mxu0
      %v9969 = vadd.f32 %v9872, %v9968
      %v9970 = vpop.f32.mrf.mxu0
      %v9971 = vpop.f32.mrf.mxu0
      %v9972 = vadd.f32 %v9875, %v9971
      %v9973 = vpop.f32.mrf.mxu0
      %9974 = vmatprep.mubr.bf16.mxu0 %v5780
      %9975 = vmatmul.mubr.bf16.gmra.mxu0 %v5779
      %v9976 = vpop.f32.mrf.mxu0
      %v9977 = vadd.f32 %v9880, %v9976
      %v9978 = vpop.f32.mrf.mxu0
      %v9979 = vpop.f32.mrf.mxu0
      %v9980 = vadd.f32 %v9883, %v9979
      %v9981 = vpop.f32.mrf.mxu0
      %9982 = vdwg.mxu0
      %9983 = vmatprep.subr.bf16.mxu0 0
      %9984 = vmatpush1.bf16.msra.mxu0 %v2190
      %9985 = vmatprep.subr.bf16.mxu0 0
      %9986 = vmatpush1.bf16.msra.mxu0 %v2189
      %9987 = vmatprep.subr.bf16.mxu0 0
      %9988 = vmatpush1.bf16.msra.mxu0 %v2188
      %9989 = vmatprep.subr.bf16.mxu0 0
      %9990 = vmatpush1.bf16.msra.mxu0 %v2187
      %9991 = vmatprep.subr.bf16.mxu0 0
      %9992 = vmatpush1.bf16.msra.mxu0 %v2186
      %9993 = vmatprep.subr.bf16.mxu0 0
      %9994 = vmatpush1.bf16.msra.mxu0 %v2185
      %9995 = vmatprep.subr.bf16.mxu0 0
      %9996 = vmatpush1.bf16.msra.mxu0 %v2184
      %9997 = vmatprep.subr.bf16.mxu0 0
      %9998 = vmatpush1.bf16.msra.mxu0 %v2183
      %9999 = vmatprep.subr.bf16.mxu0 0
      %10000 = vmatpush2.bf16.msra.mxu0 %v2198
      %10001 = vmatprep.subr.bf16.mxu0 0
      %10002 = vmatpush2.bf16.msra.mxu0 %v2197
      %10003 = vmatprep.subr.bf16.mxu0 0
      %10004 = vmatpush2.bf16.msra.mxu0 %v2196
      %10005 = vmatprep.subr.bf16.mxu0 0
      %10006 = vmatpush2.bf16.msra.mxu0 %v2195
      %10007 = vmatprep.subr.bf16.mxu0 0
      %10008 = vmatpush2.bf16.msra.mxu0 %v2194
      %10009 = vmatprep.subr.bf16.mxu0 0
      %10010 = vmatpush2.bf16.msra.mxu0 %v2193
      %10011 = vmatprep.subr.bf16.mxu0 0
      %10012 = vmatpush2.bf16.msra.mxu0 %v2192
      %10013 = vmatprep.subr.bf16.mxu0 0
      %10014 = vmatpush2.bf16.msra.mxu0 %v2191
      %10015 = vmatprep.mubr.bf16.mxu0 %v5187
      %10016 = vmatmul.mubr.bf16.gmra.mxu0 %v5186
      %v10017 = vpop.f32.mrf.mxu0
      %v10018 = vadd.f32 %v9921, %v10017
      %v10019 = vpop.f32.mrf.mxu0
      %v10020 = vpop.f32.mrf.mxu0
      %v10021 = vadd.f32 %v9924, %v10020
      %v10022 = vpop.f32.mrf.mxu0
      %10023 = vmatprep.mubr.bf16.mxu0 %v5272
      %10024 = vmatmul.mubr.bf16.gmra.mxu0 %v5271
      %v10025 = vpop.f32.mrf.mxu0
      %v10026 = vadd.f32 %v9929, %v10025
      %v10027 = vpop.f32.mrf.mxu0
      %v10028 = vpop.f32.mrf.mxu0
      %v10029 = vadd.f32 %v9932, %v10028
      %v10030 = vpop.f32.mrf.mxu0
      %10031 = vmatprep.mubr.bf16.mxu0 %v5357
      %10032 = vmatmul.mubr.bf16.gmra.mxu0 %v5356
      %v10033 = vpop.f32.mrf.mxu0
      %v10034 = vadd.f32 %v9937, %v10033
      %v10035 = vpop.f32.mrf.mxu0
      %v10036 = vpop.f32.mrf.mxu0
      %v10037 = vadd.f32 %v9940, %v10036
      %v10038 = vpop.f32.mrf.mxu0
      %10039 = vmatprep.mubr.bf16.mxu0 %v5442
      %10040 = vmatmul.mubr.bf16.gmra.mxu0 %v5441
      %v10041 = vpop.f32.mrf.mxu0
      %v10042 = vadd.f32 %v9945, %v10041
      %v10043 = vpop.f32.mrf.mxu0
      %v10044 = vpop.f32.mrf.mxu0
      %v10045 = vadd.f32 %v9948, %v10044
      %v10046 = vpop.f32.mrf.mxu0
      %10047 = vmatprep.mubr.bf16.mxu0 %v5527
      %10048 = vmatmul.mubr.bf16.gmra.mxu0 %v5526
      %v10049 = vpop.f32.mrf.mxu0
      %v10050 = vadd.f32 %v9953, %v10049
      %v10051 = vpop.f32.mrf.mxu0
      %v10052 = vpop.f32.mrf.mxu0
      %v10053 = vadd.f32 %v9956, %v10052
      %v10054 = vpop.f32.mrf.mxu0
      %10055 = vmatprep.mubr.bf16.mxu0 %v5612
      %10056 = vmatmul.mubr.bf16.gmra.mxu0 %v5611
      %v10057 = vpop.f32.mrf.mxu0
      %v10058 = vadd.f32 %v9961, %v10057
      %v10059 = vpop.f32.mrf.mxu0
      %v10060 = vpop.f32.mrf.mxu0
      %v10061 = vadd.f32 %v9964, %v10060
      %v10062 = vpop.f32.mrf.mxu0
      %10063 = vmatprep.mubr.bf16.mxu0 %v5697
      %10064 = vmatmul.mubr.bf16.gmra.mxu0 %v5696
      %v10065 = vpop.f32.mrf.mxu0
      %v10066 = vadd.f32 %v9969, %v10065
      %v10067 = vpop.f32.mrf.mxu0
      %v10068 = vpop.f32.mrf.mxu0
      %v10069 = vadd.f32 %v9972, %v10068
      %v10070 = vpop.f32.mrf.mxu0
      %10071 = vmatprep.mubr.bf16.mxu0 %v5782
      %10072 = vmatmul.mubr.bf16.gmra.mxu0 %v5781
      %v10073 = vpop.f32.mrf.mxu0
      %v10074 = vadd.f32 %v9977, %v10073
      %v10075 = vpop.f32.mrf.mxu0
      %v10076 = vpop.f32.mrf.mxu0
      %v10077 = vadd.f32 %v9980, %v10076
      %v10078 = vpop.f32.mrf.mxu0
      %10079 = vdwg.mxu0
      %10080 = vmatprep.subr.bf16.mxu0 0
      %10081 = vmatpush1.bf16.msra.mxu0 %v2206
      %10082 = vmatprep.subr.bf16.mxu0 0
      %10083 = vmatpush1.bf16.msra.mxu0 %v2205
      %10084 = vmatprep.subr.bf16.mxu0 0
      %10085 = vmatpush1.bf16.msra.mxu0 %v2204
      %10086 = vmatprep.subr.bf16.mxu0 0
      %10087 = vmatpush1.bf16.msra.mxu0 %v2203
      %10088 = vmatprep.subr.bf16.mxu0 0
      %10089 = vmatpush1.bf16.msra.mxu0 %v2202
      %10090 = vmatprep.subr.bf16.mxu0 0
      %10091 = vmatpush1.bf16.msra.mxu0 %v2201
      %10092 = vmatprep.subr.bf16.mxu0 0
      %10093 = vmatpush1.bf16.msra.mxu0 %v2200
      %10094 = vmatprep.subr.bf16.mxu0 0
      %10095 = vmatpush1.bf16.msra.mxu0 %v2199
      %10096 = vmatprep.subr.bf16.mxu0 0
      %10097 = vmatpush2.bf16.msra.mxu0 %v2214
      %10098 = vmatprep.subr.bf16.mxu0 0
      %10099 = vmatpush2.bf16.msra.mxu0 %v2213
      %10100 = vmatprep.subr.bf16.mxu0 0
      %10101 = vmatpush2.bf16.msra.mxu0 %v2212
      %10102 = vmatprep.subr.bf16.mxu0 0
      %10103 = vmatpush2.bf16.msra.mxu0 %v2211
      %10104 = vmatprep.subr.bf16.mxu0 0
      %10105 = vmatpush2.bf16.msra.mxu0 %v2210
      %10106 = vmatprep.subr.bf16.mxu0 0
      %10107 = vmatpush2.bf16.msra.mxu0 %v2209
      %10108 = vmatprep.subr.bf16.mxu0 0
      %10109 = vmatpush2.bf16.msra.mxu0 %v2208
      %10110 = vmatprep.subr.bf16.mxu0 0
      %10111 = vmatpush2.bf16.msra.mxu0 %v2207
      %10112 = vmatprep.mubr.bf16.mxu0 %v5189
      %10113 = vmatmul.mubr.bf16.gmra.mxu0 %v5188
      %v10114 = vpop.f32.mrf.mxu0
      %v10115 = vadd.f32 %v10018, %v10114
      %v10116 = vpop.f32.mrf.mxu0
      %v10117 = vpop.f32.mrf.mxu0
      %v10118 = vadd.f32 %v10021, %v10117
      %v10119 = vpop.f32.mrf.mxu0
      %10120 = vmatprep.mubr.bf16.mxu0 %v5274
      %10121 = vmatmul.mubr.bf16.gmra.mxu0 %v5273
      %v10122 = vpop.f32.mrf.mxu0
      %v10123 = vadd.f32 %v10026, %v10122
      %v10124 = vpop.f32.mrf.mxu0
      %v10125 = vpop.f32.mrf.mxu0
      %v10126 = vadd.f32 %v10029, %v10125
      %v10127 = vpop.f32.mrf.mxu0
      %10128 = vmatprep.mubr.bf16.mxu0 %v5359
      %10129 = vmatmul.mubr.bf16.gmra.mxu0 %v5358
      %v10130 = vpop.f32.mrf.mxu0
      %v10131 = vadd.f32 %v10034, %v10130
      %v10132 = vpop.f32.mrf.mxu0
      %v10133 = vpop.f32.mrf.mxu0
      %v10134 = vadd.f32 %v10037, %v10133
      %v10135 = vpop.f32.mrf.mxu0
      %10136 = vmatprep.mubr.bf16.mxu0 %v5444
      %10137 = vmatmul.mubr.bf16.gmra.mxu0 %v5443
      %v10138 = vpop.f32.mrf.mxu0
      %v10139 = vadd.f32 %v10042, %v10138
      %v10140 = vpop.f32.mrf.mxu0
      %v10141 = vpop.f32.mrf.mxu0
      %v10142 = vadd.f32 %v10045, %v10141
      %v10143 = vpop.f32.mrf.mxu0
      %10144 = vmatprep.mubr.bf16.mxu0 %v5529
      %10145 = vmatmul.mubr.bf16.gmra.mxu0 %v5528
      %v10146 = vpop.f32.mrf.mxu0
      %v10147 = vadd.f32 %v10050, %v10146
      %v10148 = vpop.f32.mrf.mxu0
      %v10149 = vpop.f32.mrf.mxu0
      %v10150 = vadd.f32 %v10053, %v10149
      %v10151 = vpop.f32.mrf.mxu0
      %10152 = vmatprep.mubr.bf16.mxu0 %v5614
      %10153 = vmatmul.mubr.bf16.gmra.mxu0 %v5613
      %v10154 = vpop.f32.mrf.mxu0
      %v10155 = vadd.f32 %v10058, %v10154
      %v10156 = vpop.f32.mrf.mxu0
      %v10157 = vpop.f32.mrf.mxu0
      %v10158 = vadd.f32 %v10061, %v10157
      %v10159 = vpop.f32.mrf.mxu0
      %10160 = vmatprep.mubr.bf16.mxu0 %v5699
      %10161 = vmatmul.mubr.bf16.gmra.mxu0 %v5698
      %v10162 = vpop.f32.mrf.mxu0
      %v10163 = vadd.f32 %v10066, %v10162
      %v10164 = vpop.f32.mrf.mxu0
      %v10165 = vpop.f32.mrf.mxu0
      %v10166 = vadd.f32 %v10069, %v10165
      %v10167 = vpop.f32.mrf.mxu0
      %10168 = vmatprep.mubr.bf16.mxu0 %v5784
      %10169 = vmatmul.mubr.bf16.gmra.mxu0 %v5783
      %v10170 = vpop.f32.mrf.mxu0
      %v10171 = vadd.f32 %v10074, %v10170
      %v10172 = vpop.f32.mrf.mxu0
      %v10173 = vpop.f32.mrf.mxu0
      %v10174 = vadd.f32 %v10077, %v10173
      %v10175 = vpop.f32.mrf.mxu0
      %10176 = vdwg.mxu0
      %10177 = vmatprep.subr.bf16.mxu0 0
      %10178 = vmatpush1.bf16.msra.mxu0 %v2222
      %10179 = vmatprep.subr.bf16.mxu0 0
      %10180 = vmatpush1.bf16.msra.mxu0 %v2221
      %10181 = vmatprep.subr.bf16.mxu0 0
      %10182 = vmatpush1.bf16.msra.mxu0 %v2220
      %10183 = vmatprep.subr.bf16.mxu0 0
      %10184 = vmatpush1.bf16.msra.mxu0 %v2219
      %10185 = vmatprep.subr.bf16.mxu0 0
      %10186 = vmatpush1.bf16.msra.mxu0 %v2218
      %10187 = vmatprep.subr.bf16.mxu0 0
      %10188 = vmatpush1.bf16.msra.mxu0 %v2217
      %10189 = vmatprep.subr.bf16.mxu0 0
      %10190 = vmatpush1.bf16.msra.mxu0 %v2216
      %10191 = vmatprep.subr.bf16.mxu0 0
      %10192 = vmatpush1.bf16.msra.mxu0 %v2215
      %10193 = vmatprep.subr.bf16.mxu0 0
      %10194 = vmatpush2.bf16.msra.mxu0 %v2230
      %10195 = vmatprep.subr.bf16.mxu0 0
      %10196 = vmatpush2.bf16.msra.mxu0 %v2229
      %10197 = vmatprep.subr.bf16.mxu0 0
      %10198 = vmatpush2.bf16.msra.mxu0 %v2228
      %10199 = vmatprep.subr.bf16.mxu0 0
      %10200 = vmatpush2.bf16.msra.mxu0 %v2227
      %10201 = vmatprep.subr.bf16.mxu0 0
      %10202 = vmatpush2.bf16.msra.mxu0 %v2226
      %10203 = vmatprep.subr.bf16.mxu0 0
      %10204 = vmatpush2.bf16.msra.mxu0 %v2225
      %10205 = vmatprep.subr.bf16.mxu0 0
      %10206 = vmatpush2.bf16.msra.mxu0 %v2224
      %10207 = vmatprep.subr.bf16.mxu0 0
      %10208 = vmatpush2.bf16.msra.mxu0 %v2223
      %10209 = vmatprep.mubr.bf16.mxu0 %v5191
      %10210 = vmatmul.mubr.bf16.gmra.mxu0 %v5190
      %v10211 = vpop.f32.mrf.mxu0
      %v10212 = vadd.f32 %v10115, %v10211
      %v10213 = vpop.f32.mrf.mxu0
      %v10214 = vpop.f32.mrf.mxu0
      %v10215 = vadd.f32 %v10118, %v10214
      %v10216 = vpop.f32.mrf.mxu0
      %10217 = vmatprep.mubr.bf16.mxu0 %v5276
      %10218 = vmatmul.mubr.bf16.gmra.mxu0 %v5275
      %v10219 = vpop.f32.mrf.mxu0
      %v10220 = vadd.f32 %v10123, %v10219
      %v10221 = vpop.f32.mrf.mxu0
      %v10222 = vpop.f32.mrf.mxu0
      %v10223 = vadd.f32 %v10126, %v10222
      %v10224 = vpop.f32.mrf.mxu0
      %10225 = vmatprep.mubr.bf16.mxu0 %v5361
      %10226 = vmatmul.mubr.bf16.gmra.mxu0 %v5360
      %v10227 = vpop.f32.mrf.mxu0
      %v10228 = vadd.f32 %v10131, %v10227
      %v10229 = vpop.f32.mrf.mxu0
      %v10230 = vpop.f32.mrf.mxu0
      %v10231 = vadd.f32 %v10134, %v10230
      %v10232 = vpop.f32.mrf.mxu0
      %10233 = vmatprep.mubr.bf16.mxu0 %v5446
      %10234 = vmatmul.mubr.bf16.gmra.mxu0 %v5445
      %v10235 = vpop.f32.mrf.mxu0
      %v10236 = vadd.f32 %v10139, %v10235
      %v10237 = vpop.f32.mrf.mxu0
      %v10238 = vpop.f32.mrf.mxu0
      %v10239 = vadd.f32 %v10142, %v10238
      %v10240 = vpop.f32.mrf.mxu0
      %10241 = vmatprep.mubr.bf16.mxu0 %v5531
      %10242 = vmatmul.mubr.bf16.gmra.mxu0 %v5530
      %v10243 = vpop.f32.mrf.mxu0
      %v10244 = vadd.f32 %v10147, %v10243
      %v10245 = vpop.f32.mrf.mxu0
      %v10246 = vpop.f32.mrf.mxu0
      %v10247 = vadd.f32 %v10150, %v10246
      %v10248 = vpop.f32.mrf.mxu0
      %10249 = vmatprep.mubr.bf16.mxu0 %v5616
      %10250 = vmatmul.mubr.bf16.gmra.mxu0 %v5615
      %v10251 = vpop.f32.mrf.mxu0
      %v10252 = vadd.f32 %v10155, %v10251
      %v10253 = vpop.f32.mrf.mxu0
      %v10254 = vpop.f32.mrf.mxu0
      %v10255 = vadd.f32 %v10158, %v10254
      %v10256 = vpop.f32.mrf.mxu0
      %10257 = vmatprep.mubr.bf16.mxu0 %v5701
      %10258 = vmatmul.mubr.bf16.gmra.mxu0 %v5700
      %v10259 = vpop.f32.mrf.mxu0
      %v10260 = vadd.f32 %v10163, %v10259
      %v10261 = vpop.f32.mrf.mxu0
      %v10262 = vpop.f32.mrf.mxu0
      %v10263 = vadd.f32 %v10166, %v10262
      %v10264 = vpop.f32.mrf.mxu0
      %10265 = vmatprep.mubr.bf16.mxu0 %v5786
      %10266 = vmatmul.mubr.bf16.gmra.mxu0 %v5785
      %v10267 = vpop.f32.mrf.mxu0
      %v10268 = vadd.f32 %v10171, %v10267
      %v10269 = vpop.f32.mrf.mxu0
      %v10270 = vpop.f32.mrf.mxu0
      %v10271 = vadd.f32 %v10174, %v10270
      %v10272 = vpop.f32.mrf.mxu0
      %10273 = vdwg.mxu0
      %10274 = vmatprep.subr.bf16.mxu0 0
      %10275 = vmatpush1.bf16.msra.mxu0 %v2238
      %10276 = vmatprep.subr.bf16.mxu0 0
      %10277 = vmatpush1.bf16.msra.mxu0 %v2237
      %10278 = vmatprep.subr.bf16.mxu0 0
      %10279 = vmatpush1.bf16.msra.mxu0 %v2236
      %10280 = vmatprep.subr.bf16.mxu0 0
      %10281 = vmatpush1.bf16.msra.mxu0 %v2235
      %10282 = vmatprep.subr.bf16.mxu0 0
      %10283 = vmatpush1.bf16.msra.mxu0 %v2234
      %10284 = vmatprep.subr.bf16.mxu0 0
      %10285 = vmatpush1.bf16.msra.mxu0 %v2233
      %10286 = vmatprep.subr.bf16.mxu0 0
      %10287 = vmatpush1.bf16.msra.mxu0 %v2232
      %10288 = vmatprep.subr.bf16.mxu0 0
      %10289 = vmatpush1.bf16.msra.mxu0 %v2231
      %10290 = vmatprep.subr.bf16.mxu0 0
      %10291 = vmatpush2.bf16.msra.mxu0 %v2246
      %10292 = vmatprep.subr.bf16.mxu0 0
      %10293 = vmatpush2.bf16.msra.mxu0 %v2245
      %10294 = vmatprep.subr.bf16.mxu0 0
      %10295 = vmatpush2.bf16.msra.mxu0 %v2244
      %10296 = vmatprep.subr.bf16.mxu0 0
      %10297 = vmatpush2.bf16.msra.mxu0 %v2243
      %10298 = vmatprep.subr.bf16.mxu0 0
      %10299 = vmatpush2.bf16.msra.mxu0 %v2242
      %10300 = vmatprep.subr.bf16.mxu0 0
      %10301 = vmatpush2.bf16.msra.mxu0 %v2241
      %10302 = vmatprep.subr.bf16.mxu0 0
      %10303 = vmatpush2.bf16.msra.mxu0 %v2240
      %10304 = vmatprep.subr.bf16.mxu0 0
      %10305 = vmatpush2.bf16.msra.mxu0 %v2239
      %10306 = vmatprep.mubr.bf16.mxu0 %v5193
      %10307 = vmatmul.mubr.bf16.gmra.mxu0 %v5192
      %v10308 = vpop.f32.mrf.mxu0
      %v10309 = vadd.f32 %v10212, %v10308
      %v10310 = vpop.f32.mrf.mxu0
      %v10311 = vpop.f32.mrf.mxu0
      %v10312 = vadd.f32 %v10215, %v10311
      %v10313 = vpop.f32.mrf.mxu0
      %10314 = vmatprep.mubr.bf16.mxu0 %v5278
      %10315 = vmatmul.mubr.bf16.gmra.mxu0 %v5277
      %v10316 = vpop.f32.mrf.mxu0
      %v10317 = vadd.f32 %v10220, %v10316
      %v10318 = vpop.f32.mrf.mxu0
      %v10319 = vpop.f32.mrf.mxu0
      %v10320 = vadd.f32 %v10223, %v10319
      %v10321 = vpop.f32.mrf.mxu0
      %10322 = vmatprep.mubr.bf16.mxu0 %v5363
      %10323 = vmatmul.mubr.bf16.gmra.mxu0 %v5362
      %v10324 = vpop.f32.mrf.mxu0
      %v10325 = vadd.f32 %v10228, %v10324
      %v10326 = vpop.f32.mrf.mxu0
      %v10327 = vpop.f32.mrf.mxu0
      %v10328 = vadd.f32 %v10231, %v10327
      %v10329 = vpop.f32.mrf.mxu0
      %10330 = vmatprep.mubr.bf16.mxu0 %v5448
      %10331 = vmatmul.mubr.bf16.gmra.mxu0 %v5447
      %v10332 = vpop.f32.mrf.mxu0
      %v10333 = vadd.f32 %v10236, %v10332
      %v10334 = vpop.f32.mrf.mxu0
      %v10335 = vpop.f32.mrf.mxu0
      %v10336 = vadd.f32 %v10239, %v10335
      %v10337 = vpop.f32.mrf.mxu0
      %10338 = vmatprep.mubr.bf16.mxu0 %v5533
      %10339 = vmatmul.mubr.bf16.gmra.mxu0 %v5532
      %v10340 = vpop.f32.mrf.mxu0
      %v10341 = vadd.f32 %v10244, %v10340
      %v10342 = vpop.f32.mrf.mxu0
      %v10343 = vpop.f32.mrf.mxu0
      %v10344 = vadd.f32 %v10247, %v10343
      %v10345 = vpop.f32.mrf.mxu0
      %10346 = vmatprep.mubr.bf16.mxu0 %v5618
      %10347 = vmatmul.mubr.bf16.gmra.mxu0 %v5617
      %v10348 = vpop.f32.mrf.mxu0
      %v10349 = vadd.f32 %v10252, %v10348
      %v10350 = vpop.f32.mrf.mxu0
      %v10351 = vpop.f32.mrf.mxu0
      %v10352 = vadd.f32 %v10255, %v10351
      %v10353 = vpop.f32.mrf.mxu0
      %10354 = vmatprep.mubr.bf16.mxu0 %v5703
      %10355 = vmatmul.mubr.bf16.gmra.mxu0 %v5702
      %v10356 = vpop.f32.mrf.mxu0
      %v10357 = vadd.f32 %v10260, %v10356
      %v10358 = vpop.f32.mrf.mxu0
      %v10359 = vpop.f32.mrf.mxu0
      %v10360 = vadd.f32 %v10263, %v10359
      %v10361 = vpop.f32.mrf.mxu0
      %10362 = vmatprep.mubr.bf16.mxu0 %v5788
      %10363 = vmatmul.mubr.bf16.gmra.mxu0 %v5787
      %v10364 = vpop.f32.mrf.mxu0
      %v10365 = vadd.f32 %v10268, %v10364
      %v10366 = vpop.f32.mrf.mxu0
      %v10367 = vpop.f32.mrf.mxu0
      %v10368 = vadd.f32 %v10271, %v10367
      %v10369 = vpop.f32.mrf.mxu0
      %10370 = vdwg.mxu0
      %10371 = vmatprep.subr.bf16.mxu0 0
      %10372 = vmatpush1.bf16.msra.mxu0 %v2254
      %10373 = vmatprep.subr.bf16.mxu0 0
      %10374 = vmatpush1.bf16.msra.mxu0 %v2253
      %10375 = vmatprep.subr.bf16.mxu0 0
      %10376 = vmatpush1.bf16.msra.mxu0 %v2252
      %10377 = vmatprep.subr.bf16.mxu0 0
      %10378 = vmatpush1.bf16.msra.mxu0 %v2251
      %10379 = vmatprep.subr.bf16.mxu0 0
      %10380 = vmatpush1.bf16.msra.mxu0 %v2250
      %10381 = vmatprep.subr.bf16.mxu0 0
      %10382 = vmatpush1.bf16.msra.mxu0 %v2249
      %10383 = vmatprep.subr.bf16.mxu0 0
      %10384 = vmatpush1.bf16.msra.mxu0 %v2248
      %10385 = vmatprep.subr.bf16.mxu0 0
      %10386 = vmatpush1.bf16.msra.mxu0 %v2247
      %10387 = vmatprep.subr.bf16.mxu0 0
      %10388 = vmatpush2.bf16.msra.mxu0 %v2262
      %10389 = vmatprep.subr.bf16.mxu0 0
      %10390 = vmatpush2.bf16.msra.mxu0 %v2261
      %10391 = vmatprep.subr.bf16.mxu0 0
      %10392 = vmatpush2.bf16.msra.mxu0 %v2260
      %10393 = vmatprep.subr.bf16.mxu0 0
      %10394 = vmatpush2.bf16.msra.mxu0 %v2259
      %10395 = vmatprep.subr.bf16.mxu0 0
      %10396 = vmatpush2.bf16.msra.mxu0 %v2258
      %10397 = vmatprep.subr.bf16.mxu0 0
      %10398 = vmatpush2.bf16.msra.mxu0 %v2257
      %10399 = vmatprep.subr.bf16.mxu0 0
      %10400 = vmatpush2.bf16.msra.mxu0 %v2256
      %10401 = vmatprep.subr.bf16.mxu0 0
      %10402 = vmatpush2.bf16.msra.mxu0 %v2255
      %10403 = vmatprep.mubr.bf16.mxu0 %v5195
      %10404 = vmatmul.mubr.bf16.gmra.mxu0 %v5194
      %v10405 = vpop.f32.mrf.mxu0
      %v10406 = vadd.f32 %v10309, %v10405
      %v10407 = vpop.f32.mrf.mxu0
      %v10408 = vpop.f32.mrf.mxu0
      %v10409 = vadd.f32 %v10312, %v10408
      %v10410 = vpop.f32.mrf.mxu0
      %10411 = vmatprep.mubr.bf16.mxu0 %v5280
      %10412 = vmatmul.mubr.bf16.gmra.mxu0 %v5279
      %v10413 = vpop.f32.mrf.mxu0
      %v10414 = vadd.f32 %v10317, %v10413
      %v10415 = vpop.f32.mrf.mxu0
      %v10416 = vpop.f32.mrf.mxu0
      %v10417 = vadd.f32 %v10320, %v10416
      %v10418 = vpop.f32.mrf.mxu0
      %10419 = vmatprep.mubr.bf16.mxu0 %v5365
      %10420 = vmatmul.mubr.bf16.gmra.mxu0 %v5364
      %v10421 = vpop.f32.mrf.mxu0
      %v10422 = vadd.f32 %v10325, %v10421
      %v10423 = vpop.f32.mrf.mxu0
      %v10424 = vpop.f32.mrf.mxu0
      %v10425 = vadd.f32 %v10328, %v10424
      %v10426 = vpop.f32.mrf.mxu0
      %10427 = vmatprep.mubr.bf16.mxu0 %v5450
      %10428 = vmatmul.mubr.bf16.gmra.mxu0 %v5449
      %v10429 = vpop.f32.mrf.mxu0
      %v10430 = vadd.f32 %v10333, %v10429
      %v10431 = vpop.f32.mrf.mxu0
      %v10432 = vpop.f32.mrf.mxu0
      %v10433 = vadd.f32 %v10336, %v10432
      %v10434 = vpop.f32.mrf.mxu0
      %10435 = vmatprep.mubr.bf16.mxu0 %v5535
      %10436 = vmatmul.mubr.bf16.gmra.mxu0 %v5534
      %v10437 = vpop.f32.mrf.mxu0
      %v10438 = vadd.f32 %v10341, %v10437
      %v10439 = vpop.f32.mrf.mxu0
      %v10440 = vpop.f32.mrf.mxu0
      %v10441 = vadd.f32 %v10344, %v10440
      %v10442 = vpop.f32.mrf.mxu0
      %10443 = vmatprep.mubr.bf16.mxu0 %v5620
      %10444 = vmatmul.mubr.bf16.gmra.mxu0 %v5619
      %v10445 = vpop.f32.mrf.mxu0
      %v10446 = vadd.f32 %v10349, %v10445
      %v10447 = vpop.f32.mrf.mxu0
      %v10448 = vpop.f32.mrf.mxu0
      %v10449 = vadd.f32 %v10352, %v10448
      %v10450 = vpop.f32.mrf.mxu0
      %10451 = vmatprep.mubr.bf16.mxu0 %v5705
      %10452 = vmatmul.mubr.bf16.gmra.mxu0 %v5704
      %v10453 = vpop.f32.mrf.mxu0
      %v10454 = vadd.f32 %v10357, %v10453
      %v10455 = vpop.f32.mrf.mxu0
      %v10456 = vpop.f32.mrf.mxu0
      %v10457 = vadd.f32 %v10360, %v10456
      %v10458 = vpop.f32.mrf.mxu0
      %10459 = vmatprep.mubr.bf16.mxu0 %v5790
      %10460 = vmatmul.mubr.bf16.gmra.mxu0 %v5789
      %v10461 = vpop.f32.mrf.mxu0
      %v10462 = vadd.f32 %v10365, %v10461
      %v10463 = vpop.f32.mrf.mxu0
      %v10464 = vpop.f32.mrf.mxu0
      %v10465 = vadd.f32 %v10368, %v10464
      %v10466 = vpop.f32.mrf.mxu0
      %10467 = vdwg.mxu0
      %10468 = vmatprep.subr.bf16.mxu0 0
      %10469 = vmatpush1.bf16.msra.mxu0 %v2270
      %10470 = vmatprep.subr.bf16.mxu0 0
      %10471 = vmatpush1.bf16.msra.mxu0 %v2269
      %10472 = vmatprep.subr.bf16.mxu0 0
      %10473 = vmatpush1.bf16.msra.mxu0 %v2268
      %10474 = vmatprep.subr.bf16.mxu0 0
      %10475 = vmatpush1.bf16.msra.mxu0 %v2267
      %10476 = vmatprep.subr.bf16.mxu0 0
      %10477 = vmatpush1.bf16.msra.mxu0 %v2266
      %10478 = vmatprep.subr.bf16.mxu0 0
      %10479 = vmatpush1.bf16.msra.mxu0 %v2265
      %10480 = vmatprep.subr.bf16.mxu0 0
      %10481 = vmatpush1.bf16.msra.mxu0 %v2264
      %10482 = vmatprep.subr.bf16.mxu0 0
      %10483 = vmatpush1.bf16.msra.mxu0 %v2263
      %10484 = vmatprep.subr.bf16.mxu0 0
      %10485 = vmatpush2.bf16.msra.mxu0 %v2278
      %10486 = vmatprep.subr.bf16.mxu0 0
      %10487 = vmatpush2.bf16.msra.mxu0 %v2277
      %10488 = vmatprep.subr.bf16.mxu0 0
      %10489 = vmatpush2.bf16.msra.mxu0 %v2276
      %10490 = vmatprep.subr.bf16.mxu0 0
      %10491 = vmatpush2.bf16.msra.mxu0 %v2275
      %10492 = vmatprep.subr.bf16.mxu0 0
      %10493 = vmatpush2.bf16.msra.mxu0 %v2274
      %10494 = vmatprep.subr.bf16.mxu0 0
      %10495 = vmatpush2.bf16.msra.mxu0 %v2273
      %10496 = vmatprep.subr.bf16.mxu0 0
      %10497 = vmatpush2.bf16.msra.mxu0 %v2272
      %10498 = vmatprep.subr.bf16.mxu0 0
      %10499 = vmatpush2.bf16.msra.mxu0 %v2271
      %10500 = vmatprep.mubr.bf16.mxu0 %v5197
      %10501 = vmatmul.mubr.bf16.gmra.mxu0 %v5196
      %v10502 = vpop.f32.mrf.mxu0
      %v10503 = vadd.f32 %v10406, %v10502
      %v10504 = vpop.f32.mrf.mxu0
      %v10505 = vpop.f32.mrf.mxu0
      %v10506 = vadd.f32 %v10409, %v10505
      %v10507 = vpop.f32.mrf.mxu0
      %10508 = vmatprep.mubr.bf16.mxu0 %v5282
      %10509 = vmatmul.mubr.bf16.gmra.mxu0 %v5281
      %v10510 = vpop.f32.mrf.mxu0
      %v10511 = vadd.f32 %v10414, %v10510
      %v10512 = vpop.f32.mrf.mxu0
      %v10513 = vpop.f32.mrf.mxu0
      %v10514 = vadd.f32 %v10417, %v10513
      %v10515 = vpop.f32.mrf.mxu0
      %10516 = vmatprep.mubr.bf16.mxu0 %v5367
      %10517 = vmatmul.mubr.bf16.gmra.mxu0 %v5366
      %v10518 = vpop.f32.mrf.mxu0
      %v10519 = vadd.f32 %v10422, %v10518
      %v10520 = vpop.f32.mrf.mxu0
      %v10521 = vpop.f32.mrf.mxu0
      %v10522 = vadd.f32 %v10425, %v10521
      %v10523 = vpop.f32.mrf.mxu0
      %10524 = vmatprep.mubr.bf16.mxu0 %v5452
      %10525 = vmatmul.mubr.bf16.gmra.mxu0 %v5451
      %v10526 = vpop.f32.mrf.mxu0
      %v10527 = vadd.f32 %v10430, %v10526
      %v10528 = vpop.f32.mrf.mxu0
      %v10529 = vpop.f32.mrf.mxu0
      %v10530 = vadd.f32 %v10433, %v10529
      %v10531 = vpop.f32.mrf.mxu0
      %10532 = vmatprep.mubr.bf16.mxu0 %v5537
      %10533 = vmatmul.mubr.bf16.gmra.mxu0 %v5536
      %v10534 = vpop.f32.mrf.mxu0
      %v10535 = vadd.f32 %v10438, %v10534
      %v10536 = vpop.f32.mrf.mxu0
      %v10537 = vpop.f32.mrf.mxu0
      %v10538 = vadd.f32 %v10441, %v10537
      %v10539 = vpop.f32.mrf.mxu0
      %10540 = vmatprep.mubr.bf16.mxu0 %v5622
      %10541 = vmatmul.mubr.bf16.gmra.mxu0 %v5621
      %v10542 = vpop.f32.mrf.mxu0
      %v10543 = vadd.f32 %v10446, %v10542
      %v10544 = vpop.f32.mrf.mxu0
      %v10545 = vpop.f32.mrf.mxu0
      %v10546 = vadd.f32 %v10449, %v10545
      %v10547 = vpop.f32.mrf.mxu0
      %10548 = vmatprep.mubr.bf16.mxu0 %v5707
      %10549 = vmatmul.mubr.bf16.gmra.mxu0 %v5706
      %v10550 = vpop.f32.mrf.mxu0
      %v10551 = vadd.f32 %v10454, %v10550
      %v10552 = vpop.f32.mrf.mxu0
      %v10553 = vpop.f32.mrf.mxu0
      %v10554 = vadd.f32 %v10457, %v10553
      %v10555 = vpop.f32.mrf.mxu0
      %10556 = vmatprep.mubr.bf16.mxu0 %v5792
      %10557 = vmatmul.mubr.bf16.gmra.mxu0 %v5791
      %v10558 = vpop.f32.mrf.mxu0
      %v10559 = vadd.f32 %v10462, %v10558
      %v10560 = vpop.f32.mrf.mxu0
      %v10561 = vpop.f32.mrf.mxu0
      %v10562 = vadd.f32 %v10465, %v10561
      %v10563 = vpop.f32.mrf.mxu0
      %10564 = vdwg.mxu0
      %10565 = vmatprep.subr.bf16.mxu0 0
      %10566 = vmatpush1.bf16.msra.mxu0 0
      %10567 = vmatprep.subr.bf16.mxu0 0
      %10568 = vmatpush1.bf16.msra.mxu0 0
      %10569 = vmatprep.subr.bf16.mxu0 0
      %10570 = vmatpush1.bf16.msra.mxu0 0
      %10571 = vmatprep.subr.bf16.mxu0 0
      %10572 = vmatpush1.bf16.msra.mxu0 0
      %10573 = vmatprep.subr.bf16.mxu0 0
      %10574 = vmatpush1.bf16.msra.mxu0 0
      %10575 = vmatprep.subr.bf16.mxu0 0
      %10576 = vmatpush1.bf16.msra.mxu0 %v2281
      %10577 = vmatprep.subr.bf16.mxu0 0
      %10578 = vmatpush1.bf16.msra.mxu0 %v2280
      %10579 = vmatprep.subr.bf16.mxu0 0
      %10580 = vmatpush1.bf16.msra.mxu0 %v2279
      %10581 = vmatprep.subr.bf16.mxu0 0
      %10582 = vmatpush2.bf16.msra.mxu0 0
      %10583 = vmatprep.subr.bf16.mxu0 0
      %10584 = vmatpush2.bf16.msra.mxu0 0
      %10585 = vmatprep.subr.bf16.mxu0 0
      %10586 = vmatpush2.bf16.msra.mxu0 0
      %10587 = vmatprep.subr.bf16.mxu0 0
      %10588 = vmatpush2.bf16.msra.mxu0 0
      %10589 = vmatprep.subr.bf16.mxu0 0
      %10590 = vmatpush2.bf16.msra.mxu0 0
      %10591 = vmatprep.subr.bf16.mxu0 0
      %10592 = vmatpush2.bf16.msra.mxu0 0
      %10593 = vmatprep.subr.bf16.mxu0 0
      %10594 = vmatpush2.bf16.msra.mxu0 0
      %10595 = vmatprep.subr.bf16.mxu0 0
      %10596 = vmatpush2.bf16.msra.mxu0 0
      %10597 = vmatprep.mubr.bf16.mxu0 0
      %10598 = vmatmul.mubr.bf16.gmra.mxu0 %v6468
      %v10599 = vpop.f32.mrf.mxu0
      %v10600 = vadd.f32 %v10503, %v10599
      %v10601 = vpop.f32.mrf.mxu0
      %v10602 = vpop.f32.mrf.mxu0
      %v10603 = vadd.f32 %v10506, %v10602
      %v10604 = vpop.f32.mrf.mxu0
      %10605 = vmatprep.mubr.bf16.mxu0 0
      %10606 = vmatmul.mubr.bf16.gmra.mxu0 %v6471
      %v10607 = vpop.f32.mrf.mxu0
      %v10608 = vadd.f32 %v10511, %v10607
      %v10609 = vpop.f32.mrf.mxu0
      %v10610 = vpop.f32.mrf.mxu0
      %v10611 = vadd.f32 %v10514, %v10610
      %v10612 = vpop.f32.mrf.mxu0
      %10613 = vmatprep.mubr.bf16.mxu0 0
      %10614 = vmatmul.mubr.bf16.gmra.mxu0 %v6474
      %v10615 = vpop.f32.mrf.mxu0
      %v10616 = vadd.f32 %v10519, %v10615
      %v10617 = vpop.f32.mrf.mxu0
      %v10618 = vpop.f32.mrf.mxu0
      %v10619 = vadd.f32 %v10522, %v10618
      %v10620 = vpop.f32.mrf.mxu0
      %10621 = vmatprep.mubr.bf16.mxu0 0
      %10622 = vmatmul.mubr.bf16.gmra.mxu0 %v6477
      %v10623 = vpop.f32.mrf.mxu0
      %v10624 = vadd.f32 %v10527, %v10623
      %v10625 = vpop.f32.mrf.mxu0
      %v10626 = vpop.f32.mrf.mxu0
      %v10627 = vadd.f32 %v10530, %v10626
      %v10628 = vpop.f32.mrf.mxu0
      %10629 = vmatprep.mubr.bf16.mxu0 0
      %10630 = vmatmul.mubr.bf16.gmra.mxu0 %v6480
      %v10631 = vpop.f32.mrf.mxu0
      %v10632 = vadd.f32 %v10535, %v10631
      %v10633 = vpop.f32.mrf.mxu0
      %v10634 = vpop.f32.mrf.mxu0
      %v10635 = vadd.f32 %v10538, %v10634
      %v10636 = vpop.f32.mrf.mxu0
      %10637 = vmatprep.mubr.bf16.mxu0 0
      %10638 = vmatmul.mubr.bf16.gmra.mxu0 %v6483
      %v10639 = vpop.f32.mrf.mxu0
      %v10640 = vadd.f32 %v10543, %v10639
      %v10641 = vpop.f32.mrf.mxu0
      %v10642 = vpop.f32.mrf.mxu0
      %v10643 = vadd.f32 %v10546, %v10642
      %v10644 = vpop.f32.mrf.mxu0
      %10645 = vmatprep.mubr.bf16.mxu0 0
      %10646 = vmatmul.mubr.bf16.gmra.mxu0 %v6486
      %v10647 = vpop.f32.mrf.mxu0
      %v10648 = vadd.f32 %v10551, %v10647
      %v10649 = vpop.f32.mrf.mxu0
      %v10650 = vpop.f32.mrf.mxu0
      %v10651 = vadd.f32 %v10554, %v10650
      %v10652 = vpop.f32.mrf.mxu0
      %10653 = vmatprep.mubr.bf16.mxu0 0
      %10654 = vmatmul.mubr.bf16.gmra.mxu0 %v6489
      %v10655 = vpop.f32.mrf.mxu0
      %v10656 = vadd.f32 %v10559, %v10655
      %v10657 = vpop.f32.mrf.mxu0
      %v10658 = vpop.f32.mrf.mxu0
      %v10659 = vadd.f32 %v10562, %v10658
      %v10660 = vpop.f32.mrf.mxu0
      %10661 = vdwg.mxu0
      %v10662 = vmax.f32 %v10600, 0.0
      %v10663 = vmax.f32 %v10603, 0.0
      %v10664 = vmax.f32 %v10608, 0.0
      %v10665 = vmax.f32 %v10611, 0.0
      %v10666 = vmax.f32 %v10616, 0.0
      %v10667 = vmax.f32 %v10619, 0.0
      %v10668 = vmax.f32 %v10624, 0.0
      %v10669 = vmax.f32 %v10627, 0.0
      %v10670 = vmax.f32 %v10632, 0.0
      %v10671 = vmax.f32 %v10635, 0.0
      %v10672 = vmax.f32 %v10640, 0.0
      %v10673 = vmax.f32 %v10643, 0.0
      %v10674 = vmax.f32 %v10648, 0.0
      %v10675 = vmax.f32 %v10651, 0.0
      %v10676 = vmax.f32 %v10656, 0.0
      %v10677 = vmax.f32 %v10659, 0.0
      %v10678 = vld [vmem:[%s3] sm:$0xf]
      %v10679 = vld [vmem:[%s3 + $0x4] sm:$0xf]
      %v10680 = vld [vmem:[%s3 + $0x8] sm:$0xf]
      %v10681 = vld [vmem:[%s3 + $0xc] sm:$0xf]
      %v10682 = vld [vmem:[%s3 + $0x10] sm:$0xf]
      %v10683 = vld [vmem:[%s3 + $0x14] sm:$0xf]
      %v10684 = vld [vmem:[%s3 + $0x18] sm:$0xf]
      %v10685 = vld [vmem:[%s3 + $0x1c] sm:$0xf]
      %v10686 = vld [vmem:[%s3 + $0x20] sm:$0xf]
      %v10687 = vld [vmem:[%s3 + $0x24] sm:$0xf]
      %v10688 = vld [vmem:[%s3 + $0x28] sm:$0xf]
      %v10689 = vld [vmem:[%s3 + $0x2c] sm:$0xf]
      %v10690 = vld [vmem:[%s3 + $0x30] sm:$0xf]
      %v10691 = vld [vmem:[%s3 + $0x34] sm:$0xf]
      %v10692 = vld [vmem:[%s3 + $0x38] sm:$0xf]
      %v10693 = vld [vmem:[%s3 + $0x3c] sm:$0xf]
      %v10694 = vpack.c.bf16 %v10663, %v10662
      %v10695 = vpack.c.bf16 %v10665, %v10664
      %v10696 = vpack.c.bf16 %v10667, %v10666
      %v10697 = vpack.c.bf16 %v10669, %v10668
      %v10698 = vpack.c.bf16 %v10671, %v10670
      %v10699 = vpack.c.bf16 %v10673, %v10672
      %v10700 = vpack.c.bf16 %v10675, %v10674
      %v10701 = vpack.c.bf16 %v10677, %v10676
      %v10702 = vld [vmem:[%s4] sm:$0xff]
      %v10703 = vld [vmem:[%s4 + $0x8] sm:$0xff]
      %v10704 = vld [vmem:[%s4 + $0x10] sm:$0xff]
      %v10705 = vld [vmem:[%s4 + $0x18] sm:$0xff]
      %v10706 = vld [vmem:[%s4 + $0x20] sm:$0xff]
      %v10707 = vld [vmem:[%s4 + $0x28] sm:$0xff]
      %v10708 = vld [vmem:[%s4 + $0x30] sm:$0xff]
      %v10709 = vld [vmem:[%s4 + $0x38] sm:$0xff]
      %v10710 = vld [vmem:[%s4 + $0x40] sm:$0xff]
      %v10711 = vld [vmem:[%s4 + $0x48] sm:$0xff]
      %v10712 = vld [vmem:[%s4 + $0x50] sm:$0xff]
      %v10713 = vld [vmem:[%s4 + $0x58] sm:$0xff]
      %v10714 = vld [vmem:[%s4 + $0x60] sm:$0xff]
      %v10715 = vld [vmem:[%s4 + $0x68] sm:$0xff]
      %v10716 = vld [vmem:[%s4 + $0x70] sm:$0xff]
      %v10717 = vld [vmem:[%s4 + $0x78] sm:$0xff]
      %10719 = vset.pattern.permute.xlu0 0
      %10720 = vperm.xlu0 %10719, %v10702
      %v10721 = vpop.permute.xlu0 %10720
      %10724 = vset.pattern.permute.xlu0 0
      %10725 = vperm.xlu0 %10724, %v10703
      %v10726 = vpop.permute.xlu0 %10725
      %10729 = vset.pattern.permute.xlu0 0
      %10730 = vperm.xlu0 %10729, %v10704
      %v10731 = vpop.permute.xlu0 %10730
      %10734 = vset.pattern.permute.xlu0 0
      %10735 = vperm.xlu0 %10734, %v10705
      %v10736 = vpop.permute.xlu0 %10735
      %10739 = vset.pattern.permute.xlu0 0
      %10740 = vperm.xlu0 %10739, %v10706
      %v10741 = vpop.permute.xlu0 %10740
      %10744 = vset.pattern.permute.xlu0 0
      %10745 = vperm.xlu0 %10744, %v10707
      %v10746 = vpop.permute.xlu0 %10745
      %10749 = vset.pattern.permute.xlu0 0
      %10750 = vperm.xlu0 %10749, %v10708
      %v10751 = vpop.permute.xlu0 %10750
      %10754 = vset.pattern.permute.xlu0 0
      %10755 = vperm.xlu0 %10754, %v10709
      %v10756 = vpop.permute.xlu0 %10755
      %10759 = vset.pattern.permute.xlu0 0
      %10760 = vperm.xlu0 %10759, %v10710
      %v10761 = vpop.permute.xlu0 %10760
      %10764 = vset.pattern.permute.xlu0 0
      %10765 = vperm.xlu0 %10764, %v10711
      %v10766 = vpop.permute.xlu0 %10765
      %10769 = vset.pattern.permute.xlu0 0
      %10770 = vperm.xlu0 %10769, %v10712
      %v10771 = vpop.permute.xlu0 %10770
      %10774 = vset.pattern.permute.xlu0 0
      %10775 = vperm.xlu0 %10774, %v10713
      %v10776 = vpop.permute.xlu0 %10775
      %10779 = vset.pattern.permute.xlu0 0
      %10780 = vperm.xlu0 %10779, %v10714
      %v10781 = vpop.permute.xlu0 %10780
      %10784 = vset.pattern.permute.xlu0 0
      %10785 = vperm.xlu0 %10784, %v10715
      %v10786 = vpop.permute.xlu0 %10785
      %10789 = vset.pattern.permute.xlu0 0
      %10790 = vperm.xlu0 %10789, %v10716
      %v10791 = vpop.permute.xlu0 %10790
      %10794 = vset.pattern.permute.xlu0 0
      %10795 = vperm.xlu0 %10794, %v10717
      %v10796 = vpop.permute.xlu0 %10795
      %v10814 = vunpack.c.l.b16 %v10678
      %v10815 = vunpack.c.l.b16 %v10679
      %v10816 = vunpack.c.l.b16 %v10680
      %v10817 = vunpack.c.l.b16 %v10681
      %v10818 = vunpack.c.l.b16 %v10682
      %v10819 = vunpack.c.l.b16 %v10683
      %v10820 = vunpack.c.l.b16 %v10684
      %v10821 = vunpack.c.l.b16 %v10685
      %v10822 = vunpack.c.l.b16 %v10686
      %v10823 = vunpack.c.l.b16 %v10687
      %v10824 = vunpack.c.l.b16 %v10688
      %v10825 = vunpack.c.l.b16 %v10689
      %v10826 = vunpack.c.l.b16 %v10690
      %v10827 = vunpack.c.l.b16 %v10691
      %v10828 = vunpack.c.l.b16 %v10692
      %v10829 = vunpack.c.l.b16 %v10693
      %v10830 = vpack.c.b16 %v10815, %v10814
      %v10831 = vpack.c.b16 %v10817, %v10816
      %v10832 = vpack.c.b16 %v10819, %v10818
      %v10833 = vpack.c.b16 %v10821, %v10820
      %v10834 = vpack.c.b16 %v10823, %v10822
      %v10835 = vpack.c.b16 %v10825, %v10824
      %v10836 = vpack.c.b16 %v10827, %v10826
      %v10837 = vpack.c.b16 %v10829, %v10828
      %10846 = vmatprep.subr.bf16.mxu0 0
      %10847 = vmatpush1.bf16.msra.mxu0 %v10701
      %10848 = vmatprep.subr.bf16.mxu0 0
      %10849 = vmatpush1.bf16.msra.mxu0 %v10700
      %10850 = vmatprep.subr.bf16.mxu0 0
      %10851 = vmatpush1.bf16.msra.mxu0 %v10699
      %10852 = vmatprep.subr.bf16.mxu0 0
      %10853 = vmatpush1.bf16.msra.mxu0 %v10698
      %10854 = vmatprep.subr.bf16.mxu0 0
      %10855 = vmatpush1.bf16.msra.mxu0 %v10697
      %10856 = vmatprep.subr.bf16.mxu0 0
      %10857 = vmatpush1.bf16.msra.mxu0 %v10696
      %10858 = vmatprep.subr.bf16.mxu0 0
      %10859 = vmatpush1.bf16.msra.mxu0 %v10695
      %10860 = vmatprep.subr.bf16.mxu0 0
      %10861 = vmatpush1.bf16.msra.mxu0 %v10694
      %10862 = vmatprep.subr.bf16.mxu0 0
      %10863 = vmatpush2.bf16.msra.mxu0 0
      %10864 = vmatprep.subr.bf16.mxu0 0
      %10865 = vmatpush2.bf16.msra.mxu0 0
      %10866 = vmatprep.subr.bf16.mxu0 0
      %10867 = vmatpush2.bf16.msra.mxu0 0
      %10868 = vmatprep.subr.bf16.mxu0 0
      %10869 = vmatpush2.bf16.msra.mxu0 0
      %10870 = vmatprep.subr.bf16.mxu0 0
      %10871 = vmatpush2.bf16.msra.mxu0 0
      %10872 = vmatprep.subr.bf16.mxu0 0
      %10873 = vmatpush2.bf16.msra.mxu0 0
      %10874 = vmatprep.subr.bf16.mxu0 0
      %10875 = vmatpush2.bf16.msra.mxu0 0
      %10876 = vmatprep.subr.bf16.mxu0 0
      %10877 = vmatpush2.bf16.msra.mxu0 0
      %10878 = vmatprep.mubr.bf16.mxu0 0
      %10879 = vmatmul.mubr.bf16.gmra.mxu0 %v10830
      %v10880 = vpop.f32.mrf.mxu0
      %v10881 = vadd.f32 %v10721, %v10880
      %v10882 = vpop.f32.mrf.mxu0
      %v10883 = vpop.f32.mrf.mxu0
      %v10884 = vadd.f32 %v10726, %v10883
      %v10885 = vpop.f32.mrf.mxu0
      %10886 = vmatprep.mubr.bf16.mxu0 0
      %10887 = vmatmul.mubr.bf16.gmra.mxu0 %v10831
      %v10888 = vpop.f32.mrf.mxu0
      %v10889 = vadd.f32 %v10731, %v10888
      %v10890 = vpop.f32.mrf.mxu0
      %v10891 = vpop.f32.mrf.mxu0
      %v10892 = vadd.f32 %v10736, %v10891
      %v10893 = vpop.f32.mrf.mxu0
      %10894 = vmatprep.mubr.bf16.mxu0 0
      %10895 = vmatmul.mubr.bf16.gmra.mxu0 %v10832
      %v10896 = vpop.f32.mrf.mxu0
      %v10897 = vadd.f32 %v10741, %v10896
      %v10898 = vpop.f32.mrf.mxu0
      %v10899 = vpop.f32.mrf.mxu0
      %v10900 = vadd.f32 %v10746, %v10899
      %v10901 = vpop.f32.mrf.mxu0
      %10902 = vmatprep.mubr.bf16.mxu0 0
      %10903 = vmatmul.mubr.bf16.gmra.mxu0 %v10833
      %v10904 = vpop.f32.mrf.mxu0
      %v10905 = vadd.f32 %v10751, %v10904
      %v10906 = vpop.f32.mrf.mxu0
      %v10907 = vpop.f32.mrf.mxu0
      %v10908 = vadd.f32 %v10756, %v10907
      %v10909 = vpop.f32.mrf.mxu0
      %10910 = vmatprep.mubr.bf16.mxu0 0
      %10911 = vmatmul.mubr.bf16.gmra.mxu0 %v10834
      %v10912 = vpop.f32.mrf.mxu0
      %v10913 = vadd.f32 %v10761, %v10912
      %v10914 = vpop.f32.mrf.mxu0
      %v10915 = vpop.f32.mrf.mxu0
      %v10916 = vadd.f32 %v10766, %v10915
      %v10917 = vpop.f32.mrf.mxu0
      %10918 = vmatprep.mubr.bf16.mxu0 0
      %10919 = vmatmul.mubr.bf16.gmra.mxu0 %v10835
      %v10920 = vpop.f32.mrf.mxu0
      %v10921 = vadd.f32 %v10771, %v10920
      %v10922 = vpop.f32.mrf.mxu0
      %v10923 = vpop.f32.mrf.mxu0
      %v10924 = vadd.f32 %v10776, %v10923
      %v10925 = vpop.f32.mrf.mxu0
      %10926 = vmatprep.mubr.bf16.mxu0 0
      %10927 = vmatmul.mubr.bf16.gmra.mxu0 %v10836
      %v10928 = vpop.f32.mrf.mxu0
      %v10929 = vadd.f32 %v10781, %v10928
      %v10930 = vpop.f32.mrf.mxu0
      %v10931 = vpop.f32.mrf.mxu0
      %v10932 = vadd.f32 %v10786, %v10931
      %v10933 = vpop.f32.mrf.mxu0
      %10934 = vmatprep.mubr.bf16.mxu0 0
      %10935 = vmatmul.mubr.bf16.gmra.mxu0 %v10837
      %v10936 = vpop.f32.mrf.mxu0
      %v10937 = vadd.f32 %v10791, %v10936
      %v10938 = vpop.f32.mrf.mxu0
      %v10939 = vpop.f32.mrf.mxu0
      %v10940 = vadd.f32 %v10796, %v10939
      %v10941 = vpop.f32.mrf.mxu0
      %10942 = vdwg.mxu0
      %vm10943 = vcmask 64512
      %10944 = vst.msk [vmem:[%s255] sm:$0xff] %vm10943, %v10881
      %10945 = vst.msk [vmem:[%s255 + $0x8] sm:$0xff] %vm10943, %v10884
      %10946 = vst.msk [vmem:[%s255 + $0x10] sm:$0xff] %vm10943, %v10889
      %10947 = vst.msk [vmem:[%s255 + $0x18] sm:$0xff] %vm10943, %v10892
      %10948 = vst.msk [vmem:[%s255 + $0x20] sm:$0xff] %vm10943, %v10897
      %10949 = vst.msk [vmem:[%s255 + $0x28] sm:$0xff] %vm10943, %v10900
      %10950 = vst.msk [vmem:[%s255 + $0x30] sm:$0xff] %vm10943, %v10905
      %10951 = vst.msk [vmem:[%s255 + $0x38] sm:$0xff] %vm10943, %v10908
      %10952 = vst.msk [vmem:[%s255 + $0x40] sm:$0xff] %vm10943, %v10913
      %10953 = vst.msk [vmem:[%s255 + $0x48] sm:$0xff] %vm10943, %v10916
      %10954 = vst.msk [vmem:[%s255 + $0x50] sm:$0xff] %vm10943, %v10921
      %10955 = vst.msk [vmem:[%s255 + $0x58] sm:$0xff] %vm10943, %v10924
      %10956 = vst.msk [vmem:[%s255 + $0x60] sm:$0xff] %vm10943, %v10929
      %10957 = vst.msk [vmem:[%s255 + $0x68] sm:$0xff] %vm10943, %v10932
      %10958 = vst.msk [vmem:[%s255 + $0x70] sm:$0xff] %vm10943, %v10937
      %10959 = vst.msk [vmem:[%s255 + $0x78] sm:$0xff] %vm10943, %v10940
      %p10960 = scmp.lt.s32.totalorder %s20, 1
      %s10961 = scalar_select %p10960, %s20, 1
      %p10962 = scmp.lt.s32.totalorder %s21, 0
      %s10963 = scalar_select %p10962, %s21, 0
      %s10964 = smul.addr %s10961, 16
      %s10965 = sadd.s32 %s10963, %s10964
      %s10966 = smul.addr %s10965, 8
      %s10967 = scalar_lea.vmem %s5, %s10966
      // Predicated region
      $region41: #{tpu_custom_call.1} parent=39 // pred_check
        %p10968 = pneg %p160
      $region42: #{tpu_custom_call.1} parent=39 // pred_check_branch
        %10970 = sbr.rel (%p10968) target = $region44
      $region43: #{tpu_custom_call.1} parent=39 // pred_region
        _
      $region44: #{tpu_custom_call.1} parent=39 // pred_fallthru
        _
    $region40: #{tpu_custom_call.1} parent=5 // pred_fallthru
      _
    %p10971 = scmp.le.s32.totalorder 2, %s11
    // Predicated region
    $region45: #{tpu_custom_call.1} parent=5 // pred_check
      %p10972 = pneg %p10971
    $region46: #{tpu_custom_call.1} parent=5 // pred_check_branch
      %10974 = sbr.rel (%p10972) target = $region48
    $region47: #{tpu_custom_call.1} parent=5 // pred_region
      %s10975 = ssub.s32 %s11, 2
      // Predicated region
      $region49: #{tpu_custom_call.1} parent=47 // pred_check
        %p10976 = pneg %p166
      $region50: #{tpu_custom_call.1} parent=47 // pred_check_branch
        %10978 = sbr.rel (%p10976) target = $region52
      $region51: #{tpu_custom_call.1} parent=47 // pred_region
        %p10979 = scmp.lt.s32.totalorder %s22, 1
        %s10980 = scalar_select %p10979, %s22, 1
        %p10981 = scmp.lt.s32.totalorder %s23, 0
        %s10982 = scalar_select %p10981, %s23, 0
        %s10983 = smul.addr %s10980, 16
        %s10984 = sadd.s32 %s10982, %s10983
        %s10985 = smul.addr %s10984, 8
        %s10986 = scalar_lea.vmem %s5, %s10985
      $region52: #{tpu_custom_call.1} parent=47 // pred_fallthru
        _
    $region48: #{tpu_custom_call.1} parent=5 // pred_fallthru
      _
  $region6: #{tpu_custom_call.1} parent=0 // loop_footer
    %s15 = sadd.s32 1, %s11
  $region7: #{tpu_custom_call.1} parent=0 // loop_footer_branch
    %10 = sbr.rel target = $region3
  $region8: #{tpu_custom_call.1} parent=0 // loop_exit
    _

</llo_original>
